<compile_context>
chip_gen: v5e
topology: v5e:2x2
jax: 0.10.0
libtpu: 0.0.40
codegen_flags: <defaults>
</compile_context>

<pallas_src>
import jax
import jax.numpy as jnp
from jax import lax
from jax.experimental import pallas as pl
from jax.experimental.pallas import tpu as pltpu

BN_EPS = 1e-5
_PAD_OFF = 128        # aligned lane offset of the bottleneck inside the shift scratch


# ------------------------------ tiling helper --------------------------------

def _pick_lane_tile(M):
    """Lane tile for (C, M) slabs: multiple of 128 and >=2 grid steps whenever
    possible (megacore sharding on v7x); otherwise the full lane extent."""
    for tm in (512, 256, 128):
        if M % tm == 0 and M // tm >= 2:
            return tm
    return M


# ------------------------------ Pallas kernels --------------------------------

def _bnrelu_matmul_kernel(x_ref, s_ref, b_ref, w_ref, o_ref):
    # out = W @ relu(x * scale + shift); BN/ReLU in f32, dot operands bf16.
    h = jnp.maximum(x_ref[...] * s_ref[...] + b_ref[...], 0.0)
    o_ref[...] = jnp.dot(w_ref[...], h.astype(jnp.bfloat16),
                         preferred_element_type=jnp.float32)


def _matmul_bnrelu_kernel(x_ref, w_ref, s_ref, b_ref, o_ref):
    # out = relu((W @ x) * scale + shift)   (conv0 -> norm0 -> relu0)
    y = jnp.dot(w_ref[...], x_ref[...], preferred_element_type=jnp.float32)
    o_ref[...] = jnp.maximum(y * s_ref[...] + b_ref[...], 0.0)


def _bnrelu_kernel(x_ref, s_ref, b_ref, o_ref):
    o_ref[...] = jnp.maximum(x_ref[...] * s_ref[...] + b_ref[...], 0.0)


# ------------------------------ kernel wrappers --------------------------------
# NOTE: weight / scale / shift operands have constant block indices; they are
# double-buffered by default which is fine at these sizes (VMEM budget is tiny).

def bnrelu_matmul(x, scale, shift, w):
    """relu(BN(x)) then 1x1 conv, channels-major: (K, M) f32 -> (Cout, M) f32."""
    K, M = x.shape
    cout = w.shape[0]
    tm = _pick_lane_tile(M)
    return pl.pallas_call(
        _bnrelu_matmul_kernel,
        out_shape=jax.ShapeDtypeStruct((cout, M), jnp.float32),
        grid=(M // tm,),
        in_specs=[
            pl.BlockSpec((K, tm), lambda i: (0, i)),
            pl.BlockSpec((K, 1), lambda i: (0, 0)),
            pl.BlockSpec((K, 1), lambda i: (0, 0)),
            pl.BlockSpec((cout, K), lambda i: (0, 0)),
        ],
        out_specs=pl.BlockSpec((cout, tm), lambda i: (0, i)),
        compiler_params=pltpu.CompilerParams(dimension_semantics=("parallel",)),
    )(x, scale, shift, w)


def matmul_bnrelu(x, w, scale, shift):
    """(W @ x) then BN+ReLU (used for conv0): (K, M) bf16 -> (Cout, M) f32."""
    K, M = x.shape
    cout = w.shape[0]
    tm = _pick_lane_tile(M)
    return pl.pallas_call(
        _matmul_bnrelu_kernel,
        out_shape=jax.ShapeDtypeStruct((cout, M), jnp.float32),
        grid=(M // tm,),
        in_specs=[
            pl.BlockSpec((K, tm), lambda i: (0, i)),
            pl.BlockSpec((cout, K), lambda i: (0, 0)),
            pl.BlockSpec((cout, 1), lambda i: (0, 0)),
            pl.BlockSpec((cout, 1), lambda i: (0, 0)),
        ],
        out_specs=pl.BlockSpec((cout, tm), lambda i: (0, i)),
        compiler_params=pltpu.CompilerParams(dimension_semantics=("parallel",)),
    )(x, w, scale, shift)


def bnrelu(x, scale, shift):
    """Elementwise eval-mode BN + ReLU on a channels-major (C, M) slab."""
    K, M = x.shape
    tm = _pick_lane_tile(M)
    return pl.pallas_call(
        _bnrelu_kernel,
        out_shape=jax.ShapeDtypeStruct((K, M), jnp.float32),
        grid=(M // tm,),
        in_specs=[
            pl.BlockSpec((K, tm), lambda i: (0, i)),
            pl.BlockSpec((K, 1), lambda i: (0, 0)),
            pl.BlockSpec((K, 1), lambda i: (0, 0)),
        ],
        out_specs=pl.BlockSpec((K, tm), lambda i: (0, i)),
        compiler_params=pltpu.CompilerParams(dimension_semantics=("parallel",)),
    )(x, scale, shift)


# --------------------------- fused dense layer kernel --------------------------

def conv3_masks(N, H, W):
    """0/1 validity masks, one per 3x3 tap, for the flat (n, y, x) lane layout:
    a flat lane shift by (dy-1)*W + (dx-1) equals the true spatial neighbour
    exactly where that neighbour is inside the image; elsewhere mask = 0."""
    M = N * H * W
    pos = jnp.arange(M, dtype=jnp.int32)
    y = (pos % (H * W)) // W
    x = pos % W
    rows = []
    for dy in range(3):
        for dx in range(3):
            oy, ox = dy - 1, dx - 1
            rows.append((y + oy >= 0) & (y + oy < H) & (x + ox >= 0) & (x + ox < W))
    return jnp.stack(rows).astype(jnp.float32).reshape(9, 1, M)


def dense_layer(buf, masks, p, *, c_in, W, M):
    """One fused dense layer: BN1+ReLU+1x1 conv + BN2+ReLU+3x3 conv.

    Reads rows [0:c_in] of `buf` (features concatenated so far) and writes the
    `growth` new channels in place into rows [c_in:c_in+growth] via
    input_output_aliases — torch.cat([x, new], 1) without any copy of `x`.
    """
    c_total = buf.shape[0]
    c_bott = p["w1"].shape[0]
    growth = p["w2"].shape[1]
    taps = [(dy - 1) * W + (dx - 1) for dy in range(3) for dx in range(3)]
    assert W + 1 <= _PAD_OFF and c_in % growth == 0 and c_total % growth == 0

    def kernel(x_ref, s1_ref, b1_ref, w1_ref, s2_ref, b2_ref, w2_ref, m_ref,
               o_ref, pad_ref):
        # BN1 + ReLU (f32), then 1x1 conv on the MXU (bf16 operands, f32 acc).
        h1 = jnp.maximum(x_ref[...] * s1_ref[...] + b1_ref[...], 0.0)
        bott = jnp.dot(w1_ref[...], h1.astype(jnp.bfloat16),
                       preferred_element_type=jnp.float32)
        # BN2 + ReLU (f32); keep the bottleneck VMEM-resident in a lane-padded
        # scratch so the 3x3 conv can read shifted windows without any im2col.
        h2 = jnp.maximum(bott * s2_ref[...] + b2_ref[...], 0.0)
        pad_ref[...] = jnp.zeros_like(pad_ref)
        pad_ref[:, _PAD_OFF:_PAD_OFF + M] = h2
        # 3x3 conv = 9 accumulating dots over shifted + masked bottleneck views.
        acc = jnp.zeros((growth, M), jnp.float32)
        for t, s in enumerate(taps):
            shifted = pad_ref[:, _PAD_OFF + s:_PAD_OFF + s + M] * m_ref[t]
            acc = acc + jnp.dot(w2_ref[t], shifted.astype(jnp.bfloat16),
                                preferred_element_type=jnp.float32)
        o_ref[...] = acc

    return pl.pallas_call(
        kernel,
        out_shape=jax.ShapeDtypeStruct((c_total, M), jnp.float32),
        grid=(1,),
        in_specs=[
            pl.BlockSpec((c_in, M), lambda i: (0, 0)),
            pl.BlockSpec((c_in, 1), lambda i: (0, 0)),
            pl.BlockSpec((c_in, 1), lambda i: (0, 0)),
            pl.BlockSpec((c_bott, c_in), lambda i: (0, 0)),
            pl.BlockSpec((c_bott, 1), lambda i: (0, 0)),
            pl.BlockSpec((c_bott, 1), lambda i: (0, 0)),
            pl.BlockSpec((9, growth, c_bott), lambda i: (0, 0, 0)),
            pl.BlockSpec((9, 1, M), lambda i: (0, 0, 0)),
        ],
        # only the new growth channels are written back to HBM
        out_specs=pl.BlockSpec((growth, M), lambda i: (c_in // growth, 0)),
        scratch_shapes=[pltpu.VMEM((c_bott, M + 2 * _PAD_OFF), jnp.float32)],
        input_output_aliases={0: 0},
        compiler_params=pltpu.CompilerParams(dimension_semantics=("arbitrary",)),
    )(buf, p["s1"], p["b1"], p["w1"], p["s2"], p["b2"], p["w2"], masks)


def run_dense_block(feats, nhw, layer_params):
    c0, M = feats.shape
    N, H, W = nhw
    growth = layer_params[0]["w2"].shape[1]
    c_total = c0 + len(layer_params) * growth
    # preallocated full-width block buffer; each layer appends its channels
    # in place (no O(L^2) concatenation traffic).
    buf = jnp.zeros((c_total, M), jnp.float32).at[:c0, :].set(feats)
    masks = conv3_masks(N, H, W)
    for j, lp in enumerate(layer_params):
        buf = dense_layer(buf, masks, lp, c_in=c0 + j * growth, W=W, M=M)
    return buf


# --------------------------------- JAX glue -----------------------------------

def im2col_cm(x_nchw, k, stride, pad):
    """Channels-major im2col: (k*k*Cin, N*Ho*Wo) patches, rows ordered
    (dy, dx, cin), columns ordered (n, y, x) — matches the conv0 weight layout."""
    N, C, H, W = x_nchw.shape
    Ho = (H + 2 * pad - k) // stride + 1
    Wo = (W + 2 * pad - k) // stride + 1
    xp = jnp.pad(x_nchw, ((0, 0), (0, 0), (pad, pad), (pad, pad)))
    rows = []
    for dy in range(k):
        for dx in range(k):
            sl = xp[:, :, dy:dy + Ho * stride:stride, dx:dx + Wo * stride:stride]
            rows.append(jnp.transpose(sl, (1, 0, 2, 3)).reshape(C, N * Ho * Wo))
    return jnp.concatenate(rows, axis=0), (Ho, Wo)


def densenet_forward(params, x_nchw):
    x = x_nchw.astype(jnp.float32)
    N = x.shape[0]

    # ----- stem: conv0 (7x7 /2, pad 3) fused with norm0 + relu0 --------------
    # TODO(synk): conv0 still uses a one-off channels-major im2col in the
    # wrapper (<1 MB of glue); a 49-tap fused stride-2 kernel was not worth it.
    patches, (Ho, Wo) = im2col_cm(x, 7, 2, 3)
    s0, b0 = params["norm0"]
    feats = matmul_bnrelu(patches.astype(jnp.bfloat16), params["conv0"], s0, b0)

    # pool0: 3x3 stride-2 max pool, pad 1.
    # TODO(synk): max pooling kept as lax.reduce_window glue (not a Pallas kernel).
    c0 = feats.shape[0]
    f4 = feats.reshape(c0, N, Ho, Wo)
    f4 = lax.reduce_window(f4, -jnp.inf, lax.max, (1, 1, 3, 3), (1, 1, 2, 2),
                           [(0, 0), (0, 0), (1, 1), (1, 1)])
    H, W = Ho // 2, Wo // 2
    feats = f4.reshape(c0, N * H * W)
    nhw = (N, H, W)

    # ----- dense blocks + transitions ----------------------------------------
    for block in params["blocks"]:
        feats = run_dense_block(feats, nhw, block["layers"])
        tp = block["transition"]
        if tp is not None:
            conv = bnrelu_matmul(feats, tp["s"], tp["b"], tp["w"])
            # 2x2 average pool.
            # TODO(synk): avg pool kept as reshape+mean glue; it cannot move in
            # front of the in-kernel ReLU and the tensor is tiny at this point.
            cout = conv.shape[0]
            Nn, Hh, Ww = nhw
            conv = conv.reshape(cout, Nn, Hh // 2, 2, Ww // 2, 2).mean(axis=(3, 5))
            nhw = (Nn, Hh // 2, Ww // 2)
            feats = conv.reshape(cout, Nn * (Hh // 2) * (Ww // 2))

    # ----- norm5 + final F.relu, global average pool, classifier -------------
    s5, b5 = params["norm5"]
    feats = bnrelu(feats, s5, b5)
    c = feats.shape[0]
    Nn, Hh, Ww = nhw
    pooled = feats.reshape(c, Nn, Hh * Ww).mean(axis=2).T          # (N, C)
    # classifier left to plain XLA: N x C x num_classes is a few kFLOPs, a
    # Pallas launch would cost more than the math.
    return pooled @ params["fc_w"] + params["fc_b"]


# ------------------------------ parameter init --------------------------------

def build_params(key, growth_rate, block_config, num_init_features, bn_size,
                 num_classes):
    k_iter = iter(jax.random.split(key, 64))

    def conv_w4(cout, cin, kh, kw):
        # kaiming_normal_, fan_in = cin*kh*kw
        fan_in = cin * kh * kw
        return jax.random.normal(next(k_iter), (cout, cin, kh, kw),
                                 jnp.float32) * jnp.sqrt(2.0 / fan_in)

    def bn(c):
        # gamma=1, beta=0, running_mean=0, running_var=1 (eval-mode BN folded)
        gamma = jnp.ones((c,), jnp.float32)
        beta = jnp.zeros((c,), jnp.float32)
        rmean = jnp.zeros((c,), jnp.float32)
        rvar = jnp.ones((c,), jnp.float32)
        scale = gamma / jnp.sqrt(rvar + BN_EPS)
        shift = beta - rmean * scale
        return scale.reshape(c, 1), shift.reshape(c, 1)

    w0 = conv_w4(num_init_features, 3, 7, 7)
    params = {
        # (Cout, kh*kw*Cin) with column order (dy, dx, cin), bf16 for the MXU
        "conv0": jnp.transpose(w0, (0, 2, 3, 1)).reshape(
            num_init_features, -1).astype(jnp.bfloat16),
        "norm0": bn(num_init_features),
    }

    num_features = num_init_features
    blocks = []
    for i, num_layers in enumerate(block_config):
        layers = []
        for j in range(num_layers):
            cin = num_features + j * growth_rate
            cbott = bn_size * growth_rate
            s1, b1 = bn(cin)
            s2, b2 = bn(cbott)
            w1 = conv_w4(cbott, cin, 1, 1)[:, :, 0, 0]          # (Cbott, Cin)
            w2 = conv_w4(growth_rate, cbott, 3, 3)
            layers.append({
                "s1": s1, "b1": b1,
                "w1": w1.astype(jnp.bfloat16),
                "s2": s2, "b2": b2,
                # (9, growth, Cbott), tap order (dy, dx)
                "w2": jnp.transpose(w2, (2, 3, 0, 1)).reshape(
                    9, growth_rate, cbott).astype(jnp.bfloat16),
            })
        num_features += num_layers * growth_rate
        block = {"layers": layers, "transition": None}
        if i != len(block_config) - 1:
            st, bt = bn(num_features)
            wt = conv_w4(num_features // 2, num_features, 1, 1)[:, :, 0, 0]
            block["transition"] = {"s": st, "b": bt, "w": wt.astype(jnp.bfloat16)}
            num_features //= 2
        blocks.append(block)

    params["blocks"] = blocks
    params["norm5"] = bn(num_features)
    params["fc_w"] = (jax.random.normal(next(k_iter),
                                        (num_features, num_classes), jnp.float32)
                      / jnp.sqrt(num_features))
    params["fc_b"] = jnp.zeros((num_classes,), jnp.float32)   # Linear bias init 0
    return params


# ----------------------------------- main --------------------------------------

if __name__ == "__main__":
    key = jax.random.PRNGKey(0)
    pkey, xkey = jax.random.split(key)

    # small DenseNet-BC: growth=8, blocks (2,2,2,2), 16 init filters, 10 classes
    params = build_params(pkey, growth_rate=8, block_config=(2, 2, 2, 2),
                          num_init_features=16, bn_size=2, num_classes=10)

    x = jax.random.normal(xkey, (2, 3, 64, 64), jnp.float32)  # NCHW like PyTorch

    fwd = jax.jit(densenet_forward)
    out = fwd(params, x)
    jax.block_until_ready(out)
    assert out.shape == (2, 10) and out.dtype == jnp.float32
    print("KERNEL_OK")
</pallas_src>

<mosaic_0001>
module attributes {stable_mosaic.version = 11 : i64} {
  func.func @_matmul_bnrelu_kernel(%arg0: i32, %arg1: memref<147x512xbf16, #tpu.memory_space<vmem>>, %arg2: memref<16x147xbf16, #tpu.memory_space<vmem>>, %arg3: memref<16x1xf32, #tpu.memory_space<vmem>>, %arg4: memref<16x1xf32, #tpu.memory_space<vmem>>, %arg5: memref<16x512xf32, #tpu.memory_space<vmem>>) attributes {dimension_semantics = [#tpu.dimension_semantics<parallel>], iteration_bounds = array<i64: 4>, scalar_prefetch = 0 : i64, scratch_operands = 0 : i64, tpu.core_type = #tpu.core_type<tc>, window_params = [{transform_indices = @transform_0, window_bounds = array<i64: 147, 512>}, {pipeline_mode = #tpu.pipeline_mode<synchronous>, transform_indices = @transform_1, window_bounds = array<i64: 16, 147>}, {pipeline_mode = #tpu.pipeline_mode<synchronous>, transform_indices = @transform_2, window_bounds = array<i64: 16, 1>}, {pipeline_mode = #tpu.pipeline_mode<synchronous>, transform_indices = @transform_3, window_bounds = array<i64: 16, 1>}, {transform_indices = @transform_4, window_bounds = array<i64: 16, 512>}]} {
    %c0 = arith.constant 0 : index
    %c0_0 = arith.constant 0 : index
    %0 = vector.load %arg2[%c0, %c0_0] : memref<16x147xbf16, #tpu.memory_space<vmem>>, vector<16x147xbf16>
    %c0_1 = arith.constant 0 : index
    %c0_2 = arith.constant 0 : index
    %1 = vector.load %arg1[%c0_1, %c0_2] : memref<147x512xbf16, #tpu.memory_space<vmem>>, vector<147x512xbf16>
    %cst = arith.constant dense<0.000000e+00> : vector<16x512xf32>
    %2 = tpu.matmul %0, %1, %cst {dimension_numbers = #tpu.dot_dimension_numbers<[1], [0], [0], [1], [0, 0, 1, 1], [], []>} : vector<16x147xbf16>, vector<147x512xbf16>, vector<16x512xf32> -> vector<16x512xf32>
    %c0_3 = arith.constant 0 : index
    %c0_4 = arith.constant 0 : index
    %3 = vector.load %arg3[%c0_3, %c0_4] : memref<16x1xf32, #tpu.memory_space<vmem>>, vector<16x1xf32>
    %4 = vector.broadcast %3 : vector<16x1xf32> to vector<16x512xf32>
    %5 = arith.mulf %2, %4 : vector<16x512xf32>
    %c0_5 = arith.constant 0 : index
    %c0_6 = arith.constant 0 : index
    %6 = vector.load %arg4[%c0_5, %c0_6] : memref<16x1xf32, #tpu.memory_space<vmem>>, vector<16x1xf32>
    %7 = vector.broadcast %6 : vector<16x1xf32> to vector<16x512xf32>
    %8 = arith.addf %5, %7 : vector<16x512xf32>
    %cst_7 = arith.constant 0.000000e+00 : f32
    %9 = vector.broadcast %cst_7 : f32 to vector<16x512xf32>
    %10 = arith.maximumf %8, %9 : vector<16x512xf32>
    %c0_8 = arith.constant 0 : index
    %c0_9 = arith.constant 0 : index
    %11 = vector.load %arg5[%c0_8, %c0_9] : memref<16x512xf32, #tpu.memory_space<vmem>>, vector<16x512xf32>
    tpu.vector_store %arg5[%c0_8, %c0_9], %10 {strides = array<i32>} : memref<16x512xf32, #tpu.memory_space<vmem>>, vector<16x512xf32>,
    return
  }
  func.func @transform_0(%arg0: i32) -> (i32, i32) {
    %c0_i32 = arith.constant 0 : i32
    %c0_i32_0 = arith.constant 0 : i32
    return %c0_i32, %arg0 : i32, i32
  }
  func.func @transform_1(%arg0: i32) -> (i32, i32) {
    %c0_i32 = arith.constant 0 : i32
    %c0_i32_0 = arith.constant 0 : i32
    %c0_i32_1 = arith.constant 0 : i32
    return %c0_i32, %c0_i32_0 : i32, i32
  }
  func.func @transform_2(%arg0: i32) -> (i32, i32) {
    %c0_i32 = arith.constant 0 : i32
    %c0_i32_0 = arith.constant 0 : i32
    %c0_i32_1 = arith.constant 0 : i32
    return %c0_i32, %c0_i32_0 : i32, i32
  }
  func.func @transform_3(%arg0: i32) -> (i32, i32) {
    %c0_i32 = arith.constant 0 : i32
    %c0_i32_0 = arith.constant 0 : i32
    %c0_i32_1 = arith.constant 0 : i32
    return %c0_i32, %c0_i32_0 : i32, i32
  }
  func.func @transform_4(%arg0: i32) -> (i32, i32) {
    %c0_i32 = arith.constant 0 : i32
    %c0_i32_0 = arith.constant 0 : i32
    return %c0_i32, %arg0 : i32, i32
  }
}

module attributes {stable_mosaic.version = 11 : i64} {
  func.func @kernel(%arg0: i32, %arg1: memref<16x512xf32, #tpu.memory_space<vmem>>, %arg2: memref<16x1xf32, #tpu.memory_space<vmem>>, %arg3: memref<16x1xf32, #tpu.memory_space<vmem>>, %arg4: memref<16x16xbf16, #tpu.memory_space<vmem>>, %arg5: memref<16x1xf32, #tpu.memory_space<vmem>>, %arg6: memref<16x1xf32, #tpu.memory_space<vmem>>, %arg7: memref<9x8x16xbf16, #tpu.memory_space<vmem>>, %arg8: memref<9x1x512xf32, #tpu.memory_space<vmem>>, %arg9: memref<8x512xf32, #tpu.memory_space<vmem>>, %arg10: memref<16x768xf32, #tpu.memory_space<vmem>>) attributes {dimension_semantics = [#tpu.dimension_semantics<arbitrary>], iteration_bounds = array<i64: 1>, scalar_prefetch = 0 : i64, scratch_operands = 1 : i64, tpu.core_type = #tpu.core_type<tc>, window_params = [{transform_indices = @transform_0, window_bounds = array<i64: 16, 512>}, {pipeline_mode = #tpu.pipeline_mode<synchronous>, transform_indices = @transform_1, window_bounds = array<i64: 16, 1>}, {pipeline_mode = #tpu.pipeline_mode<synchronous>, transform_indices = @transform_2, window_bounds = array<i64: 16, 1>}, {pipeline_mode = #tpu.pipeline_mode<synchronous>, transform_indices = @transform_3, window_bounds = array<i64: 16, 16>}, {pipeline_mode = #tpu.pipeline_mode<synchronous>, transform_indices = @transform_4, window_bounds = array<i64: 16, 1>}, {pipeline_mode = #tpu.pipeline_mode<synchronous>, transform_indices = @transform_5, window_bounds = array<i64: 16, 1>}, {pipeline_mode = #tpu.pipeline_mode<synchronous>, transform_indices = @transform_6, window_bounds = array<i64: 9, 8, 16>}, {pipeline_mode = #tpu.pipeline_mode<synchronous>, transform_indices = @transform_7, window_bounds = array<i64: 9, 1, 512>}, {transform_indices = @transform_8, window_bounds = array<i64: 8, 512>}]} {
    %c0 = arith.constant 0 : index
    %c0_0 = arith.constant 0 : index
    %0 = vector.load %arg1[%c0, %c0_0] : memref<16x512xf32, #tpu.memory_space<vmem>>, vector<16x512xf32>
    %c0_1 = arith.constant 0 : index
    %c0_2 = arith.constant 0 : index
    %1 = vector.load %arg2[%c0_1, %c0_2] : memref<16x1xf32, #tpu.memory_space<vmem>>, vector<16x1xf32>
    %2 = vector.broadcast %1 : vector<16x1xf32> to vector<16x512xf32>
    %3 = arith.mulf %0, %2 : vector<16x512xf32>
    %c0_3 = arith.constant 0 : index
    %c0_4 = arith.constant 0 : index
    %4 = vector.load %arg3[%c0_3, %c0_4] : memref<16x1xf32, #tpu.memory_space<vmem>>, vector<16x1xf32>
    %5 = vector.broadcast %4 : vector<16x1xf32> to vector<16x512xf32>
    %6 = arith.addf %3, %5 : vector<16x512xf32>
    %cst = arith.constant 0.000000e+00 : f32
    %7 = vector.broadcast %cst : f32 to vector<16x512xf32>
    %8 = arith.maximumf %6, %7 : vector<16x512xf32>
    %c0_5 = arith.constant 0 : index
    %c0_6 = arith.constant 0 : index
    %9 = vector.load %arg4[%c0_5, %c0_6] : memref<16x16xbf16, #tpu.memory_space<vmem>>, vector<16x16xbf16>
    %10 = arith.truncf %8 : vector<16x512xf32> to vector<16x512xbf16>
    %cst_7 = arith.constant dense<0.000000e+00> : vector<16x512xf32>
    %11 = tpu.matmul %9, %10, %cst_7 {dimension_numbers = #tpu.dot_dimension_numbers<[1], [0], [0], [1], [0, 0, 1, 1], [], []>} : vector<16x16xbf16>, vector<16x512xbf16>, vector<16x512xf32> -> vector<16x512xf32>
    %c0_8 = arith.constant 0 : index
    %c0_9 = arith.constant 0 : index
    %12 = vector.load %arg5[%c0_8, %c0_9] : memref<16x1xf32, #tpu.memory_space<vmem>>, vector<16x1xf32>
    %13 = vector.broadcast %12 : vector<16x1xf32> to vector<16x512xf32>
    %14 = arith.mulf %11, %13 : vector<16x512xf32>
    %c0_10 = arith.constant 0 : index
    %c0_11 = arith.constant 0 : index
    %15 = vector.load %arg6[%c0_10, %c0_11] : memref<16x1xf32, #tpu.memory_space<vmem>>, vector<16x1xf32>
    %16 = vector.broadcast %15 : vector<16x1xf32> to vector<16x512xf32>
    %17 = arith.addf %14, %16 : vector<16x512xf32>
    %cst_12 = arith.constant 0.000000e+00 : f32
    %18 = vector.broadcast %cst_12 : f32 to vector<16x512xf32>
    %19 = arith.maximumf %17, %18 : vector<16x512xf32>
    %cst_13 = arith.constant 0.000000e+00 : f32
    %20 = vector.broadcast %cst_13 : f32 to vector<16x768xf32>
    %c0_14 = arith.constant 0 : index
    %c0_15 = arith.constant 0 : index
    %21 = vector.load %arg10[%c0_14, %c0_15] : memref<16x768xf32, #tpu.memory_space<vmem>>, vector<16x768xf32>
    tpu.vector_store %arg10[%c0_14, %c0_15], %20 {strides = array<i32>} : memref<16x768xf32, #tpu.memory_space<vmem>>, vector<16x768xf32>,
    %c0_16 = arith.constant 0 : index
    %c128 = arith.constant 128 : index
    %22 = vector.load %arg10[%c0_16, %c128] : memref<16x768xf32, #tpu.memory_space<vmem>>, vector<16x512xf32>
    tpu.vector_store %arg10[%c0_16, %c128], %19 {strides = array<i32>} : memref<16x768xf32, #tpu.memory_space<vmem>>, vector<16x512xf32>,
    %cst_17 = arith.constant 0.000000e+00 : f32
    %23 = vector.broadcast %cst_17 : f32 to vector<8x512xf32>
    %c0_18 = arith.constant 0 : index
    %c111 = arith.constant 111 : index
    %24 = vector.load %arg10[%c0_18, %c111] : memref<16x768xf32, #tpu.memory_space<vmem>>, vector<16x512xf32>
    %c0_19 = arith.constant 0 : index
    %c0_20 = arith.constant 0 : index
    %c0_21 = arith.constant 0 : index
    %25 = vector.load %arg8[%c0_19, %c0_20, %c0_21] : memref<9x1x512xf32, #tpu.memory_space<vmem>>, vector<1x1x512xf32>
    %26 = vector.shape_cast %25 : vector<1x1x512xf32> to vector<1x512xf32>
    %27 = vector.broadcast %26 : vector<1x512xf32> to vector<16x512xf32>
    %28 = arith.mulf %24, %27 : vector<16x512xf32>
    %c0_22 = arith.constant 0 : index
    %c0_23 = arith.constant 0 : index
    %c0_24 = arith.constant 0 : index
    %29 = vector.load %arg7[%c0_22, %c0_23, %c0_24] : memref<9x8x16xbf16, #tpu.memory_space<vmem>>, vector<1x8x16xbf16>
    %30 = vector.shape_cast %29 : vector<1x8x16xbf16> to vector<8x16xbf16>
    %31 = arith.truncf %28 : vector<16x512xf32> to vector<16x512xbf16>
    %cst_25 = arith.constant dense<0.000000e+00> : vector<8x512xf32>
    %32 = tpu.matmul %30, %31, %cst_25 {dimension_numbers = #tpu.dot_dimension_numbers<[1], [0], [0], [1], [0, 0, 1, 1], [], []>} : vector<8x16xbf16>, vector<16x512xbf16>, vector<8x512xf32> -> vector<8x512xf32>
    %33 = arith.addf %23, %32 : vector<8x512xf32>
    %c0_26 = arith.constant 0 : index
    %c112 = arith.constant 112 : index
    %34 = vector.load %arg10[%c0_26, %c112] : memref<16x768xf32, #tpu.memory_space<vmem>>, vector<16x512xf32>
    %c1 = arith.constant 1 : index
    %c0_27 = arith.constant 0 : index
    %c0_28 = arith.constant 0 : index
    %35 = vector.load %arg8[%c1, %c0_27, %c0_28] : memref<9x1x512xf32, #tpu.memory_space<vmem>>, vector<1x1x512xf32>
    %36 = vector.shape_cast %35 : vector<1x1x512xf32> to vector<1x512xf32>
    %37 = vector.broadcast %36 : vector<1x512xf32> to vector<16x512xf32>
    %38 = arith.mulf %34, %37 : vector<16x512xf32>
    %c1_29 = arith.constant 1 : index
    %c0_30 = arith.constant 0 : index
    %c0_31 = arith.constant 0 : index
    %39 = vector.load %arg7[%c1_29, %c0_30, %c0_31] : memref<9x8x16xbf16, #tpu.memory_space<vmem>>, vector<1x8x16xbf16>
    %40 = vector.shape_cast %39 : vector<1x8x16xbf16> to vector<8x16xbf16>
    %41 = arith.truncf %38 : vector<16x512xf32> to vector<16x512xbf16>
    %cst_32 = arith.constant dense<0.000000e+00> : vector<8x512xf32>
    %42 = tpu.matmul %40, %41, %cst_32 {dimension_numbers = #tpu.dot_dimension_numbers<[1], [0], [0], [1], [0, 0, 1, 1], [], []>} : vector<8x16xbf16>, vector<16x512xbf16>, vector<8x512xf32> -> vector<8x512xf32>
    %43 = arith.addf %33, %42 : vector<8x512xf32>
    %c0_33 = arith.constant 0 : index
    %c113 = arith.constant 113 : index
    %44 = vector.load %arg10[%c0_33, %c113] : memref<16x768xf32, #tpu.memory_space<vmem>>, vector<16x512xf32>
    %c2 = arith.constant 2 : index
    %c0_34 = arith.constant 0 : index
    %c0_35 = arith.constant 0 : index
    %45 = vector.load %arg8[%c2, %c0_34, %c0_35] : memref<9x1x512xf32, #tpu.memory_space<vmem>>, vector<1x1x512xf32>
    %46 = vector.shape_cast %45 : vector<1x1x512xf32> to vector<1x512xf32>
    %47 = vector.broadcast %46 : vector<1x512xf32> to vector<16x512xf32>
    %48 = arith.mulf %44, %47 : vector<16x512xf32>
    %c2_36 = arith.constant 2 : index
    %c0_37 = arith.constant 0 : index
    %c0_38 = arith.constant 0 : index
    %49 = vector.load %arg7[%c2_36, %c0_37, %c0_38] : memref<9x8x16xbf16, #tpu.memory_space<vmem>>, vector<1x8x16xbf16>
    %50 = vector.shape_cast %49 : vector<1x8x16xbf16> to vector<8x16xbf16>
    %51 = arith.truncf %48 : vector<16x512xf32> to vector<16x512xbf16>
    %cst_39 = arith.constant dense<0.000000e+00> : vector<8x512xf32>
    %52 = tpu.matmul %50, %51, %cst_39 {dimension_numbers = #tpu.dot_dimension_numbers<[1], [0], [0], [1], [0, 0, 1, 1], [], []>} : vector<8x16xbf16>, vector<16x512xbf16>, vector<8x512xf32> -> vector<8x512xf32>
    %53 = arith.addf %43, %52 : vector<8x512xf32>
    %c0_40 = arith.constant 0 : index
    %c127 = arith.constant 127 : index
    %54 = vector.load %arg10[%c0_40, %c127] : memref<16x768xf32, #tpu.memory_space<vmem>>, vector<16x512xf32>
    %c3 = arith.constant 3 : index
    %c0_41 = arith.constant 0 : index
    %c0_42 = arith.constant 0 : index
    %55 = vector.load %arg8[%c3, %c0_41, %c0_42] : memref<9x1x512xf32, #tpu.memory_space<vmem>>, vector<1x1x512xf32>
    %56 = vector.shape_cast %55 : vector<1x1x512xf32> to vector<1x512xf32>
    %57 = vector.broadcast %56 : vector<1x512xf32> to vector<16x512xf32>
    %58 = arith.mulf %54, %57 : vector<16x512xf32>
    %c3_43 = arith.constant 3 : index
    %c0_44 = arith.constant 0 : index
    %c0_45 = arith.constant 0 : index
    %59 = vector.load %arg7[%c3_43, %c0_44, %c0_45] : memref<9x8x16xbf16, #tpu.memory_space<vmem>>, vector<1x8x16xbf16>
    %60 = vector.shape_cast %59 : vector<1x8x16xbf16> to vector<8x16xbf16>
    %61 = arith.truncf %58 : vector<16x512xf32> to vector<16x512xbf16>
    %cst_46 = arith.constant dense<0.000000e+00> : vector<8x512xf32>
    %62 = tpu.matmul %60, %61, %cst_46 {dimension_numbers = #tpu.dot_dimension_numbers<[1], [0], [0], [1], [0, 0, 1, 1], [], []>} : vector<8x16xbf16>, vector<16x512xbf16>, vector<8x512xf32> -> vector<8x512xf32>
    %63 = arith.addf %53, %62 : vector<8x512xf32>
    %c0_47 = arith.constant 0 : index
    %c128_48 = arith.constant 128 : index
    %64 = vector.load %arg10[%c0_47, %c128_48] : memref<16x768xf32, #tpu.memory_space<vmem>>, vector<16x512xf32>
    %c4 = arith.constant 4 : index
    %c0_49 = arith.constant 0 : index
    %c0_50 = arith.constant 0 : index
    %65 = vector.load %arg8[%c4, %c0_49, %c0_50] : memref<9x1x512xf32, #tpu.memory_space<vmem>>, vector<1x1x512xf32>
    %66 = vector.shape_cast %65 : vector<1x1x512xf32> to vector<1x512xf32>
    %67 = vector.broadcast %66 : vector<1x512xf32> to vector<16x512xf32>
    %68 = arith.mulf %64, %67 : vector<16x512xf32>
    %c4_51 = arith.constant 4 : index
    %c0_52 = arith.constant 0 : index
    %c0_53 = arith.constant 0 : index
    %69 = vector.load %arg7[%c4_51, %c0_52, %c0_53] : memref<9x8x16xbf16, #tpu.memory_space<vmem>>, vector<1x8x16xbf16>
    %70 = vector.shape_cast %69 : vector<1x8x16xbf16> to vector<8x16xbf16>
    %71 = arith.truncf %68 : vector<16x512xf32> to vector<16x512xbf16>
    %cst_54 = arith.constant dense<0.000000e+00> : vector<8x512xf32>
    %72 = tpu.matmul %70, %71, %cst_54 {dimension_numbers = #tpu.dot_dimension_numbers<[1], [0], [0], [1], [0, 0, 1, 1], [], []>} : vector<8x16xbf16>, vector<16x512xbf16>, vector<8x512xf32> -> vector<8x512xf32>
    %73 = arith.addf %63, %72 : vector<8x512xf32>
    %c0_55 = arith.constant 0 : index
    %c129 = arith.constant 129 : index
    %74 = vector.load %arg10[%c0_55, %c129] : memref<16x768xf32, #tpu.memory_space<vmem>>, vector<16x512xf32>
    %c5 = arith.constant 5 : index
    %c0_56 = arith.constant 0 : index
    %c0_57 = arith.constant 0 : index
    %75 = vector.load %arg8[%c5, %c0_56, %c0_57] : memref<9x1x512xf32, #tpu.memory_space<vmem>>, vector<1x1x512xf32>
    %76 = vector.shape_cast %75 : vector<1x1x512xf32> to vector<1x512xf32>
    %77 = vector.broadcast %76 : vector<1x512xf32> to vector<16x512xf32>
    %78 = arith.mulf %74, %77 : vector<16x512xf32>
    %c5_58 = arith.constant 5 : index
    %c0_59 = arith.constant 0 : index
    %c0_60 = arith.constant 0 : index
    %79 = vector.load %arg7[%c5_58, %c0_59, %c0_60] : memref<9x8x16xbf16, #tpu.memory_space<vmem>>, vector<1x8x16xbf16>
    %80 = vector.shape_cast %79 : vector<1x8x16xbf16> to vector<8x16xbf16>
    %81 = arith.truncf %78 : vector<16x512xf32> to vector<16x512xbf16>
    %cst_61 = arith.constant dense<0.000000e+00> : vector<8x512xf32>
    %82 = tpu.matmul %80, %81, %cst_61 {dimension_numbers = #tpu.dot_dimension_numbers<[1], [0], [0], [1], [0, 0, 1, 1], [], []>} : vector<8x16xbf16>, vector<16x512xbf16>, vector<8x512xf32> -> vector<8x512xf32>
    %83 = arith.addf %73, %82 : vector<8x512xf32>
    %c0_62 = arith.constant 0 : index
    %c143 = arith.constant 143 : index
    %84 = vector.load %arg10[%c0_62, %c143] : memref<16x768xf32, #tpu.memory_space<vmem>>, vector<16x512xf32>
    %c6 = arith.constant 6 : index
    %c0_63 = arith.constant 0 : index
    %c0_64 = arith.constant 0 : index
    %85 = vector.load %arg8[%c6, %c0_63, %c0_64] : memref<9x1x512xf32, #tpu.memory_space<vmem>>, vector<1x1x512xf32>
    %86 = vector.shape_cast %85 : vector<1x1x512xf32> to vector<1x512xf32>
    %87 = vector.broadcast %86 : vector<1x512xf32> to vector<16x512xf32>
    %88 = arith.mulf %84, %87 : vector<16x512xf32>
    %c6_65 = arith.constant 6 : index
    %c0_66 = arith.constant 0 : index
    %c0_67 = arith.constant 0 : index
    %89 = vector.load %arg7[%c6_65, %c0_66, %c0_67] : memref<9x8x16xbf16, #tpu.memory_space<vmem>>, vector<1x8x16xbf16>
    %90 = vector.shape_cast %89 : vector<1x8x16xbf16> to vector<8x16xbf16>
    %91 = arith.truncf %88 : vector<16x512xf32> to vector<16x512xbf16>
    %cst_68 = arith.constant dense<0.000000e+00> : vector<8x512xf32>
    %92 = tpu.matmul %90, %91, %cst_68 {dimension_numbers = #tpu.dot_dimension_numbers<[1], [0], [0], [1], [0, 0, 1, 1], [], []>} : vector<8x16xbf16>, vector<16x512xbf16>, vector<8x512xf32> -> vector<8x512xf32>
    %93 = arith.addf %83, %92 : vector<8x512xf32>
    %c0_69 = arith.constant 0 : index
    %c144 = arith.constant 144 : index
    %94 = vector.load %arg10[%c0_69, %c144] : memref<16x768xf32, #tpu.memory_space<vmem>>, vector<16x512xf32>
    %c7 = arith.constant 7 : index
    %c0_70 = arith.constant 0 : index
    %c0_71 = arith.constant 0 : index
    %95 = vector.load %arg8[%c7, %c0_70, %c0_71] : memref<9x1x512xf32, #tpu.memory_space<vmem>>, vector<1x1x512xf32>
    %96 = vector.shape_cast %95 : vector<1x1x512xf32> to vector<1x512xf32>
    %97 = vector.broadcast %96 : vector<1x512xf32> to vector<16x512xf32>
    %98 = arith.mulf %94, %97 : vector<16x512xf32>
    %c7_72 = arith.constant 7 : index
    %c0_73 = arith.constant 0 : index
    %c0_74 = arith.constant 0 : index
    %99 = vector.load %arg7[%c7_72, %c0_73, %c0_74] : memref<9x8x16xbf16, #tpu.memory_space<vmem>>, vector<1x8x16xbf16>
    %100 = vector.shape_cast %99 : vector<1x8x16xbf16> to vector<8x16xbf16>
    %101 = arith.truncf %98 : vector<16x512xf32> to vector<16x512xbf16>
    %cst_75 = arith.constant dense<0.000000e+00> : vector<8x512xf32>
    %102 = tpu.matmul %100, %101, %cst_75 {dimension_numbers = #tpu.dot_dimension_numbers<[1], [0], [0], [1], [0, 0, 1, 1], [], []>} : vector<8x16xbf16>, vector<16x512xbf16>, vector<8x512xf32> -> vector<8x512xf32>
    %103 = arith.addf %93, %102 : vector<8x512xf32>
    %c0_76 = arith.constant 0 : index
    %c145 = arith.constant 145 : index
    %104 = vector.load %arg10[%c0_76, %c145] : memref<16x768xf32, #tpu.memory_space<vmem>>, vector<16x512xf32>
    %c8 = arith.constant 8 : index
    %c0_77 = arith.constant 0 : index
    %c0_78 = arith.constant 0 : index
    %105 = vector.load %arg8[%c8, %c0_77, %c0_78] : memref<9x1x512xf32, #tpu.memory_space<vmem>>, vector<1x1x512xf32>
    %106 = vector.shape_cast %105 : vector<1x1x512xf32> to vector<1x512xf32>
    %107 = vector.broadcast %106 : vector<1x512xf32> to vector<16x512xf32>
    %108 = arith.mulf %104, %107 : vector<16x512xf32>
    %c8_79 = arith.constant 8 : index
    %c0_80 = arith.constant 0 : index
    %c0_81 = arith.constant 0 : index
    %109 = vector.load %arg7[%c8_79, %c0_80, %c0_81] : memref<9x8x16xbf16, #tpu.memory_space<vmem>>, vector<1x8x16xbf16>
    %110 = vector.shape_cast %109 : vector<1x8x16xbf16> to vector<8x16xbf16>
    %111 = arith.truncf %108 : vector<16x512xf32> to vector<16x512xbf16>
    %cst_82 = arith.constant dense<0.000000e+00> : vector<8x512xf32>
    %112 = tpu.matmul %110, %111, %cst_82 {dimension_numbers = #tpu.dot_dimension_numbers<[1], [0], [0], [1], [0, 0, 1, 1], [], []>} : vector<8x16xbf16>, vector<16x512xbf16>, vector<8x512xf32> -> vector<8x512xf32>
    %113 = arith.addf %103, %112 : vector<8x512xf32>
    %c0_83 = arith.constant 0 : index
    %c0_84 = arith.constant 0 : index
    %114 = vector.load %arg9[%c0_83, %c0_84] : memref<8x512xf32, #tpu.memory_space<vmem>>, vector<8x512xf32>
    tpu.vector_store %arg9[%c0_83, %c0_84], %113 {strides = array<i32>} : memref<8x512xf32, #tpu.memory_space<vmem>>, vector<8x512xf32>,
    return
  }
  func.func @transform_0(%arg0: i32) -> (i32, i32) {
    %c0_i32 = arith.constant 0 : i32
    %c0_i32_0 = arith.constant 0 : i32
    %c0_i32_1 = arith.constant 0 : i32
    return %c0_i32, %c0_i32_0 : i32, i32
  }
  func.func @transform_1(%arg0: i32) -> (i32, i32) {
    %c0_i32 = arith.constant 0 : i32
    %c0_i32_0 = arith.constant 0 : i32
    %c0_i32_1 = arith.constant 0 : i32
    return %c0_i32, %c0_i32_0 : i32, i32
  }
  func.func @transform_2(%arg0: i32) -> (i32, i32) {
    %c0_i32 = arith.constant 0 : i32
    %c0_i32_0 = arith.constant 0 : i32
    %c0_i32_1 = arith.constant 0 : i32
    return %c0_i32, %c0_i32_0 : i32, i32
  }
  func.func @transform_3(%arg0: i32) -> (i32, i32) {
    %c0_i32 = arith.constant 0 : i32
    %c0_i32_0 = arith.constant 0 : i32
    %c0_i32_1 = arith.constant 0 : i32
    return %c0_i32, %c0_i32_0 : i32, i32
  }
  func.func @transform_4(%arg0: i32) -> (i32, i32) {
    %c0_i32 = arith.constant 0 : i32
    %c0_i32_0 = arith.constant 0 : i32
    %c0_i32_1 = arith.constant 0 : i32
    return %c0_i32, %c0_i32_0 : i32, i32
  }
  func.func @transform_5(%arg0: i32) -> (i32, i32) {
    %c0_i32 = arith.constant 0 : i32
    %c0_i32_0 = arith.constant 0 : i32
    %c0_i32_1 = arith.constant 0 : i32
    return %c0_i32, %c0_i32_0 : i32, i32
  }
  func.func @transform_6(%arg0: i32) -> (i32, i32, i32) {
    %c0_i32 = arith.constant 0 : i32
    %c0_i32_0 = arith.constant 0 : i32
    %c0_i32_1 = arith.constant 0 : i32
    %c0_i32_2 = arith.constant 0 : i32
    return %c0_i32, %c0_i32_0, %c0_i32_1 : i32, i32, i32
  }
  func.func @transform_7(%arg0: i32) -> (i32, i32, i32) {
    %c0_i32 = arith.constant 0 : i32
    %c0_i32_0 = arith.constant 0 : i32
    %c0_i32_1 = arith.constant 0 : i32
    %c0_i32_2 = arith.constant 0 : i32
    return %c0_i32, %c0_i32_0, %c0_i32_1 : i32, i32, i32
  }
  func.func @transform_8(%arg0: i32) -> (i32, i32) {
    %c2_i32 = arith.constant 2 : i32
    %c0_i32 = arith.constant 0 : i32
    %c0_i32_0 = arith.constant 0 : i32
    return %c2_i32, %c0_i32 : i32, i32
  }
}

module attributes {stable_mosaic.version = 11 : i64} {
  func.func @kernel(%arg0: i32, %arg1: memref<24x512xf32, #tpu.memory_space<vmem>>, %arg2: memref<24x1xf32, #tpu.memory_space<vmem>>, %arg3: memref<24x1xf32, #tpu.memory_space<vmem>>, %arg4: memref<16x24xbf16, #tpu.memory_space<vmem>>, %arg5: memref<16x1xf32, #tpu.memory_space<vmem>>, %arg6: memref<16x1xf32, #tpu.memory_space<vmem>>, %arg7: memref<9x8x16xbf16, #tpu.memory_space<vmem>>, %arg8: memref<9x1x512xf32, #tpu.memory_space<vmem>>, %arg9: memref<8x512xf32, #tpu.memory_space<vmem>>, %arg10: memref<16x768xf32, #tpu.memory_space<vmem>>) attributes {dimension_semantics = [#tpu.dimension_semantics<arbitrary>], iteration_bounds = array<i64: 1>, scalar_prefetch = 0 : i64, scratch_operands = 1 : i64, tpu.core_type = #tpu.core_type<tc>, window_params = [{transform_indices = @transform_0, window_bounds = array<i64: 24, 512>}, {pipeline_mode = #tpu.pipeline_mode<synchronous>, transform_indices = @transform_1, window_bounds = array<i64: 24, 1>}, {pipeline_mode = #tpu.pipeline_mode<synchronous>, transform_indices = @transform_2, window_bounds = array<i64: 24, 1>}, {pipeline_mode = #tpu.pipeline_mode<synchronous>, transform_indices = @transform_3, window_bounds = array<i64: 16, 24>}, {pipeline_mode = #tpu.pipeline_mode<synchronous>, transform_indices = @transform_4, window_bounds = array<i64: 16, 1>}, {pipeline_mode = #tpu.pipeline_mode<synchronous>, transform_indices = @transform_5, window_bounds = array<i64: 16, 1>}, {pipeline_mode = #tpu.pipeline_mode<synchronous>, transform_indices = @transform_6, window_bounds = array<i64: 9, 8, 16>}, {pipeline_mode = #tpu.pipeline_mode<synchronous>, transform_indices = @transform_7, window_bounds = array<i64: 9, 1, 512>}, {transform_indices = @transform_8, window_bounds = array<i64: 8, 512>}]} {
    %c0 = arith.constant 0 : index
    %c0_0 = arith.constant 0 : index
    %0 = vector.load %arg1[%c0, %c0_0] : memref<24x512xf32, #tpu.memory_space<vmem>>, vector<24x512xf32>
    %c0_1 = arith.constant 0 : index
    %c0_2 = arith.constant 0 : index
    %1 = vector.load %arg2[%c0_1, %c0_2] : memref<24x1xf32, #tpu.memory_space<vmem>>, vector<24x1xf32>
    %2 = vector.broadcast %1 : vector<24x1xf32> to vector<24x512xf32>
    %3 = arith.mulf %0, %2 : vector<24x512xf32>
    %c0_3 = arith.constant 0 : index
    %c0_4 = arith.constant 0 : index
    %4 = vector.load %arg3[%c0_3, %c0_4] : memref<24x1xf32, #tpu.memory_space<vmem>>, vector<24x1xf32>
    %5 = vector.broadcast %4 : vector<24x1xf32> to vector<24x512xf32>
    %6 = arith.addf %3, %5 : vector<24x512xf32>
    %cst = arith.constant 0.000000e+00 : f32
    %7 = vector.broadcast %cst : f32 to vector<24x512xf32>
    %8 = arith.maximumf %6, %7 : vector<24x512xf32>
    %c0_5 = arith.constant 0 : index
    %c0_6 = arith.constant 0 : index
    %9 = vector.load %arg4[%c0_5, %c0_6] : memref<16x24xbf16, #tpu.memory_space<vmem>>, vector<16x24xbf16>
    %10 = arith.truncf %8 : vector<24x512xf32> to vector<24x512xbf16>
    %cst_7 = arith.constant dense<0.000000e+00> : vector<16x512xf32>
    %11 = tpu.matmul %9, %10, %cst_7 {dimension_numbers = #tpu.dot_dimension_numbers<[1], [0], [0], [1], [0, 0, 1, 1], [], []>} : vector<16x24xbf16>, vector<24x512xbf16>, vector<16x512xf32> -> vector<16x512xf32>
    %c0_8 = arith.constant 0 : index
    %c0_9 = arith.constant 0 : index
    %12 = vector.load %arg5[%c0_8, %c0_9] : memref<16x1xf32, #tpu.memory_space<vmem>>, vector<16x1xf32>
    %13 = vector.broadcast %12 : vector<16x1xf32> to vector<16x512xf32>
    %14 = arith.mulf %11, %13 : vector<16x512xf32>
    %c0_10 = arith.constant 0 : index
    %c0_11 = arith.constant 0 : index
    %15 = vector.load %arg6[%c0_10, %c0_11] : memref<16x1xf32, #tpu.memory_space<vmem>>, vector<16x1xf32>
    %16 = vector.broadcast %15 : vector<16x1xf32> to vector<16x512xf32>
    %17 = arith.addf %14, %16 : vector<16x512xf32>
    %cst_12 = arith.constant 0.000000e+00 : f32
    %18 = vector.broadcast %cst_12 : f32 to vector<16x512xf32>
    %19 = arith.maximumf %17, %18 : vector<16x512xf32>
    %cst_13 = arith.constant 0.000000e+00 : f32
    %20 = vector.broadcast %cst_13 : f32 to vector<16x768xf32>
    %c0_14 = arith.constant 0 : index
    %c0_15 = arith.constant 0 : index
    %21 = vector.load %arg10[%c0_14, %c0_15] : memref<16x768xf32, #tpu.memory_space<vmem>>, vector<16x768xf32>
    tpu.vector_store %arg10[%c0_14, %c0_15], %20 {strides = array<i32>} : memref<16x768xf32, #tpu.memory_space<vmem>>, vector<16x768xf32>,
    %c0_16 = arith.constant 0 : index
    %c128 = arith.constant 128 : index
    %22 = vector.load %arg10[%c0_16, %c128] : memref<16x768xf32, #tpu.memory_space<vmem>>, vector<16x512xf32>
    tpu.vector_store %arg10[%c0_16, %c128], %19 {strides = array<i32>} : memref<16x768xf32, #tpu.memory_space<vmem>>, vector<16x512xf32>,
    %cst_17 = arith.constant 0.000000e+00 : f32
    %23 = vector.broadcast %cst_17 : f32 to vector<8x512xf32>
    %c0_18 = arith.constant 0 : index
    %c111 = arith.constant 111 : index
    %24 = vector.load %arg10[%c0_18, %c111] : memref<16x768xf32, #tpu.memory_space<vmem>>, vector<16x512xf32>
    %c0_19 = arith.constant 0 : index
    %c0_20 = arith.constant 0 : index
    %c0_21 = arith.constant 0 : index
    %25 = vector.load %arg8[%c0_19, %c0_20, %c0_21] : memref<9x1x512xf32, #tpu.memory_space<vmem>>, vector<1x1x512xf32>
    %26 = vector.shape_cast %25 : vector<1x1x512xf32> to vector<1x512xf32>
    %27 = vector.broadcast %26 : vector<1x512xf32> to vector<16x512xf32>
    %28 = arith.mulf %24, %27 : vector<16x512xf32>
    %c0_22 = arith.constant 0 : index
    %c0_23 = arith.constant 0 : index
    %c0_24 = arith.constant 0 : index
    %29 = vector.load %arg7[%c0_22, %c0_23, %c0_24] : memref<9x8x16xbf16, #tpu.memory_space<vmem>>, vector<1x8x16xbf16>
    %30 = vector.shape_cast %29 : vector<1x8x16xbf16> to vector<8x16xbf16>
    %31 = arith.truncf %28 : vector<16x512xf32> to vector<16x512xbf16>
    %cst_25 = arith.constant dense<0.000000e+00> : vector<8x512xf32>
    %32 = tpu.matmul %30, %31, %cst_25 {dimension_numbers = #tpu.dot_dimension_numbers<[1], [0], [0], [1], [0, 0, 1, 1], [], []>} : vector<8x16xbf16>, vector<16x512xbf16>, vector<8x512xf32> -> vector<8x512xf32>
    %33 = arith.addf %23, %32 : vector<8x512xf32>
    %c0_26 = arith.constant 0 : index
    %c112 = arith.constant 112 : index
    %34 = vector.load %arg10[%c0_26, %c112] : memref<16x768xf32, #tpu.memory_space<vmem>>, vector<16x512xf32>
    %c1 = arith.constant 1 : index
    %c0_27 = arith.constant 0 : index
    %c0_28 = arith.constant 0 : index
    %35 = vector.load %arg8[%c1, %c0_27, %c0_28] : memref<9x1x512xf32, #tpu.memory_space<vmem>>, vector<1x1x512xf32>
    %36 = vector.shape_cast %35 : vector<1x1x512xf32> to vector<1x512xf32>
    %37 = vector.broadcast %36 : vector<1x512xf32> to vector<16x512xf32>
    %38 = arith.mulf %34, %37 : vector<16x512xf32>
    %c1_29 = arith.constant 1 : index
    %c0_30 = arith.constant 0 : index
    %c0_31 = arith.constant 0 : index
    %39 = vector.load %arg7[%c1_29, %c0_30, %c0_31] : memref<9x8x16xbf16, #tpu.memory_space<vmem>>, vector<1x8x16xbf16>
    %40 = vector.shape_cast %39 : vector<1x8x16xbf16> to vector<8x16xbf16>
    %41 = arith.truncf %38 : vector<16x512xf32> to vector<16x512xbf16>
    %cst_32 = arith.constant dense<0.000000e+00> : vector<8x512xf32>
    %42 = tpu.matmul %40, %41, %cst_32 {dimension_numbers = #tpu.dot_dimension_numbers<[1], [0], [0], [1], [0, 0, 1, 1], [], []>} : vector<8x16xbf16>, vector<16x512xbf16>, vector<8x512xf32> -> vector<8x512xf32>
    %43 = arith.addf %33, %42 : vector<8x512xf32>
    %c0_33 = arith.constant 0 : index
    %c113 = arith.constant 113 : index
    %44 = vector.load %arg10[%c0_33, %c113] : memref<16x768xf32, #tpu.memory_space<vmem>>, vector<16x512xf32>
    %c2 = arith.constant 2 : index
    %c0_34 = arith.constant 0 : index
    %c0_35 = arith.constant 0 : index
    %45 = vector.load %arg8[%c2, %c0_34, %c0_35] : memref<9x1x512xf32, #tpu.memory_space<vmem>>, vector<1x1x512xf32>
    %46 = vector.shape_cast %45 : vector<1x1x512xf32> to vector<1x512xf32>
    %47 = vector.broadcast %46 : vector<1x512xf32> to vector<16x512xf32>
    %48 = arith.mulf %44, %47 : vector<16x512xf32>
    %c2_36 = arith.constant 2 : index
    %c0_37 = arith.constant 0 : index
    %c0_38 = arith.constant 0 : index
    %49 = vector.load %arg7[%c2_36, %c0_37, %c0_38] : memref<9x8x16xbf16, #tpu.memory_space<vmem>>, vector<1x8x16xbf16>
    %50 = vector.shape_cast %49 : vector<1x8x16xbf16> to vector<8x16xbf16>
    %51 = arith.truncf %48 : vector<16x512xf32> to vector<16x512xbf16>
    %cst_39 = arith.constant dense<0.000000e+00> : vector<8x512xf32>
    %52 = tpu.matmul %50, %51, %cst_39 {dimension_numbers = #tpu.dot_dimension_numbers<[1], [0], [0], [1], [0, 0, 1, 1], [], []>} : vector<8x16xbf16>, vector<16x512xbf16>, vector<8x512xf32> -> vector<8x512xf32>
    %53 = arith.addf %43, %52 : vector<8x512xf32>
    %c0_40 = arith.constant 0 : index
    %c127 = arith.constant 127 : index
    %54 = vector.load %arg10[%c0_40, %c127] : memref<16x768xf32, #tpu.memory_space<vmem>>, vector<16x512xf32>
    %c3 = arith.constant 3 : index
    %c0_41 = arith.constant 0 : index
    %c0_42 = arith.constant 0 : index
    %55 = vector.load %arg8[%c3, %c0_41, %c0_42] : memref<9x1x512xf32, #tpu.memory_space<vmem>>, vector<1x1x512xf32>
    %56 = vector.shape_cast %55 : vector<1x1x512xf32> to vector<1x512xf32>
    %57 = vector.broadcast %56 : vector<1x512xf32> to vector<16x512xf32>
    %58 = arith.mulf %54, %57 : vector<16x512xf32>
    %c3_43 = arith.constant 3 : index
    %c0_44 = arith.constant 0 : index
    %c0_45 = arith.constant 0 : index
    %59 = vector.load %arg7[%c3_43, %c0_44, %c0_45] : memref<9x8x16xbf16, #tpu.memory_space<vmem>>, vector<1x8x16xbf16>
    %60 = vector.shape_cast %59 : vector<1x8x16xbf16> to vector<8x16xbf16>
    %61 = arith.truncf %58 : vector<16x512xf32> to vector<16x512xbf16>
    %cst_46 = arith.constant dense<0.000000e+00> : vector<8x512xf32>
    %62 = tpu.matmul %60, %61, %cst_46 {dimension_numbers = #tpu.dot_dimension_numbers<[1], [0], [0], [1], [0, 0, 1, 1], [], []>} : vector<8x16xbf16>, vector<16x512xbf16>, vector<8x512xf32> -> vector<8x512xf32>
    %63 = arith.addf %53, %62 : vector<8x512xf32>
    %c0_47 = arith.constant 0 : index
    %c128_48 = arith.constant 128 : index
    %64 = vector.load %arg10[%c0_47, %c128_48] : memref<16x768xf32, #tpu.memory_space<vmem>>, vector<16x512xf32>
    %c4 = arith.constant 4 : index
    %c0_49 = arith.constant 0 : index
    %c0_50 = arith.constant 0 : index
    %65 = vector.load %arg8[%c4, %c0_49, %c0_50] : memref<9x1x512xf32, #tpu.memory_space<vmem>>, vector<1x1x512xf32>
    %66 = vector.shape_cast %65 : vector<1x1x512xf32> to vector<1x512xf32>
    %67 = vector.broadcast %66 : vector<1x512xf32> to vector<16x512xf32>
    %68 = arith.mulf %64, %67 : vector<16x512xf32>
    %c4_51 = arith.constant 4 : index
    %c0_52 = arith.constant 0 : index
    %c0_53 = arith.constant 0 : index
    %69 = vector.load %arg7[%c4_51, %c0_52, %c0_53] : memref<9x8x16xbf16, #tpu.memory_space<vmem>>, vector<1x8x16xbf16>
    %70 = vector.shape_cast %69 : vector<1x8x16xbf16> to vector<8x16xbf16>
    %71 = arith.truncf %68 : vector<16x512xf32> to vector<16x512xbf16>
    %cst_54 = arith.constant dense<0.000000e+00> : vector<8x512xf32>
    %72 = tpu.matmul %70, %71, %cst_54 {dimension_numbers = #tpu.dot_dimension_numbers<[1], [0], [0], [1], [0, 0, 1, 1], [], []>} : vector<8x16xbf16>, vector<16x512xbf16>, vector<8x512xf32> -> vector<8x512xf32>
    %73 = arith.addf %63, %72 : vector<8x512xf32>
    %c0_55 = arith.constant 0 : index
    %c129 = arith.constant 129 : index
    %74 = vector.load %arg10[%c0_55, %c129] : memref<16x768xf32, #tpu.memory_space<vmem>>, vector<16x512xf32>
    %c5 = arith.constant 5 : index
    %c0_56 = arith.constant 0 : index
    %c0_57 = arith.constant 0 : index
    %75 = vector.load %arg8[%c5, %c0_56, %c0_57] : memref<9x1x512xf32, #tpu.memory_space<vmem>>, vector<1x1x512xf32>
    %76 = vector.shape_cast %75 : vector<1x1x512xf32> to vector<1x512xf32>
    %77 = vector.broadcast %76 : vector<1x512xf32> to vector<16x512xf32>
    %78 = arith.mulf %74, %77 : vector<16x512xf32>
    %c5_58 = arith.constant 5 : index
    %c0_59 = arith.constant 0 : index
    %c0_60 = arith.constant 0 : index
    %79 = vector.load %arg7[%c5_58, %c0_59, %c0_60] : memref<9x8x16xbf16, #tpu.memory_space<vmem>>, vector<1x8x16xbf16>
    %80 = vector.shape_cast %79 : vector<1x8x16xbf16> to vector<8x16xbf16>
    %81 = arith.truncf %78 : vector<16x512xf32> to vector<16x512xbf16>
    %cst_61 = arith.constant dense<0.000000e+00> : vector<8x512xf32>
    %82 = tpu.matmul %80, %81, %cst_61 {dimension_numbers = #tpu.dot_dimension_numbers<[1], [0], [0], [1], [0, 0, 1, 1], [], []>} : vector<8x16xbf16>, vector<16x512xbf16>, vector<8x512xf32> -> vector<8x512xf32>
    %83 = arith.addf %73, %82 : vector<8x512xf32>
    %c0_62 = arith.constant 0 : index
    %c143 = arith.constant 143 : index
    %84 = vector.load %arg10[%c0_62, %c143] : memref<16x768xf32, #tpu.memory_space<vmem>>, vector<16x512xf32>
    %c6 = arith.constant 6 : index
    %c0_63 = arith.constant 0 : index
    %c0_64 = arith.constant 0 : index
    %85 = vector.load %arg8[%c6, %c0_63, %c0_64] : memref<9x1x512xf32, #tpu.memory_space<vmem>>, vector<1x1x512xf32>
    %86 = vector.shape_cast %85 : vector<1x1x512xf32> to vector<1x512xf32>
    %87 = vector.broadcast %86 : vector<1x512xf32> to vector<16x512xf32>
    %88 = arith.mulf %84, %87 : vector<16x512xf32>
    %c6_65 = arith.constant 6 : index
    %c0_66 = arith.constant 0 : index
    %c0_67 = arith.constant 0 : index
    %89 = vector.load %arg7[%c6_65, %c0_66, %c0_67] : memref<9x8x16xbf16, #tpu.memory_space<vmem>>, vector<1x8x16xbf16>
    %90 = vector.shape_cast %89 : vector<1x8x16xbf16> to vector<8x16xbf16>
    %91 = arith.truncf %88 : vector<16x512xf32> to vector<16x512xbf16>
    %cst_68 = arith.constant dense<0.000000e+00> : vector<8x512xf32>
    %92 = tpu.matmul %90, %91, %cst_68 {dimension_numbers = #tpu.dot_dimension_numbers<[1], [0], [0], [1], [0, 0, 1, 1], [], []>} : vector<8x16xbf16>, vector<16x512xbf16>, vector<8x512xf32> -> vector<8x512xf32>
    %93 = arith.addf %83, %92 : vector<8x512xf32>
    %c0_69 = arith.constant 0 : index
    %c144 = arith.constant 144 : index
    %94 = vector.load %arg10[%c0_69, %c144] : memref<16x768xf32, #tpu.memory_space<vmem>>, vector<16x512xf32>
    %c7 = arith.constant 7 : index
    %c0_70 = arith.constant 0 : index
    %c0_71 = arith.constant 0 : index
    %95 = vector.load %arg8[%c7, %c0_70, %c0_71] : memref<9x1x512xf32, #tpu.memory_space<vmem>>, vector<1x1x512xf32>
    %96 = vector.shape_cast %95 : vector<1x1x512xf32> to vector<1x512xf32>
    %97 = vector.broadcast %96 : vector<1x512xf32> to vector<16x512xf32>
    %98 = arith.mulf %94, %97 : vector<16x512xf32>
    %c7_72 = arith.constant 7 : index
    %c0_73 = arith.constant 0 : index
    %c0_74 = arith.constant 0 : index
    %99 = vector.load %arg7[%c7_72, %c0_73, %c0_74] : memref<9x8x16xbf16, #tpu.memory_space<vmem>>, vector<1x8x16xbf16>
    %100 = vector.shape_cast %99 : vector<1x8x16xbf16> to vector<8x16xbf16>
    %101 = arith.truncf %98 : vector<16x512xf32> to vector<16x512xbf16>
    %cst_75 = arith.constant dense<0.000000e+00> : vector<8x512xf32>
    %102 = tpu.matmul %100, %101, %cst_75 {dimension_numbers = #tpu.dot_dimension_numbers<[1], [0], [0], [1], [0, 0, 1, 1], [], []>} : vector<8x16xbf16>, vector<16x512xbf16>, vector<8x512xf32> -> vector<8x512xf32>
    %103 = arith.addf %93, %102 : vector<8x512xf32>
    %c0_76 = arith.constant 0 : index
    %c145 = arith.constant 145 : index
    %104 = vector.load %arg10[%c0_76, %c145] : memref<16x768xf32, #tpu.memory_space<vmem>>, vector<16x512xf32>
    %c8 = arith.constant 8 : index
    %c0_77 = arith.constant 0 : index
    %c0_78 = arith.constant 0 : index
    %105 = vector.load %arg8[%c8, %c0_77, %c0_78] : memref<9x1x512xf32, #tpu.memory_space<vmem>>, vector<1x1x512xf32>
    %106 = vector.shape_cast %105 : vector<1x1x512xf32> to vector<1x512xf32>
    %107 = vector.broadcast %106 : vector<1x512xf32> to vector<16x512xf32>
    %108 = arith.mulf %104, %107 : vector<16x512xf32>
    %c8_79 = arith.constant 8 : index
    %c0_80 = arith.constant 0 : index
    %c0_81 = arith.constant 0 : index
    %109 = vector.load %arg7[%c8_79, %c0_80, %c0_81] : memref<9x8x16xbf16, #tpu.memory_space<vmem>>, vector<1x8x16xbf16>
    %110 = vector.shape_cast %109 : vector<1x8x16xbf16> to vector<8x16xbf16>
    %111 = arith.truncf %108 : vector<16x512xf32> to vector<16x512xbf16>
    %cst_82 = arith.constant dense<0.000000e+00> : vector<8x512xf32>
    %112 = tpu.matmul %110, %111, %cst_82 {dimension_numbers = #tpu.dot_dimension_numbers<[1], [0], [0], [1], [0, 0, 1, 1], [], []>} : vector<8x16xbf16>, vector<16x512xbf16>, vector<8x512xf32> -> vector<8x512xf32>
    %113 = arith.addf %103, %112 : vector<8x512xf32>
    %c0_83 = arith.constant 0 : index
    %c0_84 = arith.constant 0 : index
    %114 = vector.load %arg9[%c0_83, %c0_84] : memref<8x512xf32, #tpu.memory_space<vmem>>, vector<8x512xf32>
    tpu.vector_store %arg9[%c0_83, %c0_84], %113 {strides = array<i32>} : memref<8x512xf32, #tpu.memory_space<vmem>>, vector<8x512xf32>,
    return
  }
  func.func @transform_0(%arg0: i32) -> (i32, i32) {
    %c0_i32 = arith.constant 0 : i32
    %c0_i32_0 = arith.constant 0 : i32
    %c0_i32_1 = arith.constant 0 : i32
    return %c0_i32, %c0_i32_0 : i32, i32
  }
  func.func @transform_1(%arg0: i32) -> (i32, i32) {
    %c0_i32 = arith.constant 0 : i32
    %c0_i32_0 = arith.constant 0 : i32
    %c0_i32_1 = arith.constant 0 : i32
    return %c0_i32, %c0_i32_0 : i32, i32
  }
  func.func @transform_2(%arg0: i32) -> (i32, i32) {
    %c0_i32 = arith.constant 0 : i32
    %c0_i32_0 = arith.constant 0 : i32
    %c0_i32_1 = arith.constant 0 : i32
    return %c0_i32, %c0_i32_0 : i32, i32
  }
  func.func @transform_3(%arg0: i32) -> (i32, i32) {
    %c0_i32 = arith.constant 0 : i32
    %c0_i32_0 = arith.constant 0 : i32
    %c0_i32_1 = arith.constant 0 : i32
    return %c0_i32, %c0_i32_0 : i32, i32
  }
  func.func @transform_4(%arg0: i32) -> (i32, i32) {
    %c0_i32 = arith.constant 0 : i32
    %c0_i32_0 = arith.constant 0 : i32
    %c0_i32_1 = arith.constant 0 : i32
    return %c0_i32, %c0_i32_0 : i32, i32
  }
  func.func @transform_5(%arg0: i32) -> (i32, i32) {
    %c0_i32 = arith.constant 0 : i32
    %c0_i32_0 = arith.constant 0 : i32
    %c0_i32_1 = arith.constant 0 : i32
    return %c0_i32, %c0_i32_0 : i32, i32
  }
  func.func @transform_6(%arg0: i32) -> (i32, i32, i32) {
    %c0_i32 = arith.constant 0 : i32
    %c0_i32_0 = arith.constant 0 : i32
    %c0_i32_1 = arith.constant 0 : i32
    %c0_i32_2 = arith.constant 0 : i32
    return %c0_i32, %c0_i32_0, %c0_i32_1 : i32, i32, i32
  }
  func.func @transform_7(%arg0: i32) -> (i32, i32, i32) {
    %c0_i32 = arith.constant 0 : i32
    %c0_i32_0 = arith.constant 0 : i32
    %c0_i32_1 = arith.constant 0 : i32
    %c0_i32_2 = arith.constant 0 : i32
    return %c0_i32, %c0_i32_0, %c0_i32_1 : i32, i32, i32
  }
  func.func @transform_8(%arg0: i32) -> (i32, i32) {
    %c3_i32 = arith.constant 3 : i32
    %c0_i32 = arith.constant 0 : i32
    %c0_i32_0 = arith.constant 0 : i32
    return %c3_i32, %c0_i32 : i32, i32
  }
}

module attributes {stable_mosaic.version = 11 : i64} {
  func.func @_bnrelu_matmul_kernel(%arg0: i32, %arg1: memref<32x256xf32, #tpu.memory_space<vmem>>, %arg2: memref<32x1xf32, #tpu.memory_space<vmem>>, %arg3: memref<32x1xf32, #tpu.memory_space<vmem>>, %arg4: memref<16x32xbf16, #tpu.memory_space<vmem>>, %arg5: memref<16x256xf32, #tpu.memory_space<vmem>>) attributes {dimension_semantics = [#tpu.dimension_semantics<parallel>], iteration_bounds = array<i64: 2>, scalar_prefetch = 0 : i64, scratch_operands = 0 : i64, tpu.core_type = #tpu.core_type<tc>, window_params = [{transform_indices = @transform_0, window_bounds = array<i64: 32, 256>}, {pipeline_mode = #tpu.pipeline_mode<synchronous>, transform_indices = @transform_1, window_bounds = array<i64: 32, 1>}, {pipeline_mode = #tpu.pipeline_mode<synchronous>, transform_indices = @transform_2, window_bounds = array<i64: 32, 1>}, {pipeline_mode = #tpu.pipeline_mode<synchronous>, transform_indices = @transform_3, window_bounds = array<i64: 16, 32>}, {transform_indices = @transform_4, window_bounds = array<i64: 16, 256>}]} {
    %c0 = arith.constant 0 : index
    %c0_0 = arith.constant 0 : index
    %0 = vector.load %arg1[%c0, %c0_0] : memref<32x256xf32, #tpu.memory_space<vmem>>, vector<32x256xf32>
    %c0_1 = arith.constant 0 : index
    %c0_2 = arith.constant 0 : index
    %1 = vector.load %arg2[%c0_1, %c0_2] : memref<32x1xf32, #tpu.memory_space<vmem>>, vector<32x1xf32>
    %2 = vector.broadcast %1 : vector<32x1xf32> to vector<32x256xf32>
    %3 = arith.mulf %0, %2 : vector<32x256xf32>
    %c0_3 = arith.constant 0 : index
    %c0_4 = arith.constant 0 : index
    %4 = vector.load %arg3[%c0_3, %c0_4] : memref<32x1xf32, #tpu.memory_space<vmem>>, vector<32x1xf32>
    %5 = vector.broadcast %4 : vector<32x1xf32> to vector<32x256xf32>
    %6 = arith.addf %3, %5 : vector<32x256xf32>
    %cst = arith.constant 0.000000e+00 : f32
    %7 = vector.broadcast %cst : f32 to vector<32x256xf32>
    %8 = arith.maximumf %6, %7 : vector<32x256xf32>
    %c0_5 = arith.constant 0 : index
    %c0_6 = arith.constant 0 : index
    %9 = vector.load %arg4[%c0_5, %c0_6] : memref<16x32xbf16, #tpu.memory_space<vmem>>, vector<16x32xbf16>
    %10 = arith.truncf %8 : vector<32x256xf32> to vector<32x256xbf16>
    %cst_7 = arith.constant dense<0.000000e+00> : vector<16x256xf32>
    %11 = tpu.matmul %9, %10, %cst_7 {dimension_numbers = #tpu.dot_dimension_numbers<[1], [0], [0], [1], [0, 0, 1, 1], [], []>} : vector<16x32xbf16>, vector<32x256xbf16>, vector<16x256xf32> -> vector<16x256xf32>
    %c0_8 = arith.constant 0 : index
    %c0_9 = arith.constant 0 : index
    %12 = vector.load %arg5[%c0_8, %c0_9] : memref<16x256xf32, #tpu.memory_space<vmem>>, vector<16x256xf32>
    tpu.vector_store %arg5[%c0_8, %c0_9], %11 {strides = array<i32>} : memref<16x256xf32, #tpu.memory_space<vmem>>, vector<16x256xf32>,
    return
  }
  func.func @transform_0(%arg0: i32) -> (i32, i32) {
    %c0_i32 = arith.constant 0 : i32
    %c0_i32_0 = arith.constant 0 : i32
    return %c0_i32, %arg0 : i32, i32
  }
  func.func @transform_1(%arg0: i32) -> (i32, i32) {
    %c0_i32 = arith.constant 0 : i32
    %c0_i32_0 = arith.constant 0 : i32
    %c0_i32_1 = arith.constant 0 : i32
    return %c0_i32, %c0_i32_0 : i32, i32
  }
  func.func @transform_2(%arg0: i32) -> (i32, i32) {
    %c0_i32 = arith.constant 0 : i32
    %c0_i32_0 = arith.constant 0 : i32
    %c0_i32_1 = arith.constant 0 : i32
    return %c0_i32, %c0_i32_0 : i32, i32
  }
  func.func @transform_3(%arg0: i32) -> (i32, i32) {
    %c0_i32 = arith.constant 0 : i32
    %c0_i32_0 = arith.constant 0 : i32
    %c0_i32_1 = arith.constant 0 : i32
    return %c0_i32, %c0_i32_0 : i32, i32
  }
  func.func @transform_4(%arg0: i32) -> (i32, i32) {
    %c0_i32 = arith.constant 0 : i32
    %c0_i32_0 = arith.constant 0 : i32
    return %c0_i32, %arg0 : i32, i32
  }
}

module attributes {stable_mosaic.version = 11 : i64} {
  func.func @kernel(%arg0: i32, %arg1: memref<16x128xf32, #tpu.memory_space<vmem>>, %arg2: memref<16x1xf32, #tpu.memory_space<vmem>>, %arg3: memref<16x1xf32, #tpu.memory_space<vmem>>, %arg4: memref<16x16xbf16, #tpu.memory_space<vmem>>, %arg5: memref<16x1xf32, #tpu.memory_space<vmem>>, %arg6: memref<16x1xf32, #tpu.memory_space<vmem>>, %arg7: memref<9x8x16xbf16, #tpu.memory_space<vmem>>, %arg8: memref<9x1x128xf32, #tpu.memory_space<vmem>>, %arg9: memref<8x128xf32, #tpu.memory_space<vmem>>, %arg10: memref<16x384xf32, #tpu.memory_space<vmem>>) attributes {dimension_semantics = [#tpu.dimension_semantics<arbitrary>], iteration_bounds = array<i64: 1>, scalar_prefetch = 0 : i64, scratch_operands = 1 : i64, tpu.core_type = #tpu.core_type<tc>, window_params = [{transform_indices = @transform_0, window_bounds = array<i64: 16, 128>}, {pipeline_mode = #tpu.pipeline_mode<synchronous>, transform_indices = @transform_1, window_bounds = array<i64: 16, 1>}, {pipeline_mode = #tpu.pipeline_mode<synchronous>, transform_indices = @transform_2, window_bounds = array<i64: 16, 1>}, {pipeline_mode = #tpu.pipeline_mode<synchronous>, transform_indices = @transform_3, window_bounds = array<i64: 16, 16>}, {pipeline_mode = #tpu.pipeline_mode<synchronous>, transform_indices = @transform_4, window_bounds = array<i64: 16, 1>}, {pipeline_mode = #tpu.pipeline_mode<synchronous>, transform_indices = @transform_5, window_bounds = array<i64: 16, 1>}, {pipeline_mode = #tpu.pipeline_mode<synchronous>, transform_indices = @transform_6, window_bounds = array<i64: 9, 8, 16>}, {pipeline_mode = #tpu.pipeline_mode<synchronous>, transform_indices = @transform_7, window_bounds = array<i64: 9, 1, 128>}, {transform_indices = @transform_8, window_bounds = array<i64: 8, 128>}]} {
    %c0 = arith.constant 0 : index
    %c0_0 = arith.constant 0 : index
    %0 = vector.load %arg1[%c0, %c0_0] : memref<16x128xf32, #tpu.memory_space<vmem>>, vector<16x128xf32>
    %c0_1 = arith.constant 0 : index
    %c0_2 = arith.constant 0 : index
    %1 = vector.load %arg2[%c0_1, %c0_2] : memref<16x1xf32, #tpu.memory_space<vmem>>, vector<16x1xf32>
    %2 = vector.broadcast %1 : vector<16x1xf32> to vector<16x128xf32>
    %3 = arith.mulf %0, %2 : vector<16x128xf32>
    %c0_3 = arith.constant 0 : index
    %c0_4 = arith.constant 0 : index
    %4 = vector.load %arg3[%c0_3, %c0_4] : memref<16x1xf32, #tpu.memory_space<vmem>>, vector<16x1xf32>
    %5 = vector.broadcast %4 : vector<16x1xf32> to vector<16x128xf32>
    %6 = arith.addf %3, %5 : vector<16x128xf32>
    %cst = arith.constant 0.000000e+00 : f32
    %7 = vector.broadcast %cst : f32 to vector<16x128xf32>
    %8 = arith.maximumf %6, %7 : vector<16x128xf32>
    %c0_5 = arith.constant 0 : index
    %c0_6 = arith.constant 0 : index
    %9 = vector.load %arg4[%c0_5, %c0_6] : memref<16x16xbf16, #tpu.memory_space<vmem>>, vector<16x16xbf16>
    %10 = arith.truncf %8 : vector<16x128xf32> to vector<16x128xbf16>
    %cst_7 = arith.constant dense<0.000000e+00> : vector<16x128xf32>
    %11 = tpu.matmul %9, %10, %cst_7 {dimension_numbers = #tpu.dot_dimension_numbers<[1], [0], [0], [1], [0, 0, 1, 1], [], []>} : vector<16x16xbf16>, vector<16x128xbf16>, vector<16x128xf32> -> vector<16x128xf32>
    %c0_8 = arith.constant 0 : index
    %c0_9 = arith.constant 0 : index
    %12 = vector.load %arg5[%c0_8, %c0_9] : memref<16x1xf32, #tpu.memory_space<vmem>>, vector<16x1xf32>
    %13 = vector.broadcast %12 : vector<16x1xf32> to vector<16x128xf32>
    %14 = arith.mulf %11, %13 : vector<16x128xf32>
    %c0_10 = arith.constant 0 : index
    %c0_11 = arith.constant 0 : index
    %15 = vector.load %arg6[%c0_10, %c0_11] : memref<16x1xf32, #tpu.memory_space<vmem>>, vector<16x1xf32>
    %16 = vector.broadcast %15 : vector<16x1xf32> to vector<16x128xf32>
    %17 = arith.addf %14, %16 : vector<16x128xf32>
    %cst_12 = arith.constant 0.000000e+00 : f32
    %18 = vector.broadcast %cst_12 : f32 to vector<16x128xf32>
    %19 = arith.maximumf %17, %18 : vector<16x128xf32>
    %cst_13 = arith.constant 0.000000e+00 : f32
    %20 = vector.broadcast %cst_13 : f32 to vector<16x384xf32>
    %c0_14 = arith.constant 0 : index
    %c0_15 = arith.constant 0 : index
    %21 = vector.load %arg10[%c0_14, %c0_15] : memref<16x384xf32, #tpu.memory_space<vmem>>, vector<16x384xf32>
    tpu.vector_store %arg10[%c0_14, %c0_15], %20 {strides = array<i32>} : memref<16x384xf32, #tpu.memory_space<vmem>>, vector<16x384xf32>,
    %c0_16 = arith.constant 0 : index
    %c128 = arith.constant 128 : index
    %22 = vector.load %arg10[%c0_16, %c128] : memref<16x384xf32, #tpu.memory_space<vmem>>, vector<16x128xf32>
    tpu.vector_store %arg10[%c0_16, %c128], %19 {strides = array<i32>} : memref<16x384xf32, #tpu.memory_space<vmem>>, vector<16x128xf32>,
    %cst_17 = arith.constant 0.000000e+00 : f32
    %23 = vector.broadcast %cst_17 : f32 to vector<8x128xf32>
    %c0_18 = arith.constant 0 : index
    %c119 = arith.constant 119 : index
    %24 = vector.load %arg10[%c0_18, %c119] : memref<16x384xf32, #tpu.memory_space<vmem>>, vector<16x128xf32>
    %c0_19 = arith.constant 0 : index
    %c0_20 = arith.constant 0 : index
    %c0_21 = arith.constant 0 : index
    %25 = vector.load %arg8[%c0_19, %c0_20, %c0_21] : memref<9x1x128xf32, #tpu.memory_space<vmem>>, vector<1x1x128xf32>
    %26 = vector.shape_cast %25 : vector<1x1x128xf32> to vector<1x128xf32>
    %27 = vector.broadcast %26 : vector<1x128xf32> to vector<16x128xf32>
    %28 = arith.mulf %24, %27 : vector<16x128xf32>
    %c0_22 = arith.constant 0 : index
    %c0_23 = arith.constant 0 : index
    %c0_24 = arith.constant 0 : index
    %29 = vector.load %arg7[%c0_22, %c0_23, %c0_24] : memref<9x8x16xbf16, #tpu.memory_space<vmem>>, vector<1x8x16xbf16>
    %30 = vector.shape_cast %29 : vector<1x8x16xbf16> to vector<8x16xbf16>
    %31 = arith.truncf %28 : vector<16x128xf32> to vector<16x128xbf16>
    %cst_25 = arith.constant dense<0.000000e+00> : vector<8x128xf32>
    %32 = tpu.matmul %30, %31, %cst_25 {dimension_numbers = #tpu.dot_dimension_numbers<[1], [0], [0], [1], [0, 0, 1, 1], [], []>} : vector<8x16xbf16>, vector<16x128xbf16>, vector<8x128xf32> -> vector<8x128xf32>
    %33 = arith.addf %23, %32 : vector<8x128xf32>
    %c0_26 = arith.constant 0 : index
    %c120 = arith.constant 120 : index
    %34 = vector.load %arg10[%c0_26, %c120] : memref<16x384xf32, #tpu.memory_space<vmem>>, vector<16x128xf32>
    %c1 = arith.constant 1 : index
    %c0_27 = arith.constant 0 : index
    %c0_28 = arith.constant 0 : index
    %35 = vector.load %arg8[%c1, %c0_27, %c0_28] : memref<9x1x128xf32, #tpu.memory_space<vmem>>, vector<1x1x128xf32>
    %36 = vector.shape_cast %35 : vector<1x1x128xf32> to vector<1x128xf32>
    %37 = vector.broadcast %36 : vector<1x128xf32> to vector<16x128xf32>
    %38 = arith.mulf %34, %37 : vector<16x128xf32>
    %c1_29 = arith.constant 1 : index
    %c0_30 = arith.constant 0 : index
    %c0_31 = arith.constant 0 : index
    %39 = vector.load %arg7[%c1_29, %c0_30, %c0_31] : memref<9x8x16xbf16, #tpu.memory_space<vmem>>, vector<1x8x16xbf16>
    %40 = vector.shape_cast %39 : vector<1x8x16xbf16> to vector<8x16xbf16>
    %41 = arith.truncf %38 : vector<16x128xf32> to vector<16x128xbf16>
    %cst_32 = arith.constant dense<0.000000e+00> : vector<8x128xf32>
    %42 = tpu.matmul %40, %41, %cst_32 {dimension_numbers = #tpu.dot_dimension_numbers<[1], [0], [0], [1], [0, 0, 1, 1], [], []>} : vector<8x16xbf16>, vector<16x128xbf16>, vector<8x128xf32> -> vector<8x128xf32>
    %43 = arith.addf %33, %42 : vector<8x128xf32>
    %c0_33 = arith.constant 0 : index
    %c121 = arith.constant 121 : index
    %44 = vector.load %arg10[%c0_33, %c121] : memref<16x384xf32, #tpu.memory_space<vmem>>, vector<16x128xf32>
    %c2 = arith.constant 2 : index
    %c0_34 = arith.constant 0 : index
    %c0_35 = arith.constant 0 : index
    %45 = vector.load %arg8[%c2, %c0_34, %c0_35] : memref<9x1x128xf32, #tpu.memory_space<vmem>>, vector<1x1x128xf32>
    %46 = vector.shape_cast %45 : vector<1x1x128xf32> to vector<1x128xf32>
    %47 = vector.broadcast %46 : vector<1x128xf32> to vector<16x128xf32>
    %48 = arith.mulf %44, %47 : vector<16x128xf32>
    %c2_36 = arith.constant 2 : index
    %c0_37 = arith.constant 0 : index
    %c0_38 = arith.constant 0 : index
    %49 = vector.load %arg7[%c2_36, %c0_37, %c0_38] : memref<9x8x16xbf16, #tpu.memory_space<vmem>>, vector<1x8x16xbf16>
    %50 = vector.shape_cast %49 : vector<1x8x16xbf16> to vector<8x16xbf16>
    %51 = arith.truncf %48 : vector<16x128xf32> to vector<16x128xbf16>
    %cst_39 = arith.constant dense<0.000000e+00> : vector<8x128xf32>
    %52 = tpu.matmul %50, %51, %cst_39 {dimension_numbers = #tpu.dot_dimension_numbers<[1], [0], [0], [1], [0, 0, 1, 1], [], []>} : vector<8x16xbf16>, vector<16x128xbf16>, vector<8x128xf32> -> vector<8x128xf32>
    %53 = arith.addf %43, %52 : vector<8x128xf32>
    %c0_40 = arith.constant 0 : index
    %c127 = arith.constant 127 : index
    %54 = vector.load %arg10[%c0_40, %c127] : memref<16x384xf32, #tpu.memory_space<vmem>>, vector<16x128xf32>
    %c3 = arith.constant 3 : index
    %c0_41 = arith.constant 0 : index
    %c0_42 = arith.constant 0 : index
    %55 = vector.load %arg8[%c3, %c0_41, %c0_42] : memref<9x1x128xf32, #tpu.memory_space<vmem>>, vector<1x1x128xf32>
    %56 = vector.shape_cast %55 : vector<1x1x128xf32> to vector<1x128xf32>
    %57 = vector.broadcast %56 : vector<1x128xf32> to vector<16x128xf32>
    %58 = arith.mulf %54, %57 : vector<16x128xf32>
    %c3_43 = arith.constant 3 : index
    %c0_44 = arith.constant 0 : index
    %c0_45 = arith.constant 0 : index
    %59 = vector.load %arg7[%c3_43, %c0_44, %c0_45] : memref<9x8x16xbf16, #tpu.memory_space<vmem>>, vector<1x8x16xbf16>
    %60 = vector.shape_cast %59 : vector<1x8x16xbf16> to vector<8x16xbf16>
    %61 = arith.truncf %58 : vector<16x128xf32> to vector<16x128xbf16>
    %cst_46 = arith.constant dense<0.000000e+00> : vector<8x128xf32>
    %62 = tpu.matmul %60, %61, %cst_46 {dimension_numbers = #tpu.dot_dimension_numbers<[1], [0], [0], [1], [0, 0, 1, 1], [], []>} : vector<8x16xbf16>, vector<16x128xbf16>, vector<8x128xf32> -> vector<8x128xf32>
    %63 = arith.addf %53, %62 : vector<8x128xf32>
    %c0_47 = arith.constant 0 : index
    %c128_48 = arith.constant 128 : index
    %64 = vector.load %arg10[%c0_47, %c128_48] : memref<16x384xf32, #tpu.memory_space<vmem>>, vector<16x128xf32>
    %c4 = arith.constant 4 : index
    %c0_49 = arith.constant 0 : index
    %c0_50 = arith.constant 0 : index
    %65 = vector.load %arg8[%c4, %c0_49, %c0_50] : memref<9x1x128xf32, #tpu.memory_space<vmem>>, vector<1x1x128xf32>
    %66 = vector.shape_cast %65 : vector<1x1x128xf32> to vector<1x128xf32>
    %67 = vector.broadcast %66 : vector<1x128xf32> to vector<16x128xf32>
    %68 = arith.mulf %64, %67 : vector<16x128xf32>
    %c4_51 = arith.constant 4 : index
    %c0_52 = arith.constant 0 : index
    %c0_53 = arith.constant 0 : index
    %69 = vector.load %arg7[%c4_51, %c0_52, %c0_53] : memref<9x8x16xbf16, #tpu.memory_space<vmem>>, vector<1x8x16xbf16>
    %70 = vector.shape_cast %69 : vector<1x8x16xbf16> to vector<8x16xbf16>
    %71 = arith.truncf %68 : vector<16x128xf32> to vector<16x128xbf16>
    %cst_54 = arith.constant dense<0.000000e+00> : vector<8x128xf32>
    %72 = tpu.matmul %70, %71, %cst_54 {dimension_numbers = #tpu.dot_dimension_numbers<[1], [0], [0], [1], [0, 0, 1, 1], [], []>} : vector<8x16xbf16>, vector<16x128xbf16>, vector<8x128xf32> -> vector<8x128xf32>
    %73 = arith.addf %63, %72 : vector<8x128xf32>
    %c0_55 = arith.constant 0 : index
    %c129 = arith.constant 129 : index
    %74 = vector.load %arg10[%c0_55, %c129] : memref<16x384xf32, #tpu.memory_space<vmem>>, vector<16x128xf32>
    %c5 = arith.constant 5 : index
    %c0_56 = arith.constant 0 : index
    %c0_57 = arith.constant 0 : index
    %75 = vector.load %arg8[%c5, %c0_56, %c0_57] : memref<9x1x128xf32, #tpu.memory_space<vmem>>, vector<1x1x128xf32>
    %76 = vector.shape_cast %75 : vector<1x1x128xf32> to vector<1x128xf32>
    %77 = vector.broadcast %76 : vector<1x128xf32> to vector<16x128xf32>
    %78 = arith.mulf %74, %77 : vector<16x128xf32>
    %c5_58 = arith.constant 5 : index
    %c0_59 = arith.constant 0 : index
    %c0_60 = arith.constant 0 : index
    %79 = vector.load %arg7[%c5_58, %c0_59, %c0_60] : memref<9x8x16xbf16, #tpu.memory_space<vmem>>, vector<1x8x16xbf16>
    %80 = vector.shape_cast %79 : vector<1x8x16xbf16> to vector<8x16xbf16>
    %81 = arith.truncf %78 : vector<16x128xf32> to vector<16x128xbf16>
    %cst_61 = arith.constant dense<0.000000e+00> : vector<8x128xf32>
    %82 = tpu.matmul %80, %81, %cst_61 {dimension_numbers = #tpu.dot_dimension_numbers<[1], [0], [0], [1], [0, 0, 1, 1], [], []>} : vector<8x16xbf16>, vector<16x128xbf16>, vector<8x128xf32> -> vector<8x128xf32>
    %83 = arith.addf %73, %82 : vector<8x128xf32>
    %c0_62 = arith.constant 0 : index
    %c135 = arith.constant 135 : index
    %84 = vector.load %arg10[%c0_62, %c135] : memref<16x384xf32, #tpu.memory_space<vmem>>, vector<16x128xf32>
    %c6 = arith.constant 6 : index
    %c0_63 = arith.constant 0 : index
    %c0_64 = arith.constant 0 : index
    %85 = vector.load %arg8[%c6, %c0_63, %c0_64] : memref<9x1x128xf32, #tpu.memory_space<vmem>>, vector<1x1x128xf32>
    %86 = vector.shape_cast %85 : vector<1x1x128xf32> to vector<1x128xf32>
    %87 = vector.broadcast %86 : vector<1x128xf32> to vector<16x128xf32>
    %88 = arith.mulf %84, %87 : vector<16x128xf32>
    %c6_65 = arith.constant 6 : index
    %c0_66 = arith.constant 0 : index
    %c0_67 = arith.constant 0 : index
    %89 = vector.load %arg7[%c6_65, %c0_66, %c0_67] : memref<9x8x16xbf16, #tpu.memory_space<vmem>>, vector<1x8x16xbf16>
    %90 = vector.shape_cast %89 : vector<1x8x16xbf16> to vector<8x16xbf16>
    %91 = arith.truncf %88 : vector<16x128xf32> to vector<16x128xbf16>
    %cst_68 = arith.constant dense<0.000000e+00> : vector<8x128xf32>
    %92 = tpu.matmul %90, %91, %cst_68 {dimension_numbers = #tpu.dot_dimension_numbers<[1], [0], [0], [1], [0, 0, 1, 1], [], []>} : vector<8x16xbf16>, vector<16x128xbf16>, vector<8x128xf32> -> vector<8x128xf32>
    %93 = arith.addf %83, %92 : vector<8x128xf32>
    %c0_69 = arith.constant 0 : index
    %c136 = arith.constant 136 : index
    %94 = vector.load %arg10[%c0_69, %c136] : memref<16x384xf32, #tpu.memory_space<vmem>>, vector<16x128xf32>
    %c7 = arith.constant 7 : index
    %c0_70 = arith.constant 0 : index
    %c0_71 = arith.constant 0 : index
    %95 = vector.load %arg8[%c7, %c0_70, %c0_71] : memref<9x1x128xf32, #tpu.memory_space<vmem>>, vector<1x1x128xf32>
    %96 = vector.shape_cast %95 : vector<1x1x128xf32> to vector<1x128xf32>
    %97 = vector.broadcast %96 : vector<1x128xf32> to vector<16x128xf32>
    %98 = arith.mulf %94, %97 : vector<16x128xf32>
    %c7_72 = arith.constant 7 : index
    %c0_73 = arith.constant 0 : index
    %c0_74 = arith.constant 0 : index
    %99 = vector.load %arg7[%c7_72, %c0_73, %c0_74] : memref<9x8x16xbf16, #tpu.memory_space<vmem>>, vector<1x8x16xbf16>
    %100 = vector.shape_cast %99 : vector<1x8x16xbf16> to vector<8x16xbf16>
    %101 = arith.truncf %98 : vector<16x128xf32> to vector<16x128xbf16>
    %cst_75 = arith.constant dense<0.000000e+00> : vector<8x128xf32>
    %102 = tpu.matmul %100, %101, %cst_75 {dimension_numbers = #tpu.dot_dimension_numbers<[1], [0], [0], [1], [0, 0, 1, 1], [], []>} : vector<8x16xbf16>, vector<16x128xbf16>, vector<8x128xf32> -> vector<8x128xf32>
    %103 = arith.addf %93, %102 : vector<8x128xf32>
    %c0_76 = arith.constant 0 : index
    %c137 = arith.constant 137 : index
    %104 = vector.load %arg10[%c0_76, %c137] : memref<16x384xf32, #tpu.memory_space<vmem>>, vector<16x128xf32>
    %c8 = arith.constant 8 : index
    %c0_77 = arith.constant 0 : index
    %c0_78 = arith.constant 0 : index
    %105 = vector.load %arg8[%c8, %c0_77, %c0_78] : memref<9x1x128xf32, #tpu.memory_space<vmem>>, vector<1x1x128xf32>
    %106 = vector.shape_cast %105 : vector<1x1x128xf32> to vector<1x128xf32>
    %107 = vector.broadcast %106 : vector<1x128xf32> to vector<16x128xf32>
    %108 = arith.mulf %104, %107 : vector<16x128xf32>
    %c8_79 = arith.constant 8 : index
    %c0_80 = arith.constant 0 : index
    %c0_81 = arith.constant 0 : index
    %109 = vector.load %arg7[%c8_79, %c0_80, %c0_81] : memref<9x8x16xbf16, #tpu.memory_space<vmem>>, vector<1x8x16xbf16>
    %110 = vector.shape_cast %109 : vector<1x8x16xbf16> to vector<8x16xbf16>
    %111 = arith.truncf %108 : vector<16x128xf32> to vector<16x128xbf16>
    %cst_82 = arith.constant dense<0.000000e+00> : vector<8x128xf32>
    %112 = tpu.matmul %110, %111, %cst_82 {dimension_numbers = #tpu.dot_dimension_numbers<[1], [0], [0], [1], [0, 0, 1, 1], [], []>} : vector<8x16xbf16>, vector<16x128xbf16>, vector<8x128xf32> -> vector<8x128xf32>
    %113 = arith.addf %103, %112 : vector<8x128xf32>
    %c0_83 = arith.constant 0 : index
    %c0_84 = arith.constant 0 : index
    %114 = vector.load %arg9[%c0_83, %c0_84] : memref<8x128xf32, #tpu.memory_space<vmem>>, vector<8x128xf32>
    tpu.vector_store %arg9[%c0_83, %c0_84], %113 {strides = array<i32>} : memref<8x128xf32, #tpu.memory_space<vmem>>, vector<8x128xf32>,
    return
  }
  func.func @transform_0(%arg0: i32) -> (i32, i32) {
    %c0_i32 = arith.constant 0 : i32
    %c0_i32_0 = arith.constant 0 : i32
    %c0_i32_1 = arith.constant 0 : i32
    return %c0_i32, %c0_i32_0 : i32, i32
  }
  func.func @transform_1(%arg0: i32) -> (i32, i32) {
    %c0_i32 = arith.constant 0 : i32
    %c0_i32_0 = arith.constant 0 : i32
    %c0_i32_1 = arith.constant 0 : i32
    return %c0_i32, %c0_i32_0 : i32, i32
  }
  func.func @transform_2(%arg0: i32) -> (i32, i32) {
    %c0_i32 = arith.constant 0 : i32
    %c0_i32_0 = arith.constant 0 : i32
    %c0_i32_1 = arith.constant 0 : i32
    return %c0_i32, %c0_i32_0 : i32, i32
  }
  func.func @transform_3(%arg0: i32) -> (i32, i32) {
    %c0_i32 = arith.constant 0 : i32
    %c0_i32_0 = arith.constant 0 : i32
    %c0_i32_1 = arith.constant 0 : i32
    return %c0_i32, %c0_i32_0 : i32, i32
  }
  func.func @transform_4(%arg0: i32) -> (i32, i32) {
    %c0_i32 = arith.constant 0 : i32
    %c0_i32_0 = arith.constant 0 : i32
    %c0_i32_1 = arith.constant 0 : i32
    return %c0_i32, %c0_i32_0 : i32, i32
  }
  func.func @transform_5(%arg0: i32) -> (i32, i32) {
    %c0_i32 = arith.constant 0 : i32
    %c0_i32_0 = arith.constant 0 : i32
    %c0_i32_1 = arith.constant 0 : i32
    return %c0_i32, %c0_i32_0 : i32, i32
  }
  func.func @transform_6(%arg0: i32) -> (i32, i32, i32) {
    %c0_i32 = arith.constant 0 : i32
    %c0_i32_0 = arith.constant 0 : i32
    %c0_i32_1 = arith.constant 0 : i32
    %c0_i32_2 = arith.constant 0 : i32
    return %c0_i32, %c0_i32_0, %c0_i32_1 : i32, i32, i32
  }
  func.func @transform_7(%arg0: i32) -> (i32, i32, i32) {
    %c0_i32 = arith.constant 0 : i32
    %c0_i32_0 = arith.constant 0 : i32
    %c0_i32_1 = arith.constant 0 : i32
    %c0_i32_2 = arith.constant 0 : i32
    return %c0_i32, %c0_i32_0, %c0_i32_1 : i32, i32, i32
  }
  func.func @transform_8(%arg0: i32) -> (i32, i32) {
    %c2_i32 = arith.constant 2 : i32
    %c0_i32 = arith.constant 0 : i32
    %c0_i32_0 = arith.constant 0 : i32
    return %c2_i32, %c0_i32 : i32, i32
  }
}

module attributes {stable_mosaic.version = 11 : i64} {
  func.func @_bnrelu_matmul_kernel(%arg0: i32, %arg1: memref<32x128xf32, #tpu.memory_space<vmem>>, %arg2: memref<32x1xf32, #tpu.memory_space<vmem>>, %arg3: memref<32x1xf32, #tpu.memory_space<vmem>>, %arg4: memref<16x32xbf16, #tpu.memory_space<vmem>>, %arg5: memref<16x128xf32, #tpu.memory_space<vmem>>) attributes {dimension_semantics = [#tpu.dimension_semantics<parallel>], iteration_bounds = array<i64: 1>, scalar_prefetch = 0 : i64, scratch_operands = 0 : i64, tpu.core_type = #tpu.core_type<tc>, window_params = [{transform_indices = @transform_0, window_bounds = array<i64: 32, 128>}, {pipeline_mode = #tpu.pipeline_mode<synchronous>, transform_indices = @transform_1, window_bounds = array<i64: 32, 1>}, {pipeline_mode = #tpu.pipeline_mode<synchronous>, transform_indices = @transform_2, window_bounds = array<i64: 32, 1>}, {pipeline_mode = #tpu.pipeline_mode<synchronous>, transform_indices = @transform_3, window_bounds = array<i64: 16, 32>}, {transform_indices = @transform_4, window_bounds = array<i64: 16, 128>}]} {
    %c0 = arith.constant 0 : index
    %c0_0 = arith.constant 0 : index
    %0 = vector.load %arg1[%c0, %c0_0] : memref<32x128xf32, #tpu.memory_space<vmem>>, vector<32x128xf32>
    %c0_1 = arith.constant 0 : index
    %c0_2 = arith.constant 0 : index
    %1 = vector.load %arg2[%c0_1, %c0_2] : memref<32x1xf32, #tpu.memory_space<vmem>>, vector<32x1xf32>
    %2 = vector.broadcast %1 : vector<32x1xf32> to vector<32x128xf32>
    %3 = arith.mulf %0, %2 : vector<32x128xf32>
    %c0_3 = arith.constant 0 : index
    %c0_4 = arith.constant 0 : index
    %4 = vector.load %arg3[%c0_3, %c0_4] : memref<32x1xf32, #tpu.memory_space<vmem>>, vector<32x1xf32>
    %5 = vector.broadcast %4 : vector<32x1xf32> to vector<32x128xf32>
    %6 = arith.addf %3, %5 : vector<32x128xf32>
    %cst = arith.constant 0.000000e+00 : f32
    %7 = vector.broadcast %cst : f32 to vector<32x128xf32>
    %8 = arith.maximumf %6, %7 : vector<32x128xf32>
    %c0_5 = arith.constant 0 : index
    %c0_6 = arith.constant 0 : index
    %9 = vector.load %arg4[%c0_5, %c0_6] : memref<16x32xbf16, #tpu.memory_space<vmem>>, vector<16x32xbf16>
    %10 = arith.truncf %8 : vector<32x128xf32> to vector<32x128xbf16>
    %cst_7 = arith.constant dense<0.000000e+00> : vector<16x128xf32>
    %11 = tpu.matmul %9, %10, %cst_7 {dimension_numbers = #tpu.dot_dimension_numbers<[1], [0], [0], [1], [0, 0, 1, 1], [], []>} : vector<16x32xbf16>, vector<32x128xbf16>, vector<16x128xf32> -> vector<16x128xf32>
    %c0_8 = arith.constant 0 : index
    %c0_9 = arith.constant 0 : index
    %12 = vector.load %arg5[%c0_8, %c0_9] : memref<16x128xf32, #tpu.memory_space<vmem>>, vector<16x128xf32>
    tpu.vector_store %arg5[%c0_8, %c0_9], %11 {strides = array<i32>} : memref<16x128xf32, #tpu.memory_space<vmem>>, vector<16x128xf32>,
    return
  }
  func.func @transform_0(%arg0: i32) -> (i32, i32) {
    %c0_i32 = arith.constant 0 : i32
    %c0_i32_0 = arith.constant 0 : i32
    return %c0_i32, %arg0 : i32, i32
  }
  func.func @transform_1(%arg0: i32) -> (i32, i32) {
    %c0_i32 = arith.constant 0 : i32
    %c0_i32_0 = arith.constant 0 : i32
    %c0_i32_1 = arith.constant 0 : i32
    return %c0_i32, %c0_i32_0 : i32, i32
  }
  func.func @transform_2(%arg0: i32) -> (i32, i32) {
    %c0_i32 = arith.constant 0 : i32
    %c0_i32_0 = arith.constant 0 : i32
    %c0_i32_1 = arith.constant 0 : i32
    return %c0_i32, %c0_i32_0 : i32, i32
  }
  func.func @transform_3(%arg0: i32) -> (i32, i32) {
    %c0_i32 = arith.constant 0 : i32
    %c0_i32_0 = arith.constant 0 : i32
    %c0_i32_1 = arith.constant 0 : i32
    return %c0_i32, %c0_i32_0 : i32, i32
  }
  func.func @transform_4(%arg0: i32) -> (i32, i32) {
    %c0_i32 = arith.constant 0 : i32
    %c0_i32_0 = arith.constant 0 : i32
    return %c0_i32, %arg0 : i32, i32
  }
}

module attributes {stable_mosaic.version = 11 : i64} {
  func.func @kernel(%arg0: i32, %arg1: memref<24x128xf32, #tpu.memory_space<vmem>>, %arg2: memref<24x1xf32, #tpu.memory_space<vmem>>, %arg3: memref<24x1xf32, #tpu.memory_space<vmem>>, %arg4: memref<16x24xbf16, #tpu.memory_space<vmem>>, %arg5: memref<16x1xf32, #tpu.memory_space<vmem>>, %arg6: memref<16x1xf32, #tpu.memory_space<vmem>>, %arg7: memref<9x8x16xbf16, #tpu.memory_space<vmem>>, %arg8: memref<9x1x128xf32, #tpu.memory_space<vmem>>, %arg9: memref<8x128xf32, #tpu.memory_space<vmem>>, %arg10: memref<16x384xf32, #tpu.memory_space<vmem>>) attributes {dimension_semantics = [#tpu.dimension_semantics<arbitrary>], iteration_bounds = array<i64: 1>, scalar_prefetch = 0 : i64, scratch_operands = 1 : i64, tpu.core_type = #tpu.core_type<tc>, window_params = [{transform_indices = @transform_0, window_bounds = array<i64: 24, 128>}, {pipeline_mode = #tpu.pipeline_mode<synchronous>, transform_indices = @transform_1, window_bounds = array<i64: 24, 1>}, {pipeline_mode = #tpu.pipeline_mode<synchronous>, transform_indices = @transform_2, window_bounds = array<i64: 24, 1>}, {pipeline_mode = #tpu.pipeline_mode<synchronous>, transform_indices = @transform_3, window_bounds = array<i64: 16, 24>}, {pipeline_mode = #tpu.pipeline_mode<synchronous>, transform_indices = @transform_4, window_bounds = array<i64: 16, 1>}, {pipeline_mode = #tpu.pipeline_mode<synchronous>, transform_indices = @transform_5, window_bounds = array<i64: 16, 1>}, {pipeline_mode = #tpu.pipeline_mode<synchronous>, transform_indices = @transform_6, window_bounds = array<i64: 9, 8, 16>}, {pipeline_mode = #tpu.pipeline_mode<synchronous>, transform_indices = @transform_7, window_bounds = array<i64: 9, 1, 128>}, {transform_indices = @transform_8, window_bounds = array<i64: 8, 128>}]} {
    %c0 = arith.constant 0 : index
    %c0_0 = arith.constant 0 : index
    %0 = vector.load %arg1[%c0, %c0_0] : memref<24x128xf32, #tpu.memory_space<vmem>>, vector<24x128xf32>
    %c0_1 = arith.constant 0 : index
    %c0_2 = arith.constant 0 : index
    %1 = vector.load %arg2[%c0_1, %c0_2] : memref<24x1xf32, #tpu.memory_space<vmem>>, vector<24x1xf32>
    %2 = vector.broadcast %1 : vector<24x1xf32> to vector<24x128xf32>
    %3 = arith.mulf %0, %2 : vector<24x128xf32>
    %c0_3 = arith.constant 0 : index
    %c0_4 = arith.constant 0 : index
    %4 = vector.load %arg3[%c0_3, %c0_4] : memref<24x1xf32, #tpu.memory_space<vmem>>, vector<24x1xf32>
    %5 = vector.broadcast %4 : vector<24x1xf32> to vector<24x128xf32>
    %6 = arith.addf %3, %5 : vector<24x128xf32>
    %cst = arith.constant 0.000000e+00 : f32
    %7 = vector.broadcast %cst : f32 to vector<24x128xf32>
    %8 = arith.maximumf %6, %7 : vector<24x128xf32>
    %c0_5 = arith.constant 0 : index
    %c0_6 = arith.constant 0 : index
    %9 = vector.load %arg4[%c0_5, %c0_6] : memref<16x24xbf16, #tpu.memory_space<vmem>>, vector<16x24xbf16>
    %10 = arith.truncf %8 : vector<24x128xf32> to vector<24x128xbf16>
    %cst_7 = arith.constant dense<0.000000e+00> : vector<16x128xf32>
    %11 = tpu.matmul %9, %10, %cst_7 {dimension_numbers = #tpu.dot_dimension_numbers<[1], [0], [0], [1], [0, 0, 1, 1], [], []>} : vector<16x24xbf16>, vector<24x128xbf16>, vector<16x128xf32> -> vector<16x128xf32>
    %c0_8 = arith.constant 0 : index
    %c0_9 = arith.constant 0 : index
    %12 = vector.load %arg5[%c0_8, %c0_9] : memref<16x1xf32, #tpu.memory_space<vmem>>, vector<16x1xf32>
    %13 = vector.broadcast %12 : vector<16x1xf32> to vector<16x128xf32>
    %14 = arith.mulf %11, %13 : vector<16x128xf32>
    %c0_10 = arith.constant 0 : index
    %c0_11 = arith.constant 0 : index
    %15 = vector.load %arg6[%c0_10, %c0_11] : memref<16x1xf32, #tpu.memory_space<vmem>>, vector<16x1xf32>
    %16 = vector.broadcast %15 : vector<16x1xf32> to vector<16x128xf32>
    %17 = arith.addf %14, %16 : vector<16x128xf32>
    %cst_12 = arith.constant 0.000000e+00 : f32
    %18 = vector.broadcast %cst_12 : f32 to vector<16x128xf32>
    %19 = arith.maximumf %17, %18 : vector<16x128xf32>
    %cst_13 = arith.constant 0.000000e+00 : f32
    %20 = vector.broadcast %cst_13 : f32 to vector<16x384xf32>
    %c0_14 = arith.constant 0 : index
    %c0_15 = arith.constant 0 : index
    %21 = vector.load %arg10[%c0_14, %c0_15] : memref<16x384xf32, #tpu.memory_space<vmem>>, vector<16x384xf32>
    tpu.vector_store %arg10[%c0_14, %c0_15], %20 {strides = array<i32>} : memref<16x384xf32, #tpu.memory_space<vmem>>, vector<16x384xf32>,
    %c0_16 = arith.constant 0 : index
    %c128 = arith.constant 128 : index
    %22 = vector.load %arg10[%c0_16, %c128] : memref<16x384xf32, #tpu.memory_space<vmem>>, vector<16x128xf32>
    tpu.vector_store %arg10[%c0_16, %c128], %19 {strides = array<i32>} : memref<16x384xf32, #tpu.memory_space<vmem>>, vector<16x128xf32>,
    %cst_17 = arith.constant 0.000000e+00 : f32
    %23 = vector.broadcast %cst_17 : f32 to vector<8x128xf32>
    %c0_18 = arith.constant 0 : index
    %c119 = arith.constant 119 : index
    %24 = vector.load %arg10[%c0_18, %c119] : memref<16x384xf32, #tpu.memory_space<vmem>>, vector<16x128xf32>
    %c0_19 = arith.constant 0 : index
    %c0_20 = arith.constant 0 : index
    %c0_21 = arith.constant 0 : index
    %25 = vector.load %arg8[%c0_19, %c0_20, %c0_21] : memref<9x1x128xf32, #tpu.memory_space<vmem>>, vector<1x1x128xf32>
    %26 = vector.shape_cast %25 : vector<1x1x128xf32> to vector<1x128xf32>
    %27 = vector.broadcast %26 : vector<1x128xf32> to vector<16x128xf32>
    %28 = arith.mulf %24, %27 : vector<16x128xf32>
    %c0_22 = arith.constant 0 : index
    %c0_23 = arith.constant 0 : index
    %c0_24 = arith.constant 0 : index
    %29 = vector.load %arg7[%c0_22, %c0_23, %c0_24] : memref<9x8x16xbf16, #tpu.memory_space<vmem>>, vector<1x8x16xbf16>
    %30 = vector.shape_cast %29 : vector<1x8x16xbf16> to vector<8x16xbf16>
    %31 = arith.truncf %28 : vector<16x128xf32> to vector<16x128xbf16>
    %cst_25 = arith.constant dense<0.000000e+00> : vector<8x128xf32>
    %32 = tpu.matmul %30, %31, %cst_25 {dimension_numbers = #tpu.dot_dimension_numbers<[1], [0], [0], [1], [0, 0, 1, 1], [], []>} : vector<8x16xbf16>, vector<16x128xbf16>, vector<8x128xf32> -> vector<8x128xf32>
    %33 = arith.addf %23, %32 : vector<8x128xf32>
    %c0_26 = arith.constant 0 : index
    %c120 = arith.constant 120 : index
    %34 = vector.load %arg10[%c0_26, %c120] : memref<16x384xf32, #tpu.memory_space<vmem>>, vector<16x128xf32>
    %c1 = arith.constant 1 : index
    %c0_27 = arith.constant 0 : index
    %c0_28 = arith.constant 0 : index
    %35 = vector.load %arg8[%c1, %c0_27, %c0_28] : memref<9x1x128xf32, #tpu.memory_space<vmem>>, vector<1x1x128xf32>
    %36 = vector.shape_cast %35 : vector<1x1x128xf32> to vector<1x128xf32>
    %37 = vector.broadcast %36 : vector<1x128xf32> to vector<16x128xf32>
    %38 = arith.mulf %34, %37 : vector<16x128xf32>
    %c1_29 = arith.constant 1 : index
    %c0_30 = arith.constant 0 : index
    %c0_31 = arith.constant 0 : index
    %39 = vector.load %arg7[%c1_29, %c0_30, %c0_31] : memref<9x8x16xbf16, #tpu.memory_space<vmem>>, vector<1x8x16xbf16>
    %40 = vector.shape_cast %39 : vector<1x8x16xbf16> to vector<8x16xbf16>
    %41 = arith.truncf %38 : vector<16x128xf32> to vector<16x128xbf16>
    %cst_32 = arith.constant dense<0.000000e+00> : vector<8x128xf32>
    %42 = tpu.matmul %40, %41, %cst_32 {dimension_numbers = #tpu.dot_dimension_numbers<[1], [0], [0], [1], [0, 0, 1, 1], [], []>} : vector<8x16xbf16>, vector<16x128xbf16>, vector<8x128xf32> -> vector<8x128xf32>
    %43 = arith.addf %33, %42 : vector<8x128xf32>
    %c0_33 = arith.constant 0 : index
    %c121 = arith.constant 121 : index
    %44 = vector.load %arg10[%c0_33, %c121] : memref<16x384xf32, #tpu.memory_space<vmem>>, vector<16x128xf32>
    %c2 = arith.constant 2 : index
    %c0_34 = arith.constant 0 : index
    %c0_35 = arith.constant 0 : index
    %45 = vector.load %arg8[%c2, %c0_34, %c0_35] : memref<9x1x128xf32, #tpu.memory_space<vmem>>, vector<1x1x128xf32>
    %46 = vector.shape_cast %45 : vector<1x1x128xf32> to vector<1x128xf32>
    %47 = vector.broadcast %46 : vector<1x128xf32> to vector<16x128xf32>
    %48 = arith.mulf %44, %47 : vector<16x128xf32>
    %c2_36 = arith.constant 2 : index
    %c0_37 = arith.constant 0 : index
    %c0_38 = arith.constant 0 : index
    %49 = vector.load %arg7[%c2_36, %c0_37, %c0_38] : memref<9x8x16xbf16, #tpu.memory_space<vmem>>, vector<1x8x16xbf16>
    %50 = vector.shape_cast %49 : vector<1x8x16xbf16> to vector<8x16xbf16>
    %51 = arith.truncf %48 : vector<16x128xf32> to vector<16x128xbf16>
    %cst_39 = arith.constant dense<0.000000e+00> : vector<8x128xf32>
    %52 = tpu.matmul %50, %51, %cst_39 {dimension_numbers = #tpu.dot_dimension_numbers<[1], [0], [0], [1], [0, 0, 1, 1], [], []>} : vector<8x16xbf16>, vector<16x128xbf16>, vector<8x128xf32> -> vector<8x128xf32>
    %53 = arith.addf %43, %52 : vector<8x128xf32>
    %c0_40 = arith.constant 0 : index
    %c127 = arith.constant 127 : index
    %54 = vector.load %arg10[%c0_40, %c127] : memref<16x384xf32, #tpu.memory_space<vmem>>, vector<16x128xf32>
    %c3 = arith.constant 3 : index
    %c0_41 = arith.constant 0 : index
    %c0_42 = arith.constant 0 : index
    %55 = vector.load %arg8[%c3, %c0_41, %c0_42] : memref<9x1x128xf32, #tpu.memory_space<vmem>>, vector<1x1x128xf32>
    %56 = vector.shape_cast %55 : vector<1x1x128xf32> to vector<1x128xf32>
    %57 = vector.broadcast %56 : vector<1x128xf32> to vector<16x128xf32>
    %58 = arith.mulf %54, %57 : vector<16x128xf32>
    %c3_43 = arith.constant 3 : index
    %c0_44 = arith.constant 0 : index
    %c0_45 = arith.constant 0 : index
    %59 = vector.load %arg7[%c3_43, %c0_44, %c0_45] : memref<9x8x16xbf16, #tpu.memory_space<vmem>>, vector<1x8x16xbf16>
    %60 = vector.shape_cast %59 : vector<1x8x16xbf16> to vector<8x16xbf16>
    %61 = arith.truncf %58 : vector<16x128xf32> to vector<16x128xbf16>
    %cst_46 = arith.constant dense<0.000000e+00> : vector<8x128xf32>
    %62 = tpu.matmul %60, %61, %cst_46 {dimension_numbers = #tpu.dot_dimension_numbers<[1], [0], [0], [1], [0, 0, 1, 1], [], []>} : vector<8x16xbf16>, vector<16x128xbf16>, vector<8x128xf32> -> vector<8x128xf32>
    %63 = arith.addf %53, %62 : vector<8x128xf32>
    %c0_47 = arith.constant 0 : index
    %c128_48 = arith.constant 128 : index
    %64 = vector.load %arg10[%c0_47, %c128_48] : memref<16x384xf32, #tpu.memory_space<vmem>>, vector<16x128xf32>
    %c4 = arith.constant 4 : index
    %c0_49 = arith.constant 0 : index
    %c0_50 = arith.constant 0 : index
    %65 = vector.load %arg8[%c4, %c0_49, %c0_50] : memref<9x1x128xf32, #tpu.memory_space<vmem>>, vector<1x1x128xf32>
    %66 = vector.shape_cast %65 : vector<1x1x128xf32> to vector<1x128xf32>
    %67 = vector.broadcast %66 : vector<1x128xf32> to vector<16x128xf32>
    %68 = arith.mulf %64, %67 : vector<16x128xf32>
    %c4_51 = arith.constant 4 : index
    %c0_52 = arith.constant 0 : index
    %c0_53 = arith.constant 0 : index
    %69 = vector.load %arg7[%c4_51, %c0_52, %c0_53] : memref<9x8x16xbf16, #tpu.memory_space<vmem>>, vector<1x8x16xbf16>
    %70 = vector.shape_cast %69 : vector<1x8x16xbf16> to vector<8x16xbf16>
    %71 = arith.truncf %68 : vector<16x128xf32> to vector<16x128xbf16>
    %cst_54 = arith.constant dense<0.000000e+00> : vector<8x128xf32>
    %72 = tpu.matmul %70, %71, %cst_54 {dimension_numbers = #tpu.dot_dimension_numbers<[1], [0], [0], [1], [0, 0, 1, 1], [], []>} : vector<8x16xbf16>, vector<16x128xbf16>, vector<8x128xf32> -> vector<8x128xf32>
    %73 = arith.addf %63, %72 : vector<8x128xf32>
    %c0_55 = arith.constant 0 : index
    %c129 = arith.constant 129 : index
    %74 = vector.load %arg10[%c0_55, %c129] : memref<16x384xf32, #tpu.memory_space<vmem>>, vector<16x128xf32>
    %c5 = arith.constant 5 : index
    %c0_56 = arith.constant 0 : index
    %c0_57 = arith.constant 0 : index
    %75 = vector.load %arg8[%c5, %c0_56, %c0_57] : memref<9x1x128xf32, #tpu.memory_space<vmem>>, vector<1x1x128xf32>
    %76 = vector.shape_cast %75 : vector<1x1x128xf32> to vector<1x128xf32>
    %77 = vector.broadcast %76 : vector<1x128xf32> to vector<16x128xf32>
    %78 = arith.mulf %74, %77 : vector<16x128xf32>
    %c5_58 = arith.constant 5 : index
    %c0_59 = arith.constant 0 : index
    %c0_60 = arith.constant 0 : index
    %79 = vector.load %arg7[%c5_58, %c0_59, %c0_60] : memref<9x8x16xbf16, #tpu.memory_space<vmem>>, vector<1x8x16xbf16>
    %80 = vector.shape_cast %79 : vector<1x8x16xbf16> to vector<8x16xbf16>
    %81 = arith.truncf %78 : vector<16x128xf32> to vector<16x128xbf16>
    %cst_61 = arith.constant dense<0.000000e+00> : vector<8x128xf32>
    %82 = tpu.matmul %80, %81, %cst_61 {dimension_numbers = #tpu.dot_dimension_numbers<[1], [0], [0], [1], [0, 0, 1, 1], [], []>} : vector<8x16xbf16>, vector<16x128xbf16>, vector<8x128xf32> -> vector<8x128xf32>
    %83 = arith.addf %73, %82 : vector<8x128xf32>
    %c0_62 = arith.constant 0 : index
    %c135 = arith.constant 135 : index
    %84 = vector.load %arg10[%c0_62, %c135] : memref<16x384xf32, #tpu.memory_space<vmem>>, vector<16x128xf32>
    %c6 = arith.constant 6 : index
    %c0_63 = arith.constant 0 : index
    %c0_64 = arith.constant 0 : index
    %85 = vector.load %arg8[%c6, %c0_63, %c0_64] : memref<9x1x128xf32, #tpu.memory_space<vmem>>, vector<1x1x128xf32>
    %86 = vector.shape_cast %85 : vector<1x1x128xf32> to vector<1x128xf32>
    %87 = vector.broadcast %86 : vector<1x128xf32> to vector<16x128xf32>
    %88 = arith.mulf %84, %87 : vector<16x128xf32>
    %c6_65 = arith.constant 6 : index
    %c0_66 = arith.constant 0 : index
    %c0_67 = arith.constant 0 : index
    %89 = vector.load %arg7[%c6_65, %c0_66, %c0_67] : memref<9x8x16xbf16, #tpu.memory_space<vmem>>, vector<1x8x16xbf16>
    %90 = vector.shape_cast %89 : vector<1x8x16xbf16> to vector<8x16xbf16>
    %91 = arith.truncf %88 : vector<16x128xf32> to vector<16x128xbf16>
    %cst_68 = arith.constant dense<0.000000e+00> : vector<8x128xf32>
    %92 = tpu.matmul %90, %91, %cst_68 {dimension_numbers = #tpu.dot_dimension_numbers<[1], [0], [0], [1], [0, 0, 1, 1], [], []>} : vector<8x16xbf16>, vector<16x128xbf16>, vector<8x128xf32> -> vector<8x128xf32>
    %93 = arith.addf %83, %92 : vector<8x128xf32>
    %c0_69 = arith.constant 0 : index
    %c136 = arith.constant 136 : index
    %94 = vector.load %arg10[%c0_69, %c136] : memref<16x384xf32, #tpu.memory_space<vmem>>, vector<16x128xf32>
    %c7 = arith.constant 7 : index
    %c0_70 = arith.constant 0 : index
    %c0_71 = arith.constant 0 : index
    %95 = vector.load %arg8[%c7, %c0_70, %c0_71] : memref<9x1x128xf32, #tpu.memory_space<vmem>>, vector<1x1x128xf32>
    %96 = vector.shape_cast %95 : vector<1x1x128xf32> to vector<1x128xf32>
    %97 = vector.broadcast %96 : vector<1x128xf32> to vector<16x128xf32>
    %98 = arith.mulf %94, %97 : vector<16x128xf32>
    %c7_72 = arith.constant 7 : index
    %c0_73 = arith.constant 0 : index
    %c0_74 = arith.constant 0 : index
    %99 = vector.load %arg7[%c7_72, %c0_73, %c0_74] : memref<9x8x16xbf16, #tpu.memory_space<vmem>>, vector<1x8x16xbf16>
    %100 = vector.shape_cast %99 : vector<1x8x16xbf16> to vector<8x16xbf16>
    %101 = arith.truncf %98 : vector<16x128xf32> to vector<16x128xbf16>
    %cst_75 = arith.constant dense<0.000000e+00> : vector<8x128xf32>
    %102 = tpu.matmul %100, %101, %cst_75 {dimension_numbers = #tpu.dot_dimension_numbers<[1], [0], [0], [1], [0, 0, 1, 1], [], []>} : vector<8x16xbf16>, vector<16x128xbf16>, vector<8x128xf32> -> vector<8x128xf32>
    %103 = arith.addf %93, %102 : vector<8x128xf32>
    %c0_76 = arith.constant 0 : index
    %c137 = arith.constant 137 : index
    %104 = vector.load %arg10[%c0_76, %c137] : memref<16x384xf32, #tpu.memory_space<vmem>>, vector<16x128xf32>
    %c8 = arith.constant 8 : index
    %c0_77 = arith.constant 0 : index
    %c0_78 = arith.constant 0 : index
    %105 = vector.load %arg8[%c8, %c0_77, %c0_78] : memref<9x1x128xf32, #tpu.memory_space<vmem>>, vector<1x1x128xf32>
    %106 = vector.shape_cast %105 : vector<1x1x128xf32> to vector<1x128xf32>
    %107 = vector.broadcast %106 : vector<1x128xf32> to vector<16x128xf32>
    %108 = arith.mulf %104, %107 : vector<16x128xf32>
    %c8_79 = arith.constant 8 : index
    %c0_80 = arith.constant 0 : index
    %c0_81 = arith.constant 0 : index
    %109 = vector.load %arg7[%c8_79, %c0_80, %c0_81] : memref<9x8x16xbf16, #tpu.memory_space<vmem>>, vector<1x8x16xbf16>
    %110 = vector.shape_cast %109 : vector<1x8x16xbf16> to vector<8x16xbf16>
    %111 = arith.truncf %108 : vector<16x128xf32> to vector<16x128xbf16>
    %cst_82 = arith.constant dense<0.000000e+00> : vector<8x128xf32>
    %112 = tpu.matmul %110, %111, %cst_82 {dimension_numbers = #tpu.dot_dimension_numbers<[1], [0], [0], [1], [0, 0, 1, 1], [], []>} : vector<8x16xbf16>, vector<16x128xbf16>, vector<8x128xf32> -> vector<8x128xf32>
    %113 = arith.addf %103, %112 : vector<8x128xf32>
    %c0_83 = arith.constant 0 : index
    %c0_84 = arith.constant 0 : index
    %114 = vector.load %arg9[%c0_83, %c0_84] : memref<8x128xf32, #tpu.memory_space<vmem>>, vector<8x128xf32>
    tpu.vector_store %arg9[%c0_83, %c0_84], %113 {strides = array<i32>} : memref<8x128xf32, #tpu.memory_space<vmem>>, vector<8x128xf32>,
    return
  }
  func.func @transform_0(%arg0: i32) -> (i32, i32) {
    %c0_i32 = arith.constant 0 : i32
    %c0_i32_0 = arith.constant 0 : i32
    %c0_i32_1 = arith.constant 0 : i32
    return %c0_i32, %c0_i32_0 : i32, i32
  }
  func.func @transform_1(%arg0: i32) -> (i32, i32) {
    %c0_i32 = arith.constant 0 : i32
    %c0_i32_0 = arith.constant 0 : i32
    %c0_i32_1 = arith.constant 0 : i32
    return %c0_i32, %c0_i32_0 : i32, i32
  }
  func.func @transform_2(%arg0: i32) -> (i32, i32) {
    %c0_i32 = arith.constant 0 : i32
    %c0_i32_0 = arith.constant 0 : i32
    %c0_i32_1 = arith.constant 0 : i32
    return %c0_i32, %c0_i32_0 : i32, i32
  }
  func.func @transform_3(%arg0: i32) -> (i32, i32) {
    %c0_i32 = arith.constant 0 : i32
    %c0_i32_0 = arith.constant 0 : i32
    %c0_i32_1 = arith.constant 0 : i32
    return %c0_i32, %c0_i32_0 : i32, i32
  }
  func.func @transform_4(%arg0: i32) -> (i32, i32) {
    %c0_i32 = arith.constant 0 : i32
    %c0_i32_0 = arith.constant 0 : i32
    %c0_i32_1 = arith.constant 0 : i32
    return %c0_i32, %c0_i32_0 : i32, i32
  }
  func.func @transform_5(%arg0: i32) -> (i32, i32) {
    %c0_i32 = arith.constant 0 : i32
    %c0_i32_0 = arith.constant 0 : i32
    %c0_i32_1 = arith.constant 0 : i32
    return %c0_i32, %c0_i32_0 : i32, i32
  }
  func.func @transform_6(%arg0: i32) -> (i32, i32, i32) {
    %c0_i32 = arith.constant 0 : i32
    %c0_i32_0 = arith.constant 0 : i32
    %c0_i32_1 = arith.constant 0 : i32
    %c0_i32_2 = arith.constant 0 : i32
    return %c0_i32, %c0_i32_0, %c0_i32_1 : i32, i32, i32
  }
  func.func @transform_7(%arg0: i32) -> (i32, i32, i32) {
    %c0_i32 = arith.constant 0 : i32
    %c0_i32_0 = arith.constant 0 : i32
    %c0_i32_1 = arith.constant 0 : i32
    %c0_i32_2 = arith.constant 0 : i32
    return %c0_i32, %c0_i32_0, %c0_i32_1 : i32, i32, i32
  }
  func.func @transform_8(%arg0: i32) -> (i32, i32) {
    %c3_i32 = arith.constant 3 : i32
    %c0_i32 = arith.constant 0 : i32
    %c0_i32_0 = arith.constant 0 : i32
    return %c3_i32, %c0_i32 : i32, i32
  }
}

module attributes {stable_mosaic.version = 11 : i64} {
  func.func @_bnrelu_matmul_kernel(%arg0: i32, %arg1: memref<32x32xf32, #tpu.memory_space<vmem>>, %arg2: memref<32x1xf32, #tpu.memory_space<vmem>>, %arg3: memref<32x1xf32, #tpu.memory_space<vmem>>, %arg4: memref<16x32xbf16, #tpu.memory_space<vmem>>, %arg5: memref<16x32xf32, #tpu.memory_space<vmem>>) attributes {dimension_semantics = [#tpu.dimension_semantics<parallel>], iteration_bounds = array<i64: 1>, scalar_prefetch = 0 : i64, scratch_operands = 0 : i64, tpu.core_type = #tpu.core_type<tc>, window_params = [{transform_indices = @transform_0, window_bounds = array<i64: 32, 32>}, {pipeline_mode = #tpu.pipeline_mode<synchronous>, transform_indices = @transform_1, window_bounds = array<i64: 32, 1>}, {pipeline_mode = #tpu.pipeline_mode<synchronous>, transform_indices = @transform_2, window_bounds = array<i64: 32, 1>}, {pipeline_mode = #tpu.pipeline_mode<synchronous>, transform_indices = @transform_3, window_bounds = array<i64: 16, 32>}, {transform_indices = @transform_4, window_bounds = array<i64: 16, 32>}]} {
    %c0 = arith.constant 0 : index
    %c0_0 = arith.constant 0 : index
    %0 = vector.load %arg1[%c0, %c0_0] : memref<32x32xf32, #tpu.memory_space<vmem>>, vector<32x32xf32>
    %c0_1 = arith.constant 0 : index
    %c0_2 = arith.constant 0 : index
    %1 = vector.load %arg2[%c0_1, %c0_2] : memref<32x1xf32, #tpu.memory_space<vmem>>, vector<32x1xf32>
    %2 = vector.broadcast %1 : vector<32x1xf32> to vector<32x32xf32>
    %3 = arith.mulf %0, %2 : vector<32x32xf32>
    %c0_3 = arith.constant 0 : index
    %c0_4 = arith.constant 0 : index
    %4 = vector.load %arg3[%c0_3, %c0_4] : memref<32x1xf32, #tpu.memory_space<vmem>>, vector<32x1xf32>
    %5 = vector.broadcast %4 : vector<32x1xf32> to vector<32x32xf32>
    %6 = arith.addf %3, %5 : vector<32x32xf32>
    %cst = arith.constant 0.000000e+00 : f32
    %7 = vector.broadcast %cst : f32 to vector<32x32xf32>
    %8 = arith.maximumf %6, %7 : vector<32x32xf32>
    %c0_5 = arith.constant 0 : index
    %c0_6 = arith.constant 0 : index
    %9 = vector.load %arg4[%c0_5, %c0_6] : memref<16x32xbf16, #tpu.memory_space<vmem>>, vector<16x32xbf16>
    %10 = arith.truncf %8 : vector<32x32xf32> to vector<32x32xbf16>
    %cst_7 = arith.constant dense<0.000000e+00> : vector<16x32xf32>
    %11 = tpu.matmul %9, %10, %cst_7 {dimension_numbers = #tpu.dot_dimension_numbers<[1], [0], [0], [1], [0, 0, 1, 1], [], []>} : vector<16x32xbf16>, vector<32x32xbf16>, vector<16x32xf32> -> vector<16x32xf32>
    %c0_8 = arith.constant 0 : index
    %c0_9 = arith.constant 0 : index
    %12 = vector.load %arg5[%c0_8, %c0_9] : memref<16x32xf32, #tpu.memory_space<vmem>>, vector<16x32xf32>
    tpu.vector_store %arg5[%c0_8, %c0_9], %11 {strides = array<i32>} : memref<16x32xf32, #tpu.memory_space<vmem>>, vector<16x32xf32>,
    return
  }
  func.func @transform_0(%arg0: i32) -> (i32, i32) {
    %c0_i32 = arith.constant 0 : i32
    %c0_i32_0 = arith.constant 0 : i32
    return %c0_i32, %arg0 : i32, i32
  }
  func.func @transform_1(%arg0: i32) -> (i32, i32) {
    %c0_i32 = arith.constant 0 : i32
    %c0_i32_0 = arith.constant 0 : i32
    %c0_i32_1 = arith.constant 0 : i32
    return %c0_i32, %c0_i32_0 : i32, i32
  }
  func.func @transform_2(%arg0: i32) -> (i32, i32) {
    %c0_i32 = arith.constant 0 : i32
    %c0_i32_0 = arith.constant 0 : i32
    %c0_i32_1 = arith.constant 0 : i32
    return %c0_i32, %c0_i32_0 : i32, i32
  }
  func.func @transform_3(%arg0: i32) -> (i32, i32) {
    %c0_i32 = arith.constant 0 : i32
    %c0_i32_0 = arith.constant 0 : i32
    %c0_i32_1 = arith.constant 0 : i32
    return %c0_i32, %c0_i32_0 : i32, i32
  }
  func.func @transform_4(%arg0: i32) -> (i32, i32) {
    %c0_i32 = arith.constant 0 : i32
    %c0_i32_0 = arith.constant 0 : i32
    return %c0_i32, %arg0 : i32, i32
  }
}

module attributes {stable_mosaic.version = 11 : i64} {
  func.func @kernel(%arg0: i32, %arg1: memref<16x32xf32, #tpu.memory_space<vmem>>, %arg2: memref<16x1xf32, #tpu.memory_space<vmem>>, %arg3: memref<16x1xf32, #tpu.memory_space<vmem>>, %arg4: memref<16x16xbf16, #tpu.memory_space<vmem>>, %arg5: memref<16x1xf32, #tpu.memory_space<vmem>>, %arg6: memref<16x1xf32, #tpu.memory_space<vmem>>, %arg7: memref<9x8x16xbf16, #tpu.memory_space<vmem>>, %arg8: memref<9x1x32xf32, #tpu.memory_space<vmem>>, %arg9: memref<8x32xf32, #tpu.memory_space<vmem>>, %arg10: memref<16x288xf32, #tpu.memory_space<vmem>>) attributes {dimension_semantics = [#tpu.dimension_semantics<arbitrary>], iteration_bounds = array<i64: 1>, scalar_prefetch = 0 : i64, scratch_operands = 1 : i64, tpu.core_type = #tpu.core_type<tc>, window_params = [{transform_indices = @transform_0, window_bounds = array<i64: 16, 32>}, {pipeline_mode = #tpu.pipeline_mode<synchronous>, transform_indices = @transform_1, window_bounds = array<i64: 16, 1>}, {pipeline_mode = #tpu.pipeline_mode<synchronous>, transform_indices = @transform_2, window_bounds = array<i64: 16, 1>}, {pipeline_mode = #tpu.pipeline_mode<synchronous>, transform_indices = @transform_3, window_bounds = array<i64: 16, 16>}, {pipeline_mode = #tpu.pipeline_mode<synchronous>, transform_indices = @transform_4, window_bounds = array<i64: 16, 1>}, {pipeline_mode = #tpu.pipeline_mode<synchronous>, transform_indices = @transform_5, window_bounds = array<i64: 16, 1>}, {pipeline_mode = #tpu.pipeline_mode<synchronous>, transform_indices = @transform_6, window_bounds = array<i64: 9, 8, 16>}, {pipeline_mode = #tpu.pipeline_mode<synchronous>, transform_indices = @transform_7, window_bounds = array<i64: 9, 1, 32>}, {transform_indices = @transform_8, window_bounds = array<i64: 8, 32>}]} {
    %c0 = arith.constant 0 : index
    %c0_0 = arith.constant 0 : index
    %0 = vector.load %arg1[%c0, %c0_0] : memref<16x32xf32, #tpu.memory_space<vmem>>, vector<16x32xf32>
    %c0_1 = arith.constant 0 : index
    %c0_2 = arith.constant 0 : index
    %1 = vector.load %arg2[%c0_1, %c0_2] : memref<16x1xf32, #tpu.memory_space<vmem>>, vector<16x1xf32>
    %2 = vector.broadcast %1 : vector<16x1xf32> to vector<16x32xf32>
    %3 = arith.mulf %0, %2 : vector<16x32xf32>
    %c0_3 = arith.constant 0 : index
    %c0_4 = arith.constant 0 : index
    %4 = vector.load %arg3[%c0_3, %c0_4] : memref<16x1xf32, #tpu.memory_space<vmem>>, vector<16x1xf32>
    %5 = vector.broadcast %4 : vector<16x1xf32> to vector<16x32xf32>
    %6 = arith.addf %3, %5 : vector<16x32xf32>
    %cst = arith.constant 0.000000e+00 : f32
    %7 = vector.broadcast %cst : f32 to vector<16x32xf32>
    %8 = arith.maximumf %6, %7 : vector<16x32xf32>
    %c0_5 = arith.constant 0 : index
    %c0_6 = arith.constant 0 : index
    %9 = vector.load %arg4[%c0_5, %c0_6] : memref<16x16xbf16, #tpu.memory_space<vmem>>, vector<16x16xbf16>
    %10 = arith.truncf %8 : vector<16x32xf32> to vector<16x32xbf16>
    %cst_7 = arith.constant dense<0.000000e+00> : vector<16x32xf32>
    %11 = tpu.matmul %9, %10, %cst_7 {dimension_numbers = #tpu.dot_dimension_numbers<[1], [0], [0], [1], [0, 0, 1, 1], [], []>} : vector<16x16xbf16>, vector<16x32xbf16>, vector<16x32xf32> -> vector<16x32xf32>
    %c0_8 = arith.constant 0 : index
    %c0_9 = arith.constant 0 : index
    %12 = vector.load %arg5[%c0_8, %c0_9] : memref<16x1xf32, #tpu.memory_space<vmem>>, vector<16x1xf32>
    %13 = vector.broadcast %12 : vector<16x1xf32> to vector<16x32xf32>
    %14 = arith.mulf %11, %13 : vector<16x32xf32>
    %c0_10 = arith.constant 0 : index
    %c0_11 = arith.constant 0 : index
    %15 = vector.load %arg6[%c0_10, %c0_11] : memref<16x1xf32, #tpu.memory_space<vmem>>, vector<16x1xf32>
    %16 = vector.broadcast %15 : vector<16x1xf32> to vector<16x32xf32>
    %17 = arith.addf %14, %16 : vector<16x32xf32>
    %cst_12 = arith.constant 0.000000e+00 : f32
    %18 = vector.broadcast %cst_12 : f32 to vector<16x32xf32>
    %19 = arith.maximumf %17, %18 : vector<16x32xf32>
    %cst_13 = arith.constant 0.000000e+00 : f32
    %20 = vector.broadcast %cst_13 : f32 to vector<16x288xf32>
    %c0_14 = arith.constant 0 : index
    %c0_15 = arith.constant 0 : index
    %21 = vector.load %arg10[%c0_14, %c0_15] : memref<16x288xf32, #tpu.memory_space<vmem>>, vector<16x288xf32>
    tpu.vector_store %arg10[%c0_14, %c0_15], %20 {strides = array<i32>} : memref<16x288xf32, #tpu.memory_space<vmem>>, vector<16x288xf32>,
    %c0_16 = arith.constant 0 : index
    %c128 = arith.constant 128 : index
    %22 = vector.load %arg10[%c0_16, %c128] : memref<16x288xf32, #tpu.memory_space<vmem>>, vector<16x32xf32>
    tpu.vector_store %arg10[%c0_16, %c128], %19 {strides = array<i32>} : memref<16x288xf32, #tpu.memory_space<vmem>>, vector<16x32xf32>,
    %cst_17 = arith.constant 0.000000e+00 : f32
    %23 = vector.broadcast %cst_17 : f32 to vector<8x32xf32>
    %c0_18 = arith.constant 0 : index
    %c123 = arith.constant 123 : index
    %24 = vector.load %arg10[%c0_18, %c123] : memref<16x288xf32, #tpu.memory_space<vmem>>, vector<16x32xf32>
    %c0_19 = arith.constant 0 : index
    %c0_20 = arith.constant 0 : index
    %c0_21 = arith.constant 0 : index
    %25 = vector.load %arg8[%c0_19, %c0_20, %c0_21] : memref<9x1x32xf32, #tpu.memory_space<vmem>>, vector<1x1x32xf32>
    %26 = vector.shape_cast %25 : vector<1x1x32xf32> to vector<1x32xf32>
    %27 = vector.broadcast %26 : vector<1x32xf32> to vector<16x32xf32>
    %28 = arith.mulf %24, %27 : vector<16x32xf32>
    %c0_22 = arith.constant 0 : index
    %c0_23 = arith.constant 0 : index
    %c0_24 = arith.constant 0 : index
    %29 = vector.load %arg7[%c0_22, %c0_23, %c0_24] : memref<9x8x16xbf16, #tpu.memory_space<vmem>>, vector<1x8x16xbf16>
    %30 = vector.shape_cast %29 : vector<1x8x16xbf16> to vector<8x16xbf16>
    %31 = arith.truncf %28 : vector<16x32xf32> to vector<16x32xbf16>
    %cst_25 = arith.constant dense<0.000000e+00> : vector<8x32xf32>
    %32 = tpu.matmul %30, %31, %cst_25 {dimension_numbers = #tpu.dot_dimension_numbers<[1], [0], [0], [1], [0, 0, 1, 1], [], []>} : vector<8x16xbf16>, vector<16x32xbf16>, vector<8x32xf32> -> vector<8x32xf32>
    %33 = arith.addf %23, %32 : vector<8x32xf32>
    %c0_26 = arith.constant 0 : index
    %c124 = arith.constant 124 : index
    %34 = vector.load %arg10[%c0_26, %c124] : memref<16x288xf32, #tpu.memory_space<vmem>>, vector<16x32xf32>
    %c1 = arith.constant 1 : index
    %c0_27 = arith.constant 0 : index
    %c0_28 = arith.constant 0 : index
    %35 = vector.load %arg8[%c1, %c0_27, %c0_28] : memref<9x1x32xf32, #tpu.memory_space<vmem>>, vector<1x1x32xf32>
    %36 = vector.shape_cast %35 : vector<1x1x32xf32> to vector<1x32xf32>
    %37 = vector.broadcast %36 : vector<1x32xf32> to vector<16x32xf32>
    %38 = arith.mulf %34, %37 : vector<16x32xf32>
    %c1_29 = arith.constant 1 : index
    %c0_30 = arith.constant 0 : index
    %c0_31 = arith.constant 0 : index
    %39 = vector.load %arg7[%c1_29, %c0_30, %c0_31] : memref<9x8x16xbf16, #tpu.memory_space<vmem>>, vector<1x8x16xbf16>
    %40 = vector.shape_cast %39 : vector<1x8x16xbf16> to vector<8x16xbf16>
    %41 = arith.truncf %38 : vector<16x32xf32> to vector<16x32xbf16>
    %cst_32 = arith.constant dense<0.000000e+00> : vector<8x32xf32>
    %42 = tpu.matmul %40, %41, %cst_32 {dimension_numbers = #tpu.dot_dimension_numbers<[1], [0], [0], [1], [0, 0, 1, 1], [], []>} : vector<8x16xbf16>, vector<16x32xbf16>, vector<8x32xf32> -> vector<8x32xf32>
    %43 = arith.addf %33, %42 : vector<8x32xf32>
    %c0_33 = arith.constant 0 : index
    %c125 = arith.constant 125 : index
    %44 = vector.load %arg10[%c0_33, %c125] : memref<16x288xf32, #tpu.memory_space<vmem>>, vector<16x32xf32>
    %c2 = arith.constant 2 : index
    %c0_34 = arith.constant 0 : index
    %c0_35 = arith.constant 0 : index
    %45 = vector.load %arg8[%c2, %c0_34, %c0_35] : memref<9x1x32xf32, #tpu.memory_space<vmem>>, vector<1x1x32xf32>
    %46 = vector.shape_cast %45 : vector<1x1x32xf32> to vector<1x32xf32>
    %47 = vector.broadcast %46 : vector<1x32xf32> to vector<16x32xf32>
    %48 = arith.mulf %44, %47 : vector<16x32xf32>
    %c2_36 = arith.constant 2 : index
    %c0_37 = arith.constant 0 : index
    %c0_38 = arith.constant 0 : index
    %49 = vector.load %arg7[%c2_36, %c0_37, %c0_38] : memref<9x8x16xbf16, #tpu.memory_space<vmem>>, vector<1x8x16xbf16>
    %50 = vector.shape_cast %49 : vector<1x8x16xbf16> to vector<8x16xbf16>
    %51 = arith.truncf %48 : vector<16x32xf32> to vector<16x32xbf16>
    %cst_39 = arith.constant dense<0.000000e+00> : vector<8x32xf32>
    %52 = tpu.matmul %50, %51, %cst_39 {dimension_numbers = #tpu.dot_dimension_numbers<[1], [0], [0], [1], [0, 0, 1, 1], [], []>} : vector<8x16xbf16>, vector<16x32xbf16>, vector<8x32xf32> -> vector<8x32xf32>
    %53 = arith.addf %43, %52 : vector<8x32xf32>
    %c0_40 = arith.constant 0 : index
    %c127 = arith.constant 127 : index
    %54 = vector.load %arg10[%c0_40, %c127] : memref<16x288xf32, #tpu.memory_space<vmem>>, vector<16x32xf32>
    %c3 = arith.constant 3 : index
    %c0_41 = arith.constant 0 : index
    %c0_42 = arith.constant 0 : index
    %55 = vector.load %arg8[%c3, %c0_41, %c0_42] : memref<9x1x32xf32, #tpu.memory_space<vmem>>, vector<1x1x32xf32>
    %56 = vector.shape_cast %55 : vector<1x1x32xf32> to vector<1x32xf32>
    %57 = vector.broadcast %56 : vector<1x32xf32> to vector<16x32xf32>
    %58 = arith.mulf %54, %57 : vector<16x32xf32>
    %c3_43 = arith.constant 3 : index
    %c0_44 = arith.constant 0 : index
    %c0_45 = arith.constant 0 : index
    %59 = vector.load %arg7[%c3_43, %c0_44, %c0_45] : memref<9x8x16xbf16, #tpu.memory_space<vmem>>, vector<1x8x16xbf16>
    %60 = vector.shape_cast %59 : vector<1x8x16xbf16> to vector<8x16xbf16>
    %61 = arith.truncf %58 : vector<16x32xf32> to vector<16x32xbf16>
    %cst_46 = arith.constant dense<0.000000e+00> : vector<8x32xf32>
    %62 = tpu.matmul %60, %61, %cst_46 {dimension_numbers = #tpu.dot_dimension_numbers<[1], [0], [0], [1], [0, 0, 1, 1], [], []>} : vector<8x16xbf16>, vector<16x32xbf16>, vector<8x32xf32> -> vector<8x32xf32>
    %63 = arith.addf %53, %62 : vector<8x32xf32>
    %c0_47 = arith.constant 0 : index
    %c128_48 = arith.constant 128 : index
    %64 = vector.load %arg10[%c0_47, %c128_48] : memref<16x288xf32, #tpu.memory_space<vmem>>, vector<16x32xf32>
    %c4 = arith.constant 4 : index
    %c0_49 = arith.constant 0 : index
    %c0_50 = arith.constant 0 : index
    %65 = vector.load %arg8[%c4, %c0_49, %c0_50] : memref<9x1x32xf32, #tpu.memory_space<vmem>>, vector<1x1x32xf32>
    %66 = vector.shape_cast %65 : vector<1x1x32xf32> to vector<1x32xf32>
    %67 = vector.broadcast %66 : vector<1x32xf32> to vector<16x32xf32>
    %68 = arith.mulf %64, %67 : vector<16x32xf32>
    %c4_51 = arith.constant 4 : index
    %c0_52 = arith.constant 0 : index
    %c0_53 = arith.constant 0 : index
    %69 = vector.load %arg7[%c4_51, %c0_52, %c0_53] : memref<9x8x16xbf16, #tpu.memory_space<vmem>>, vector<1x8x16xbf16>
    %70 = vector.shape_cast %69 : vector<1x8x16xbf16> to vector<8x16xbf16>
    %71 = arith.truncf %68 : vector<16x32xf32> to vector<16x32xbf16>
    %cst_54 = arith.constant dense<0.000000e+00> : vector<8x32xf32>
    %72 = tpu.matmul %70, %71, %cst_54 {dimension_numbers = #tpu.dot_dimension_numbers<[1], [0], [0], [1], [0, 0, 1, 1], [], []>} : vector<8x16xbf16>, vector<16x32xbf16>, vector<8x32xf32> -> vector<8x32xf32>
    %73 = arith.addf %63, %72 : vector<8x32xf32>
    %c0_55 = arith.constant 0 : index
    %c129 = arith.constant 129 : index
    %74 = vector.load %arg10[%c0_55, %c129] : memref<16x288xf32, #tpu.memory_space<vmem>>, vector<16x32xf32>
    %c5 = arith.constant 5 : index
    %c0_56 = arith.constant 0 : index
    %c0_57 = arith.constant 0 : index
    %75 = vector.load %arg8[%c5, %c0_56, %c0_57] : memref<9x1x32xf32, #tpu.memory_space<vmem>>, vector<1x1x32xf32>
    %76 = vector.shape_cast %75 : vector<1x1x32xf32> to vector<1x32xf32>
    %77 = vector.broadcast %76 : vector<1x32xf32> to vector<16x32xf32>
    %78 = arith.mulf %74, %77 : vector<16x32xf32>
    %c5_58 = arith.constant 5 : index
    %c0_59 = arith.constant 0 : index
    %c0_60 = arith.constant 0 : index
    %79 = vector.load %arg7[%c5_58, %c0_59, %c0_60] : memref<9x8x16xbf16, #tpu.memory_space<vmem>>, vector<1x8x16xbf16>
    %80 = vector.shape_cast %79 : vector<1x8x16xbf16> to vector<8x16xbf16>
    %81 = arith.truncf %78 : vector<16x32xf32> to vector<16x32xbf16>
    %cst_61 = arith.constant dense<0.000000e+00> : vector<8x32xf32>
    %82 = tpu.matmul %80, %81, %cst_61 {dimension_numbers = #tpu.dot_dimension_numbers<[1], [0], [0], [1], [0, 0, 1, 1], [], []>} : vector<8x16xbf16>, vector<16x32xbf16>, vector<8x32xf32> -> vector<8x32xf32>
    %83 = arith.addf %73, %82 : vector<8x32xf32>
    %c0_62 = arith.constant 0 : index
    %c131 = arith.constant 131 : index
    %84 = vector.load %arg10[%c0_62, %c131] : memref<16x288xf32, #tpu.memory_space<vmem>>, vector<16x32xf32>
    %c6 = arith.constant 6 : index
    %c0_63 = arith.constant 0 : index
    %c0_64 = arith.constant 0 : index
    %85 = vector.load %arg8[%c6, %c0_63, %c0_64] : memref<9x1x32xf32, #tpu.memory_space<vmem>>, vector<1x1x32xf32>
    %86 = vector.shape_cast %85 : vector<1x1x32xf32> to vector<1x32xf32>
    %87 = vector.broadcast %86 : vector<1x32xf32> to vector<16x32xf32>
    %88 = arith.mulf %84, %87 : vector<16x32xf32>
    %c6_65 = arith.constant 6 : index
    %c0_66 = arith.constant 0 : index
    %c0_67 = arith.constant 0 : index
    %89 = vector.load %arg7[%c6_65, %c0_66, %c0_67] : memref<9x8x16xbf16, #tpu.memory_space<vmem>>, vector<1x8x16xbf16>
    %90 = vector.shape_cast %89 : vector<1x8x16xbf16> to vector<8x16xbf16>
    %91 = arith.truncf %88 : vector<16x32xf32> to vector<16x32xbf16>
    %cst_68 = arith.constant dense<0.000000e+00> : vector<8x32xf32>
    %92 = tpu.matmul %90, %91, %cst_68 {dimension_numbers = #tpu.dot_dimension_numbers<[1], [0], [0], [1], [0, 0, 1, 1], [], []>} : vector<8x16xbf16>, vector<16x32xbf16>, vector<8x32xf32> -> vector<8x32xf32>
    %93 = arith.addf %83, %92 : vector<8x32xf32>
    %c0_69 = arith.constant 0 : index
    %c132 = arith.constant 132 : index
    %94 = vector.load %arg10[%c0_69, %c132] : memref<16x288xf32, #tpu.memory_space<vmem>>, vector<16x32xf32>
    %c7 = arith.constant 7 : index
    %c0_70 = arith.constant 0 : index
    %c0_71 = arith.constant 0 : index
    %95 = vector.load %arg8[%c7, %c0_70, %c0_71] : memref<9x1x32xf32, #tpu.memory_space<vmem>>, vector<1x1x32xf32>
    %96 = vector.shape_cast %95 : vector<1x1x32xf32> to vector<1x32xf32>
    %97 = vector.broadcast %96 : vector<1x32xf32> to vector<16x32xf32>
    %98 = arith.mulf %94, %97 : vector<16x32xf32>
    %c7_72 = arith.constant 7 : index
    %c0_73 = arith.constant 0 : index
    %c0_74 = arith.constant 0 : index
    %99 = vector.load %arg7[%c7_72, %c0_73, %c0_74] : memref<9x8x16xbf16, #tpu.memory_space<vmem>>, vector<1x8x16xbf16>
    %100 = vector.shape_cast %99 : vector<1x8x16xbf16> to vector<8x16xbf16>
    %101 = arith.truncf %98 : vector<16x32xf32> to vector<16x32xbf16>
    %cst_75 = arith.constant dense<0.000000e+00> : vector<8x32xf32>
    %102 = tpu.matmul %100, %101, %cst_75 {dimension_numbers = #tpu.dot_dimension_numbers<[1], [0], [0], [1], [0, 0, 1, 1], [], []>} : vector<8x16xbf16>, vector<16x32xbf16>, vector<8x32xf32> -> vector<8x32xf32>
    %103 = arith.addf %93, %102 : vector<8x32xf32>
    %c0_76 = arith.constant 0 : index
    %c133 = arith.constant 133 : index
    %104 = vector.load %arg10[%c0_76, %c133] : memref<16x288xf32, #tpu.memory_space<vmem>>, vector<16x32xf32>
    %c8 = arith.constant 8 : index
    %c0_77 = arith.constant 0 : index
    %c0_78 = arith.constant 0 : index
    %105 = vector.load %arg8[%c8, %c0_77, %c0_78] : memref<9x1x32xf32, #tpu.memory_space<vmem>>, vector<1x1x32xf32>
    %106 = vector.shape_cast %105 : vector<1x1x32xf32> to vector<1x32xf32>
    %107 = vector.broadcast %106 : vector<1x32xf32> to vector<16x32xf32>
    %108 = arith.mulf %104, %107 : vector<16x32xf32>
    %c8_79 = arith.constant 8 : index
    %c0_80 = arith.constant 0 : index
    %c0_81 = arith.constant 0 : index
    %109 = vector.load %arg7[%c8_79, %c0_80, %c0_81] : memref<9x8x16xbf16, #tpu.memory_space<vmem>>, vector<1x8x16xbf16>
    %110 = vector.shape_cast %109 : vector<1x8x16xbf16> to vector<8x16xbf16>
    %111 = arith.truncf %108 : vector<16x32xf32> to vector<16x32xbf16>
    %cst_82 = arith.constant dense<0.000000e+00> : vector<8x32xf32>
    %112 = tpu.matmul %110, %111, %cst_82 {dimension_numbers = #tpu.dot_dimension_numbers<[1], [0], [0], [1], [0, 0, 1, 1], [], []>} : vector<8x16xbf16>, vector<16x32xbf16>, vector<8x32xf32> -> vector<8x32xf32>
    %113 = arith.addf %103, %112 : vector<8x32xf32>
    %c0_83 = arith.constant 0 : index
    %c0_84 = arith.constant 0 : index
    %114 = vector.load %arg9[%c0_83, %c0_84] : memref<8x32xf32, #tpu.memory_space<vmem>>, vector<8x32xf32>
    tpu.vector_store %arg9[%c0_83, %c0_84], %113 {strides = array<i32>} : memref<8x32xf32, #tpu.memory_space<vmem>>, vector<8x32xf32>,
    return
  }
  func.func @transform_0(%arg0: i32) -> (i32, i32) {
    %c0_i32 = arith.constant 0 : i32
    %c0_i32_0 = arith.constant 0 : i32
    %c0_i32_1 = arith.constant 0 : i32
    return %c0_i32, %c0_i32_0 : i32, i32
  }
  func.func @transform_1(%arg0: i32) -> (i32, i32) {
    %c0_i32 = arith.constant 0 : i32
    %c0_i32_0 = arith.constant 0 : i32
    %c0_i32_1 = arith.constant 0 : i32
    return %c0_i32, %c0_i32_0 : i32, i32
  }
  func.func @transform_2(%arg0: i32) -> (i32, i32) {
    %c0_i32 = arith.constant 0 : i32
    %c0_i32_0 = arith.constant 0 : i32
    %c0_i32_1 = arith.constant 0 : i32
    return %c0_i32, %c0_i32_0 : i32, i32
  }
  func.func @transform_3(%arg0: i32) -> (i32, i32) {
    %c0_i32 = arith.constant 0 : i32
    %c0_i32_0 = arith.constant 0 : i32
    %c0_i32_1 = arith.constant 0 : i32
    return %c0_i32, %c0_i32_0 : i32, i32
  }
  func.func @transform_4(%arg0: i32) -> (i32, i32) {
    %c0_i32 = arith.constant 0 : i32
    %c0_i32_0 = arith.constant 0 : i32
    %c0_i32_1 = arith.constant 0 : i32
    return %c0_i32, %c0_i32_0 : i32, i32
  }
  func.func @transform_5(%arg0: i32) -> (i32, i32) {
    %c0_i32 = arith.constant 0 : i32
    %c0_i32_0 = arith.constant 0 : i32
    %c0_i32_1 = arith.constant 0 : i32
    return %c0_i32, %c0_i32_0 : i32, i32
  }
  func.func @transform_6(%arg0: i32) -> (i32, i32, i32) {
    %c0_i32 = arith.constant 0 : i32
    %c0_i32_0 = arith.constant 0 : i32
    %c0_i32_1 = arith.constant 0 : i32
    %c0_i32_2 = arith.constant 0 : i32
    return %c0_i32, %c0_i32_0, %c0_i32_1 : i32, i32, i32
  }
  func.func @transform_7(%arg0: i32) -> (i32, i32, i32) {
    %c0_i32 = arith.constant 0 : i32
    %c0_i32_0 = arith.constant 0 : i32
    %c0_i32_1 = arith.constant 0 : i32
    %c0_i32_2 = arith.constant 0 : i32
    return %c0_i32, %c0_i32_0, %c0_i32_1 : i32, i32, i32
  }
  func.func @transform_8(%arg0: i32) -> (i32, i32) {
    %c2_i32 = arith.constant 2 : i32
    %c0_i32 = arith.constant 0 : i32
    %c0_i32_0 = arith.constant 0 : i32
    return %c2_i32, %c0_i32 : i32, i32
  }
}

module attributes {stable_mosaic.version = 11 : i64} {
  func.func @kernel(%arg0: i32, %arg1: memref<24x32xf32, #tpu.memory_space<vmem>>, %arg2: memref<24x1xf32, #tpu.memory_space<vmem>>, %arg3: memref<24x1xf32, #tpu.memory_space<vmem>>, %arg4: memref<16x24xbf16, #tpu.memory_space<vmem>>, %arg5: memref<16x1xf32, #tpu.memory_space<vmem>>, %arg6: memref<16x1xf32, #tpu.memory_space<vmem>>, %arg7: memref<9x8x16xbf16, #tpu.memory_space<vmem>>, %arg8: memref<9x1x32xf32, #tpu.memory_space<vmem>>, %arg9: memref<8x32xf32, #tpu.memory_space<vmem>>, %arg10: memref<16x288xf32, #tpu.memory_space<vmem>>) attributes {dimension_semantics = [#tpu.dimension_semantics<arbitrary>], iteration_bounds = array<i64: 1>, scalar_prefetch = 0 : i64, scratch_operands = 1 : i64, tpu.core_type = #tpu.core_type<tc>, window_params = [{transform_indices = @transform_0, window_bounds = array<i64: 24, 32>}, {pipeline_mode = #tpu.pipeline_mode<synchronous>, transform_indices = @transform_1, window_bounds = array<i64: 24, 1>}, {pipeline_mode = #tpu.pipeline_mode<synchronous>, transform_indices = @transform_2, window_bounds = array<i64: 24, 1>}, {pipeline_mode = #tpu.pipeline_mode<synchronous>, transform_indices = @transform_3, window_bounds = array<i64: 16, 24>}, {pipeline_mode = #tpu.pipeline_mode<synchronous>, transform_indices = @transform_4, window_bounds = array<i64: 16, 1>}, {pipeline_mode = #tpu.pipeline_mode<synchronous>, transform_indices = @transform_5, window_bounds = array<i64: 16, 1>}, {pipeline_mode = #tpu.pipeline_mode<synchronous>, transform_indices = @transform_6, window_bounds = array<i64: 9, 8, 16>}, {pipeline_mode = #tpu.pipeline_mode<synchronous>, transform_indices = @transform_7, window_bounds = array<i64: 9, 1, 32>}, {transform_indices = @transform_8, window_bounds = array<i64: 8, 32>}]} {
    %c0 = arith.constant 0 : index
    %c0_0 = arith.constant 0 : index
    %0 = vector.load %arg1[%c0, %c0_0] : memref<24x32xf32, #tpu.memory_space<vmem>>, vector<24x32xf32>
    %c0_1 = arith.constant 0 : index
    %c0_2 = arith.constant 0 : index
    %1 = vector.load %arg2[%c0_1, %c0_2] : memref<24x1xf32, #tpu.memory_space<vmem>>, vector<24x1xf32>
    %2 = vector.broadcast %1 : vector<24x1xf32> to vector<24x32xf32>
    %3 = arith.mulf %0, %2 : vector<24x32xf32>
    %c0_3 = arith.constant 0 : index
    %c0_4 = arith.constant 0 : index
    %4 = vector.load %arg3[%c0_3, %c0_4] : memref<24x1xf32, #tpu.memory_space<vmem>>, vector<24x1xf32>
    %5 = vector.broadcast %4 : vector<24x1xf32> to vector<24x32xf32>
    %6 = arith.addf %3, %5 : vector<24x32xf32>
    %cst = arith.constant 0.000000e+00 : f32
    %7 = vector.broadcast %cst : f32 to vector<24x32xf32>
    %8 = arith.maximumf %6, %7 : vector<24x32xf32>
    %c0_5 = arith.constant 0 : index
    %c0_6 = arith.constant 0 : index
    %9 = vector.load %arg4[%c0_5, %c0_6] : memref<16x24xbf16, #tpu.memory_space<vmem>>, vector<16x24xbf16>
    %10 = arith.truncf %8 : vector<24x32xf32> to vector<24x32xbf16>
    %cst_7 = arith.constant dense<0.000000e+00> : vector<16x32xf32>
    %11 = tpu.matmul %9, %10, %cst_7 {dimension_numbers = #tpu.dot_dimension_numbers<[1], [0], [0], [1], [0, 0, 1, 1], [], []>} : vector<16x24xbf16>, vector<24x32xbf16>, vector<16x32xf32> -> vector<16x32xf32>
    %c0_8 = arith.constant 0 : index
    %c0_9 = arith.constant 0 : index
    %12 = vector.load %arg5[%c0_8, %c0_9] : memref<16x1xf32, #tpu.memory_space<vmem>>, vector<16x1xf32>
    %13 = vector.broadcast %12 : vector<16x1xf32> to vector<16x32xf32>
    %14 = arith.mulf %11, %13 : vector<16x32xf32>
    %c0_10 = arith.constant 0 : index
    %c0_11 = arith.constant 0 : index
    %15 = vector.load %arg6[%c0_10, %c0_11] : memref<16x1xf32, #tpu.memory_space<vmem>>, vector<16x1xf32>
    %16 = vector.broadcast %15 : vector<16x1xf32> to vector<16x32xf32>
    %17 = arith.addf %14, %16 : vector<16x32xf32>
    %cst_12 = arith.constant 0.000000e+00 : f32
    %18 = vector.broadcast %cst_12 : f32 to vector<16x32xf32>
    %19 = arith.maximumf %17, %18 : vector<16x32xf32>
    %cst_13 = arith.constant 0.000000e+00 : f32
    %20 = vector.broadcast %cst_13 : f32 to vector<16x288xf32>
    %c0_14 = arith.constant 0 : index
    %c0_15 = arith.constant 0 : index
    %21 = vector.load %arg10[%c0_14, %c0_15] : memref<16x288xf32, #tpu.memory_space<vmem>>, vector<16x288xf32>
    tpu.vector_store %arg10[%c0_14, %c0_15], %20 {strides = array<i32>} : memref<16x288xf32, #tpu.memory_space<vmem>>, vector<16x288xf32>,
    %c0_16 = arith.constant 0 : index
    %c128 = arith.constant 128 : index
    %22 = vector.load %arg10[%c0_16, %c128] : memref<16x288xf32, #tpu.memory_space<vmem>>, vector<16x32xf32>
    tpu.vector_store %arg10[%c0_16, %c128], %19 {strides = array<i32>} : memref<16x288xf32, #tpu.memory_space<vmem>>, vector<16x32xf32>,
    %cst_17 = arith.constant 0.000000e+00 : f32
    %23 = vector.broadcast %cst_17 : f32 to vector<8x32xf32>
    %c0_18 = arith.constant 0 : index
    %c123 = arith.constant 123 : index
    %24 = vector.load %arg10[%c0_18, %c123] : memref<16x288xf32, #tpu.memory_space<vmem>>, vector<16x32xf32>
    %c0_19 = arith.constant 0 : index
    %c0_20 = arith.constant 0 : index
    %c0_21 = arith.constant 0 : index
    %25 = vector.load %arg8[%c0_19, %c0_20, %c0_21] : memref<9x1x32xf32, #tpu.memory_space<vmem>>, vector<1x1x32xf32>
    %26 = vector.shape_cast %25 : vector<1x1x32xf32> to vector<1x32xf32>
    %27 = vector.broadcast %26 : vector<1x32xf32> to vector<16x32xf32>
    %28 = arith.mulf %24, %27 : vector<16x32xf32>
    %c0_22 = arith.constant 0 : index
    %c0_23 = arith.constant 0 : index
    %c0_24 = arith.constant 0 : index
    %29 = vector.load %arg7[%c0_22, %c0_23, %c0_24] : memref<9x8x16xbf16, #tpu.memory_space<vmem>>, vector<1x8x16xbf16>
    %30 = vector.shape_cast %29 : vector<1x8x16xbf16> to vector<8x16xbf16>
    %31 = arith.truncf %28 : vector<16x32xf32> to vector<16x32xbf16>
    %cst_25 = arith.constant dense<0.000000e+00> : vector<8x32xf32>
    %32 = tpu.matmul %30, %31, %cst_25 {dimension_numbers = #tpu.dot_dimension_numbers<[1], [0], [0], [1], [0, 0, 1, 1], [], []>} : vector<8x16xbf16>, vector<16x32xbf16>, vector<8x32xf32> -> vector<8x32xf32>
    %33 = arith.addf %23, %32 : vector<8x32xf32>
    %c0_26 = arith.constant 0 : index
    %c124 = arith.constant 124 : index
    %34 = vector.load %arg10[%c0_26, %c124] : memref<16x288xf32, #tpu.memory_space<vmem>>, vector<16x32xf32>
    %c1 = arith.constant 1 : index
    %c0_27 = arith.constant 0 : index
    %c0_28 = arith.constant 0 : index
    %35 = vector.load %arg8[%c1, %c0_27, %c0_28] : memref<9x1x32xf32, #tpu.memory_space<vmem>>, vector<1x1x32xf32>
    %36 = vector.shape_cast %35 : vector<1x1x32xf32> to vector<1x32xf32>
    %37 = vector.broadcast %36 : vector<1x32xf32> to vector<16x32xf32>
    %38 = arith.mulf %34, %37 : vector<16x32xf32>
    %c1_29 = arith.constant 1 : index
    %c0_30 = arith.constant 0 : index
    %c0_31 = arith.constant 0 : index
    %39 = vector.load %arg7[%c1_29, %c0_30, %c0_31] : memref<9x8x16xbf16, #tpu.memory_space<vmem>>, vector<1x8x16xbf16>
    %40 = vector.shape_cast %39 : vector<1x8x16xbf16> to vector<8x16xbf16>
    %41 = arith.truncf %38 : vector<16x32xf32> to vector<16x32xbf16>
    %cst_32 = arith.constant dense<0.000000e+00> : vector<8x32xf32>
    %42 = tpu.matmul %40, %41, %cst_32 {dimension_numbers = #tpu.dot_dimension_numbers<[1], [0], [0], [1], [0, 0, 1, 1], [], []>} : vector<8x16xbf16>, vector<16x32xbf16>, vector<8x32xf32> -> vector<8x32xf32>
    %43 = arith.addf %33, %42 : vector<8x32xf32>
    %c0_33 = arith.constant 0 : index
    %c125 = arith.constant 125 : index
    %44 = vector.load %arg10[%c0_33, %c125] : memref<16x288xf32, #tpu.memory_space<vmem>>, vector<16x32xf32>
    %c2 = arith.constant 2 : index
    %c0_34 = arith.constant 0 : index
    %c0_35 = arith.constant 0 : index
    %45 = vector.load %arg8[%c2, %c0_34, %c0_35] : memref<9x1x32xf32, #tpu.memory_space<vmem>>, vector<1x1x32xf32>
    %46 = vector.shape_cast %45 : vector<1x1x32xf32> to vector<1x32xf32>
    %47 = vector.broadcast %46 : vector<1x32xf32> to vector<16x32xf32>
    %48 = arith.mulf %44, %47 : vector<16x32xf32>
    %c2_36 = arith.constant 2 : index
    %c0_37 = arith.constant 0 : index
    %c0_38 = arith.constant 0 : index
    %49 = vector.load %arg7[%c2_36, %c0_37, %c0_38] : memref<9x8x16xbf16, #tpu.memory_space<vmem>>, vector<1x8x16xbf16>
    %50 = vector.shape_cast %49 : vector<1x8x16xbf16> to vector<8x16xbf16>
    %51 = arith.truncf %48 : vector<16x32xf32> to vector<16x32xbf16>
    %cst_39 = arith.constant dense<0.000000e+00> : vector<8x32xf32>
    %52 = tpu.matmul %50, %51, %cst_39 {dimension_numbers = #tpu.dot_dimension_numbers<[1], [0], [0], [1], [0, 0, 1, 1], [], []>} : vector<8x16xbf16>, vector<16x32xbf16>, vector<8x32xf32> -> vector<8x32xf32>
    %53 = arith.addf %43, %52 : vector<8x32xf32>
    %c0_40 = arith.constant 0 : index
    %c127 = arith.constant 127 : index
    %54 = vector.load %arg10[%c0_40, %c127] : memref<16x288xf32, #tpu.memory_space<vmem>>, vector<16x32xf32>
    %c3 = arith.constant 3 : index
    %c0_41 = arith.constant 0 : index
    %c0_42 = arith.constant 0 : index
    %55 = vector.load %arg8[%c3, %c0_41, %c0_42] : memref<9x1x32xf32, #tpu.memory_space<vmem>>, vector<1x1x32xf32>
    %56 = vector.shape_cast %55 : vector<1x1x32xf32> to vector<1x32xf32>
    %57 = vector.broadcast %56 : vector<1x32xf32> to vector<16x32xf32>
    %58 = arith.mulf %54, %57 : vector<16x32xf32>
    %c3_43 = arith.constant 3 : index
    %c0_44 = arith.constant 0 : index
    %c0_45 = arith.constant 0 : index
    %59 = vector.load %arg7[%c3_43, %c0_44, %c0_45] : memref<9x8x16xbf16, #tpu.memory_space<vmem>>, vector<1x8x16xbf16>
    %60 = vector.shape_cast %59 : vector<1x8x16xbf16> to vector<8x16xbf16>
    %61 = arith.truncf %58 : vector<16x32xf32> to vector<16x32xbf16>
    %cst_46 = arith.constant dense<0.000000e+00> : vector<8x32xf32>
    %62 = tpu.matmul %60, %61, %cst_46 {dimension_numbers = #tpu.dot_dimension_numbers<[1], [0], [0], [1], [0, 0, 1, 1], [], []>} : vector<8x16xbf16>, vector<16x32xbf16>, vector<8x32xf32> -> vector<8x32xf32>
    %63 = arith.addf %53, %62 : vector<8x32xf32>
    %c0_47 = arith.constant 0 : index
    %c128_48 = arith.constant 128 : index
    %64 = vector.load %arg10[%c0_47, %c128_48] : memref<16x288xf32, #tpu.memory_space<vmem>>, vector<16x32xf32>
    %c4 = arith.constant 4 : index
    %c0_49 = arith.constant 0 : index
    %c0_50 = arith.constant 0 : index
    %65 = vector.load %arg8[%c4, %c0_49, %c0_50] : memref<9x1x32xf32, #tpu.memory_space<vmem>>, vector<1x1x32xf32>
    %66 = vector.shape_cast %65 : vector<1x1x32xf32> to vector<1x32xf32>
    %67 = vector.broadcast %66 : vector<1x32xf32> to vector<16x32xf32>
    %68 = arith.mulf %64, %67 : vector<16x32xf32>
    %c4_51 = arith.constant 4 : index
    %c0_52 = arith.constant 0 : index
    %c0_53 = arith.constant 0 : index
    %69 = vector.load %arg7[%c4_51, %c0_52, %c0_53] : memref<9x8x16xbf16, #tpu.memory_space<vmem>>, vector<1x8x16xbf16>
    %70 = vector.shape_cast %69 : vector<1x8x16xbf16> to vector<8x16xbf16>
    %71 = arith.truncf %68 : vector<16x32xf32> to vector<16x32xbf16>
    %cst_54 = arith.constant dense<0.000000e+00> : vector<8x32xf32>
    %72 = tpu.matmul %70, %71, %cst_54 {dimension_numbers = #tpu.dot_dimension_numbers<[1], [0], [0], [1], [0, 0, 1, 1], [], []>} : vector<8x16xbf16>, vector<16x32xbf16>, vector<8x32xf32> -> vector<8x32xf32>
    %73 = arith.addf %63, %72 : vector<8x32xf32>
    %c0_55 = arith.constant 0 : index
    %c129 = arith.constant 129 : index
    %74 = vector.load %arg10[%c0_55, %c129] : memref<16x288xf32, #tpu.memory_space<vmem>>, vector<16x32xf32>
    %c5 = arith.constant 5 : index
    %c0_56 = arith.constant 0 : index
    %c0_57 = arith.constant 0 : index
    %75 = vector.load %arg8[%c5, %c0_56, %c0_57] : memref<9x1x32xf32, #tpu.memory_space<vmem>>, vector<1x1x32xf32>
    %76 = vector.shape_cast %75 : vector<1x1x32xf32> to vector<1x32xf32>
    %77 = vector.broadcast %76 : vector<1x32xf32> to vector<16x32xf32>
    %78 = arith.mulf %74, %77 : vector<16x32xf32>
    %c5_58 = arith.constant 5 : index
    %c0_59 = arith.constant 0 : index
    %c0_60 = arith.constant 0 : index
    %79 = vector.load %arg7[%c5_58, %c0_59, %c0_60] : memref<9x8x16xbf16, #tpu.memory_space<vmem>>, vector<1x8x16xbf16>
    %80 = vector.shape_cast %79 : vector<1x8x16xbf16> to vector<8x16xbf16>
    %81 = arith.truncf %78 : vector<16x32xf32> to vector<16x32xbf16>
    %cst_61 = arith.constant dense<0.000000e+00> : vector<8x32xf32>
    %82 = tpu.matmul %80, %81, %cst_61 {dimension_numbers = #tpu.dot_dimension_numbers<[1], [0], [0], [1], [0, 0, 1, 1], [], []>} : vector<8x16xbf16>, vector<16x32xbf16>, vector<8x32xf32> -> vector<8x32xf32>
    %83 = arith.addf %73, %82 : vector<8x32xf32>
    %c0_62 = arith.constant 0 : index
    %c131 = arith.constant 131 : index
    %84 = vector.load %arg10[%c0_62, %c131] : memref<16x288xf32, #tpu.memory_space<vmem>>, vector<16x32xf32>
    %c6 = arith.constant 6 : index
    %c0_63 = arith.constant 0 : index
    %c0_64 = arith.constant 0 : index
    %85 = vector.load %arg8[%c6, %c0_63, %c0_64] : memref<9x1x32xf32, #tpu.memory_space<vmem>>, vector<1x1x32xf32>
    %86 = vector.shape_cast %85 : vector<1x1x32xf32> to vector<1x32xf32>
    %87 = vector.broadcast %86 : vector<1x32xf32> to vector<16x32xf32>
    %88 = arith.mulf %84, %87 : vector<16x32xf32>
    %c6_65 = arith.constant 6 : index
    %c0_66 = arith.constant 0 : index
    %c0_67 = arith.constant 0 : index
    %89 = vector.load %arg7[%c6_65, %c0_66, %c0_67] : memref<9x8x16xbf16, #tpu.memory_space<vmem>>, vector<1x8x16xbf16>
    %90 = vector.shape_cast %89 : vector<1x8x16xbf16> to vector<8x16xbf16>
    %91 = arith.truncf %88 : vector<16x32xf32> to vector<16x32xbf16>
    %cst_68 = arith.constant dense<0.000000e+00> : vector<8x32xf32>
    %92 = tpu.matmul %90, %91, %cst_68 {dimension_numbers = #tpu.dot_dimension_numbers<[1], [0], [0], [1], [0, 0, 1, 1], [], []>} : vector<8x16xbf16>, vector<16x32xbf16>, vector<8x32xf32> -> vector<8x32xf32>
    %93 = arith.addf %83, %92 : vector<8x32xf32>
    %c0_69 = arith.constant 0 : index
    %c132 = arith.constant 132 : index
    %94 = vector.load %arg10[%c0_69, %c132] : memref<16x288xf32, #tpu.memory_space<vmem>>, vector<16x32xf32>
    %c7 = arith.constant 7 : index
    %c0_70 = arith.constant 0 : index
    %c0_71 = arith.constant 0 : index
    %95 = vector.load %arg8[%c7, %c0_70, %c0_71] : memref<9x1x32xf32, #tpu.memory_space<vmem>>, vector<1x1x32xf32>
    %96 = vector.shape_cast %95 : vector<1x1x32xf32> to vector<1x32xf32>
    %97 = vector.broadcast %96 : vector<1x32xf32> to vector<16x32xf32>
    %98 = arith.mulf %94, %97 : vector<16x32xf32>
    %c7_72 = arith.constant 7 : index
    %c0_73 = arith.constant 0 : index
    %c0_74 = arith.constant 0 : index
    %99 = vector.load %arg7[%c7_72, %c0_73, %c0_74] : memref<9x8x16xbf16, #tpu.memory_space<vmem>>, vector<1x8x16xbf16>
    %100 = vector.shape_cast %99 : vector<1x8x16xbf16> to vector<8x16xbf16>
    %101 = arith.truncf %98 : vector<16x32xf32> to vector<16x32xbf16>
    %cst_75 = arith.constant dense<0.000000e+00> : vector<8x32xf32>
    %102 = tpu.matmul %100, %101, %cst_75 {dimension_numbers = #tpu.dot_dimension_numbers<[1], [0], [0], [1], [0, 0, 1, 1], [], []>} : vector<8x16xbf16>, vector<16x32xbf16>, vector<8x32xf32> -> vector<8x32xf32>
    %103 = arith.addf %93, %102 : vector<8x32xf32>
    %c0_76 = arith.constant 0 : index
    %c133 = arith.constant 133 : index
    %104 = vector.load %arg10[%c0_76, %c133] : memref<16x288xf32, #tpu.memory_space<vmem>>, vector<16x32xf32>
    %c8 = arith.constant 8 : index
    %c0_77 = arith.constant 0 : index
    %c0_78 = arith.constant 0 : index
    %105 = vector.load %arg8[%c8, %c0_77, %c0_78] : memref<9x1x32xf32, #tpu.memory_space<vmem>>, vector<1x1x32xf32>
    %106 = vector.shape_cast %105 : vector<1x1x32xf32> to vector<1x32xf32>
    %107 = vector.broadcast %106 : vector<1x32xf32> to vector<16x32xf32>
    %108 = arith.mulf %104, %107 : vector<16x32xf32>
    %c8_79 = arith.constant 8 : index
    %c0_80 = arith.constant 0 : index
    %c0_81 = arith.constant 0 : index
    %109 = vector.load %arg7[%c8_79, %c0_80, %c0_81] : memref<9x8x16xbf16, #tpu.memory_space<vmem>>, vector<1x8x16xbf16>
    %110 = vector.shape_cast %109 : vector<1x8x16xbf16> to vector<8x16xbf16>
    %111 = arith.truncf %108 : vector<16x32xf32> to vector<16x32xbf16>
    %cst_82 = arith.constant dense<0.000000e+00> : vector<8x32xf32>
    %112 = tpu.matmul %110, %111, %cst_82 {dimension_numbers = #tpu.dot_dimension_numbers<[1], [0], [0], [1], [0, 0, 1, 1], [], []>} : vector<8x16xbf16>, vector<16x32xbf16>, vector<8x32xf32> -> vector<8x32xf32>
    %113 = arith.addf %103, %112 : vector<8x32xf32>
    %c0_83 = arith.constant 0 : index
    %c0_84 = arith.constant 0 : index
    %114 = vector.load %arg9[%c0_83, %c0_84] : memref<8x32xf32, #tpu.memory_space<vmem>>, vector<8x32xf32>
    tpu.vector_store %arg9[%c0_83, %c0_84], %113 {strides = array<i32>} : memref<8x32xf32, #tpu.memory_space<vmem>>, vector<8x32xf32>,
    return
  }
  func.func @transform_0(%arg0: i32) -> (i32, i32) {
    %c0_i32 = arith.constant 0 : i32
    %c0_i32_0 = arith.constant 0 : i32
    %c0_i32_1 = arith.constant 0 : i32
    return %c0_i32, %c0_i32_0 : i32, i32
  }
  func.func @transform_1(%arg0: i32) -> (i32, i32) {
    %c0_i32 = arith.constant 0 : i32
    %c0_i32_0 = arith.constant 0 : i32
    %c0_i32_1 = arith.constant 0 : i32
    return %c0_i32, %c0_i32_0 : i32, i32
  }
  func.func @transform_2(%arg0: i32) -> (i32, i32) {
    %c0_i32 = arith.constant 0 : i32
    %c0_i32_0 = arith.constant 0 : i32
    %c0_i32_1 = arith.constant 0 : i32
    return %c0_i32, %c0_i32_0 : i32, i32
  }
  func.func @transform_3(%arg0: i32) -> (i32, i32) {
    %c0_i32 = arith.constant 0 : i32
    %c0_i32_0 = arith.constant 0 : i32
    %c0_i32_1 = arith.constant 0 : i32
    return %c0_i32, %c0_i32_0 : i32, i32
  }
  func.func @transform_4(%arg0: i32) -> (i32, i32) {
    %c0_i32 = arith.constant 0 : i32
    %c0_i32_0 = arith.constant 0 : i32
    %c0_i32_1 = arith.constant 0 : i32
    return %c0_i32, %c0_i32_0 : i32, i32
  }
  func.func @transform_5(%arg0: i32) -> (i32, i32) {
    %c0_i32 = arith.constant 0 : i32
    %c0_i32_0 = arith.constant 0 : i32
    %c0_i32_1 = arith.constant 0 : i32
    return %c0_i32, %c0_i32_0 : i32, i32
  }
  func.func @transform_6(%arg0: i32) -> (i32, i32, i32) {
    %c0_i32 = arith.constant 0 : i32
    %c0_i32_0 = arith.constant 0 : i32
    %c0_i32_1 = arith.constant 0 : i32
    %c0_i32_2 = arith.constant 0 : i32
    return %c0_i32, %c0_i32_0, %c0_i32_1 : i32, i32, i32
  }
  func.func @transform_7(%arg0: i32) -> (i32, i32, i32) {
    %c0_i32 = arith.constant 0 : i32
    %c0_i32_0 = arith.constant 0 : i32
    %c0_i32_1 = arith.constant 0 : i32
    %c0_i32_2 = arith.constant 0 : i32
    return %c0_i32, %c0_i32_0, %c0_i32_1 : i32, i32, i32
  }
  func.func @transform_8(%arg0: i32) -> (i32, i32) {
    %c3_i32 = arith.constant 3 : i32
    %c0_i32 = arith.constant 0 : i32
    %c0_i32_0 = arith.constant 0 : i32
    return %c3_i32, %c0_i32 : i32, i32
  }
}

module attributes {stable_mosaic.version = 11 : i64} {
  func.func @kernel(%arg0: i32, %arg1: memref<16x8xf32, #tpu.memory_space<vmem>>, %arg2: memref<16x1xf32, #tpu.memory_space<vmem>>, %arg3: memref<16x1xf32, #tpu.memory_space<vmem>>, %arg4: memref<16x16xbf16, #tpu.memory_space<vmem>>, %arg5: memref<16x1xf32, #tpu.memory_space<vmem>>, %arg6: memref<16x1xf32, #tpu.memory_space<vmem>>, %arg7: memref<9x8x16xbf16, #tpu.memory_space<vmem>>, %arg8: memref<9x1x8xf32, #tpu.memory_space<vmem>>, %arg9: memref<8x8xf32, #tpu.memory_space<vmem>>, %arg10: memref<16x264xf32, #tpu.memory_space<vmem>>) attributes {dimension_semantics = [#tpu.dimension_semantics<arbitrary>], iteration_bounds = array<i64: 1>, scalar_prefetch = 0 : i64, scratch_operands = 1 : i64, tpu.core_type = #tpu.core_type<tc>, window_params = [{transform_indices = @transform_0, window_bounds = array<i64: 16, 8>}, {pipeline_mode = #tpu.pipeline_mode<synchronous>, transform_indices = @transform_1, window_bounds = array<i64: 16, 1>}, {pipeline_mode = #tpu.pipeline_mode<synchronous>, transform_indices = @transform_2, window_bounds = array<i64: 16, 1>}, {pipeline_mode = #tpu.pipeline_mode<synchronous>, transform_indices = @transform_3, window_bounds = array<i64: 16, 16>}, {pipeline_mode = #tpu.pipeline_mode<synchronous>, transform_indices = @transform_4, window_bounds = array<i64: 16, 1>}, {pipeline_mode = #tpu.pipeline_mode<synchronous>, transform_indices = @transform_5, window_bounds = array<i64: 16, 1>}, {pipeline_mode = #tpu.pipeline_mode<synchronous>, transform_indices = @transform_6, window_bounds = array<i64: 9, 8, 16>}, {pipeline_mode = #tpu.pipeline_mode<synchronous>, transform_indices = @transform_7, window_bounds = array<i64: 9, 1, 8>}, {transform_indices = @transform_8, window_bounds = array<i64: 8, 8>}]} {
    %c0 = arith.constant 0 : index
    %c0_0 = arith.constant 0 : index
    %0 = vector.load %arg1[%c0, %c0_0] : memref<16x8xf32, #tpu.memory_space<vmem>>, vector<16x8xf32>
    %c0_1 = arith.constant 0 : index
    %c0_2 = arith.constant 0 : index
    %1 = vector.load %arg2[%c0_1, %c0_2] : memref<16x1xf32, #tpu.memory_space<vmem>>, vector<16x1xf32>
    %2 = vector.broadcast %1 : vector<16x1xf32> to vector<16x8xf32>
    %3 = arith.mulf %0, %2 : vector<16x8xf32>
    %c0_3 = arith.constant 0 : index
    %c0_4 = arith.constant 0 : index
    %4 = vector.load %arg3[%c0_3, %c0_4] : memref<16x1xf32, #tpu.memory_space<vmem>>, vector<16x1xf32>
    %5 = vector.broadcast %4 : vector<16x1xf32> to vector<16x8xf32>
    %6 = arith.addf %3, %5 : vector<16x8xf32>
    %cst = arith.constant 0.000000e+00 : f32
    %7 = vector.broadcast %cst : f32 to vector<16x8xf32>
    %8 = arith.maximumf %6, %7 : vector<16x8xf32>
    %c0_5 = arith.constant 0 : index
    %c0_6 = arith.constant 0 : index
    %9 = vector.load %arg4[%c0_5, %c0_6] : memref<16x16xbf16, #tpu.memory_space<vmem>>, vector<16x16xbf16>
    %10 = arith.truncf %8 : vector<16x8xf32> to vector<16x8xbf16>
    %cst_7 = arith.constant dense<0.000000e+00> : vector<16x8xf32>
    %11 = tpu.matmul %9, %10, %cst_7 {dimension_numbers = #tpu.dot_dimension_numbers<[1], [0], [0], [1], [0, 0, 1, 1], [], []>} : vector<16x16xbf16>, vector<16x8xbf16>, vector<16x8xf32> -> vector<16x8xf32>
    %c0_8 = arith.constant 0 : index
    %c0_9 = arith.constant 0 : index
    %12 = vector.load %arg5[%c0_8, %c0_9] : memref<16x1xf32, #tpu.memory_space<vmem>>, vector<16x1xf32>
    %13 = vector.broadcast %12 : vector<16x1xf32> to vector<16x8xf32>
    %14 = arith.mulf %11, %13 : vector<16x8xf32>
    %c0_10 = arith.constant 0 : index
    %c0_11 = arith.constant 0 : index
    %15 = vector.load %arg6[%c0_10, %c0_11] : memref<16x1xf32, #tpu.memory_space<vmem>>, vector<16x1xf32>
    %16 = vector.broadcast %15 : vector<16x1xf32> to vector<16x8xf32>
    %17 = arith.addf %14, %16 : vector<16x8xf32>
    %cst_12 = arith.constant 0.000000e+00 : f32
    %18 = vector.broadcast %cst_12 : f32 to vector<16x8xf32>
    %19 = arith.maximumf %17, %18 : vector<16x8xf32>
    %cst_13 = arith.constant 0.000000e+00 : f32
    %20 = vector.broadcast %cst_13 : f32 to vector<16x264xf32>
    %c0_14 = arith.constant 0 : index
    %c0_15 = arith.constant 0 : index
    %21 = vector.load %arg10[%c0_14, %c0_15] : memref<16x264xf32, #tpu.memory_space<vmem>>, vector<16x264xf32>
    tpu.vector_store %arg10[%c0_14, %c0_15], %20 {strides = array<i32>} : memref<16x264xf32, #tpu.memory_space<vmem>>, vector<16x264xf32>,
    %c0_16 = arith.constant 0 : index
    %c128 = arith.constant 128 : index
    %22 = vector.load %arg10[%c0_16, %c128] : memref<16x264xf32, #tpu.memory_space<vmem>>, vector<16x8xf32>
    tpu.vector_store %arg10[%c0_16, %c128], %19 {strides = array<i32>} : memref<16x264xf32, #tpu.memory_space<vmem>>, vector<16x8xf32>,
    %cst_17 = arith.constant 0.000000e+00 : f32
    %23 = vector.broadcast %cst_17 : f32 to vector<8x8xf32>
    %c0_18 = arith.constant 0 : index
    %c125 = arith.constant 125 : index
    %24 = vector.load %arg10[%c0_18, %c125] : memref<16x264xf32, #tpu.memory_space<vmem>>, vector<16x8xf32>
    %c0_19 = arith.constant 0 : index
    %c0_20 = arith.constant 0 : index
    %c0_21 = arith.constant 0 : index
    %25 = vector.load %arg8[%c0_19, %c0_20, %c0_21] : memref<9x1x8xf32, #tpu.memory_space<vmem>>, vector<1x1x8xf32>
    %26 = vector.shape_cast %25 : vector<1x1x8xf32> to vector<1x8xf32>
    %27 = vector.broadcast %26 : vector<1x8xf32> to vector<16x8xf32>
    %28 = arith.mulf %24, %27 : vector<16x8xf32>
    %c0_22 = arith.constant 0 : index
    %c0_23 = arith.constant 0 : index
    %c0_24 = arith.constant 0 : index
    %29 = vector.load %arg7[%c0_22, %c0_23, %c0_24] : memref<9x8x16xbf16, #tpu.memory_space<vmem>>, vector<1x8x16xbf16>
    %30 = vector.shape_cast %29 : vector<1x8x16xbf16> to vector<8x16xbf16>
    %31 = arith.truncf %28 : vector<16x8xf32> to vector<16x8xbf16>
    %cst_25 = arith.constant dense<0.000000e+00> : vector<8x8xf32>
    %32 = tpu.matmul %30, %31, %cst_25 {dimension_numbers = #tpu.dot_dimension_numbers<[1], [0], [0], [1], [0, 0, 1, 1], [], []>} : vector<8x16xbf16>, vector<16x8xbf16>, vector<8x8xf32> -> vector<8x8xf32>
    %33 = arith.addf %23, %32 : vector<8x8xf32>
    %c0_26 = arith.constant 0 : index
    %c126 = arith.constant 126 : index
    %34 = vector.load %arg10[%c0_26, %c126] : memref<16x264xf32, #tpu.memory_space<vmem>>, vector<16x8xf32>
    %c1 = arith.constant 1 : index
    %c0_27 = arith.constant 0 : index
    %c0_28 = arith.constant 0 : index
    %35 = vector.load %arg8[%c1, %c0_27, %c0_28] : memref<9x1x8xf32, #tpu.memory_space<vmem>>, vector<1x1x8xf32>
    %36 = vector.shape_cast %35 : vector<1x1x8xf32> to vector<1x8xf32>
    %37 = vector.broadcast %36 : vector<1x8xf32> to vector<16x8xf32>
    %38 = arith.mulf %34, %37 : vector<16x8xf32>
    %c1_29 = arith.constant 1 : index
    %c0_30 = arith.constant 0 : index
    %c0_31 = arith.constant 0 : index
    %39 = vector.load %arg7[%c1_29, %c0_30, %c0_31] : memref<9x8x16xbf16, #tpu.memory_space<vmem>>, vector<1x8x16xbf16>
    %40 = vector.shape_cast %39 : vector<1x8x16xbf16> to vector<8x16xbf16>
    %41 = arith.truncf %38 : vector<16x8xf32> to vector<16x8xbf16>
    %cst_32 = arith.constant dense<0.000000e+00> : vector<8x8xf32>
    %42 = tpu.matmul %40, %41, %cst_32 {dimension_numbers = #tpu.dot_dimension_numbers<[1], [0], [0], [1], [0, 0, 1, 1], [], []>} : vector<8x16xbf16>, vector<16x8xbf16>, vector<8x8xf32> -> vector<8x8xf32>
    %43 = arith.addf %33, %42 : vector<8x8xf32>
    %c0_33 = arith.constant 0 : index
    %c127 = arith.constant 127 : index
    %44 = vector.load %arg10[%c0_33, %c127] : memref<16x264xf32, #tpu.memory_space<vmem>>, vector<16x8xf32>
    %c2 = arith.constant 2 : index
    %c0_34 = arith.constant 0 : index
    %c0_35 = arith.constant 0 : index
    %45 = vector.load %arg8[%c2, %c0_34, %c0_35] : memref<9x1x8xf32, #tpu.memory_space<vmem>>, vector<1x1x8xf32>
    %46 = vector.shape_cast %45 : vector<1x1x8xf32> to vector<1x8xf32>
    %47 = vector.broadcast %46 : vector<1x8xf32> to vector<16x8xf32>
    %48 = arith.mulf %44, %47 : vector<16x8xf32>
    %c2_36 = arith.constant 2 : index
    %c0_37 = arith.constant 0 : index
    %c0_38 = arith.constant 0 : index
    %49 = vector.load %arg7[%c2_36, %c0_37, %c0_38] : memref<9x8x16xbf16, #tpu.memory_space<vmem>>, vector<1x8x16xbf16>
    %50 = vector.shape_cast %49 : vector<1x8x16xbf16> to vector<8x16xbf16>
    %51 = arith.truncf %48 : vector<16x8xf32> to vector<16x8xbf16>
    %cst_39 = arith.constant dense<0.000000e+00> : vector<8x8xf32>
    %52 = tpu.matmul %50, %51, %cst_39 {dimension_numbers = #tpu.dot_dimension_numbers<[1], [0], [0], [1], [0, 0, 1, 1], [], []>} : vector<8x16xbf16>, vector<16x8xbf16>, vector<8x8xf32> -> vector<8x8xf32>
    %53 = arith.addf %43, %52 : vector<8x8xf32>
    %c0_40 = arith.constant 0 : index
    %c127_41 = arith.constant 127 : index
    %54 = vector.load %arg10[%c0_40, %c127_41] : memref<16x264xf32, #tpu.memory_space<vmem>>, vector<16x8xf32>
    %c3 = arith.constant 3 : index
    %c0_42 = arith.constant 0 : index
    %c0_43 = arith.constant 0 : index
    %55 = vector.load %arg8[%c3, %c0_42, %c0_43] : memref<9x1x8xf32, #tpu.memory_space<vmem>>, vector<1x1x8xf32>
    %56 = vector.shape_cast %55 : vector<1x1x8xf32> to vector<1x8xf32>
    %57 = vector.broadcast %56 : vector<1x8xf32> to vector<16x8xf32>
    %58 = arith.mulf %54, %57 : vector<16x8xf32>
    %c3_44 = arith.constant 3 : index
    %c0_45 = arith.constant 0 : index
    %c0_46 = arith.constant 0 : index
    %59 = vector.load %arg7[%c3_44, %c0_45, %c0_46] : memref<9x8x16xbf16, #tpu.memory_space<vmem>>, vector<1x8x16xbf16>
    %60 = vector.shape_cast %59 : vector<1x8x16xbf16> to vector<8x16xbf16>
    %61 = arith.truncf %58 : vector<16x8xf32> to vector<16x8xbf16>
    %cst_47 = arith.constant dense<0.000000e+00> : vector<8x8xf32>
    %62 = tpu.matmul %60, %61, %cst_47 {dimension_numbers = #tpu.dot_dimension_numbers<[1], [0], [0], [1], [0, 0, 1, 1], [], []>} : vector<8x16xbf16>, vector<16x8xbf16>, vector<8x8xf32> -> vector<8x8xf32>
    %63 = arith.addf %53, %62 : vector<8x8xf32>
    %c0_48 = arith.constant 0 : index
    %c128_49 = arith.constant 128 : index
    %64 = vector.load %arg10[%c0_48, %c128_49] : memref<16x264xf32, #tpu.memory_space<vmem>>, vector<16x8xf32>
    %c4 = arith.constant 4 : index
    %c0_50 = arith.constant 0 : index
    %c0_51 = arith.constant 0 : index
    %65 = vector.load %arg8[%c4, %c0_50, %c0_51] : memref<9x1x8xf32, #tpu.memory_space<vmem>>, vector<1x1x8xf32>
    %66 = vector.shape_cast %65 : vector<1x1x8xf32> to vector<1x8xf32>
    %67 = vector.broadcast %66 : vector<1x8xf32> to vector<16x8xf32>
    %68 = arith.mulf %64, %67 : vector<16x8xf32>
    %c4_52 = arith.constant 4 : index
    %c0_53 = arith.constant 0 : index
    %c0_54 = arith.constant 0 : index
    %69 = vector.load %arg7[%c4_52, %c0_53, %c0_54] : memref<9x8x16xbf16, #tpu.memory_space<vmem>>, vector<1x8x16xbf16>
    %70 = vector.shape_cast %69 : vector<1x8x16xbf16> to vector<8x16xbf16>
    %71 = arith.truncf %68 : vector<16x8xf32> to vector<16x8xbf16>
    %cst_55 = arith.constant dense<0.000000e+00> : vector<8x8xf32>
    %72 = tpu.matmul %70, %71, %cst_55 {dimension_numbers = #tpu.dot_dimension_numbers<[1], [0], [0], [1], [0, 0, 1, 1], [], []>} : vector<8x16xbf16>, vector<16x8xbf16>, vector<8x8xf32> -> vector<8x8xf32>
    %73 = arith.addf %63, %72 : vector<8x8xf32>
    %c0_56 = arith.constant 0 : index
    %c129 = arith.constant 129 : index
    %74 = vector.load %arg10[%c0_56, %c129] : memref<16x264xf32, #tpu.memory_space<vmem>>, vector<16x8xf32>
    %c5 = arith.constant 5 : index
    %c0_57 = arith.constant 0 : index
    %c0_58 = arith.constant 0 : index
    %75 = vector.load %arg8[%c5, %c0_57, %c0_58] : memref<9x1x8xf32, #tpu.memory_space<vmem>>, vector<1x1x8xf32>
    %76 = vector.shape_cast %75 : vector<1x1x8xf32> to vector<1x8xf32>
    %77 = vector.broadcast %76 : vector<1x8xf32> to vector<16x8xf32>
    %78 = arith.mulf %74, %77 : vector<16x8xf32>
    %c5_59 = arith.constant 5 : index
    %c0_60 = arith.constant 0 : index
    %c0_61 = arith.constant 0 : index
    %79 = vector.load %arg7[%c5_59, %c0_60, %c0_61] : memref<9x8x16xbf16, #tpu.memory_space<vmem>>, vector<1x8x16xbf16>
    %80 = vector.shape_cast %79 : vector<1x8x16xbf16> to vector<8x16xbf16>
    %81 = arith.truncf %78 : vector<16x8xf32> to vector<16x8xbf16>
    %cst_62 = arith.constant dense<0.000000e+00> : vector<8x8xf32>
    %82 = tpu.matmul %80, %81, %cst_62 {dimension_numbers = #tpu.dot_dimension_numbers<[1], [0], [0], [1], [0, 0, 1, 1], [], []>} : vector<8x16xbf16>, vector<16x8xbf16>, vector<8x8xf32> -> vector<8x8xf32>
    %83 = arith.addf %73, %82 : vector<8x8xf32>
    %c0_63 = arith.constant 0 : index
    %c129_64 = arith.constant 129 : index
    %84 = vector.load %arg10[%c0_63, %c129_64] : memref<16x264xf32, #tpu.memory_space<vmem>>, vector<16x8xf32>
    %c6 = arith.constant 6 : index
    %c0_65 = arith.constant 0 : index
    %c0_66 = arith.constant 0 : index
    %85 = vector.load %arg8[%c6, %c0_65, %c0_66] : memref<9x1x8xf32, #tpu.memory_space<vmem>>, vector<1x1x8xf32>
    %86 = vector.shape_cast %85 : vector<1x1x8xf32> to vector<1x8xf32>
    %87 = vector.broadcast %86 : vector<1x8xf32> to vector<16x8xf32>
    %88 = arith.mulf %84, %87 : vector<16x8xf32>
    %c6_67 = arith.constant 6 : index
    %c0_68 = arith.constant 0 : index
    %c0_69 = arith.constant 0 : index
    %89 = vector.load %arg7[%c6_67, %c0_68, %c0_69] : memref<9x8x16xbf16, #tpu.memory_space<vmem>>, vector<1x8x16xbf16>
    %90 = vector.shape_cast %89 : vector<1x8x16xbf16> to vector<8x16xbf16>
    %91 = arith.truncf %88 : vector<16x8xf32> to vector<16x8xbf16>
    %cst_70 = arith.constant dense<0.000000e+00> : vector<8x8xf32>
    %92 = tpu.matmul %90, %91, %cst_70 {dimension_numbers = #tpu.dot_dimension_numbers<[1], [0], [0], [1], [0, 0, 1, 1], [], []>} : vector<8x16xbf16>, vector<16x8xbf16>, vector<8x8xf32> -> vector<8x8xf32>
    %93 = arith.addf %83, %92 : vector<8x8xf32>
    %c0_71 = arith.constant 0 : index
    %c130 = arith.constant 130 : index
    %94 = vector.load %arg10[%c0_71, %c130] : memref<16x264xf32, #tpu.memory_space<vmem>>, vector<16x8xf32>
    %c7 = arith.constant 7 : index
    %c0_72 = arith.constant 0 : index
    %c0_73 = arith.constant 0 : index
    %95 = vector.load %arg8[%c7, %c0_72, %c0_73] : memref<9x1x8xf32, #tpu.memory_space<vmem>>, vector<1x1x8xf32>
    %96 = vector.shape_cast %95 : vector<1x1x8xf32> to vector<1x8xf32>
    %97 = vector.broadcast %96 : vector<1x8xf32> to vector<16x8xf32>
    %98 = arith.mulf %94, %97 : vector<16x8xf32>
    %c7_74 = arith.constant 7 : index
    %c0_75 = arith.constant 0 : index
    %c0_76 = arith.constant 0 : index
    %99 = vector.load %arg7[%c7_74, %c0_75, %c0_76] : memref<9x8x16xbf16, #tpu.memory_space<vmem>>, vector<1x8x16xbf16>
    %100 = vector.shape_cast %99 : vector<1x8x16xbf16> to vector<8x16xbf16>
    %101 = arith.truncf %98 : vector<16x8xf32> to vector<16x8xbf16>
    %cst_77 = arith.constant dense<0.000000e+00> : vector<8x8xf32>
    %102 = tpu.matmul %100, %101, %cst_77 {dimension_numbers = #tpu.dot_dimension_numbers<[1], [0], [0], [1], [0, 0, 1, 1], [], []>} : vector<8x16xbf16>, vector<16x8xbf16>, vector<8x8xf32> -> vector<8x8xf32>
    %103 = arith.addf %93, %102 : vector<8x8xf32>
    %c0_78 = arith.constant 0 : index
    %c131 = arith.constant 131 : index
    %104 = vector.load %arg10[%c0_78, %c131] : memref<16x264xf32, #tpu.memory_space<vmem>>, vector<16x8xf32>
    %c8 = arith.constant 8 : index
    %c0_79 = arith.constant 0 : index
    %c0_80 = arith.constant 0 : index
    %105 = vector.load %arg8[%c8, %c0_79, %c0_80] : memref<9x1x8xf32, #tpu.memory_space<vmem>>, vector<1x1x8xf32>
    %106 = vector.shape_cast %105 : vector<1x1x8xf32> to vector<1x8xf32>
    %107 = vector.broadcast %106 : vector<1x8xf32> to vector<16x8xf32>
    %108 = arith.mulf %104, %107 : vector<16x8xf32>
    %c8_81 = arith.constant 8 : index
    %c0_82 = arith.constant 0 : index
    %c0_83 = arith.constant 0 : index
    %109 = vector.load %arg7[%c8_81, %c0_82, %c0_83] : memref<9x8x16xbf16, #tpu.memory_space<vmem>>, vector<1x8x16xbf16>
    %110 = vector.shape_cast %109 : vector<1x8x16xbf16> to vector<8x16xbf16>
    %111 = arith.truncf %108 : vector<16x8xf32> to vector<16x8xbf16>
    %cst_84 = arith.constant dense<0.000000e+00> : vector<8x8xf32>
    %112 = tpu.matmul %110, %111, %cst_84 {dimension_numbers = #tpu.dot_dimension_numbers<[1], [0], [0], [1], [0, 0, 1, 1], [], []>} : vector<8x16xbf16>, vector<16x8xbf16>, vector<8x8xf32> -> vector<8x8xf32>
    %113 = arith.addf %103, %112 : vector<8x8xf32>
    %c0_85 = arith.constant 0 : index
    %c0_86 = arith.constant 0 : index
    %114 = vector.load %arg9[%c0_85, %c0_86] : memref<8x8xf32, #tpu.memory_space<vmem>>, vector<8x8xf32>
    tpu.vector_store %arg9[%c0_85, %c0_86], %113 {strides = array<i32>} : memref<8x8xf32, #tpu.memory_space<vmem>>, vector<8x8xf32>,
    return
  }
  func.func @transform_0(%arg0: i32) -> (i32, i32) {
    %c0_i32 = arith.constant 0 : i32
    %c0_i32_0 = arith.constant 0 : i32
    %c0_i32_1 = arith.constant 0 : i32
    return %c0_i32, %c0_i32_0 : i32, i32
  }
  func.func @transform_1(%arg0: i32) -> (i32, i32) {
    %c0_i32 = arith.constant 0 : i32
    %c0_i32_0 = arith.constant 0 : i32
    %c0_i32_1 = arith.constant 0 : i32
    return %c0_i32, %c0_i32_0 : i32, i32
  }
  func.func @transform_2(%arg0: i32) -> (i32, i32) {
    %c0_i32 = arith.constant 0 : i32
    %c0_i32_0 = arith.constant 0 : i32
    %c0_i32_1 = arith.constant 0 : i32
    return %c0_i32, %c0_i32_0 : i32, i32
  }
  func.func @transform_3(%arg0: i32) -> (i32, i32) {
    %c0_i32 = arith.constant 0 : i32
    %c0_i32_0 = arith.constant 0 : i32
    %c0_i32_1 = arith.constant 0 : i32
    return %c0_i32, %c0_i32_0 : i32, i32
  }
  func.func @transform_4(%arg0: i32) -> (i32, i32) {
    %c0_i32 = arith.constant 0 : i32
    %c0_i32_0 = arith.constant 0 : i32
    %c0_i32_1 = arith.constant 0 : i32
    return %c0_i32, %c0_i32_0 : i32, i32
  }
  func.func @transform_5(%arg0: i32) -> (i32, i32) {
    %c0_i32 = arith.constant 0 : i32
    %c0_i32_0 = arith.constant 0 : i32
    %c0_i32_1 = arith.constant 0 : i32
    return %c0_i32, %c0_i32_0 : i32, i32
  }
  func.func @transform_6(%arg0: i32) -> (i32, i32, i32) {
    %c0_i32 = arith.constant 0 : i32
    %c0_i32_0 = arith.constant 0 : i32
    %c0_i32_1 = arith.constant 0 : i32
    %c0_i32_2 = arith.constant 0 : i32
    return %c0_i32, %c0_i32_0, %c0_i32_1 : i32, i32, i32
  }
  func.func @transform_7(%arg0: i32) -> (i32, i32, i32) {
    %c0_i32 = arith.constant 0 : i32
    %c0_i32_0 = arith.constant 0 : i32
    %c0_i32_1 = arith.constant 0 : i32
    %c0_i32_2 = arith.constant 0 : i32
    return %c0_i32, %c0_i32_0, %c0_i32_1 : i32, i32, i32
  }
  func.func @transform_8(%arg0: i32) -> (i32, i32) {
    %c2_i32 = arith.constant 2 : i32
    %c0_i32 = arith.constant 0 : i32
    %c0_i32_0 = arith.constant 0 : i32
    return %c2_i32, %c0_i32 : i32, i32
  }
}

module attributes {stable_mosaic.version = 11 : i64} {
  func.func @_bnrelu_kernel(%arg0: i32, %arg1: memref<32x8xf32, #tpu.memory_space<vmem>>, %arg2: memref<32x1xf32, #tpu.memory_space<vmem>>, %arg3: memref<32x1xf32, #tpu.memory_space<vmem>>, %arg4: memref<32x8xf32, #tpu.memory_space<vmem>>) attributes {dimension_semantics = [#tpu.dimension_semantics<parallel>], iteration_bounds = array<i64: 1>, scalar_prefetch = 0 : i64, scratch_operands = 0 : i64, tpu.core_type = #tpu.core_type<tc>, window_params = [{transform_indices = @transform_0, window_bounds = array<i64: 32, 8>}, {pipeline_mode = #tpu.pipeline_mode<synchronous>, transform_indices = @transform_1, window_bounds = array<i64: 32, 1>}, {pipeline_mode = #tpu.pipeline_mode<synchronous>, transform_indices = @transform_2, window_bounds = array<i64: 32, 1>}, {transform_indices = @transform_3, window_bounds = array<i64: 32, 8>}]} {
    %c0 = arith.constant 0 : index
    %c0_0 = arith.constant 0 : index
    %0 = vector.load %arg1[%c0, %c0_0] : memref<32x8xf32, #tpu.memory_space<vmem>>, vector<32x8xf32>
    %c0_1 = arith.constant 0 : index
    %c0_2 = arith.constant 0 : index
    %1 = vector.load %arg2[%c0_1, %c0_2] : memref<32x1xf32, #tpu.memory_space<vmem>>, vector<32x1xf32>
    %2 = vector.broadcast %1 : vector<32x1xf32> to vector<32x8xf32>
    %3 = arith.mulf %0, %2 : vector<32x8xf32>
    %c0_3 = arith.constant 0 : index
    %c0_4 = arith.constant 0 : index
    %4 = vector.load %arg3[%c0_3, %c0_4] : memref<32x1xf32, #tpu.memory_space<vmem>>, vector<32x1xf32>
    %5 = vector.broadcast %4 : vector<32x1xf32> to vector<32x8xf32>
    %6 = arith.addf %3, %5 : vector<32x8xf32>
    %cst = arith.constant 0.000000e+00 : f32
    %7 = vector.broadcast %cst : f32 to vector<32x8xf32>
    %8 = arith.maximumf %6, %7 : vector<32x8xf32>
    %c0_5 = arith.constant 0 : index
    %c0_6 = arith.constant 0 : index
    %9 = vector.load %arg4[%c0_5, %c0_6] : memref<32x8xf32, #tpu.memory_space<vmem>>, vector<32x8xf32>
    tpu.vector_store %arg4[%c0_5, %c0_6], %8 {strides = array<i32>} : memref<32x8xf32, #tpu.memory_space<vmem>>, vector<32x8xf32>,
    return
  }
  func.func @transform_0(%arg0: i32) -> (i32, i32) {
    %c0_i32 = arith.constant 0 : i32
    %c0_i32_0 = arith.constant 0 : i32
    return %c0_i32, %arg0 : i32, i32
  }
  func.func @transform_1(%arg0: i32) -> (i32, i32) {
    %c0_i32 = arith.constant 0 : i32
    %c0_i32_0 = arith.constant 0 : i32
    %c0_i32_1 = arith.constant 0 : i32
    return %c0_i32, %c0_i32_0 : i32, i32
  }
  func.func @transform_2(%arg0: i32) -> (i32, i32) {
    %c0_i32 = arith.constant 0 : i32
    %c0_i32_0 = arith.constant 0 : i32
    %c0_i32_1 = arith.constant 0 : i32
    return %c0_i32, %c0_i32_0 : i32, i32
  }
  func.func @transform_3(%arg0: i32) -> (i32, i32) {
    %c0_i32 = arith.constant 0 : i32
    %c0_i32_0 = arith.constant 0 : i32
    return %c0_i32, %arg0 : i32, i32
  }
}

module attributes {stable_mosaic.version = 11 : i64} {
  func.func @kernel(%arg0: i32, %arg1: memref<24x8xf32, #tpu.memory_space<vmem>>, %arg2: memref<24x1xf32, #tpu.memory_space<vmem>>, %arg3: memref<24x1xf32, #tpu.memory_space<vmem>>, %arg4: memref<16x24xbf16, #tpu.memory_space<vmem>>, %arg5: memref<16x1xf32, #tpu.memory_space<vmem>>, %arg6: memref<16x1xf32, #tpu.memory_space<vmem>>, %arg7: memref<9x8x16xbf16, #tpu.memory_space<vmem>>, %arg8: memref<9x1x8xf32, #tpu.memory_space<vmem>>, %arg9: memref<8x8xf32, #tpu.memory_space<vmem>>, %arg10: memref<16x264xf32, #tpu.memory_space<vmem>>) attributes {dimension_semantics = [#tpu.dimension_semantics<arbitrary>], iteration_bounds = array<i64: 1>, scalar_prefetch = 0 : i64, scratch_operands = 1 : i64, tpu.core_type = #tpu.core_type<tc>, window_params = [{transform_indices = @transform_0, window_bounds = array<i64: 24, 8>}, {pipeline_mode = #tpu.pipeline_mode<synchronous>, transform_indices = @transform_1, window_bounds = array<i64: 24, 1>}, {pipeline_mode = #tpu.pipeline_mode<synchronous>, transform_indices = @transform_2, window_bounds = array<i64: 24, 1>}, {pipeline_mode = #tpu.pipeline_mode<synchronous>, transform_indices = @transform_3, window_bounds = array<i64: 16, 24>}, {pipeline_mode = #tpu.pipeline_mode<synchronous>, transform_indices = @transform_4, window_bounds = array<i64: 16, 1>}, {pipeline_mode = #tpu.pipeline_mode<synchronous>, transform_indices = @transform_5, window_bounds = array<i64: 16, 1>}, {pipeline_mode = #tpu.pipeline_mode<synchronous>, transform_indices = @transform_6, window_bounds = array<i64: 9, 8, 16>}, {pipeline_mode = #tpu.pipeline_mode<synchronous>, transform_indices = @transform_7, window_bounds = array<i64: 9, 1, 8>}, {transform_indices = @transform_8, window_bounds = array<i64: 8, 8>}]} {
    %c0 = arith.constant 0 : index
    %c0_0 = arith.constant 0 : index
    %0 = vector.load %arg1[%c0, %c0_0] : memref<24x8xf32, #tpu.memory_space<vmem>>, vector<24x8xf32>
    %c0_1 = arith.constant 0 : index
    %c0_2 = arith.constant 0 : index
    %1 = vector.load %arg2[%c0_1, %c0_2] : memref<24x1xf32, #tpu.memory_space<vmem>>, vector<24x1xf32>
    %2 = vector.broadcast %1 : vector<24x1xf32> to vector<24x8xf32>
    %3 = arith.mulf %0, %2 : vector<24x8xf32>
    %c0_3 = arith.constant 0 : index
    %c0_4 = arith.constant 0 : index
    %4 = vector.load %arg3[%c0_3, %c0_4] : memref<24x1xf32, #tpu.memory_space<vmem>>, vector<24x1xf32>
    %5 = vector.broadcast %4 : vector<24x1xf32> to vector<24x8xf32>
    %6 = arith.addf %3, %5 : vector<24x8xf32>
    %cst = arith.constant 0.000000e+00 : f32
    %7 = vector.broadcast %cst : f32 to vector<24x8xf32>
    %8 = arith.maximumf %6, %7 : vector<24x8xf32>
    %c0_5 = arith.constant 0 : index
    %c0_6 = arith.constant 0 : index
    %9 = vector.load %arg4[%c0_5, %c0_6] : memref<16x24xbf16, #tpu.memory_space<vmem>>, vector<16x24xbf16>
    %10 = arith.truncf %8 : vector<24x8xf32> to vector<24x8xbf16>
    %cst_7 = arith.constant dense<0.000000e+00> : vector<16x8xf32>
    %11 = tpu.matmul %9, %10, %cst_7 {dimension_numbers = #tpu.dot_dimension_numbers<[1], [0], [0], [1], [0, 0, 1, 1], [], []>} : vector<16x24xbf16>, vector<24x8xbf16>, vector<16x8xf32> -> vector<16x8xf32>
    %c0_8 = arith.constant 0 : index
    %c0_9 = arith.constant 0 : index
    %12 = vector.load %arg5[%c0_8, %c0_9] : memref<16x1xf32, #tpu.memory_space<vmem>>, vector<16x1xf32>
    %13 = vector.broadcast %12 : vector<16x1xf32> to vector<16x8xf32>
    %14 = arith.mulf %11, %13 : vector<16x8xf32>
    %c0_10 = arith.constant 0 : index
    %c0_11 = arith.constant 0 : index
    %15 = vector.load %arg6[%c0_10, %c0_11] : memref<16x1xf32, #tpu.memory_space<vmem>>, vector<16x1xf32>
    %16 = vector.broadcast %15 : vector<16x1xf32> to vector<16x8xf32>
    %17 = arith.addf %14, %16 : vector<16x8xf32>
    %cst_12 = arith.constant 0.000000e+00 : f32
    %18 = vector.broadcast %cst_12 : f32 to vector<16x8xf32>
    %19 = arith.maximumf %17, %18 : vector<16x8xf32>
    %cst_13 = arith.constant 0.000000e+00 : f32
    %20 = vector.broadcast %cst_13 : f32 to vector<16x264xf32>
    %c0_14 = arith.constant 0 : index
    %c0_15 = arith.constant 0 : index
    %21 = vector.load %arg10[%c0_14, %c0_15] : memref<16x264xf32, #tpu.memory_space<vmem>>, vector<16x264xf32>
    tpu.vector_store %arg10[%c0_14, %c0_15], %20 {strides = array<i32>} : memref<16x264xf32, #tpu.memory_space<vmem>>, vector<16x264xf32>,
    %c0_16 = arith.constant 0 : index
    %c128 = arith.constant 128 : index
    %22 = vector.load %arg10[%c0_16, %c128] : memref<16x264xf32, #tpu.memory_space<vmem>>, vector<16x8xf32>
    tpu.vector_store %arg10[%c0_16, %c128], %19 {strides = array<i32>} : memref<16x264xf32, #tpu.memory_space<vmem>>, vector<16x8xf32>,
    %cst_17 = arith.constant 0.000000e+00 : f32
    %23 = vector.broadcast %cst_17 : f32 to vector<8x8xf32>
    %c0_18 = arith.constant 0 : index
    %c125 = arith.constant 125 : index
    %24 = vector.load %arg10[%c0_18, %c125] : memref<16x264xf32, #tpu.memory_space<vmem>>, vector<16x8xf32>
    %c0_19 = arith.constant 0 : index
    %c0_20 = arith.constant 0 : index
    %c0_21 = arith.constant 0 : index
    %25 = vector.load %arg8[%c0_19, %c0_20, %c0_21] : memref<9x1x8xf32, #tpu.memory_space<vmem>>, vector<1x1x8xf32>
    %26 = vector.shape_cast %25 : vector<1x1x8xf32> to vector<1x8xf32>
    %27 = vector.broadcast %26 : vector<1x8xf32> to vector<16x8xf32>
    %28 = arith.mulf %24, %27 : vector<16x8xf32>
    %c0_22 = arith.constant 0 : index
    %c0_23 = arith.constant 0 : index
    %c0_24 = arith.constant 0 : index
    %29 = vector.load %arg7[%c0_22, %c0_23, %c0_24] : memref<9x8x16xbf16, #tpu.memory_space<vmem>>, vector<1x8x16xbf16>
    %30 = vector.shape_cast %29 : vector<1x8x16xbf16> to vector<8x16xbf16>
    %31 = arith.truncf %28 : vector<16x8xf32> to vector<16x8xbf16>
    %cst_25 = arith.constant dense<0.000000e+00> : vector<8x8xf32>
    %32 = tpu.matmul %30, %31, %cst_25 {dimension_numbers = #tpu.dot_dimension_numbers<[1], [0], [0], [1], [0, 0, 1, 1], [], []>} : vector<8x16xbf16>, vector<16x8xbf16>, vector<8x8xf32> -> vector<8x8xf32>
    %33 = arith.addf %23, %32 : vector<8x8xf32>
    %c0_26 = arith.constant 0 : index
    %c126 = arith.constant 126 : index
    %34 = vector.load %arg10[%c0_26, %c126] : memref<16x264xf32, #tpu.memory_space<vmem>>, vector<16x8xf32>
    %c1 = arith.constant 1 : index
    %c0_27 = arith.constant 0 : index
    %c0_28 = arith.constant 0 : index
    %35 = vector.load %arg8[%c1, %c0_27, %c0_28] : memref<9x1x8xf32, #tpu.memory_space<vmem>>, vector<1x1x8xf32>
    %36 = vector.shape_cast %35 : vector<1x1x8xf32> to vector<1x8xf32>
    %37 = vector.broadcast %36 : vector<1x8xf32> to vector<16x8xf32>
    %38 = arith.mulf %34, %37 : vector<16x8xf32>
    %c1_29 = arith.constant 1 : index
    %c0_30 = arith.constant 0 : index
    %c0_31 = arith.constant 0 : index
    %39 = vector.load %arg7[%c1_29, %c0_30, %c0_31] : memref<9x8x16xbf16, #tpu.memory_space<vmem>>, vector<1x8x16xbf16>
    %40 = vector.shape_cast %39 : vector<1x8x16xbf16> to vector<8x16xbf16>
    %41 = arith.truncf %38 : vector<16x8xf32> to vector<16x8xbf16>
    %cst_32 = arith.constant dense<0.000000e+00> : vector<8x8xf32>
    %42 = tpu.matmul %40, %41, %cst_32 {dimension_numbers = #tpu.dot_dimension_numbers<[1], [0], [0], [1], [0, 0, 1, 1], [], []>} : vector<8x16xbf16>, vector<16x8xbf16>, vector<8x8xf32> -> vector<8x8xf32>
    %43 = arith.addf %33, %42 : vector<8x8xf32>
    %c0_33 = arith.constant 0 : index
    %c127 = arith.constant 127 : index
    %44 = vector.load %arg10[%c0_33, %c127] : memref<16x264xf32, #tpu.memory_space<vmem>>, vector<16x8xf32>
    %c2 = arith.constant 2 : index
    %c0_34 = arith.constant 0 : index
    %c0_35 = arith.constant 0 : index
    %45 = vector.load %arg8[%c2, %c0_34, %c0_35] : memref<9x1x8xf32, #tpu.memory_space<vmem>>, vector<1x1x8xf32>
    %46 = vector.shape_cast %45 : vector<1x1x8xf32> to vector<1x8xf32>
    %47 = vector.broadcast %46 : vector<1x8xf32> to vector<16x8xf32>
    %48 = arith.mulf %44, %47 : vector<16x8xf32>
    %c2_36 = arith.constant 2 : index
    %c0_37 = arith.constant 0 : index
    %c0_38 = arith.constant 0 : index
    %49 = vector.load %arg7[%c2_36, %c0_37, %c0_38] : memref<9x8x16xbf16, #tpu.memory_space<vmem>>, vector<1x8x16xbf16>
    %50 = vector.shape_cast %49 : vector<1x8x16xbf16> to vector<8x16xbf16>
    %51 = arith.truncf %48 : vector<16x8xf32> to vector<16x8xbf16>
    %cst_39 = arith.constant dense<0.000000e+00> : vector<8x8xf32>
    %52 = tpu.matmul %50, %51, %cst_39 {dimension_numbers = #tpu.dot_dimension_numbers<[1], [0], [0], [1], [0, 0, 1, 1], [], []>} : vector<8x16xbf16>, vector<16x8xbf16>, vector<8x8xf32> -> vector<8x8xf32>
    %53 = arith.addf %43, %52 : vector<8x8xf32>
    %c0_40 = arith.constant 0 : index
    %c127_41 = arith.constant 127 : index
    %54 = vector.load %arg10[%c0_40, %c127_41] : memref<16x264xf32, #tpu.memory_space<vmem>>, vector<16x8xf32>
    %c3 = arith.constant 3 : index
    %c0_42 = arith.constant 0 : index
    %c0_43 = arith.constant 0 : index
    %55 = vector.load %arg8[%c3, %c0_42, %c0_43] : memref<9x1x8xf32, #tpu.memory_space<vmem>>, vector<1x1x8xf32>
    %56 = vector.shape_cast %55 : vector<1x1x8xf32> to vector<1x8xf32>
    %57 = vector.broadcast %56 : vector<1x8xf32> to vector<16x8xf32>
    %58 = arith.mulf %54, %57 : vector<16x8xf32>
    %c3_44 = arith.constant 3 : index
    %c0_45 = arith.constant 0 : index
    %c0_46 = arith.constant 0 : index
    %59 = vector.load %arg7[%c3_44, %c0_45, %c0_46] : memref<9x8x16xbf16, #tpu.memory_space<vmem>>, vector<1x8x16xbf16>
    %60 = vector.shape_cast %59 : vector<1x8x16xbf16> to vector<8x16xbf16>
    %61 = arith.truncf %58 : vector<16x8xf32> to vector<16x8xbf16>
    %cst_47 = arith.constant dense<0.000000e+00> : vector<8x8xf32>
    %62 = tpu.matmul %60, %61, %cst_47 {dimension_numbers = #tpu.dot_dimension_numbers<[1], [0], [0], [1], [0, 0, 1, 1], [], []>} : vector<8x16xbf16>, vector<16x8xbf16>, vector<8x8xf32> -> vector<8x8xf32>
    %63 = arith.addf %53, %62 : vector<8x8xf32>
    %c0_48 = arith.constant 0 : index
    %c128_49 = arith.constant 128 : index
    %64 = vector.load %arg10[%c0_48, %c128_49] : memref<16x264xf32, #tpu.memory_space<vmem>>, vector<16x8xf32>
    %c4 = arith.constant 4 : index
    %c0_50 = arith.constant 0 : index
    %c0_51 = arith.constant 0 : index
    %65 = vector.load %arg8[%c4, %c0_50, %c0_51] : memref<9x1x8xf32, #tpu.memory_space<vmem>>, vector<1x1x8xf32>
    %66 = vector.shape_cast %65 : vector<1x1x8xf32> to vector<1x8xf32>
    %67 = vector.broadcast %66 : vector<1x8xf32> to vector<16x8xf32>
    %68 = arith.mulf %64, %67 : vector<16x8xf32>
    %c4_52 = arith.constant 4 : index
    %c0_53 = arith.constant 0 : index
    %c0_54 = arith.constant 0 : index
    %69 = vector.load %arg7[%c4_52, %c0_53, %c0_54] : memref<9x8x16xbf16, #tpu.memory_space<vmem>>, vector<1x8x16xbf16>
    %70 = vector.shape_cast %69 : vector<1x8x16xbf16> to vector<8x16xbf16>
    %71 = arith.truncf %68 : vector<16x8xf32> to vector<16x8xbf16>
    %cst_55 = arith.constant dense<0.000000e+00> : vector<8x8xf32>
    %72 = tpu.matmul %70, %71, %cst_55 {dimension_numbers = #tpu.dot_dimension_numbers<[1], [0], [0], [1], [0, 0, 1, 1], [], []>} : vector<8x16xbf16>, vector<16x8xbf16>, vector<8x8xf32> -> vector<8x8xf32>
    %73 = arith.addf %63, %72 : vector<8x8xf32>
    %c0_56 = arith.constant 0 : index
    %c129 = arith.constant 129 : index
    %74 = vector.load %arg10[%c0_56, %c129] : memref<16x264xf32, #tpu.memory_space<vmem>>, vector<16x8xf32>
    %c5 = arith.constant 5 : index
    %c0_57 = arith.constant 0 : index
    %c0_58 = arith.constant 0 : index
    %75 = vector.load %arg8[%c5, %c0_57, %c0_58] : memref<9x1x8xf32, #tpu.memory_space<vmem>>, vector<1x1x8xf32>
    %76 = vector.shape_cast %75 : vector<1x1x8xf32> to vector<1x8xf32>
    %77 = vector.broadcast %76 : vector<1x8xf32> to vector<16x8xf32>
    %78 = arith.mulf %74, %77 : vector<16x8xf32>
    %c5_59 = arith.constant 5 : index
    %c0_60 = arith.constant 0 : index
    %c0_61 = arith.constant 0 : index
    %79 = vector.load %arg7[%c5_59, %c0_60, %c0_61] : memref<9x8x16xbf16, #tpu.memory_space<vmem>>, vector<1x8x16xbf16>
    %80 = vector.shape_cast %79 : vector<1x8x16xbf16> to vector<8x16xbf16>
    %81 = arith.truncf %78 : vector<16x8xf32> to vector<16x8xbf16>
    %cst_62 = arith.constant dense<0.000000e+00> : vector<8x8xf32>
    %82 = tpu.matmul %80, %81, %cst_62 {dimension_numbers = #tpu.dot_dimension_numbers<[1], [0], [0], [1], [0, 0, 1, 1], [], []>} : vector<8x16xbf16>, vector<16x8xbf16>, vector<8x8xf32> -> vector<8x8xf32>
    %83 = arith.addf %73, %82 : vector<8x8xf32>
    %c0_63 = arith.constant 0 : index
    %c129_64 = arith.constant 129 : index
    %84 = vector.load %arg10[%c0_63, %c129_64] : memref<16x264xf32, #tpu.memory_space<vmem>>, vector<16x8xf32>
    %c6 = arith.constant 6 : index
    %c0_65 = arith.constant 0 : index
    %c0_66 = arith.constant 0 : index
    %85 = vector.load %arg8[%c6, %c0_65, %c0_66] : memref<9x1x8xf32, #tpu.memory_space<vmem>>, vector<1x1x8xf32>
    %86 = vector.shape_cast %85 : vector<1x1x8xf32> to vector<1x8xf32>
    %87 = vector.broadcast %86 : vector<1x8xf32> to vector<16x8xf32>
    %88 = arith.mulf %84, %87 : vector<16x8xf32>
    %c6_67 = arith.constant 6 : index
    %c0_68 = arith.constant 0 : index
    %c0_69 = arith.constant 0 : index
    %89 = vector.load %arg7[%c6_67, %c0_68, %c0_69] : memref<9x8x16xbf16, #tpu.memory_space<vmem>>, vector<1x8x16xbf16>
    %90 = vector.shape_cast %89 : vector<1x8x16xbf16> to vector<8x16xbf16>
    %91 = arith.truncf %88 : vector<16x8xf32> to vector<16x8xbf16>
    %cst_70 = arith.constant dense<0.000000e+00> : vector<8x8xf32>
    %92 = tpu.matmul %90, %91, %cst_70 {dimension_numbers = #tpu.dot_dimension_numbers<[1], [0], [0], [1], [0, 0, 1, 1], [], []>} : vector<8x16xbf16>, vector<16x8xbf16>, vector<8x8xf32> -> vector<8x8xf32>
    %93 = arith.addf %83, %92 : vector<8x8xf32>
    %c0_71 = arith.constant 0 : index
    %c130 = arith.constant 130 : index
    %94 = vector.load %arg10[%c0_71, %c130] : memref<16x264xf32, #tpu.memory_space<vmem>>, vector<16x8xf32>
    %c7 = arith.constant 7 : index
    %c0_72 = arith.constant 0 : index
    %c0_73 = arith.constant 0 : index
    %95 = vector.load %arg8[%c7, %c0_72, %c0_73] : memref<9x1x8xf32, #tpu.memory_space<vmem>>, vector<1x1x8xf32>
    %96 = vector.shape_cast %95 : vector<1x1x8xf32> to vector<1x8xf32>
    %97 = vector.broadcast %96 : vector<1x8xf32> to vector<16x8xf32>
    %98 = arith.mulf %94, %97 : vector<16x8xf32>
    %c7_74 = arith.constant 7 : index
    %c0_75 = arith.constant 0 : index
    %c0_76 = arith.constant 0 : index
    %99 = vector.load %arg7[%c7_74, %c0_75, %c0_76] : memref<9x8x16xbf16, #tpu.memory_space<vmem>>, vector<1x8x16xbf16>
    %100 = vector.shape_cast %99 : vector<1x8x16xbf16> to vector<8x16xbf16>
    %101 = arith.truncf %98 : vector<16x8xf32> to vector<16x8xbf16>
    %cst_77 = arith.constant dense<0.000000e+00> : vector<8x8xf32>
    %102 = tpu.matmul %100, %101, %cst_77 {dimension_numbers = #tpu.dot_dimension_numbers<[1], [0], [0], [1], [0, 0, 1, 1], [], []>} : vector<8x16xbf16>, vector<16x8xbf16>, vector<8x8xf32> -> vector<8x8xf32>
    %103 = arith.addf %93, %102 : vector<8x8xf32>
    %c0_78 = arith.constant 0 : index
    %c131 = arith.constant 131 : index
    %104 = vector.load %arg10[%c0_78, %c131] : memref<16x264xf32, #tpu.memory_space<vmem>>, vector<16x8xf32>
    %c8 = arith.constant 8 : index
    %c0_79 = arith.constant 0 : index
    %c0_80 = arith.constant 0 : index
    %105 = vector.load %arg8[%c8, %c0_79, %c0_80] : memref<9x1x8xf32, #tpu.memory_space<vmem>>, vector<1x1x8xf32>
    %106 = vector.shape_cast %105 : vector<1x1x8xf32> to vector<1x8xf32>
    %107 = vector.broadcast %106 : vector<1x8xf32> to vector<16x8xf32>
    %108 = arith.mulf %104, %107 : vector<16x8xf32>
    %c8_81 = arith.constant 8 : index
    %c0_82 = arith.constant 0 : index
    %c0_83 = arith.constant 0 : index
    %109 = vector.load %arg7[%c8_81, %c0_82, %c0_83] : memref<9x8x16xbf16, #tpu.memory_space<vmem>>, vector<1x8x16xbf16>
    %110 = vector.shape_cast %109 : vector<1x8x16xbf16> to vector<8x16xbf16>
    %111 = arith.truncf %108 : vector<16x8xf32> to vector<16x8xbf16>
    %cst_84 = arith.constant dense<0.000000e+00> : vector<8x8xf32>
    %112 = tpu.matmul %110, %111, %cst_84 {dimension_numbers = #tpu.dot_dimension_numbers<[1], [0], [0], [1], [0, 0, 1, 1], [], []>} : vector<8x16xbf16>, vector<16x8xbf16>, vector<8x8xf32> -> vector<8x8xf32>
    %113 = arith.addf %103, %112 : vector<8x8xf32>
    %c0_85 = arith.constant 0 : index
    %c0_86 = arith.constant 0 : index
    %114 = vector.load %arg9[%c0_85, %c0_86] : memref<8x8xf32, #tpu.memory_space<vmem>>, vector<8x8xf32>
    tpu.vector_store %arg9[%c0_85, %c0_86], %113 {strides = array<i32>} : memref<8x8xf32, #tpu.memory_space<vmem>>, vector<8x8xf32>,
    return
  }
  func.func @transform_0(%arg0: i32) -> (i32, i32) {
    %c0_i32 = arith.constant 0 : i32
    %c0_i32_0 = arith.constant 0 : i32
    %c0_i32_1 = arith.constant 0 : i32
    return %c0_i32, %c0_i32_0 : i32, i32
  }
  func.func @transform_1(%arg0: i32) -> (i32, i32) {
    %c0_i32 = arith.constant 0 : i32
    %c0_i32_0 = arith.constant 0 : i32
    %c0_i32_1 = arith.constant 0 : i32
    return %c0_i32, %c0_i32_0 : i32, i32
  }
  func.func @transform_2(%arg0: i32) -> (i32, i32) {
    %c0_i32 = arith.constant 0 : i32
    %c0_i32_0 = arith.constant 0 : i32
    %c0_i32_1 = arith.constant 0 : i32
    return %c0_i32, %c0_i32_0 : i32, i32
  }
  func.func @transform_3(%arg0: i32) -> (i32, i32) {
    %c0_i32 = arith.constant 0 : i32
    %c0_i32_0 = arith.constant 0 : i32
    %c0_i32_1 = arith.constant 0 : i32
    return %c0_i32, %c0_i32_0 : i32, i32
  }
  func.func @transform_4(%arg0: i32) -> (i32, i32) {
    %c0_i32 = arith.constant 0 : i32
    %c0_i32_0 = arith.constant 0 : i32
    %c0_i32_1 = arith.constant 0 : i32
    return %c0_i32, %c0_i32_0 : i32, i32
  }
  func.func @transform_5(%arg0: i32) -> (i32, i32) {
    %c0_i32 = arith.constant 0 : i32
    %c0_i32_0 = arith.constant 0 : i32
    %c0_i32_1 = arith.constant 0 : i32
    return %c0_i32, %c0_i32_0 : i32, i32
  }
  func.func @transform_6(%arg0: i32) -> (i32, i32, i32) {
    %c0_i32 = arith.constant 0 : i32
    %c0_i32_0 = arith.constant 0 : i32
    %c0_i32_1 = arith.constant 0 : i32
    %c0_i32_2 = arith.constant 0 : i32
    return %c0_i32, %c0_i32_0, %c0_i32_1 : i32, i32, i32
  }
  func.func @transform_7(%arg0: i32) -> (i32, i32, i32) {
    %c0_i32 = arith.constant 0 : i32
    %c0_i32_0 = arith.constant 0 : i32
    %c0_i32_1 = arith.constant 0 : i32
    %c0_i32_2 = arith.constant 0 : i32
    return %c0_i32, %c0_i32_0, %c0_i32_1 : i32, i32, i32
  }
  func.func @transform_8(%arg0: i32) -> (i32, i32) {
    %c3_i32 = arith.constant 3 : i32
    %c0_i32 = arith.constant 0 : i32
    %c0_i32_0 = arith.constant 0 : i32
    return %c3_i32, %c0_i32 : i32, i32
  }
}

</mosaic_0001>

<llo_original>
// kernel: densenet_forward.13
$region0: #{densenet_forward.13}
  #allocation0 [shape = 'u32[]', space=smem, size = 0x4, offset = 0x4, fixed_abs, tag = 'smem constant byte address 0x4 - core index']
  #allocation1 [shape = 'u32[72,128]{1,0:T(1,128)}', space=vmem, size = 0x9000, scoped, tag = 'internal scratch']
  %s0 = inlined_call_operand.vmem [shape: bf16[147,2048], index: 0, kind: input, shape index: {}]
  %s1 = inlined_call_operand.vmem [shape: bf16[16,147], index: 1, kind: input, shape index: {}]
  %s2 = inlined_call_operand.vmem [shape: f32[16,1], index: 2, kind: input, shape index: {}]
  %s3 = inlined_call_operand.vmem [shape: f32[16,1], index: 3, kind: input, shape index: {}]
  %s4 = inlined_call_operand.vmem [shape: f32[16,2048], index: 4, kind: output, shape index: {}]
  %s5 = sld [smem:[#allocation0]]
  $region91: #{densenet_forward.13} parent=0
    _
  %s7 = ssub.s32 1, %s5
  %s8 = scalar_select 0, %s7, %s5
  $region1: #{densenet_forward.13} parent=0
    #allocation2 [shape = 'u8[311296]{0}', space=vmem, size = 0x4c000, scoped, tag = 'input window, operand 0']
    #allocation3 [shape = 'u8[65536]{0}', space=vmem, size = 0x10000, scoped, tag = 'output window, operand 0']
    loop: start=0, step=1, limit=6
    $region2: #{densenet_forward.13} parent=1 // loop_pre_header
      _
    $region3: #{densenet_forward.13} parent=1 // loop_header
      %s10 = sphi 0, %s14
      %p11 = scmp.ge.s32.totalorder %s10, 6
      %s20 = sphi 0, %s22
      %s23 = sphi 0, %s20
      %s24 = sphi 0, %s23
      %s40 = sphi 0, %s24
      %s44 = sphi 0, %s44
      %s46 = sphi 0, %s44
      %s47 = sphi 0, %s46
      %s61 = sphi 0, %s47
      %s65 = sphi 0, %s65
      %s67 = sphi 0, %s65
      %s68 = sphi 0, %s67
      %s82 = sphi 0, %s68
      %s86 = sphi 0, %s86
      %s88 = sphi 0, %s86
      %s89 = sphi 0, %s88
      %s103 = sphi 0, %s89
      %s109 = sphi 0, %s111
      %s112 = sphi 0, %s109
      %s113 = sphi 0, %s112
      %s129 = sphi 0, %s113
    $region4: #{densenet_forward.13} parent=1 // loop_header_branch
      %13 = sbr.rel (%p11) target = $region8
    $region5: #{densenet_forward.13} parent=1 // loop_body
      %s15 = ssub.s32 %s10, 1
      %s16 = ssub.s32 %s10, 2
      %s17 = sadd.s32 %s10, 1
      %s18 = ssub.s32 %s10, %s17
      %p19 = scmp.eq.s32.totalorder %s18, 0
      %s21 = sadd.s32 %s20, 1
      %s22 = scalar_select %p19, %s20, %s21
      %p25 = pneg %p19
      %p26 = scmp.eq.s32.totalorder %s10, 3
      %p27 = por %p25, %p26
      %p28 = scmp.ne.s32.totalorder %s20, %s23
      %p29 = scmp.eq.s32.totalorder %s10, 0
      %p30 = por %p28, %p29
      %p31 = scmp.ne.s32.totalorder %s20, %s23
      %p32 = scmp.eq.s32.totalorder %s15, 3
      %p33 = por %p31, %p32
      %p34 = scmp.ne.s32.totalorder %s23, %s24
      %p35 = scmp.eq.s32.totalorder %s15, 0
      %p36 = por %p34, %p35
      %p37 = scmp.ne.s32.totalorder %s23, %s24
      %p38 = scmp.eq.s32.totalorder %s16, 3
      %p39 = por %p37, %p38
      %p41 = scmp.ne.s32.totalorder %s24, %s40
      %p42 = scmp.eq.s32.totalorder %s16, 0
      %p43 = por %p41, %p42
      %s45 = sadd.s32 %s44, 1
      %p48 = scmp.eq.s32.totalorder %s10, 3
      %p49 = scmp.ne.s32.totalorder %s44, %s46
      %p50 = scmp.eq.s32.totalorder %s10, 0
      %p51 = por %p49, %p50
      %p52 = scmp.ne.s32.totalorder %s44, %s46
      %p53 = scmp.eq.s32.totalorder %s15, 3
      %p54 = por %p52, %p53
      %p55 = scmp.ne.s32.totalorder %s46, %s47
      %p56 = scmp.eq.s32.totalorder %s15, 0
      %p57 = por %p55, %p56
      %p58 = scmp.ne.s32.totalorder %s46, %s47
      %p59 = scmp.eq.s32.totalorder %s16, 3
      %p60 = por %p58, %p59
      %p62 = scmp.ne.s32.totalorder %s47, %s61
      %p63 = scmp.eq.s32.totalorder %s16, 0
      %p64 = por %p62, %p63
      %s66 = sadd.s32 %s65, 1
      %p69 = scmp.eq.s32.totalorder %s10, 3
      %p70 = scmp.ne.s32.totalorder %s65, %s67
      %p71 = scmp.eq.s32.totalorder %s10, 0
      %p72 = por %p70, %p71
      %p73 = scmp.ne.s32.totalorder %s65, %s67
      %p74 = scmp.eq.s32.totalorder %s15, 3
      %p75 = por %p73, %p74
      %p76 = scmp.ne.s32.totalorder %s67, %s68
      %p77 = scmp.eq.s32.totalorder %s15, 0
      %p78 = por %p76, %p77
      %p79 = scmp.ne.s32.totalorder %s67, %s68
      %p80 = scmp.eq.s32.totalorder %s16, 3
      %p81 = por %p79, %p80
      %p83 = scmp.ne.s32.totalorder %s68, %s82
      %p84 = scmp.eq.s32.totalorder %s16, 0
      %p85 = por %p83, %p84
      %s87 = sadd.s32 %s86, 1
      %p90 = scmp.eq.s32.totalorder %s10, 3
      %p91 = scmp.ne.s32.totalorder %s86, %s88
      %p92 = scmp.eq.s32.totalorder %s10, 0
      %p93 = por %p91, %p92
      %p94 = scmp.ne.s32.totalorder %s86, %s88
      %p95 = scmp.eq.s32.totalorder %s15, 3
      %p96 = por %p94, %p95
      %p97 = scmp.ne.s32.totalorder %s88, %s89
      %p98 = scmp.eq.s32.totalorder %s15, 0
      %p99 = por %p97, %p98
      %p100 = scmp.ne.s32.totalorder %s88, %s89
      %p101 = scmp.eq.s32.totalorder %s16, 3
      %p102 = por %p100, %p101
      %p104 = scmp.ne.s32.totalorder %s89, %s103
      %p105 = scmp.eq.s32.totalorder %s16, 0
      %p106 = por %p104, %p105
      %s107 = ssub.s32 %s10, %s17
      %p108 = scmp.eq.s32.totalorder %s107, 0
      %s110 = sadd.s32 %s109, 1
      %s111 = scalar_select %p108, %s109, %s110
      %p114 = pneg %p108
      %p115 = scmp.eq.s32.totalorder %s10, 3
      %p116 = por %p114, %p115
      %p117 = scmp.ne.s32.totalorder %s109, %s112
      %p118 = scmp.eq.s32.totalorder %s10, 0
      %p119 = por %p117, %p118
      %p120 = scmp.ne.s32.totalorder %s109, %s112
      %p121 = scmp.eq.s32.totalorder %s15, 3
      %p122 = por %p120, %p121
      %p123 = scmp.ne.s32.totalorder %s112, %s113
      %p124 = scmp.eq.s32.totalorder %s15, 0
      %p125 = por %p123, %p124
      %p126 = scmp.ne.s32.totalorder %s112, %s113
      %p127 = scmp.eq.s32.totalorder %s16, 3
      %p128 = por %p126, %p127
      %p130 = scmp.ne.s32.totalorder %s113, %s129
      %p131 = scmp.eq.s32.totalorder %s16, 0
      %p132 = por %p130, %p131
      %p133 = scmp.le.s32.totalorder 1, %s10
      %p134 = scmp.lt.s32.totalorder %s10, 5
      %p135 = pnand %p133, %p134
      %p136 = pneg %p135
      // Predicated region
      $region9: #{densenet_forward.13} parent=5 // pred_check
        _
      $region10: #{densenet_forward.13} parent=5 // pred_check_branch
        %138 = sbr.rel (%p135) target = $region12
      $region11: #{densenet_forward.13} parent=5 // pred_region
        %s139 = ssub.s32 %s10, 1
        // Predicated region
        $region13: #{densenet_forward.13} parent=11 // pred_check
          %p140 = pneg %p57
        $region14: #{densenet_forward.13} parent=11 // pred_check_branch
          %142 = sbr.rel (%p140) target = $region16
        $region15: #{densenet_forward.13} parent=11 // pred_region
          _
        $region16: #{densenet_forward.13} parent=11 // pred_fallthru
          _
        // Predicated region
        $region17: #{densenet_forward.13} parent=11 // pred_check
          %p143 = pneg %p78
        $region18: #{densenet_forward.13} parent=11 // pred_check_branch
          %145 = sbr.rel (%p143) target = $region20
        $region19: #{densenet_forward.13} parent=11 // pred_region
          _
        $region20: #{densenet_forward.13} parent=11 // pred_fallthru
          _
        // Predicated region
        $region21: #{densenet_forward.13} parent=11 // pred_check
          %p146 = pneg %p99
        $region22: #{densenet_forward.13} parent=11 // pred_check_branch
          %148 = sbr.rel (%p146) target = $region24
        $region23: #{densenet_forward.13} parent=11 // pred_region
          _
        $region24: #{densenet_forward.13} parent=11 // pred_fallthru
          _
      $region12: #{densenet_forward.13} parent=5 // pred_fallthru
        _
      %p149 = scmp.lt.s32.totalorder %s10, 4
      // Predicated region
      $region25: #{densenet_forward.13} parent=5 // pred_check
        %p150 = pneg %p149
      $region26: #{densenet_forward.13} parent=5 // pred_check_branch
        %152 = sbr.rel (%p150) target = $region28
      $region27: #{densenet_forward.13} parent=5 // pred_region
        // Predicated region
        $region29: #{densenet_forward.13} parent=27 // pred_check
          %p153 = pneg %p30
        $region30: #{densenet_forward.13} parent=27 // pred_check_branch
          %155 = sbr.rel (%p153) target = $region32
        $region31: #{densenet_forward.13} parent=27 // pred_region
          %s156 = sand.u32 %s20, 1
          %s157 = sand.u32 %s20, 1
          %s158 = smul.addr %s157, 304
          %s159 = scalar_lea.vmem [#allocation2], %s158
          %s160 = smul.u32 4, %s10
          %s161 = smul.addr %s160, 4
          %s162 = scalar_lea.vmem %s0, %s161
          // Predicated region
          $region33: #{densenet_forward.13} parent=31 // pred_check
            _
          $region34: #{densenet_forward.13} parent=31 // pred_check_branch
            %164 = sbr.rel (0) target = $region36
          $region35: #{densenet_forward.13} parent=31 // pred_region
            // Predicated region
            $region37: #{densenet_forward.13} parent=35 // pred_check
              _
            $region38: #{densenet_forward.13} parent=35 // pred_check_branch
              %166 = sbr.rel (0) target = $region40
            $region39: #{densenet_forward.13} parent=35 // pred_region
              loop: start=0, step=1, limit=1
              $region41: #{densenet_forward.13} parent=39 // loop_pre_header
                _
              $region42: #{densenet_forward.13} parent=39 // loop_header
                %s168 = sphi 0, %s172
                %p169 = scmp.ge.s32.totalorder %s168, 1
                %s173 = sphi %s162, %s162
                %s174 = sphi %s159, %s159
              $region43: #{densenet_forward.13} parent=39 // loop_header_branch
                %171 = sbr.rel (%p169) target = $region47
              $region44: #{densenet_forward.13} parent=39 // loop_body
                %v175 = vld [vmem:[%s173] sm:$0xff]
                %176 = vst [vmem:[%s174] sm:$0xff] %v175
                %v177 = vld [vmem:[%s173 + $0x8] sm:$0xff]
                %178 = vst [vmem:[%s174 + $0x8] sm:$0xff] %v177
                %v179 = vld [vmem:[%s173 + $0x40] sm:$0xff]
                %180 = vst [vmem:[%s174 + $0x10] sm:$0xff] %v179
                %v181 = vld [vmem:[%s173 + $0x48] sm:$0xff]
                %182 = vst [vmem:[%s174 + $0x18] sm:$0xff] %v181
                %v183 = vld [vmem:[%s173 + $0x80] sm:$0xff]
                %184 = vst [vmem:[%s174 + $0x20] sm:$0xff] %v183
                %v185 = vld [vmem:[%s173 + $0x88] sm:$0xff]
                %186 = vst [vmem:[%s174 + $0x28] sm:$0xff] %v185
                %v187 = vld [vmem:[%s173 + $0xc0] sm:$0xff]
                %188 = vst [vmem:[%s174 + $0x30] sm:$0xff] %v187
                %v189 = vld [vmem:[%s173 + $0xc8] sm:$0xff]
                %190 = vst [vmem:[%s174 + $0x38] sm:$0xff] %v189
                %v191 = vld [vmem:[%s173 + $0x100] sm:$0xff]
                %192 = vst [vmem:[%s174 + $0x40] sm:$0xff] %v191
                %v193 = vld [vmem:[%s173 + $0x108] sm:$0xff]
                %194 = vst [vmem:[%s174 + $0x48] sm:$0xff] %v193
                %v195 = vld [vmem:[%s173 + $0x140] sm:$0xff]
                %196 = vst [vmem:[%s174 + $0x50] sm:$0xff] %v195
                %v197 = vld [vmem:[%s173 + $0x148] sm:$0xff]
                %198 = vst [vmem:[%s174 + $0x58] sm:$0xff] %v197
                %v199 = vld [vmem:[%s173 + $0x180] sm:$0xff]
                %200 = vst [vmem:[%s174 + $0x60] sm:$0xff] %v199
                %v201 = vld [vmem:[%s173 + $0x188] sm:$0xff]
                %202 = vst [vmem:[%s174 + $0x68] sm:$0xff] %v201
                %v203 = vld [vmem:[%s173 + $0x1c0] sm:$0xff]
                %204 = vst [vmem:[%s174 + $0x70] sm:$0xff] %v203
                %v205 = vld [vmem:[%s173 + $0x1c8] sm:$0xff]
                %206 = vst [vmem:[%s174 + $0x78] sm:$0xff] %v205
                %v207 = vld [vmem:[%s173 + $0x200] sm:$0xff]
                %208 = vst [vmem:[%s174 + $0x80] sm:$0xff] %v207
                %v209 = vld [vmem:[%s173 + $0x208] sm:$0xff]
                %210 = vst [vmem:[%s174 + $0x88] sm:$0xff] %v209
                %v211 = vld [vmem:[%s173 + $0x240] sm:$0xff]
                %212 = vst [vmem:[%s174 + $0x90] sm:$0xff] %v211
                %v213 = vld [vmem:[%s173 + $0x248] sm:$0xff]
                %214 = vst [vmem:[%s174 + $0x98] sm:$0xff] %v213
                %v215 = vld [vmem:[%s173 + $0x280] sm:$0xff]
                %216 = vst [vmem:[%s174 + $0xa0] sm:$0xff] %v215
                %v217 = vld [vmem:[%s173 + $0x288] sm:$0xff]
                %218 = vst [vmem:[%s174 + $0xa8] sm:$0xff] %v217
                %v219 = vld [vmem:[%s173 + $0x2c0] sm:$0xff]
                %220 = vst [vmem:[%s174 + $0xb0] sm:$0xff] %v219
                %v221 = vld [vmem:[%s173 + $0x2c8] sm:$0xff]
                %222 = vst [vmem:[%s174 + $0xb8] sm:$0xff] %v221
                %v223 = vld [vmem:[%s173 + $0x300] sm:$0xff]
                %224 = vst [vmem:[%s174 + $0xc0] sm:$0xff] %v223
                %v225 = vld [vmem:[%s173 + $0x308] sm:$0xff]
                %226 = vst [vmem:[%s174 + $0xc8] sm:$0xff] %v225
                %v227 = vld [vmem:[%s173 + $0x340] sm:$0xff]
                %228 = vst [vmem:[%s174 + $0xd0] sm:$0xff] %v227
                %v229 = vld [vmem:[%s173 + $0x348] sm:$0xff]
                %230 = vst [vmem:[%s174 + $0xd8] sm:$0xff] %v229
                %v231 = vld [vmem:[%s173 + $0x380] sm:$0xff]
                %232 = vst [vmem:[%s174 + $0xe0] sm:$0xff] %v231
                %v233 = vld [vmem:[%s173 + $0x388] sm:$0xff]
                %234 = vst [vmem:[%s174 + $0xe8] sm:$0xff] %v233
                %v235 = vld [vmem:[%s173 + $0x3c0] sm:$0xff]
                %236 = vst [vmem:[%s174 + $0xf0] sm:$0xff] %v235
                %v237 = vld [vmem:[%s173 + $0x3c8] sm:$0xff]
                %238 = vst [vmem:[%s174 + $0xf8] sm:$0xff] %v237
                %v239 = vld [vmem:[%s173 + $0x400] sm:$0xff]
                %240 = vst [vmem:[%s174 + $0x100] sm:$0xff] %v239
                %v241 = vld [vmem:[%s173 + $0x408] sm:$0xff]
                %242 = vst [vmem:[%s174 + $0x108] sm:$0xff] %v241
                %v243 = vld [vmem:[%s173 + $0x440] sm:$0xff]
                %244 = vst [vmem:[%s174 + $0x110] sm:$0xff] %v243
                %v245 = vld [vmem:[%s173 + $0x448] sm:$0xff]
                %246 = vst [vmem:[%s174 + $0x118] sm:$0xff] %v245
                %v247 = vld [vmem:[%s173 + $0x480] sm:$0xff]
                %248 = vst [vmem:[%s174 + $0x120] sm:$0xff] %v247
                %v249 = vld [vmem:[%s173 + $0x488] sm:$0xff]
                %250 = vst [vmem:[%s174 + $0x128] sm:$0xff] %v249
              $region45: #{densenet_forward.13} parent=39 // loop_footer
                %s172 = sadd.s32 1, %s168
              $region46: #{densenet_forward.13} parent=39 // loop_footer_branch
                %167 = sbr.rel target = $region42
              $region47: #{densenet_forward.13} parent=39 // loop_exit
                _
            $region40: #{densenet_forward.13} parent=35 // pred_fallthru
              _
            // Predicated region
            $region48: #{densenet_forward.13} parent=35 // pred_check
              _
            $region49: #{densenet_forward.13} parent=35 // pred_check_branch
              %252 = sbr.rel target = $region51
            $region50: #{densenet_forward.13} parent=35 // pred_region
              _
            $region51: #{densenet_forward.13} parent=35 // pred_fallthru
              _
          $region36: #{densenet_forward.13} parent=31 // pred_fallthru
            _
          %253 = vnop
        $region32: #{densenet_forward.13} parent=27 // pred_fallthru
          _
      $region28: #{densenet_forward.13} parent=5 // pred_fallthru
        _
      %p254 = scmp.le.s32.totalorder 1, %s10
      %p255 = scmp.lt.s32.totalorder %s10, 5
      %p256 = pnand %p254, %p255
      %p257 = pneg %p256
      // Predicated region
      $region52: #{densenet_forward.13} parent=5 // pred_check
        _
      $region53: #{densenet_forward.13} parent=5 // pred_check_branch
        %259 = sbr.rel (%p256) target = $region55
      $region54: #{densenet_forward.13} parent=5 // pred_region
        %s260 = ssub.s32 %s10, 1
        %s261 = sand.u32 %s23, 1
        %s262 = sand.u32 %s23, 1
        %s263 = smul.addr %s262, 304
        %s264 = scalar_lea.vmem [#allocation2], %s263
        // Predicated region
        $region56: #{densenet_forward.13} parent=54 // pred_check
          %p265 = pneg %p36
        $region57: #{densenet_forward.13} parent=54 // pred_check_branch
          %267 = sbr.rel (%p265) target = $region59
        $region58: #{densenet_forward.13} parent=54 // pred_region
          _
        $region59: #{densenet_forward.13} parent=54 // pred_fallthru
          _
        %s268 = sand.u32 %s23, 1
        %s269 = sand.u32 %s23, 1
        %s270 = smul.addr %s269, 304
        %s271 = scalar_lea.vmem [#allocation2], %s270
        %p272 = pneg %p36
        %p273 = pneg %p33
        %p274 = pneg %p57
        %p275 = pneg %p54
        %p276 = pneg %p78
        %p277 = pneg %p75
        %p278 = pneg %p99
        %p279 = pneg %p96
        %p280 = pneg %p125
        %p281 = pneg %p122
        %s282 = sand.u32 %s112, 1
        %s283 = sand.u32 %s112, 1
        %s284 = smul.addr %s283, 64
        %s285 = scalar_lea.vmem [#allocation3], %s284
        %s286 = smul.u32 4, %s15
        %s287 = smul.u32 4, %s15
        %v289 = vld [vmem:[%s1] sm:$0xff]
        %v290 = vld [vmem:[%s1 + $0x8] sm:$0xff]
        %v291 = vld [vmem:[%s264] sm:$0xff]
        %v292 = vld [vmem:[%s264 + $0x8] sm:$0xff]
        %v293 = vld [vmem:[%s264 + $0x10] sm:$0xff]
        %v294 = vld [vmem:[%s264 + $0x18] sm:$0xff]
        %v295 = vld [vmem:[%s264 + $0x20] sm:$0xff]
        %v296 = vld [vmem:[%s264 + $0x28] sm:$0xff]
        %v297 = vld [vmem:[%s264 + $0x30] sm:$0xff]
        %v298 = vld [vmem:[%s264 + $0x38] sm:$0xff]
        %v299 = vld [vmem:[%s264 + $0x40] sm:$0xff]
        %v300 = vld [vmem:[%s264 + $0x48] sm:$0xff]
        %v301 = vld [vmem:[%s264 + $0x50] sm:$0xff]
        %v302 = vld [vmem:[%s264 + $0x58] sm:$0xff]
        %v303 = vld [vmem:[%s264 + $0x60] sm:$0xff]
        %v304 = vld [vmem:[%s264 + $0x68] sm:$0xff]
        %v305 = vld [vmem:[%s264 + $0x70] sm:$0xff]
        %v306 = vld [vmem:[%s264 + $0x78] sm:$0xff]
        %v307 = vld [vmem:[%s264 + $0x80] sm:$0xff]
        %v308 = vld [vmem:[%s264 + $0x88] sm:$0xff]
        %v309 = vld [vmem:[%s264 + $0x90] sm:$0xff]
        %v310 = vld [vmem:[%s264 + $0x98] sm:$0xff]
        %v311 = vld [vmem:[%s264 + $0xa0] sm:$0xff]
        %v312 = vld [vmem:[%s264 + $0xa8] sm:$0xff]
        %v313 = vld [vmem:[%s264 + $0xb0] sm:$0xff]
        %v314 = vld [vmem:[%s264 + $0xb8] sm:$0xff]
        %v315 = vld [vmem:[%s264 + $0xc0] sm:$0xff]
        %v316 = vld [vmem:[%s264 + $0xc8] sm:$0xff]
        %v317 = vld [vmem:[%s264 + $0xd0] sm:$0xff]
        %v318 = vld [vmem:[%s264 + $0xd8] sm:$0xff]
        %v319 = vld [vmem:[%s264 + $0xe0] sm:$0xff]
        %v320 = vld [vmem:[%s264 + $0xe8] sm:$0xff]
        %v321 = vld [vmem:[%s264 + $0xf0] sm:$0xff]
        %v322 = vld [vmem:[%s264 + $0xf8] sm:$0xff]
        %v323 = vld [vmem:[%s264 + $0x100] sm:$0xff]
        %v324 = vld [vmem:[%s264 + $0x108] sm:$0xff]
        %v325 = vld [vmem:[%s264 + $0x110] sm:$0xff]
        %v326 = vld [vmem:[%s264 + $0x118] sm:$0xff]
        %v327 = vld [vmem:[%s264 + $0x120] sm:$0x33]
        %v328 = vld [vmem:[%s264 + $0x128] sm:$0x33]
        %v331 = vunpack.c.l.b16 %v289
        %v332 = vunpack.c.h.b16 %v289
        %v333 = vunpack.c.l.b16 %v290
        %v334 = vunpack.c.h.b16 %v290
        %v335 = vpack.c.b16 %v333, %v331
        %v336 = vpack.c.b16 %v334, %v332
        %v376 = vunpack.c.l.b16 %v291
        %v377 = vunpack.c.h.b16 %v291
        %v378 = vunpack.c.l.b16 %v292
        %v379 = vunpack.c.h.b16 %v292
        %v380 = vunpack.c.l.b16 %v293
        %v381 = vunpack.c.h.b16 %v293
        %v382 = vunpack.c.l.b16 %v294
        %v383 = vunpack.c.h.b16 %v294
        %v384 = vunpack.c.l.b16 %v295
        %v385 = vunpack.c.h.b16 %v295
        %v386 = vunpack.c.l.b16 %v296
        %v387 = vunpack.c.h.b16 %v296
        %v388 = vunpack.c.l.b16 %v297
        %v389 = vunpack.c.h.b16 %v297
        %v390 = vunpack.c.l.b16 %v298
        %v391 = vunpack.c.h.b16 %v298
        %v392 = vunpack.c.l.b16 %v299
        %v393 = vunpack.c.h.b16 %v299
        %v394 = vunpack.c.l.b16 %v300
        %v395 = vunpack.c.h.b16 %v300
        %v396 = vunpack.c.l.b16 %v301
        %v397 = vunpack.c.h.b16 %v301
        %v398 = vunpack.c.l.b16 %v302
        %v399 = vunpack.c.h.b16 %v302
        %v400 = vunpack.c.l.b16 %v303
        %v401 = vunpack.c.h.b16 %v303
        %v402 = vunpack.c.l.b16 %v304
        %v403 = vunpack.c.h.b16 %v304
        %v404 = vunpack.c.l.b16 %v305
        %v405 = vunpack.c.h.b16 %v305
        %v406 = vunpack.c.l.b16 %v306
        %v407 = vunpack.c.h.b16 %v306
        %v408 = vunpack.c.l.b16 %v307
        %v409 = vunpack.c.h.b16 %v307
        %v410 = vunpack.c.l.b16 %v308
        %v411 = vunpack.c.h.b16 %v308
        %v412 = vunpack.c.l.b16 %v309
        %v413 = vunpack.c.h.b16 %v309
        %v414 = vunpack.c.l.b16 %v310
        %v415 = vunpack.c.h.b16 %v310
        %v416 = vunpack.c.l.b16 %v311
        %v417 = vunpack.c.h.b16 %v311
        %v418 = vunpack.c.l.b16 %v312
        %v419 = vunpack.c.h.b16 %v312
        %v420 = vunpack.c.l.b16 %v313
        %v421 = vunpack.c.h.b16 %v313
        %v422 = vunpack.c.l.b16 %v314
        %v423 = vunpack.c.h.b16 %v314
        %v424 = vunpack.c.l.b16 %v315
        %v425 = vunpack.c.h.b16 %v315
        %v426 = vunpack.c.l.b16 %v316
        %v427 = vunpack.c.h.b16 %v316
        %v428 = vunpack.c.l.b16 %v317
        %v429 = vunpack.c.h.b16 %v317
        %v430 = vunpack.c.l.b16 %v318
        %v431 = vunpack.c.h.b16 %v318
        %v432 = vunpack.c.l.b16 %v319
        %v433 = vunpack.c.h.b16 %v319
        %v434 = vunpack.c.l.b16 %v320
        %v435 = vunpack.c.h.b16 %v320
        %v436 = vunpack.c.l.b16 %v321
        %v437 = vunpack.c.h.b16 %v321
        %v438 = vunpack.c.l.b16 %v322
        %v439 = vunpack.c.h.b16 %v322
        %v440 = vunpack.c.l.b16 %v323
        %v441 = vunpack.c.h.b16 %v323
        %v442 = vunpack.c.l.b16 %v324
        %v443 = vunpack.c.h.b16 %v324
        %v444 = vunpack.c.l.b16 %v325
        %v445 = vunpack.c.h.b16 %v325
        %v446 = vunpack.c.l.b16 %v326
        %v447 = vunpack.c.h.b16 %v326
        %v448 = vunpack.c.l.b16 %v327
        %v449 = vunpack.c.h.b16 %v327
        %v450 = vunpack.c.l.b16 %v328
        %v451 = vunpack.c.h.b16 %v328
        %v452 = vpack.c.b16 %v380, %v376
        %v453 = vpack.c.b16 %v381, %v377
        %v454 = vpack.c.b16 %v382, %v378
        %v455 = vpack.c.b16 %v383, %v379
        %v456 = vpack.c.b16 %v388, %v384
        %v457 = vpack.c.b16 %v389, %v385
        %v458 = vpack.c.b16 %v390, %v386
        %v459 = vpack.c.b16 %v391, %v387
        %v460 = vpack.c.b16 %v396, %v392
        %v461 = vpack.c.b16 %v397, %v393
        %v462 = vpack.c.b16 %v398, %v394
        %v463 = vpack.c.b16 %v399, %v395
        %v464 = vpack.c.b16 %v404, %v400
        %v465 = vpack.c.b16 %v405, %v401
        %v466 = vpack.c.b16 %v406, %v402
        %v467 = vpack.c.b16 %v407, %v403
        %v468 = vpack.c.b16 %v412, %v408
        %v469 = vpack.c.b16 %v413, %v409
        %v470 = vpack.c.b16 %v414, %v410
        %v471 = vpack.c.b16 %v415, %v411
        %v472 = vpack.c.b16 %v420, %v416
        %v473 = vpack.c.b16 %v421, %v417
        %v474 = vpack.c.b16 %v422, %v418
        %v475 = vpack.c.b16 %v423, %v419
        %v476 = vpack.c.b16 %v428, %v424
        %v477 = vpack.c.b16 %v429, %v425
        %v478 = vpack.c.b16 %v430, %v426
        %v479 = vpack.c.b16 %v431, %v427
        %v480 = vpack.c.b16 %v436, %v432
        %v481 = vpack.c.b16 %v437, %v433
        %v482 = vpack.c.b16 %v438, %v434
        %v483 = vpack.c.b16 %v439, %v435
        %v484 = vpack.c.b16 %v444, %v440
        %v485 = vpack.c.b16 %v445, %v441
        %v486 = vpack.c.b16 %v446, %v442
        %v487 = vpack.c.b16 %v447, %v443
        %v488 = vpack.c.b16 %v448, %v448
        %v489 = vpack.c.b16 %v449, %v449
        %v490 = vpack.c.b16 %v450, %v450
        %v491 = vpack.c.b16 %v451, %v451
        %vm528 = vcmask 154624
        %v530 = vsel %vm528, %v336, 0
        %vm532 = vcmask 1040384
        %vm533 = vcmask 1041408
        %v534 = vsel %vm532, 4294967295, 65535
        %v535 = vsel %vm533, %v534, 0
        %v537 = vand.u32 %v488, %v535
        %v540 = vand.u32 %v489, %v535
        %v543 = vand.u32 %v490, %v535
        %v546 = vand.u32 %v491, %v535
        %548 = vmatpush.bf16.msra.mxu0 %v480
        %549 = vmatpush.bf16.msra.mxu0 %v476
        %550 = vmatpush.bf16.msra.mxu0 %v472
        %551 = vmatpush.bf16.msra.mxu0 %v468
        %552 = vmatpush.bf16.msra.mxu0 %v464
        %553 = vmatpush.bf16.msra.mxu0 %v460
        %554 = vmatpush.bf16.msra.mxu0 %v456
        %555 = vmatpush.bf16.msra.mxu0 %v452
        %556 = vmatmul.bf16.gmra.mxu0 %v335
        %v557 = vpop.f32.mrf.mxu0
        %v558 = vadd.f32 0.0, %v557
        %v559 = vpop.f32.mrf.mxu0
        %v560 = vadd.f32 0.0, %v559
        %561 = vdwg.mxu0
        %562 = vmatpush.bf16.msra.mxu0 0
        %563 = vmatpush.bf16.msra.mxu0 0
        %564 = vmatpush.bf16.msra.mxu0 0
        %565 = vmatpush.bf16.msra.mxu0 0
        %566 = vmatpush.bf16.msra.mxu0 0
        %567 = vmatpush.bf16.msra.mxu0 0
        %568 = vmatpush.bf16.msra.mxu0 %v537
        %569 = vmatpush.bf16.msra.mxu0 %v484
        %570 = vmatmul.bf16.gmra.mxu0 %v530
        %v571 = vpop.f32.mrf.mxu0
        %v572 = vadd.f32 %v558, %v571
        %v573 = vpop.f32.mrf.mxu0
        %v574 = vadd.f32 %v560, %v573
        %575 = vdwg.mxu0
        %576 = vmatpush.bf16.msra.mxu0 %v481
        %577 = vmatpush.bf16.msra.mxu0 %v477
        %578 = vmatpush.bf16.msra.mxu0 %v473
        %579 = vmatpush.bf16.msra.mxu0 %v469
        %580 = vmatpush.bf16.msra.mxu0 %v465
        %581 = vmatpush.bf16.msra.mxu0 %v461
        %582 = vmatpush.bf16.msra.mxu0 %v457
        %583 = vmatpush.bf16.msra.mxu0 %v453
        %584 = vmatmul.bf16.gmra.mxu0 %v335
        %v585 = vpop.f32.mrf.mxu0
        %v586 = vadd.f32 0.0, %v585
        %v587 = vpop.f32.mrf.mxu0
        %v588 = vadd.f32 0.0, %v587
        %589 = vdwg.mxu0
        %590 = vmatpush.bf16.msra.mxu0 0
        %591 = vmatpush.bf16.msra.mxu0 0
        %592 = vmatpush.bf16.msra.mxu0 0
        %593 = vmatpush.bf16.msra.mxu0 0
        %594 = vmatpush.bf16.msra.mxu0 0
        %595 = vmatpush.bf16.msra.mxu0 0
        %596 = vmatpush.bf16.msra.mxu0 %v540
        %597 = vmatpush.bf16.msra.mxu0 %v485
        %598 = vmatmul.bf16.gmra.mxu0 %v530
        %v599 = vpop.f32.mrf.mxu0
        %v600 = vadd.f32 %v586, %v599
        %v601 = vpop.f32.mrf.mxu0
        %v602 = vadd.f32 %v588, %v601
        %603 = vdwg.mxu0
        %604 = vmatpush.bf16.msra.mxu0 %v482
        %605 = vmatpush.bf16.msra.mxu0 %v478
        %606 = vmatpush.bf16.msra.mxu0 %v474
        %607 = vmatpush.bf16.msra.mxu0 %v470
        %608 = vmatpush.bf16.msra.mxu0 %v466
        %609 = vmatpush.bf16.msra.mxu0 %v462
        %610 = vmatpush.bf16.msra.mxu0 %v458
        %611 = vmatpush.bf16.msra.mxu0 %v454
        %612 = vmatmul.bf16.gmra.mxu0 %v335
        %v613 = vpop.f32.mrf.mxu0
        %v614 = vadd.f32 0.0, %v613
        %v615 = vpop.f32.mrf.mxu0
        %v616 = vadd.f32 0.0, %v615
        %617 = vdwg.mxu0
        %618 = vmatpush.bf16.msra.mxu0 0
        %619 = vmatpush.bf16.msra.mxu0 0
        %620 = vmatpush.bf16.msra.mxu0 0
        %621 = vmatpush.bf16.msra.mxu0 0
        %622 = vmatpush.bf16.msra.mxu0 0
        %623 = vmatpush.bf16.msra.mxu0 0
        %624 = vmatpush.bf16.msra.mxu0 %v543
        %625 = vmatpush.bf16.msra.mxu0 %v486
        %626 = vmatmul.bf16.gmra.mxu0 %v530
        %v627 = vpop.f32.mrf.mxu0
        %v628 = vadd.f32 %v614, %v627
        %v629 = vpop.f32.mrf.mxu0
        %v630 = vadd.f32 %v616, %v629
        %631 = vdwg.mxu0
        %632 = vmatpush.bf16.msra.mxu0 %v483
        %633 = vmatpush.bf16.msra.mxu0 %v479
        %634 = vmatpush.bf16.msra.mxu0 %v475
        %635 = vmatpush.bf16.msra.mxu0 %v471
        %636 = vmatpush.bf16.msra.mxu0 %v467
        %637 = vmatpush.bf16.msra.mxu0 %v463
        %638 = vmatpush.bf16.msra.mxu0 %v459
        %639 = vmatpush.bf16.msra.mxu0 %v455
        %640 = vmatmul.bf16.gmra.mxu0 %v335
        %v641 = vpop.f32.mrf.mxu0
        %v642 = vadd.f32 0.0, %v641
        %v643 = vpop.f32.mrf.mxu0
        %v644 = vadd.f32 0.0, %v643
        %645 = vdwg.mxu0
        %646 = vmatpush.bf16.msra.mxu0 0
        %647 = vmatpush.bf16.msra.mxu0 0
        %648 = vmatpush.bf16.msra.mxu0 0
        %649 = vmatpush.bf16.msra.mxu0 0
        %650 = vmatpush.bf16.msra.mxu0 0
        %651 = vmatpush.bf16.msra.mxu0 0
        %652 = vmatpush.bf16.msra.mxu0 %v546
        %653 = vmatpush.bf16.msra.mxu0 %v487
        %654 = vmatmul.bf16.gmra.mxu0 %v530
        %v655 = vpop.f32.mrf.mxu0
        %v656 = vadd.f32 %v642, %v655
        %v657 = vpop.f32.mrf.mxu0
        %v658 = vadd.f32 %v644, %v657
        %659 = vdwg.mxu0
        %v660 = vld [vmem:[%s2] sm:$0xff]
        %v661 = vld [vmem:[%s2 + $0x8] sm:$0xff]
        %663 = vset.pattern.permute.xlu0 0
        %664 = vperm.xlu0 %663, %v660
        %v665 = vpop.permute.xlu0 %664
        %668 = vset.pattern.permute.xlu0 0
        %669 = vperm.xlu0 %668, %v661
        %v670 = vpop.permute.xlu0 %669
        %v672 = vmul.f32 %v572, %v665
        %v673 = vmul.f32 %v600, %v665
        %v674 = vmul.f32 %v628, %v665
        %v675 = vmul.f32 %v656, %v665
        %v676 = vmul.f32 %v574, %v670
        %v677 = vmul.f32 %v602, %v670
        %v678 = vmul.f32 %v630, %v670
        %v679 = vmul.f32 %v658, %v670
        %v680 = vld [vmem:[%s3] sm:$0xff]
        %v681 = vld [vmem:[%s3 + $0x8] sm:$0xff]
        %683 = vset.pattern.permute.xlu0 0
        %684 = vperm.xlu0 %683, %v680
        %v685 = vpop.permute.xlu0 %684
        %688 = vset.pattern.permute.xlu0 0
        %689 = vperm.xlu0 %688, %v681
        %v690 = vpop.permute.xlu0 %689
        %v692 = vadd.f32 %v672, %v685
        %v693 = vadd.f32 %v673, %v685
        %v694 = vadd.f32 %v674, %v685
        %v695 = vadd.f32 %v675, %v685
        %v696 = vadd.f32 %v676, %v690
        %v697 = vadd.f32 %v677, %v690
        %v698 = vadd.f32 %v678, %v690
        %v699 = vadd.f32 %v679, %v690
        %v700 = vmax.f32 %v692, 0.0
        %v701 = vmax.f32 %v693, 0.0
        %v702 = vmax.f32 %v694, 0.0
        %v703 = vmax.f32 %v695, 0.0
        %v704 = vmax.f32 %v696, 0.0
        %v705 = vmax.f32 %v697, 0.0
        %v706 = vmax.f32 %v698, 0.0
        %v707 = vmax.f32 %v699, 0.0
        %708 = vst [vmem:[%s285] sm:$0xff] %v700
        %709 = vst [vmem:[%s285 + $0x8] sm:$0xff] %v701
        %710 = vst [vmem:[%s285 + $0x10] sm:$0xff] %v702
        %711 = vst [vmem:[%s285 + $0x18] sm:$0xff] %v703
        %712 = vst [vmem:[%s285 + $0x20] sm:$0xff] %v704
        %713 = vst [vmem:[%s285 + $0x28] sm:$0xff] %v705
        %714 = vst [vmem:[%s285 + $0x30] sm:$0xff] %v706
        %715 = vst [vmem:[%s285 + $0x38] sm:$0xff] %v707
        %s716 = sand.u32 %s112, 1
        %s717 = sand.u32 %s112, 1
        %s718 = smul.addr %s717, 64
        %s719 = scalar_lea.vmem [#allocation3], %s718
        // Predicated region
        $region60: #{densenet_forward.13} parent=54 // pred_check
          %p720 = pneg %p122
        $region61: #{densenet_forward.13} parent=54 // pred_check_branch
          %722 = sbr.rel (%p720) target = $region63
        $region62: #{densenet_forward.13} parent=54 // pred_region
          %s723 = smul.u32 4, %s15
          %s724 = smul.addr %s723, 8
          %s725 = scalar_lea.vmem %s4, %s724
          // Predicated region
          $region64: #{densenet_forward.13} parent=62 // pred_check
            _
          $region65: #{densenet_forward.13} parent=62 // pred_check_branch
            %727 = sbr.rel (0) target = $region67
          $region66: #{densenet_forward.13} parent=62 // pred_region
            // Predicated region
            $region68: #{densenet_forward.13} parent=66 // pred_check
              _
            $region69: #{densenet_forward.13} parent=66 // pred_check_branch
              %729 = sbr.rel (0) target = $region71
            $region70: #{densenet_forward.13} parent=66 // pred_region
              loop: start=0, step=1, limit=1
              $region72: #{densenet_forward.13} parent=70 // loop_pre_header
                _
              $region73: #{densenet_forward.13} parent=70 // loop_header
                %s731 = sphi 0, %s735
                %p732 = scmp.ge.s32.totalorder %s731, 1
                %s736 = sphi %s719, %s719
                %s737 = sphi %s725, %s725
              $region74: #{densenet_forward.13} parent=70 // loop_header_branch
                %734 = sbr.rel (%p732) target = $region78
              $region75: #{densenet_forward.13} parent=70 // loop_body
                %v738 = vld [vmem:[%s736] sm:$0xff]
                %739 = vst [vmem:[%s737] sm:$0xff] %v738
                %v740 = vld [vmem:[%s736 + $0x8] sm:$0xff]
                %741 = vst [vmem:[%s737 + $0x8] sm:$0xff] %v740
                %v742 = vld [vmem:[%s736 + $0x10] sm:$0xff]
                %743 = vst [vmem:[%s737 + $0x10] sm:$0xff] %v742
                %v744 = vld [vmem:[%s736 + $0x18] sm:$0xff]
                %745 = vst [vmem:[%s737 + $0x18] sm:$0xff] %v744
                %v746 = vld [vmem:[%s736 + $0x20] sm:$0xff]
                %747 = vst [vmem:[%s737 + $0x80] sm:$0xff] %v746
                %v748 = vld [vmem:[%s736 + $0x28] sm:$0xff]
                %749 = vst [vmem:[%s737 + $0x88] sm:$0xff] %v748
                %v750 = vld [vmem:[%s736 + $0x30] sm:$0xff]
                %751 = vst [vmem:[%s737 + $0x90] sm:$0xff] %v750
                %v752 = vld [vmem:[%s736 + $0x38] sm:$0xff]
                %753 = vst [vmem:[%s737 + $0x98] sm:$0xff] %v752
              $region76: #{densenet_forward.13} parent=70 // loop_footer
                %s735 = sadd.s32 1, %s731
              $region77: #{densenet_forward.13} parent=70 // loop_footer_branch
                %730 = sbr.rel target = $region73
              $region78: #{densenet_forward.13} parent=70 // loop_exit
                _
            $region71: #{densenet_forward.13} parent=66 // pred_fallthru
              _
            // Predicated region
            $region79: #{densenet_forward.13} parent=66 // pred_check
              _
            $region80: #{densenet_forward.13} parent=66 // pred_check_branch
              %755 = sbr.rel target = $region82
            $region81: #{densenet_forward.13} parent=66 // pred_region
              _
            $region82: #{densenet_forward.13} parent=66 // pred_fallthru
              _
          $region67: #{densenet_forward.13} parent=62 // pred_fallthru
            _
          %756 = vnop
        $region63: #{densenet_forward.13} parent=54 // pred_fallthru
          _
      $region55: #{densenet_forward.13} parent=5 // pred_fallthru
        _
      %p757 = scmp.le.s32.totalorder 2, %s10
      // Predicated region
      $region83: #{densenet_forward.13} parent=5 // pred_check
        %p758 = pneg %p757
      $region84: #{densenet_forward.13} parent=5 // pred_check_branch
        %760 = sbr.rel (%p758) target = $region86
      $region85: #{densenet_forward.13} parent=5 // pred_region
        %s761 = ssub.s32 %s10, 2
        // Predicated region
        $region87: #{densenet_forward.13} parent=85 // pred_check
          %p762 = pneg %p128
        $region88: #{densenet_forward.13} parent=85 // pred_check_branch
          %764 = sbr.rel (%p762) target = $region90
        $region89: #{densenet_forward.13} parent=85 // pred_region
          %s765 = sand.u32 %s113, 1
          %s766 = sand.u32 %s113, 1
          %s767 = smul.addr %s766, 64
          %s768 = scalar_lea.vmem [#allocation3], %s767
        $region90: #{densenet_forward.13} parent=85 // pred_fallthru
          _
      $region86: #{densenet_forward.13} parent=5 // pred_fallthru
        _
    $region6: #{densenet_forward.13} parent=1 // loop_footer
      %s14 = sadd.s32 1, %s10
    $region7: #{densenet_forward.13} parent=1 // loop_footer_branch
      %9 = sbr.rel target = $region3
    $region8: #{densenet_forward.13} parent=1 // loop_exit
      _

// kernel: densenet_forward.16
$region0: #{densenet_forward.16}
  #allocation0 [shape = 'u32[]', space=smem, size = 0x4, offset = 0x4, fixed_abs, tag = 'smem constant byte address 0x4 - core index']
  #allocation1 [shape = 'u32[72,128]{1,0:T(1,128)}', space=vmem, size = 0x9000, scoped, tag = 'internal scratch']
  %s0 = inlined_call_operand.vmem [shape: f32[32,512], index: 0, kind: input, shape index: {}]
  %s1 = inlined_call_operand.vmem [shape: f32[32,1], index: 1, kind: input, shape index: {}]
  %s2 = inlined_call_operand.vmem [shape: f32[32,1], index: 2, kind: input, shape index: {}]
  %s3 = inlined_call_operand.vmem [shape: bf16[16,32], index: 3, kind: input, shape index: {}]
  %s4 = inlined_call_operand.vmem [shape: f32[16,512], index: 4, kind: output, shape index: {}]
  %s5 = sld [smem:[#allocation0]]
  $region91: #{densenet_forward.16} parent=0
    _
  %s7 = ssub.s32 1, %s5
  %s8 = scalar_select 0, %s7, %s5
  $region1: #{densenet_forward.16} parent=0
    #allocation2 [shape = 'u8[65536]{0}', space=vmem, size = 0x10000, scoped, tag = 'input window, operand 0']
    #allocation3 [shape = 'u8[32768]{0}', space=vmem, size = 0x8000, scoped, tag = 'output window, operand 0']
    loop: start=0, step=1, limit=4
    $region2: #{densenet_forward.16} parent=1 // loop_pre_header
      _
    $region3: #{densenet_forward.16} parent=1 // loop_header
      %s10 = sphi 0, %s14
      %p11 = scmp.ge.s32.totalorder %s10, 4
      %s20 = sphi 0, %s22
      %s23 = sphi 0, %s20
      %s24 = sphi 0, %s23
      %s40 = sphi 0, %s24
      %s44 = sphi 0, %s44
      %s46 = sphi 0, %s44
      %s47 = sphi 0, %s46
      %s61 = sphi 0, %s47
      %s65 = sphi 0, %s65
      %s67 = sphi 0, %s65
      %s68 = sphi 0, %s67
      %s82 = sphi 0, %s68
      %s86 = sphi 0, %s86
      %s88 = sphi 0, %s86
      %s89 = sphi 0, %s88
      %s103 = sphi 0, %s89
      %s109 = sphi 0, %s111
      %s112 = sphi 0, %s109
      %s113 = sphi 0, %s112
      %s129 = sphi 0, %s113
    $region4: #{densenet_forward.16} parent=1 // loop_header_branch
      %13 = sbr.rel (%p11) target = $region8
    $region5: #{densenet_forward.16} parent=1 // loop_body
      %s15 = ssub.s32 %s10, 1
      %s16 = ssub.s32 %s10, 2
      %s17 = sadd.s32 %s10, 1
      %s18 = ssub.s32 %s10, %s17
      %p19 = scmp.eq.s32.totalorder %s18, 0
      %s21 = sadd.s32 %s20, 1
      %s22 = scalar_select %p19, %s20, %s21
      %p25 = pneg %p19
      %p26 = scmp.eq.s32.totalorder %s10, 1
      %p27 = por %p25, %p26
      %p28 = scmp.ne.s32.totalorder %s20, %s23
      %p29 = scmp.eq.s32.totalorder %s10, 0
      %p30 = por %p28, %p29
      %p31 = scmp.ne.s32.totalorder %s20, %s23
      %p32 = scmp.eq.s32.totalorder %s15, 1
      %p33 = por %p31, %p32
      %p34 = scmp.ne.s32.totalorder %s23, %s24
      %p35 = scmp.eq.s32.totalorder %s15, 0
      %p36 = por %p34, %p35
      %p37 = scmp.ne.s32.totalorder %s23, %s24
      %p38 = scmp.eq.s32.totalorder %s16, 1
      %p39 = por %p37, %p38
      %p41 = scmp.ne.s32.totalorder %s24, %s40
      %p42 = scmp.eq.s32.totalorder %s16, 0
      %p43 = por %p41, %p42
      %s45 = sadd.s32 %s44, 1
      %p48 = scmp.eq.s32.totalorder %s10, 1
      %p49 = scmp.ne.s32.totalorder %s44, %s46
      %p50 = scmp.eq.s32.totalorder %s10, 0
      %p51 = por %p49, %p50
      %p52 = scmp.ne.s32.totalorder %s44, %s46
      %p53 = scmp.eq.s32.totalorder %s15, 1
      %p54 = por %p52, %p53
      %p55 = scmp.ne.s32.totalorder %s46, %s47
      %p56 = scmp.eq.s32.totalorder %s15, 0
      %p57 = por %p55, %p56
      %p58 = scmp.ne.s32.totalorder %s46, %s47
      %p59 = scmp.eq.s32.totalorder %s16, 1
      %p60 = por %p58, %p59
      %p62 = scmp.ne.s32.totalorder %s47, %s61
      %p63 = scmp.eq.s32.totalorder %s16, 0
      %p64 = por %p62, %p63
      %s66 = sadd.s32 %s65, 1
      %p69 = scmp.eq.s32.totalorder %s10, 1
      %p70 = scmp.ne.s32.totalorder %s65, %s67
      %p71 = scmp.eq.s32.totalorder %s10, 0
      %p72 = por %p70, %p71
      %p73 = scmp.ne.s32.totalorder %s65, %s67
      %p74 = scmp.eq.s32.totalorder %s15, 1
      %p75 = por %p73, %p74
      %p76 = scmp.ne.s32.totalorder %s67, %s68
      %p77 = scmp.eq.s32.totalorder %s15, 0
      %p78 = por %p76, %p77
      %p79 = scmp.ne.s32.totalorder %s67, %s68
      %p80 = scmp.eq.s32.totalorder %s16, 1
      %p81 = por %p79, %p80
      %p83 = scmp.ne.s32.totalorder %s68, %s82
      %p84 = scmp.eq.s32.totalorder %s16, 0
      %p85 = por %p83, %p84
      %s87 = sadd.s32 %s86, 1
      %p90 = scmp.eq.s32.totalorder %s10, 1
      %p91 = scmp.ne.s32.totalorder %s86, %s88
      %p92 = scmp.eq.s32.totalorder %s10, 0
      %p93 = por %p91, %p92
      %p94 = scmp.ne.s32.totalorder %s86, %s88
      %p95 = scmp.eq.s32.totalorder %s15, 1
      %p96 = por %p94, %p95
      %p97 = scmp.ne.s32.totalorder %s88, %s89
      %p98 = scmp.eq.s32.totalorder %s15, 0
      %p99 = por %p97, %p98
      %p100 = scmp.ne.s32.totalorder %s88, %s89
      %p101 = scmp.eq.s32.totalorder %s16, 1
      %p102 = por %p100, %p101
      %p104 = scmp.ne.s32.totalorder %s89, %s103
      %p105 = scmp.eq.s32.totalorder %s16, 0
      %p106 = por %p104, %p105
      %s107 = ssub.s32 %s10, %s17
      %p108 = scmp.eq.s32.totalorder %s107, 0
      %s110 = sadd.s32 %s109, 1
      %s111 = scalar_select %p108, %s109, %s110
      %p114 = pneg %p108
      %p115 = scmp.eq.s32.totalorder %s10, 1
      %p116 = por %p114, %p115
      %p117 = scmp.ne.s32.totalorder %s109, %s112
      %p118 = scmp.eq.s32.totalorder %s10, 0
      %p119 = por %p117, %p118
      %p120 = scmp.ne.s32.totalorder %s109, %s112
      %p121 = scmp.eq.s32.totalorder %s15, 1
      %p122 = por %p120, %p121
      %p123 = scmp.ne.s32.totalorder %s112, %s113
      %p124 = scmp.eq.s32.totalorder %s15, 0
      %p125 = por %p123, %p124
      %p126 = scmp.ne.s32.totalorder %s112, %s113
      %p127 = scmp.eq.s32.totalorder %s16, 1
      %p128 = por %p126, %p127
      %p130 = scmp.ne.s32.totalorder %s113, %s129
      %p131 = scmp.eq.s32.totalorder %s16, 0
      %p132 = por %p130, %p131
      %p133 = scmp.le.s32.totalorder 1, %s10
      %p134 = scmp.lt.s32.totalorder %s10, 3
      %p135 = pnand %p133, %p134
      %p136 = pneg %p135
      // Predicated region
      $region9: #{densenet_forward.16} parent=5 // pred_check
        _
      $region10: #{densenet_forward.16} parent=5 // pred_check_branch
        %138 = sbr.rel (%p135) target = $region12
      $region11: #{densenet_forward.16} parent=5 // pred_region
        %s139 = ssub.s32 %s10, 1
        // Predicated region
        $region13: #{densenet_forward.16} parent=11 // pred_check
          %p140 = pneg %p57
        $region14: #{densenet_forward.16} parent=11 // pred_check_branch
          %142 = sbr.rel (%p140) target = $region16
        $region15: #{densenet_forward.16} parent=11 // pred_region
          _
        $region16: #{densenet_forward.16} parent=11 // pred_fallthru
          _
        // Predicated region
        $region17: #{densenet_forward.16} parent=11 // pred_check
          %p143 = pneg %p78
        $region18: #{densenet_forward.16} parent=11 // pred_check_branch
          %145 = sbr.rel (%p143) target = $region20
        $region19: #{densenet_forward.16} parent=11 // pred_region
          _
        $region20: #{densenet_forward.16} parent=11 // pred_fallthru
          _
        // Predicated region
        $region21: #{densenet_forward.16} parent=11 // pred_check
          %p146 = pneg %p99
        $region22: #{densenet_forward.16} parent=11 // pred_check_branch
          %148 = sbr.rel (%p146) target = $region24
        $region23: #{densenet_forward.16} parent=11 // pred_region
          _
        $region24: #{densenet_forward.16} parent=11 // pred_fallthru
          _
      $region12: #{densenet_forward.16} parent=5 // pred_fallthru
        _
      %p149 = scmp.lt.s32.totalorder %s10, 2
      // Predicated region
      $region25: #{densenet_forward.16} parent=5 // pred_check
        %p150 = pneg %p149
      $region26: #{densenet_forward.16} parent=5 // pred_check_branch
        %152 = sbr.rel (%p150) target = $region28
      $region27: #{densenet_forward.16} parent=5 // pred_region
        // Predicated region
        $region29: #{densenet_forward.16} parent=27 // pred_check
          %p153 = pneg %p30
        $region30: #{densenet_forward.16} parent=27 // pred_check_branch
          %155 = sbr.rel (%p153) target = $region32
        $region31: #{densenet_forward.16} parent=27 // pred_region
          %s156 = sand.u32 %s20, 1
          %s157 = sand.u32 %s20, 1
          %s158 = smul.addr %s157, 64
          %s159 = scalar_lea.vmem [#allocation2], %s158
          %s160 = smul.u32 2, %s10
          %s161 = smul.addr %s160, 8
          %s162 = scalar_lea.vmem %s0, %s161
          // Predicated region
          $region33: #{densenet_forward.16} parent=31 // pred_check
            _
          $region34: #{densenet_forward.16} parent=31 // pred_check_branch
            %164 = sbr.rel (0) target = $region36
          $region35: #{densenet_forward.16} parent=31 // pred_region
            // Predicated region
            $region37: #{densenet_forward.16} parent=35 // pred_check
              _
            $region38: #{densenet_forward.16} parent=35 // pred_check_branch
              %166 = sbr.rel (0) target = $region40
            $region39: #{densenet_forward.16} parent=35 // pred_region
              loop: start=0, step=1, limit=1
              $region41: #{densenet_forward.16} parent=39 // loop_pre_header
                _
              $region42: #{densenet_forward.16} parent=39 // loop_header
                %s168 = sphi 0, %s172
                %p169 = scmp.ge.s32.totalorder %s168, 1
                %s173 = sphi %s162, %s162
                %s174 = sphi %s159, %s159
              $region43: #{densenet_forward.16} parent=39 // loop_header_branch
                %171 = sbr.rel (%p169) target = $region47
              $region44: #{densenet_forward.16} parent=39 // loop_body
                %v175 = vld [vmem:[%s173] sm:$0xff]
                %176 = vst [vmem:[%s174] sm:$0xff] %v175
                %v177 = vld [vmem:[%s173 + $0x8] sm:$0xff]
                %178 = vst [vmem:[%s174 + $0x8] sm:$0xff] %v177
                %v179 = vld [vmem:[%s173 + $0x20] sm:$0xff]
                %180 = vst [vmem:[%s174 + $0x10] sm:$0xff] %v179
                %v181 = vld [vmem:[%s173 + $0x28] sm:$0xff]
                %182 = vst [vmem:[%s174 + $0x18] sm:$0xff] %v181
                %v183 = vld [vmem:[%s173 + $0x40] sm:$0xff]
                %184 = vst [vmem:[%s174 + $0x20] sm:$0xff] %v183
                %v185 = vld [vmem:[%s173 + $0x48] sm:$0xff]
                %186 = vst [vmem:[%s174 + $0x28] sm:$0xff] %v185
                %v187 = vld [vmem:[%s173 + $0x60] sm:$0xff]
                %188 = vst [vmem:[%s174 + $0x30] sm:$0xff] %v187
                %v189 = vld [vmem:[%s173 + $0x68] sm:$0xff]
                %190 = vst [vmem:[%s174 + $0x38] sm:$0xff] %v189
              $region45: #{densenet_forward.16} parent=39 // loop_footer
                %s172 = sadd.s32 1, %s168
              $region46: #{densenet_forward.16} parent=39 // loop_footer_branch
                %167 = sbr.rel target = $region42
              $region47: #{densenet_forward.16} parent=39 // loop_exit
                _
            $region40: #{densenet_forward.16} parent=35 // pred_fallthru
              _
            // Predicated region
            $region48: #{densenet_forward.16} parent=35 // pred_check
              _
            $region49: #{densenet_forward.16} parent=35 // pred_check_branch
              %192 = sbr.rel target = $region51
            $region50: #{densenet_forward.16} parent=35 // pred_region
              _
            $region51: #{densenet_forward.16} parent=35 // pred_fallthru
              _
          $region36: #{densenet_forward.16} parent=31 // pred_fallthru
            _
          %193 = vnop
        $region32: #{densenet_forward.16} parent=27 // pred_fallthru
          _
      $region28: #{densenet_forward.16} parent=5 // pred_fallthru
        _
      %p194 = scmp.le.s32.totalorder 1, %s10
      %p195 = scmp.lt.s32.totalorder %s10, 3
      %p196 = pnand %p194, %p195
      %p197 = pneg %p196
      // Predicated region
      $region52: #{densenet_forward.16} parent=5 // pred_check
        _
      $region53: #{densenet_forward.16} parent=5 // pred_check_branch
        %199 = sbr.rel (%p196) target = $region55
      $region54: #{densenet_forward.16} parent=5 // pred_region
        %s200 = ssub.s32 %s10, 1
        %s201 = sand.u32 %s23, 1
        %s202 = sand.u32 %s23, 1
        %s203 = smul.addr %s202, 64
        %s204 = scalar_lea.vmem [#allocation2], %s203
        // Predicated region
        $region56: #{densenet_forward.16} parent=54 // pred_check
          %p205 = pneg %p36
        $region57: #{densenet_forward.16} parent=54 // pred_check_branch
          %207 = sbr.rel (%p205) target = $region59
        $region58: #{densenet_forward.16} parent=54 // pred_region
          _
        $region59: #{densenet_forward.16} parent=54 // pred_fallthru
          _
        %s208 = sand.u32 %s23, 1
        %s209 = sand.u32 %s23, 1
        %s210 = smul.addr %s209, 64
        %s211 = scalar_lea.vmem [#allocation2], %s210
        %p212 = pneg %p36
        %p213 = pneg %p33
        %p214 = pneg %p57
        %p215 = pneg %p54
        %p216 = pneg %p78
        %p217 = pneg %p75
        %p218 = pneg %p99
        %p219 = pneg %p96
        %p220 = pneg %p125
        %p221 = pneg %p122
        %s222 = sand.u32 %s112, 1
        %s223 = sand.u32 %s112, 1
        %s224 = smul.addr %s223, 32
        %s225 = scalar_lea.vmem [#allocation3], %s224
        %s226 = smul.u32 2, %s15
        %s227 = smul.u32 2, %s15
        %v229 = vld [vmem:[%s204] sm:$0xff]
        %v230 = vld [vmem:[%s204 + $0x8] sm:$0xff]
        %v231 = vld [vmem:[%s204 + $0x10] sm:$0xff]
        %v232 = vld [vmem:[%s204 + $0x18] sm:$0xff]
        %v233 = vld [vmem:[%s204 + $0x20] sm:$0xff]
        %v234 = vld [vmem:[%s204 + $0x28] sm:$0xff]
        %v235 = vld [vmem:[%s204 + $0x30] sm:$0xff]
        %v236 = vld [vmem:[%s204 + $0x38] sm:$0xff]
        %v237 = vld [vmem:[%s1] sm:$0xff]
        %v238 = vld [vmem:[%s1 + $0x8] sm:$0xff]
        %v239 = vld [vmem:[%s1 + $0x10] sm:$0xff]
        %v240 = vld [vmem:[%s1 + $0x18] sm:$0xff]
        %242 = vset.pattern.permute.xlu0 0
        %243 = vperm.xlu0 %242, %v237
        %v244 = vpop.permute.xlu0 %243
        %247 = vset.pattern.permute.xlu0 0
        %248 = vperm.xlu0 %247, %v238
        %v249 = vpop.permute.xlu0 %248
        %252 = vset.pattern.permute.xlu0 0
        %253 = vperm.xlu0 %252, %v239
        %v254 = vpop.permute.xlu0 %253
        %257 = vset.pattern.permute.xlu0 0
        %258 = vperm.xlu0 %257, %v240
        %v259 = vpop.permute.xlu0 %258
        %v261 = vmul.f32 %v229, %v244
        %v262 = vmul.f32 %v230, %v244
        %v263 = vmul.f32 %v231, %v249
        %v264 = vmul.f32 %v232, %v249
        %v265 = vmul.f32 %v233, %v254
        %v266 = vmul.f32 %v234, %v254
        %v267 = vmul.f32 %v235, %v259
        %v268 = vmul.f32 %v236, %v259
        %v269 = vld [vmem:[%s2] sm:$0xff]
        %v270 = vld [vmem:[%s2 + $0x8] sm:$0xff]
        %v271 = vld [vmem:[%s2 + $0x10] sm:$0xff]
        %v272 = vld [vmem:[%s2 + $0x18] sm:$0xff]
        %274 = vset.pattern.permute.xlu0 0
        %275 = vperm.xlu0 %274, %v269
        %v276 = vpop.permute.xlu0 %275
        %279 = vset.pattern.permute.xlu0 0
        %280 = vperm.xlu0 %279, %v270
        %v281 = vpop.permute.xlu0 %280
        %284 = vset.pattern.permute.xlu0 0
        %285 = vperm.xlu0 %284, %v271
        %v286 = vpop.permute.xlu0 %285
        %289 = vset.pattern.permute.xlu0 0
        %290 = vperm.xlu0 %289, %v272
        %v291 = vpop.permute.xlu0 %290
        %v293 = vadd.f32 %v261, %v276
        %v294 = vadd.f32 %v262, %v276
        %v295 = vadd.f32 %v263, %v281
        %v296 = vadd.f32 %v264, %v281
        %v297 = vadd.f32 %v265, %v286
        %v298 = vadd.f32 %v266, %v286
        %v299 = vadd.f32 %v267, %v291
        %v300 = vadd.f32 %v268, %v291
        %v301 = vmax.f32 %v293, 0.0
        %v302 = vmax.f32 %v294, 0.0
        %v303 = vmax.f32 %v295, 0.0
        %v304 = vmax.f32 %v296, 0.0
        %v305 = vmax.f32 %v297, 0.0
        %v306 = vmax.f32 %v298, 0.0
        %v307 = vmax.f32 %v299, 0.0
        %v308 = vmax.f32 %v300, 0.0
        %v309 = vld [vmem:[%s3] sm:$0xf]
        %v310 = vld [vmem:[%s3 + $0x4] sm:$0xf]
        %v311 = vpack.c.bf16 %v303, %v301
        %v312 = vpack.c.bf16 %v304, %v302
        %v313 = vpack.c.bf16 %v307, %v305
        %v314 = vpack.c.bf16 %v308, %v306
        %v317 = vunpack.c.l.b16 %v309
        %v318 = vunpack.c.l.b16 %v310
        %v319 = vpack.c.b16 %v318, %v317
        %vm320 = vcmask 261120
        %v322 = vsel %vm320, %v319, 0
        %324 = vmatpush.bf16.msra.mxu0 0
        %325 = vmatpush.bf16.msra.mxu0 0
        %326 = vmatpush.bf16.msra.mxu0 0
        %327 = vmatpush.bf16.msra.mxu0 0
        %328 = vmatpush.bf16.msra.mxu0 0
        %329 = vmatpush.bf16.msra.mxu0 0
        %330 = vmatpush.bf16.msra.mxu0 %v313
        %331 = vmatpush.bf16.msra.mxu0 %v311
        %332 = vmatmul.bf16.gmra.mxu0 %v322
        %v333 = vpop.f32.mrf.mxu0
        %v334 = vadd.f32 0.0, %v333
        %v335 = vpop.f32.mrf.mxu0
        %v336 = vadd.f32 0.0, %v335
        %337 = vdwg.mxu0
        %338 = vmatpush.bf16.msra.mxu0 0
        %339 = vmatpush.bf16.msra.mxu0 0
        %340 = vmatpush.bf16.msra.mxu0 0
        %341 = vmatpush.bf16.msra.mxu0 0
        %342 = vmatpush.bf16.msra.mxu0 0
        %343 = vmatpush.bf16.msra.mxu0 0
        %344 = vmatpush.bf16.msra.mxu0 %v314
        %345 = vmatpush.bf16.msra.mxu0 %v312
        %346 = vmatmul.bf16.gmra.mxu0 %v322
        %v347 = vpop.f32.mrf.mxu0
        %v348 = vadd.f32 0.0, %v347
        %v349 = vpop.f32.mrf.mxu0
        %v350 = vadd.f32 0.0, %v349
        %351 = vdwg.mxu0
        %352 = vst [vmem:[%s225] sm:$0xff] %v334
        %353 = vst [vmem:[%s225 + $0x8] sm:$0xff] %v348
        %354 = vst [vmem:[%s225 + $0x10] sm:$0xff] %v336
        %355 = vst [vmem:[%s225 + $0x18] sm:$0xff] %v350
        %s356 = sand.u32 %s112, 1
        %s357 = sand.u32 %s112, 1
        %s358 = smul.addr %s357, 32
        %s359 = scalar_lea.vmem [#allocation3], %s358
        // Predicated region
        $region60: #{densenet_forward.16} parent=54 // pred_check
          %p360 = pneg %p122
        $region61: #{densenet_forward.16} parent=54 // pred_check_branch
          %362 = sbr.rel (%p360) target = $region63
        $region62: #{densenet_forward.16} parent=54 // pred_region
          %s363 = smul.u32 2, %s15
          %s364 = smul.addr %s363, 8
          %s365 = scalar_lea.vmem %s4, %s364
          // Predicated region
          $region64: #{densenet_forward.16} parent=62 // pred_check
            _
          $region65: #{densenet_forward.16} parent=62 // pred_check_branch
            %367 = sbr.rel (0) target = $region67
          $region66: #{densenet_forward.16} parent=62 // pred_region
            // Predicated region
            $region68: #{densenet_forward.16} parent=66 // pred_check
              _
            $region69: #{densenet_forward.16} parent=66 // pred_check_branch
              %369 = sbr.rel (0) target = $region71
            $region70: #{densenet_forward.16} parent=66 // pred_region
              loop: start=0, step=1, limit=1
              $region72: #{densenet_forward.16} parent=70 // loop_pre_header
                _
              $region73: #{densenet_forward.16} parent=70 // loop_header
                %s371 = sphi 0, %s375
                %p372 = scmp.ge.s32.totalorder %s371, 1
                %s376 = sphi %s359, %s359
                %s377 = sphi %s365, %s365
              $region74: #{densenet_forward.16} parent=70 // loop_header_branch
                %374 = sbr.rel (%p372) target = $region78
              $region75: #{densenet_forward.16} parent=70 // loop_body
                %v378 = vld [vmem:[%s376] sm:$0xff]
                %379 = vst [vmem:[%s377] sm:$0xff] %v378
                %v380 = vld [vmem:[%s376 + $0x8] sm:$0xff]
                %381 = vst [vmem:[%s377 + $0x8] sm:$0xff] %v380
                %v382 = vld [vmem:[%s376 + $0x10] sm:$0xff]
                %383 = vst [vmem:[%s377 + $0x20] sm:$0xff] %v382
                %v384 = vld [vmem:[%s376 + $0x18] sm:$0xff]
                %385 = vst [vmem:[%s377 + $0x28] sm:$0xff] %v384
              $region76: #{densenet_forward.16} parent=70 // loop_footer
                %s375 = sadd.s32 1, %s371
              $region77: #{densenet_forward.16} parent=70 // loop_footer_branch
                %370 = sbr.rel target = $region73
              $region78: #{densenet_forward.16} parent=70 // loop_exit
                _
            $region71: #{densenet_forward.16} parent=66 // pred_fallthru
              _
            // Predicated region
            $region79: #{densenet_forward.16} parent=66 // pred_check
              _
            $region80: #{densenet_forward.16} parent=66 // pred_check_branch
              %387 = sbr.rel target = $region82
            $region81: #{densenet_forward.16} parent=66 // pred_region
              _
            $region82: #{densenet_forward.16} parent=66 // pred_fallthru
              _
          $region67: #{densenet_forward.16} parent=62 // pred_fallthru
            _
          %388 = vnop
        $region63: #{densenet_forward.16} parent=54 // pred_fallthru
          _
      $region55: #{densenet_forward.16} parent=5 // pred_fallthru
        _
      %p389 = scmp.le.s32.totalorder 2, %s10
      // Predicated region
      $region83: #{densenet_forward.16} parent=5 // pred_check
        %p390 = pneg %p389
      $region84: #{densenet_forward.16} parent=5 // pred_check_branch
        %392 = sbr.rel (%p390) target = $region86
      $region85: #{densenet_forward.16} parent=5 // pred_region
        %s393 = ssub.s32 %s10, 2
        // Predicated region
        $region87: #{densenet_forward.16} parent=85 // pred_check
          %p394 = pneg %p128
        $region88: #{densenet_forward.16} parent=85 // pred_check_branch
          %396 = sbr.rel (%p394) target = $region90
        $region89: #{densenet_forward.16} parent=85 // pred_region
          %s397 = sand.u32 %s113, 1
          %s398 = sand.u32 %s113, 1
          %s399 = smul.addr %s398, 32
          %s400 = scalar_lea.vmem [#allocation3], %s399
        $region90: #{densenet_forward.16} parent=85 // pred_fallthru
          _
      $region86: #{densenet_forward.16} parent=5 // pred_fallthru
        _
    $region6: #{densenet_forward.16} parent=1 // loop_footer
      %s14 = sadd.s32 1, %s10
    $region7: #{densenet_forward.16} parent=1 // loop_footer_branch
      %9 = sbr.rel target = $region3
    $region8: #{densenet_forward.16} parent=1 // loop_exit
      _

// kernel: densenet_forward.14
$region0: #{densenet_forward.14}
  #allocation0 [shape = 'u32[]', space=smem, size = 0x4, offset = 0x4, fixed_abs, tag = 'smem constant byte address 0x4 - core index']
  #allocation1 [shape = 'u32[72,128]{1,0:T(1,128)}', space=vmem, size = 0x9000, scoped, tag = 'internal scratch']
  #allocation2 [shape = 'f32[16,768]{1,0:T(8,128)}', space=vmem, size = 0xc000, scoped, tag = 'scratch operand']
  %s0 = inlined_call_operand.vmem [shape: f32[32,512], index: 0, kind: input, shape index: {}, may-alias: {0,8}]
  %s1 = inlined_call_operand.vmem [shape: f32[16,1], index: 1, kind: input, shape index: {}]
  %s2 = inlined_call_operand.vmem [shape: f32[16,1], index: 2, kind: input, shape index: {}]
  %s3 = inlined_call_operand.vmem [shape: bf16[16,16], index: 3, kind: input, shape index: {}]
  %s4 = inlined_call_operand.vmem [shape: f32[16,1], index: 4, kind: input, shape index: {}]
  %s5 = inlined_call_operand.vmem [shape: f32[16,1], index: 5, kind: input, shape index: {}]
  %s6 = inlined_call_operand.vmem [shape: bf16[9,8,16], index: 6, kind: input, shape index: {}]
  %s7 = inlined_call_operand.vmem [shape: f32[9,1,512], index: 7, kind: input, shape index: {}]
  %s8 = inlined_call_operand.vmem [shape: f32[32,512], index: 8, kind: output, shape index: {}, may-alias: {0,8}]
  %s9 = sld [smem:[#allocation0]]
  $region42: #{densenet_forward.14} parent=0
    _
  %s11 = ssub.s32 1, %s9
  %s12 = scalar_select 0, %s11, %s9
  // Predicated region
  $region2: #{densenet_forward.14} parent=0 // pred_check
    _
  $region3: #{densenet_forward.14} parent=0 // pred_check_branch
    %14 = sbr.rel (0) target = $region5
  $region4: #{densenet_forward.14} parent=0 // pred_region
    _
  $region5: #{densenet_forward.14} parent=0 // pred_fallthru
    _
  // Predicated region
  $region6: #{densenet_forward.14} parent=0 // pred_check
    _
  $region7: #{densenet_forward.14} parent=0 // pred_check_branch
    %16 = sbr.rel (0) target = $region9
  $region8: #{densenet_forward.14} parent=0 // pred_region
    _
  $region9: #{densenet_forward.14} parent=0 // pred_fallthru
    _
  // Predicated region
  $region10: #{densenet_forward.14} parent=0 // pred_check
    _
  $region11: #{densenet_forward.14} parent=0 // pred_check_branch
    %18 = sbr.rel (0) target = $region13
  $region12: #{densenet_forward.14} parent=0 // pred_region
    _
  $region13: #{densenet_forward.14} parent=0 // pred_fallthru
    _
  // Predicated region
  $region14: #{densenet_forward.14} parent=0 // pred_check
    _
  $region15: #{densenet_forward.14} parent=0 // pred_check_branch
    %20 = sbr.rel (0) target = $region17
  $region16: #{densenet_forward.14} parent=0 // pred_region
    _
  $region17: #{densenet_forward.14} parent=0 // pred_fallthru
    _
  // Predicated region
  $region18: #{densenet_forward.14} parent=0 // pred_check
    _
  $region19: #{densenet_forward.14} parent=0 // pred_check_branch
    %22 = sbr.rel (0) target = $region21
  $region20: #{densenet_forward.14} parent=0 // pred_region
    _
  $region21: #{densenet_forward.14} parent=0 // pred_fallthru
    _
  // Predicated region
  $region22: #{densenet_forward.14} parent=0 // pred_check
    _
  $region23: #{densenet_forward.14} parent=0 // pred_check_branch
    %24 = sbr.rel (0) target = $region25
  $region24: #{densenet_forward.14} parent=0 // pred_region
    _
  $region25: #{densenet_forward.14} parent=0 // pred_fallthru
    _
  // Predicated region
  $region26: #{densenet_forward.14} parent=0 // pred_check
    _
  $region27: #{densenet_forward.14} parent=0 // pred_check_branch
    %26 = sbr.rel (0) target = $region29
  $region28: #{densenet_forward.14} parent=0 // pred_region
    _
  $region29: #{densenet_forward.14} parent=0 // pred_fallthru
    _
  // Predicated region
  $region30: #{densenet_forward.14} parent=0 // pred_check
    _
  $region31: #{densenet_forward.14} parent=0 // pred_check_branch
    %28 = sbr.rel (0) target = $region33
  $region32: #{densenet_forward.14} parent=0 // pred_region
    _
  $region33: #{densenet_forward.14} parent=0 // pred_fallthru
    _
  %s29 = scalar_lea.vmem %s8, 64
  %s30 = scalar_lea.vmem %s8, 64
  %v32 = vld [vmem:[%s0] sm:$0xff]
  %v33 = vld [vmem:[%s0 + $0x8] sm:$0xff]
  %v34 = vld [vmem:[%s0 + $0x10] sm:$0xff]
  %v35 = vld [vmem:[%s0 + $0x18] sm:$0xff]
  %v36 = vld [vmem:[%s0 + $0x20] sm:$0xff]
  %v37 = vld [vmem:[%s0 + $0x28] sm:$0xff]
  %v38 = vld [vmem:[%s0 + $0x30] sm:$0xff]
  %v39 = vld [vmem:[%s0 + $0x38] sm:$0xff]
  %v40 = vld [vmem:[%s1] sm:$0xff]
  %v41 = vld [vmem:[%s1 + $0x8] sm:$0xff]
  %43 = vset.pattern.permute.xlu0 0
  %44 = vperm.xlu0 %43, %v40
  %v45 = vpop.permute.xlu0 %44
  %48 = vset.pattern.permute.xlu0 0
  %49 = vperm.xlu0 %48, %v41
  %v50 = vpop.permute.xlu0 %49
  %v52 = vmul.f32 %v32, %v45
  %v53 = vmul.f32 %v33, %v45
  %v54 = vmul.f32 %v34, %v45
  %v55 = vmul.f32 %v35, %v45
  %v56 = vmul.f32 %v36, %v50
  %v57 = vmul.f32 %v37, %v50
  %v58 = vmul.f32 %v38, %v50
  %v59 = vmul.f32 %v39, %v50
  %v60 = vld [vmem:[%s2] sm:$0xff]
  %v61 = vld [vmem:[%s2 + $0x8] sm:$0xff]
  %63 = vset.pattern.permute.xlu0 0
  %64 = vperm.xlu0 %63, %v60
  %v65 = vpop.permute.xlu0 %64
  %68 = vset.pattern.permute.xlu0 0
  %69 = vperm.xlu0 %68, %v61
  %v70 = vpop.permute.xlu0 %69
  %v72 = vadd.f32 %v52, %v65
  %v73 = vadd.f32 %v53, %v65
  %v74 = vadd.f32 %v54, %v65
  %v75 = vadd.f32 %v55, %v65
  %v76 = vadd.f32 %v56, %v70
  %v77 = vadd.f32 %v57, %v70
  %v78 = vadd.f32 %v58, %v70
  %v79 = vadd.f32 %v59, %v70
  %v80 = vmax.f32 %v72, 0.0
  %v81 = vmax.f32 %v73, 0.0
  %v82 = vmax.f32 %v74, 0.0
  %v83 = vmax.f32 %v75, 0.0
  %v84 = vmax.f32 %v76, 0.0
  %v85 = vmax.f32 %v77, 0.0
  %v86 = vmax.f32 %v78, 0.0
  %v87 = vmax.f32 %v79, 0.0
  %v88 = vld [vmem:[%s3] sm:$0xf]
  %v89 = vld [vmem:[%s3 + $0x4] sm:$0xf]
  %v90 = vpack.c.bf16 %v84, %v80
  %v91 = vpack.c.bf16 %v85, %v81
  %v92 = vpack.c.bf16 %v86, %v82
  %v93 = vpack.c.bf16 %v87, %v83
  %v96 = vunpack.c.l.b16 %v88
  %v97 = vunpack.c.l.b16 %v89
  %v98 = vpack.c.b16 %v97, %v96
  %vm99 = vcmask 130048
  %v101 = vsel %vm99, %v98, 0
  %103 = vmatpush.bf16.msra.mxu0 0
  %104 = vmatpush.bf16.msra.mxu0 0
  %105 = vmatpush.bf16.msra.mxu0 0
  %106 = vmatpush.bf16.msra.mxu0 0
  %107 = vmatpush.bf16.msra.mxu0 0
  %108 = vmatpush.bf16.msra.mxu0 0
  %109 = vmatpush.bf16.msra.mxu0 0
  %110 = vmatpush.bf16.msra.mxu0 %v90
  %111 = vmatmul.bf16.gmra.mxu0 %v101
  %v112 = vpop.f32.mrf.mxu0
  %v113 = vadd.f32 0.0, %v112
  %v114 = vpop.f32.mrf.mxu0
  %v115 = vadd.f32 0.0, %v114
  %116 = vdwg.mxu0
  %117 = vmatpush.bf16.msra.mxu0 0
  %118 = vmatpush.bf16.msra.mxu0 0
  %119 = vmatpush.bf16.msra.mxu0 0
  %120 = vmatpush.bf16.msra.mxu0 0
  %121 = vmatpush.bf16.msra.mxu0 0
  %122 = vmatpush.bf16.msra.mxu0 0
  %123 = vmatpush.bf16.msra.mxu0 0
  %124 = vmatpush.bf16.msra.mxu0 %v91
  %125 = vmatmul.bf16.gmra.mxu0 %v101
  %v126 = vpop.f32.mrf.mxu0
  %v127 = vadd.f32 0.0, %v126
  %v128 = vpop.f32.mrf.mxu0
  %v129 = vadd.f32 0.0, %v128
  %130 = vdwg.mxu0
  %131 = vmatpush.bf16.msra.mxu0 0
  %132 = vmatpush.bf16.msra.mxu0 0
  %133 = vmatpush.bf16.msra.mxu0 0
  %134 = vmatpush.bf16.msra.mxu0 0
  %135 = vmatpush.bf16.msra.mxu0 0
  %136 = vmatpush.bf16.msra.mxu0 0
  %137 = vmatpush.bf16.msra.mxu0 0
  %138 = vmatpush.bf16.msra.mxu0 %v92
  %139 = vmatmul.bf16.gmra.mxu0 %v101
  %v140 = vpop.f32.mrf.mxu0
  %v141 = vadd.f32 0.0, %v140
  %v142 = vpop.f32.mrf.mxu0
  %v143 = vadd.f32 0.0, %v142
  %144 = vdwg.mxu0
  %145 = vmatpush.bf16.msra.mxu0 0
  %146 = vmatpush.bf16.msra.mxu0 0
  %147 = vmatpush.bf16.msra.mxu0 0
  %148 = vmatpush.bf16.msra.mxu0 0
  %149 = vmatpush.bf16.msra.mxu0 0
  %150 = vmatpush.bf16.msra.mxu0 0
  %151 = vmatpush.bf16.msra.mxu0 0
  %152 = vmatpush.bf16.msra.mxu0 %v93
  %153 = vmatmul.bf16.gmra.mxu0 %v101
  %v154 = vpop.f32.mrf.mxu0
  %v155 = vadd.f32 0.0, %v154
  %v156 = vpop.f32.mrf.mxu0
  %v157 = vadd.f32 0.0, %v156
  %158 = vdwg.mxu0
  %v159 = vld [vmem:[%s4] sm:$0xff]
  %v160 = vld [vmem:[%s4 + $0x8] sm:$0xff]
  %162 = vset.pattern.permute.xlu0 0
  %163 = vperm.xlu0 %162, %v159
  %v164 = vpop.permute.xlu0 %163
  %167 = vset.pattern.permute.xlu0 0
  %168 = vperm.xlu0 %167, %v160
  %v169 = vpop.permute.xlu0 %168
  %v171 = vmul.f32 %v113, %v164
  %v172 = vmul.f32 %v127, %v164
  %v173 = vmul.f32 %v141, %v164
  %v174 = vmul.f32 %v155, %v164
  %v175 = vmul.f32 %v115, %v169
  %v176 = vmul.f32 %v129, %v169
  %v177 = vmul.f32 %v143, %v169
  %v178 = vmul.f32 %v157, %v169
  %v179 = vld [vmem:[%s5] sm:$0xff]
  %v180 = vld [vmem:[%s5 + $0x8] sm:$0xff]
  %182 = vset.pattern.permute.xlu0 0
  %183 = vperm.xlu0 %182, %v179
  %v184 = vpop.permute.xlu0 %183
  %187 = vset.pattern.permute.xlu0 0
  %188 = vperm.xlu0 %187, %v180
  %v189 = vpop.permute.xlu0 %188
  %v191 = vadd.f32 %v171, %v184
  %v192 = vadd.f32 %v172, %v184
  %v193 = vadd.f32 %v173, %v184
  %v194 = vadd.f32 %v174, %v184
  %v195 = vadd.f32 %v175, %v189
  %v196 = vadd.f32 %v176, %v189
  %v197 = vadd.f32 %v177, %v189
  %v198 = vadd.f32 %v178, %v189
  %v199 = vmax.f32 %v191, 0.0
  %v200 = vmax.f32 %v192, 0.0
  %v201 = vmax.f32 %v193, 0.0
  %v202 = vmax.f32 %v194, 0.0
  %v203 = vmax.f32 %v195, 0.0
  %v204 = vmax.f32 %v196, 0.0
  %v205 = vmax.f32 %v197, 0.0
  %v206 = vmax.f32 %v198, 0.0
  %207 = vst [vmem:[#allocation2] sm:$0xff] 0.0
  %208 = vst [vmem:[#allocation2 + $0x8] sm:$0xff] 0.0
  %209 = vst [vmem:[#allocation2 + $0x10] sm:$0xff] 0.0
  %210 = vst [vmem:[#allocation2 + $0x18] sm:$0xff] 0.0
  %211 = vst [vmem:[#allocation2 + $0x20] sm:$0xff] 0.0
  %212 = vst [vmem:[#allocation2 + $0x28] sm:$0xff] 0.0
  %213 = vst [vmem:[#allocation2 + $0x30] sm:$0xff] 0.0
  %214 = vst [vmem:[#allocation2 + $0x38] sm:$0xff] 0.0
  %215 = vst [vmem:[#allocation2 + $0x40] sm:$0xff] 0.0
  %216 = vst [vmem:[#allocation2 + $0x48] sm:$0xff] 0.0
  %217 = vst [vmem:[#allocation2 + $0x50] sm:$0xff] 0.0
  %218 = vst [vmem:[#allocation2 + $0x58] sm:$0xff] 0.0
  %219 = vst [vmem:[#allocation2 + $0x8] sm:$0xff] %v199
  %220 = vst [vmem:[#allocation2 + $0x10] sm:$0xff] %v200
  %221 = vst [vmem:[#allocation2 + $0x18] sm:$0xff] %v201
  %222 = vst [vmem:[#allocation2 + $0x20] sm:$0xff] %v202
  %223 = vst [vmem:[#allocation2 + $0x38] sm:$0xff] %v203
  %224 = vst [vmem:[#allocation2 + $0x40] sm:$0xff] %v204
  %225 = vst [vmem:[#allocation2 + $0x48] sm:$0xff] %v205
  %226 = vst [vmem:[#allocation2 + $0x50] sm:$0xff] %v206
  %v227 = vld [vmem:[#allocation2] sm:$0xff]
  %v228 = vld [vmem:[#allocation2 + $0x8] sm:$0xff]
  %v229 = vld [vmem:[#allocation2 + $0x10] sm:$0xff]
  %v230 = vld [vmem:[#allocation2 + $0x18] sm:$0xff]
  %v231 = vld [vmem:[#allocation2 + $0x20] sm:$0xff]
  %v232 = vld [vmem:[#allocation2 + $0x30] sm:$0xff]
  %v233 = vld [vmem:[#allocation2 + $0x38] sm:$0xff]
  %v234 = vld [vmem:[#allocation2 + $0x40] sm:$0xff]
  %v235 = vld [vmem:[#allocation2 + $0x48] sm:$0xff]
  %v236 = vld [vmem:[#allocation2 + $0x50] sm:$0xff]
  %v237 = vld [vmem:[%s7] sm:$0xf]
  %v239 = vperm.slane %v237, 0
  %v240 = vperm.slane %v237, 1
  %v241 = vperm.slane %v237, 2
  %v242 = vperm.slane %v237, 3
  %243 = vrot.lane.b32.xlu0 %v239, 111
  %v244 = vpop.permute.xlu0 %243
  %245 = vrot.lane.b32.xlu0 %v240, 111
  %v246 = vpop.permute.xlu0 %245
  %247 = vrot.lane.b32.xlu0 %v241, 111
  %v248 = vpop.permute.xlu0 %247
  %249 = vrot.lane.b32.xlu0 %v242, 111
  %v250 = vpop.permute.xlu0 %249
  %vm251 = vcmask 908288
  %v252 = vsel %vm251, %v244, %v246
  %v253 = vsel %vm251, %v246, %v248
  %v254 = vsel %vm251, %v248, %v250
  %v260 = vmul.f32 %v227, %v244
  %v261 = vmul.f32 %v228, %v252
  %v262 = vmul.f32 %v229, %v253
  %v263 = vmul.f32 %v230, %v254
  %v264 = vmul.f32 %v231, %v250
  %v265 = vmul.f32 %v232, %v244
  %v266 = vmul.f32 %v233, %v252
  %v267 = vmul.f32 %v234, %v253
  %v268 = vmul.f32 %v235, %v254
  %v269 = vmul.f32 %v236, %v250
  %v270 = vld [vmem:[%s6] sm:$0xf]
  %v271 = vpack.c.bf16 %v265, %v260
  %v272 = vpack.c.bf16 %v266, %v261
  %v273 = vpack.c.bf16 %v267, %v262
  %v274 = vpack.c.bf16 %v268, %v263
  %v275 = vpack.c.bf16 %v269, %v264
  %s276 = scalar_lea.vmem %s7, 4
  %v277 = vld [vmem:[%s276] sm:$0xf]
  %v279 = vperm.slane %v277, 0
  %v280 = vperm.slane %v277, 1
  %v281 = vperm.slane %v277, 2
  %v282 = vperm.slane %v277, 3
  %283 = vrot.lane.b32.xlu0 %v279, 112
  %v284 = vpop.permute.xlu0 %283
  %285 = vrot.lane.b32.xlu0 %v280, 112
  %v286 = vpop.permute.xlu0 %285
  %287 = vrot.lane.b32.xlu0 %v281, 112
  %v288 = vpop.permute.xlu0 %287
  %289 = vrot.lane.b32.xlu0 %v282, 112
  %v290 = vpop.permute.xlu0 %289
  %vm291 = vcmask 916480
  %v292 = vsel %vm291, %v284, %v286
  %v293 = vsel %vm291, %v286, %v288
  %v294 = vsel %vm291, %v288, %v290
  %v300 = vmul.f32 %v227, %v284
  %v301 = vmul.f32 %v228, %v292
  %v302 = vmul.f32 %v229, %v293
  %v303 = vmul.f32 %v230, %v294
  %v304 = vmul.f32 %v231, %v290
  %v305 = vmul.f32 %v232, %v284
  %v306 = vmul.f32 %v233, %v292
  %v307 = vmul.f32 %v234, %v293
  %v308 = vmul.f32 %v235, %v294
  %v309 = vmul.f32 %v236, %v290
  %s310 = scalar_lea.vmem %s6, 4
  %v311 = vld [vmem:[%s310] sm:$0xf]
  %v312 = vpack.c.bf16 %v305, %v300
  %v313 = vpack.c.bf16 %v306, %v301
  %v314 = vpack.c.bf16 %v307, %v302
  %v315 = vpack.c.bf16 %v308, %v303
  %v316 = vpack.c.bf16 %v309, %v304
  %322 = vrot.lane.b32.xlu0 %v312, 16
  %v323 = vpop.permute.xlu0 %322
  %324 = vrot.lane.b32.xlu0 %v313, 16
  %v325 = vpop.permute.xlu0 %324
  %326 = vrot.lane.b32.xlu0 %v314, 16
  %v327 = vpop.permute.xlu0 %326
  %328 = vrot.lane.b32.xlu0 %v315, 16
  %v329 = vpop.permute.xlu0 %328
  %330 = vrot.lane.b32.xlu0 %v316, 16
  %v331 = vpop.permute.xlu0 %330
  %vm332 = vcmask 130048
  %v333 = vsel %vm332, %v323, %v325
  %v334 = vsel %vm332, %v325, %v327
  %v335 = vsel %vm332, %v327, %v329
  %v336 = vsel %vm332, %v329, %v331
  %v342 = vsel %vm99, %v311, 0
  %344 = vmatpush.bf16.msra.mxu0 0
  %345 = vmatpush.bf16.msra.mxu0 0
  %346 = vmatpush.bf16.msra.mxu0 0
  %347 = vmatpush.bf16.msra.mxu0 0
  %348 = vmatpush.bf16.msra.mxu0 0
  %349 = vmatpush.bf16.msra.mxu0 0
  %350 = vmatpush.bf16.msra.mxu0 0
  %351 = vmatpush.bf16.msra.mxu0 %v333
  %352 = vmatmul.bf16.gmra.mxu0 %v342
  %v353 = vpop.f32.mrf.mxu0
  %v354 = vadd.f32 0.0, %v353
  %v355 = vpop.f32.mrf.mxu0
  %356 = vdwg.mxu0
  %357 = vmatpush.bf16.msra.mxu0 0
  %358 = vmatpush.bf16.msra.mxu0 0
  %359 = vmatpush.bf16.msra.mxu0 0
  %360 = vmatpush.bf16.msra.mxu0 0
  %361 = vmatpush.bf16.msra.mxu0 0
  %362 = vmatpush.bf16.msra.mxu0 0
  %363 = vmatpush.bf16.msra.mxu0 0
  %364 = vmatpush.bf16.msra.mxu0 %v334
  %365 = vmatmul.bf16.gmra.mxu0 %v342
  %v366 = vpop.f32.mrf.mxu0
  %v367 = vadd.f32 0.0, %v366
  %v368 = vpop.f32.mrf.mxu0
  %369 = vdwg.mxu0
  %370 = vmatpush.bf16.msra.mxu0 0
  %371 = vmatpush.bf16.msra.mxu0 0
  %372 = vmatpush.bf16.msra.mxu0 0
  %373 = vmatpush.bf16.msra.mxu0 0
  %374 = vmatpush.bf16.msra.mxu0 0
  %375 = vmatpush.bf16.msra.mxu0 0
  %376 = vmatpush.bf16.msra.mxu0 0
  %377 = vmatpush.bf16.msra.mxu0 %v335
  %378 = vmatmul.bf16.gmra.mxu0 %v342
  %v379 = vpop.f32.mrf.mxu0
  %v380 = vadd.f32 0.0, %v379
  %v381 = vpop.f32.mrf.mxu0
  %382 = vdwg.mxu0
  %383 = vmatpush.bf16.msra.mxu0 0
  %384 = vmatpush.bf16.msra.mxu0 0
  %385 = vmatpush.bf16.msra.mxu0 0
  %386 = vmatpush.bf16.msra.mxu0 0
  %387 = vmatpush.bf16.msra.mxu0 0
  %388 = vmatpush.bf16.msra.mxu0 0
  %389 = vmatpush.bf16.msra.mxu0 0
  %390 = vmatpush.bf16.msra.mxu0 %v336
  %391 = vmatmul.bf16.gmra.mxu0 %v342
  %v392 = vpop.f32.mrf.mxu0
  %v393 = vadd.f32 0.0, %v392
  %v394 = vpop.f32.mrf.mxu0
  %395 = vdwg.mxu0
  %401 = vrot.lane.b32.xlu0 %v271, 17
  %v402 = vpop.permute.xlu0 %401
  %403 = vrot.lane.b32.xlu0 %v272, 17
  %v404 = vpop.permute.xlu0 %403
  %405 = vrot.lane.b32.xlu0 %v273, 17
  %v406 = vpop.permute.xlu0 %405
  %407 = vrot.lane.b32.xlu0 %v274, 17
  %v408 = vpop.permute.xlu0 %407
  %409 = vrot.lane.b32.xlu0 %v275, 17
  %v410 = vpop.permute.xlu0 %409
  %vm411 = vcmask 138240
  %v412 = vsel %vm411, %v402, %v404
  %v413 = vsel %vm411, %v404, %v406
  %v414 = vsel %vm411, %v406, %v408
  %v415 = vsel %vm411, %v408, %v410
  %v421 = vsel %vm99, %v270, 0
  %423 = vmatpush.bf16.msra.mxu0 0
  %424 = vmatpush.bf16.msra.mxu0 0
  %425 = vmatpush.bf16.msra.mxu0 0
  %426 = vmatpush.bf16.msra.mxu0 0
  %427 = vmatpush.bf16.msra.mxu0 0
  %428 = vmatpush.bf16.msra.mxu0 0
  %429 = vmatpush.bf16.msra.mxu0 0
  %430 = vmatpush.bf16.msra.mxu0 %v412
  %431 = vmatmul.bf16.gmra.mxu0 %v421
  %v432 = vpop.f32.mrf.mxu0
  %v433 = vadd.f32 %v354, %v432
  %v434 = vpop.f32.mrf.mxu0
  %435 = vdwg.mxu0
  %436 = vmatpush.bf16.msra.mxu0 0
  %437 = vmatpush.bf16.msra.mxu0 0
  %438 = vmatpush.bf16.msra.mxu0 0
  %439 = vmatpush.bf16.msra.mxu0 0
  %440 = vmatpush.bf16.msra.mxu0 0
  %441 = vmatpush.bf16.msra.mxu0 0
  %442 = vmatpush.bf16.msra.mxu0 0
  %443 = vmatpush.bf16.msra.mxu0 %v413
  %444 = vmatmul.bf16.gmra.mxu0 %v421
  %v445 = vpop.f32.mrf.mxu0
  %v446 = vadd.f32 %v367, %v445
  %v447 = vpop.f32.mrf.mxu0
  %448 = vdwg.mxu0
  %449 = vmatpush.bf16.msra.mxu0 0
  %450 = vmatpush.bf16.msra.mxu0 0
  %451 = vmatpush.bf16.msra.mxu0 0
  %452 = vmatpush.bf16.msra.mxu0 0
  %453 = vmatpush.bf16.msra.mxu0 0
  %454 = vmatpush.bf16.msra.mxu0 0
  %455 = vmatpush.bf16.msra.mxu0 0
  %456 = vmatpush.bf16.msra.mxu0 %v414
  %457 = vmatmul.bf16.gmra.mxu0 %v421
  %v458 = vpop.f32.mrf.mxu0
  %v459 = vadd.f32 %v380, %v458
  %v460 = vpop.f32.mrf.mxu0
  %461 = vdwg.mxu0
  %462 = vmatpush.bf16.msra.mxu0 0
  %463 = vmatpush.bf16.msra.mxu0 0
  %464 = vmatpush.bf16.msra.mxu0 0
  %465 = vmatpush.bf16.msra.mxu0 0
  %466 = vmatpush.bf16.msra.mxu0 0
  %467 = vmatpush.bf16.msra.mxu0 0
  %468 = vmatpush.bf16.msra.mxu0 0
  %469 = vmatpush.bf16.msra.mxu0 %v415
  %470 = vmatmul.bf16.gmra.mxu0 %v421
  %v471 = vpop.f32.mrf.mxu0
  %v472 = vadd.f32 %v393, %v471
  %v473 = vpop.f32.mrf.mxu0
  %474 = vdwg.mxu0
  %s475 = scalar_lea.vmem %s7, 8
  %v476 = vld [vmem:[%s475] sm:$0xf]
  %v478 = vperm.slane %v476, 0
  %v479 = vperm.slane %v476, 1
  %v480 = vperm.slane %v476, 2
  %v481 = vperm.slane %v476, 3
  %482 = vrot.lane.b32.xlu0 %v478, 113
  %v483 = vpop.permute.xlu0 %482
  %484 = vrot.lane.b32.xlu0 %v479, 113
  %v485 = vpop.permute.xlu0 %484
  %486 = vrot.lane.b32.xlu0 %v480, 113
  %v487 = vpop.permute.xlu0 %486
  %488 = vrot.lane.b32.xlu0 %v481, 113
  %v489 = vpop.permute.xlu0 %488
  %vm490 = vcmask 924672
  %v491 = vsel %vm490, %v483, %v485
  %v492 = vsel %vm490, %v485, %v487
  %v493 = vsel %vm490, %v487, %v489
  %v499 = vmul.f32 %v227, %v483
  %v500 = vmul.f32 %v228, %v491
  %v501 = vmul.f32 %v229, %v492
  %v502 = vmul.f32 %v230, %v493
  %v503 = vmul.f32 %v231, %v489
  %v504 = vmul.f32 %v232, %v483
  %v505 = vmul.f32 %v233, %v491
  %v506 = vmul.f32 %v234, %v492
  %v507 = vmul.f32 %v235, %v493
  %v508 = vmul.f32 %v236, %v489
  %s509 = scalar_lea.vmem %s6, 8
  %v510 = vld [vmem:[%s509] sm:$0xf]
  %v511 = vpack.c.bf16 %v504, %v499
  %v512 = vpack.c.bf16 %v505, %v500
  %v513 = vpack.c.bf16 %v506, %v501
  %v514 = vpack.c.bf16 %v507, %v502
  %v515 = vpack.c.bf16 %v508, %v503
  %521 = vrot.lane.b32.xlu0 %v511, 15
  %v522 = vpop.permute.xlu0 %521
  %523 = vrot.lane.b32.xlu0 %v512, 15
  %v524 = vpop.permute.xlu0 %523
  %525 = vrot.lane.b32.xlu0 %v513, 15
  %v526 = vpop.permute.xlu0 %525
  %527 = vrot.lane.b32.xlu0 %v514, 15
  %v528 = vpop.permute.xlu0 %527
  %529 = vrot.lane.b32.xlu0 %v515, 15
  %v530 = vpop.permute.xlu0 %529
  %vm531 = vcmask 121856
  %v532 = vsel %vm531, %v522, %v524
  %v533 = vsel %vm531, %v524, %v526
  %v534 = vsel %vm531, %v526, %v528
  %v535 = vsel %vm531, %v528, %v530
  %v541 = vsel %vm99, %v510, 0
  %543 = vmatpush.bf16.msra.mxu0 0
  %544 = vmatpush.bf16.msra.mxu0 0
  %545 = vmatpush.bf16.msra.mxu0 0
  %546 = vmatpush.bf16.msra.mxu0 0
  %547 = vmatpush.bf16.msra.mxu0 0
  %548 = vmatpush.bf16.msra.mxu0 0
  %549 = vmatpush.bf16.msra.mxu0 0
  %550 = vmatpush.bf16.msra.mxu0 %v532
  %551 = vmatmul.bf16.gmra.mxu0 %v541
  %v552 = vpop.f32.mrf.mxu0
  %v553 = vadd.f32 0.0, %v552
  %v554 = vpop.f32.mrf.mxu0
  %555 = vdwg.mxu0
  %556 = vmatpush.bf16.msra.mxu0 0
  %557 = vmatpush.bf16.msra.mxu0 0
  %558 = vmatpush.bf16.msra.mxu0 0
  %559 = vmatpush.bf16.msra.mxu0 0
  %560 = vmatpush.bf16.msra.mxu0 0
  %561 = vmatpush.bf16.msra.mxu0 0
  %562 = vmatpush.bf16.msra.mxu0 0
  %563 = vmatpush.bf16.msra.mxu0 %v533
  %564 = vmatmul.bf16.gmra.mxu0 %v541
  %v565 = vpop.f32.mrf.mxu0
  %v566 = vadd.f32 0.0, %v565
  %v567 = vpop.f32.mrf.mxu0
  %568 = vdwg.mxu0
  %569 = vmatpush.bf16.msra.mxu0 0
  %570 = vmatpush.bf16.msra.mxu0 0
  %571 = vmatpush.bf16.msra.mxu0 0
  %572 = vmatpush.bf16.msra.mxu0 0
  %573 = vmatpush.bf16.msra.mxu0 0
  %574 = vmatpush.bf16.msra.mxu0 0
  %575 = vmatpush.bf16.msra.mxu0 0
  %576 = vmatpush.bf16.msra.mxu0 %v534
  %577 = vmatmul.bf16.gmra.mxu0 %v541
  %v578 = vpop.f32.mrf.mxu0
  %v579 = vadd.f32 0.0, %v578
  %v580 = vpop.f32.mrf.mxu0
  %581 = vdwg.mxu0
  %582 = vmatpush.bf16.msra.mxu0 0
  %583 = vmatpush.bf16.msra.mxu0 0
  %584 = vmatpush.bf16.msra.mxu0 0
  %585 = vmatpush.bf16.msra.mxu0 0
  %586 = vmatpush.bf16.msra.mxu0 0
  %587 = vmatpush.bf16.msra.mxu0 0
  %588 = vmatpush.bf16.msra.mxu0 0
  %589 = vmatpush.bf16.msra.mxu0 %v535
  %590 = vmatmul.bf16.gmra.mxu0 %v541
  %v591 = vpop.f32.mrf.mxu0
  %v592 = vadd.f32 0.0, %v591
  %v593 = vpop.f32.mrf.mxu0
  %594 = vdwg.mxu0
  %v595 = vadd.f32 %v433, %v553
  %v596 = vadd.f32 %v446, %v566
  %v597 = vadd.f32 %v459, %v579
  %v598 = vadd.f32 %v472, %v592
  %s599 = scalar_lea.vmem %s7, 12
  %v600 = vld [vmem:[%s599] sm:$0xf]
  %v602 = vperm.slane %v600, 0
  %v603 = vperm.slane %v600, 1
  %v604 = vperm.slane %v600, 2
  %v605 = vperm.slane %v600, 3
  %606 = vrot.lane.b32.xlu0 %v602, 127
  %v607 = vpop.permute.xlu0 %606
  %608 = vrot.lane.b32.xlu0 %v603, 127
  %v609 = vpop.permute.xlu0 %608
  %610 = vrot.lane.b32.xlu0 %v604, 127
  %v611 = vpop.permute.xlu0 %610
  %612 = vrot.lane.b32.xlu0 %v605, 127
  %v613 = vpop.permute.xlu0 %612
  %vm614 = vcmask 1039360
  %v615 = vsel %vm614, %v607, %v609
  %v616 = vsel %vm614, %v609, %v611
  %v617 = vsel %vm614, %v611, %v613
  %v623 = vmul.f32 %v227, %v607
  %v624 = vmul.f32 %v228, %v615
  %v625 = vmul.f32 %v229, %v616
  %v626 = vmul.f32 %v230, %v617
  %v627 = vmul.f32 %v231, %v613
  %v628 = vmul.f32 %v232, %v607
  %v629 = vmul.f32 %v233, %v615
  %v630 = vmul.f32 %v234, %v616
  %v631 = vmul.f32 %v235, %v617
  %v632 = vmul.f32 %v236, %v613
  %s633 = scalar_lea.vmem %s6, 12
  %v634 = vld [vmem:[%s633] sm:$0xf]
  %v635 = vpack.c.bf16 %v628, %v623
  %v636 = vpack.c.bf16 %v629, %v624
  %v637 = vpack.c.bf16 %v630, %v625
  %v638 = vpack.c.bf16 %v631, %v626
  %v639 = vpack.c.bf16 %v632, %v627
  %645 = vrot.lane.b32.xlu0 %v635, 1
  %v646 = vpop.permute.xlu0 %645
  %647 = vrot.lane.b32.xlu0 %v636, 1
  %v648 = vpop.permute.xlu0 %647
  %649 = vrot.lane.b32.xlu0 %v637, 1
  %v650 = vpop.permute.xlu0 %649
  %651 = vrot.lane.b32.xlu0 %v638, 1
  %v652 = vpop.permute.xlu0 %651
  %653 = vrot.lane.b32.xlu0 %v639, 1
  %v654 = vpop.permute.xlu0 %653
  %vm655 = vcmask 7168
  %v656 = vsel %vm655, %v646, %v648
  %v657 = vsel %vm655, %v648, %v650
  %v658 = vsel %vm655, %v650, %v652
  %v659 = vsel %vm655, %v652, %v654
  %v665 = vsel %vm99, %v634, 0
  %667 = vmatpush.bf16.msra.mxu0 0
  %668 = vmatpush.bf16.msra.mxu0 0
  %669 = vmatpush.bf16.msra.mxu0 0
  %670 = vmatpush.bf16.msra.mxu0 0
  %671 = vmatpush.bf16.msra.mxu0 0
  %672 = vmatpush.bf16.msra.mxu0 0
  %673 = vmatpush.bf16.msra.mxu0 0
  %674 = vmatpush.bf16.msra.mxu0 %v656
  %675 = vmatmul.bf16.gmra.mxu0 %v665
  %v676 = vpop.f32.mrf.mxu0
  %v677 = vadd.f32 0.0, %v676
  %v678 = vpop.f32.mrf.mxu0
  %679 = vdwg.mxu0
  %680 = vmatpush.bf16.msra.mxu0 0
  %681 = vmatpush.bf16.msra.mxu0 0
  %682 = vmatpush.bf16.msra.mxu0 0
  %683 = vmatpush.bf16.msra.mxu0 0
  %684 = vmatpush.bf16.msra.mxu0 0
  %685 = vmatpush.bf16.msra.mxu0 0
  %686 = vmatpush.bf16.msra.mxu0 0
  %687 = vmatpush.bf16.msra.mxu0 %v657
  %688 = vmatmul.bf16.gmra.mxu0 %v665
  %v689 = vpop.f32.mrf.mxu0
  %v690 = vadd.f32 0.0, %v689
  %v691 = vpop.f32.mrf.mxu0
  %692 = vdwg.mxu0
  %693 = vmatpush.bf16.msra.mxu0 0
  %694 = vmatpush.bf16.msra.mxu0 0
  %695 = vmatpush.bf16.msra.mxu0 0
  %696 = vmatpush.bf16.msra.mxu0 0
  %697 = vmatpush.bf16.msra.mxu0 0
  %698 = vmatpush.bf16.msra.mxu0 0
  %699 = vmatpush.bf16.msra.mxu0 0
  %700 = vmatpush.bf16.msra.mxu0 %v658
  %701 = vmatmul.bf16.gmra.mxu0 %v665
  %v702 = vpop.f32.mrf.mxu0
  %v703 = vadd.f32 0.0, %v702
  %v704 = vpop.f32.mrf.mxu0
  %705 = vdwg.mxu0
  %706 = vmatpush.bf16.msra.mxu0 0
  %707 = vmatpush.bf16.msra.mxu0 0
  %708 = vmatpush.bf16.msra.mxu0 0
  %709 = vmatpush.bf16.msra.mxu0 0
  %710 = vmatpush.bf16.msra.mxu0 0
  %711 = vmatpush.bf16.msra.mxu0 0
  %712 = vmatpush.bf16.msra.mxu0 0
  %713 = vmatpush.bf16.msra.mxu0 %v659
  %714 = vmatmul.bf16.gmra.mxu0 %v665
  %v715 = vpop.f32.mrf.mxu0
  %v716 = vadd.f32 0.0, %v715
  %v717 = vpop.f32.mrf.mxu0
  %718 = vdwg.mxu0
  %v719 = vadd.f32 %v595, %v677
  %v720 = vadd.f32 %v596, %v690
  %v721 = vadd.f32 %v597, %v703
  %v722 = vadd.f32 %v598, %v716
  %s723 = scalar_lea.vmem %s7, 16
  %v724 = vld [vmem:[%s723] sm:$0xf]
  %v726 = vperm.slane %v724, 0
  %v727 = vperm.slane %v724, 1
  %v728 = vperm.slane %v724, 2
  %v729 = vperm.slane %v724, 3
  %v734 = vmul.f32 %v228, %v726
  %v735 = vmul.f32 %v229, %v727
  %v736 = vmul.f32 %v230, %v728
  %v737 = vmul.f32 %v231, %v729
  %v738 = vmul.f32 %v233, %v726
  %v739 = vmul.f32 %v234, %v727
  %v740 = vmul.f32 %v235, %v728
  %v741 = vmul.f32 %v236, %v729
  %s742 = scalar_lea.vmem %s6, 16
  %v743 = vld [vmem:[%s742] sm:$0xf]
  %v744 = vpack.c.bf16 %v738, %v734
  %v745 = vpack.c.bf16 %v739, %v735
  %v746 = vpack.c.bf16 %v740, %v736
  %v747 = vpack.c.bf16 %v741, %v737
  %v749 = vsel %vm99, %v743, 0
  %751 = vmatpush.bf16.msra.mxu0 0
  %752 = vmatpush.bf16.msra.mxu0 0
  %753 = vmatpush.bf16.msra.mxu0 0
  %754 = vmatpush.bf16.msra.mxu0 0
  %755 = vmatpush.bf16.msra.mxu0 0
  %756 = vmatpush.bf16.msra.mxu0 0
  %757 = vmatpush.bf16.msra.mxu0 0
  %758 = vmatpush.bf16.msra.mxu0 %v744
  %759 = vmatmul.bf16.gmra.mxu0 %v749
  %v760 = vpop.f32.mrf.mxu0
  %v761 = vadd.f32 0.0, %v760
  %v762 = vpop.f32.mrf.mxu0
  %763 = vdwg.mxu0
  %764 = vmatpush.bf16.msra.mxu0 0
  %765 = vmatpush.bf16.msra.mxu0 0
  %766 = vmatpush.bf16.msra.mxu0 0
  %767 = vmatpush.bf16.msra.mxu0 0
  %768 = vmatpush.bf16.msra.mxu0 0
  %769 = vmatpush.bf16.msra.mxu0 0
  %770 = vmatpush.bf16.msra.mxu0 0
  %771 = vmatpush.bf16.msra.mxu0 %v745
  %772 = vmatmul.bf16.gmra.mxu0 %v749
  %v773 = vpop.f32.mrf.mxu0
  %v774 = vadd.f32 0.0, %v773
  %v775 = vpop.f32.mrf.mxu0
  %776 = vdwg.mxu0
  %777 = vmatpush.bf16.msra.mxu0 0
  %778 = vmatpush.bf16.msra.mxu0 0
  %779 = vmatpush.bf16.msra.mxu0 0
  %780 = vmatpush.bf16.msra.mxu0 0
  %781 = vmatpush.bf16.msra.mxu0 0
  %782 = vmatpush.bf16.msra.mxu0 0
  %783 = vmatpush.bf16.msra.mxu0 0
  %784 = vmatpush.bf16.msra.mxu0 %v746
  %785 = vmatmul.bf16.gmra.mxu0 %v749
  %v786 = vpop.f32.mrf.mxu0
  %v787 = vadd.f32 0.0, %v786
  %v788 = vpop.f32.mrf.mxu0
  %789 = vdwg.mxu0
  %790 = vmatpush.bf16.msra.mxu0 0
  %791 = vmatpush.bf16.msra.mxu0 0
  %792 = vmatpush.bf16.msra.mxu0 0
  %793 = vmatpush.bf16.msra.mxu0 0
  %794 = vmatpush.bf16.msra.mxu0 0
  %795 = vmatpush.bf16.msra.mxu0 0
  %796 = vmatpush.bf16.msra.mxu0 0
  %797 = vmatpush.bf16.msra.mxu0 %v747
  %798 = vmatmul.bf16.gmra.mxu0 %v749
  %v799 = vpop.f32.mrf.mxu0
  %v800 = vadd.f32 0.0, %v799
  %v801 = vpop.f32.mrf.mxu0
  %802 = vdwg.mxu0
  %v803 = vadd.f32 %v719, %v761
  %v804 = vadd.f32 %v720, %v774
  %v805 = vadd.f32 %v721, %v787
  %v806 = vadd.f32 %v722, %v800
  %v807 = vld [vmem:[#allocation2 + $0x8] sm:$0xff]
  %v808 = vld [vmem:[#allocation2 + $0x10] sm:$0xff]
  %v809 = vld [vmem:[#allocation2 + $0x18] sm:$0xff]
  %v810 = vld [vmem:[#allocation2 + $0x20] sm:$0xff]
  %v811 = vld [vmem:[#allocation2 + $0x28] sm:$0xff]
  %v812 = vld [vmem:[#allocation2 + $0x38] sm:$0xff]
  %v813 = vld [vmem:[#allocation2 + $0x40] sm:$0xff]
  %v814 = vld [vmem:[#allocation2 + $0x48] sm:$0xff]
  %v815 = vld [vmem:[#allocation2 + $0x50] sm:$0xff]
  %v816 = vld [vmem:[#allocation2 + $0x58] sm:$0xff]
  %s817 = scalar_lea.vmem %s7, 20
  %v818 = vld [vmem:[%s817] sm:$0xf]
  %v820 = vperm.slane %v818, 0
  %v821 = vperm.slane %v818, 1
  %v822 = vperm.slane %v818, 2
  %v823 = vperm.slane %v818, 3
  %824 = vrot.lane.b32.xlu0 %v820, 1
  %v825 = vpop.permute.xlu0 %824
  %826 = vrot.lane.b32.xlu0 %v821, 1
  %v827 = vpop.permute.xlu0 %826
  %828 = vrot.lane.b32.xlu0 %v822, 1
  %v829 = vpop.permute.xlu0 %828
  %830 = vrot.lane.b32.xlu0 %v823, 1
  %v831 = vpop.permute.xlu0 %830
  %vm832 = vcmask 7168
  %v833 = vsel %vm832, %v825, %v827
  %v834 = vsel %vm832, %v827, %v829
  %v835 = vsel %vm832, %v829, %v831
  %v841 = vmul.f32 %v807, %v825
  %v842 = vmul.f32 %v808, %v833
  %v843 = vmul.f32 %v809, %v834
  %v844 = vmul.f32 %v810, %v835
  %v845 = vmul.f32 %v811, %v831
  %v846 = vmul.f32 %v812, %v825
  %v847 = vmul.f32 %v813, %v833
  %v848 = vmul.f32 %v814, %v834
  %v849 = vmul.f32 %v815, %v835
  %v850 = vmul.f32 %v816, %v831
  %s851 = scalar_lea.vmem %s6, 20
  %v852 = vld [vmem:[%s851] sm:$0xf]
  %v853 = vpack.c.bf16 %v846, %v841
  %v854 = vpack.c.bf16 %v847, %v842
  %v855 = vpack.c.bf16 %v848, %v843
  %v856 = vpack.c.bf16 %v849, %v844
  %v857 = vpack.c.bf16 %v850, %v845
  %863 = vrot.lane.b32.xlu0 %v853, 127
  %v864 = vpop.permute.xlu0 %863
  %865 = vrot.lane.b32.xlu0 %v854, 127
  %v866 = vpop.permute.xlu0 %865
  %867 = vrot.lane.b32.xlu0 %v855, 127
  %v868 = vpop.permute.xlu0 %867
  %869 = vrot.lane.b32.xlu0 %v856, 127
  %v870 = vpop.permute.xlu0 %869
  %871 = vrot.lane.b32.xlu0 %v857, 127
  %v872 = vpop.permute.xlu0 %871
  %vm873 = vcmask 1039360
  %v874 = vsel %vm873, %v864, %v866
  %v875 = vsel %vm873, %v866, %v868
  %v876 = vsel %vm873, %v868, %v870
  %v877 = vsel %vm873, %v870, %v872
  %v883 = vsel %vm99, %v852, 0
  %885 = vmatpush.bf16.msra.mxu0 0
  %886 = vmatpush.bf16.msra.mxu0 0
  %887 = vmatpush.bf16.msra.mxu0 0
  %888 = vmatpush.bf16.msra.mxu0 0
  %889 = vmatpush.bf16.msra.mxu0 0
  %890 = vmatpush.bf16.msra.mxu0 0
  %891 = vmatpush.bf16.msra.mxu0 0
  %892 = vmatpush.bf16.msra.mxu0 %v874
  %893 = vmatmul.bf16.gmra.mxu0 %v883
  %v894 = vpop.f32.mrf.mxu0
  %v895 = vadd.f32 0.0, %v894
  %v896 = vpop.f32.mrf.mxu0
  %897 = vdwg.mxu0
  %898 = vmatpush.bf16.msra.mxu0 0
  %899 = vmatpush.bf16.msra.mxu0 0
  %900 = vmatpush.bf16.msra.mxu0 0
  %901 = vmatpush.bf16.msra.mxu0 0
  %902 = vmatpush.bf16.msra.mxu0 0
  %903 = vmatpush.bf16.msra.mxu0 0
  %904 = vmatpush.bf16.msra.mxu0 0
  %905 = vmatpush.bf16.msra.mxu0 %v875
  %906 = vmatmul.bf16.gmra.mxu0 %v883
  %v907 = vpop.f32.mrf.mxu0
  %v908 = vadd.f32 0.0, %v907
  %v909 = vpop.f32.mrf.mxu0
  %910 = vdwg.mxu0
  %911 = vmatpush.bf16.msra.mxu0 0
  %912 = vmatpush.bf16.msra.mxu0 0
  %913 = vmatpush.bf16.msra.mxu0 0
  %914 = vmatpush.bf16.msra.mxu0 0
  %915 = vmatpush.bf16.msra.mxu0 0
  %916 = vmatpush.bf16.msra.mxu0 0
  %917 = vmatpush.bf16.msra.mxu0 0
  %918 = vmatpush.bf16.msra.mxu0 %v876
  %919 = vmatmul.bf16.gmra.mxu0 %v883
  %v920 = vpop.f32.mrf.mxu0
  %v921 = vadd.f32 0.0, %v920
  %v922 = vpop.f32.mrf.mxu0
  %923 = vdwg.mxu0
  %924 = vmatpush.bf16.msra.mxu0 0
  %925 = vmatpush.bf16.msra.mxu0 0
  %926 = vmatpush.bf16.msra.mxu0 0
  %927 = vmatpush.bf16.msra.mxu0 0
  %928 = vmatpush.bf16.msra.mxu0 0
  %929 = vmatpush.bf16.msra.mxu0 0
  %930 = vmatpush.bf16.msra.mxu0 0
  %931 = vmatpush.bf16.msra.mxu0 %v877
  %932 = vmatmul.bf16.gmra.mxu0 %v883
  %v933 = vpop.f32.mrf.mxu0
  %v934 = vadd.f32 0.0, %v933
  %v935 = vpop.f32.mrf.mxu0
  %936 = vdwg.mxu0
  %v937 = vadd.f32 %v803, %v895
  %v938 = vadd.f32 %v804, %v908
  %v939 = vadd.f32 %v805, %v921
  %v940 = vadd.f32 %v806, %v934
  %s941 = scalar_lea.vmem %s7, 24
  %v942 = vld [vmem:[%s941] sm:$0xf]
  %v944 = vperm.slane %v942, 0
  %v945 = vperm.slane %v942, 1
  %v946 = vperm.slane %v942, 2
  %v947 = vperm.slane %v942, 3
  %948 = vrot.lane.b32.xlu0 %v944, 15
  %v949 = vpop.permute.xlu0 %948
  %950 = vrot.lane.b32.xlu0 %v945, 15
  %v951 = vpop.permute.xlu0 %950
  %952 = vrot.lane.b32.xlu0 %v946, 15
  %v953 = vpop.permute.xlu0 %952
  %954 = vrot.lane.b32.xlu0 %v947, 15
  %v955 = vpop.permute.xlu0 %954
  %vm956 = vcmask 121856
  %v957 = vsel %vm956, %v949, %v951
  %v958 = vsel %vm956, %v951, %v953
  %v959 = vsel %vm956, %v953, %v955
  %v965 = vmul.f32 %v807, %v949
  %v966 = vmul.f32 %v808, %v957
  %v967 = vmul.f32 %v809, %v958
  %v968 = vmul.f32 %v810, %v959
  %v969 = vmul.f32 %v811, %v955
  %v970 = vmul.f32 %v812, %v949
  %v971 = vmul.f32 %v813, %v957
  %v972 = vmul.f32 %v814, %v958
  %v973 = vmul.f32 %v815, %v959
  %v974 = vmul.f32 %v816, %v955
  %s975 = scalar_lea.vmem %s6, 24
  %v976 = vld [vmem:[%s975] sm:$0xf]
  %v977 = vpack.c.bf16 %v970, %v965
  %v978 = vpack.c.bf16 %v971, %v966
  %v979 = vpack.c.bf16 %v972, %v967
  %v980 = vpack.c.bf16 %v973, %v968
  %v981 = vpack.c.bf16 %v974, %v969
  %987 = vrot.lane.b32.xlu0 %v977, 113
  %v988 = vpop.permute.xlu0 %987
  %989 = vrot.lane.b32.xlu0 %v978, 113
  %v990 = vpop.permute.xlu0 %989
  %991 = vrot.lane.b32.xlu0 %v979, 113
  %v992 = vpop.permute.xlu0 %991
  %993 = vrot.lane.b32.xlu0 %v980, 113
  %v994 = vpop.permute.xlu0 %993
  %995 = vrot.lane.b32.xlu0 %v981, 113
  %v996 = vpop.permute.xlu0 %995
  %vm997 = vcmask 924672
  %v998 = vsel %vm997, %v988, %v990
  %v999 = vsel %vm997, %v990, %v992
  %v1000 = vsel %vm997, %v992, %v994
  %v1001 = vsel %vm997, %v994, %v996
  %v1007 = vsel %vm99, %v976, 0
  %1009 = vmatpush.bf16.msra.mxu0 0
  %1010 = vmatpush.bf16.msra.mxu0 0
  %1011 = vmatpush.bf16.msra.mxu0 0
  %1012 = vmatpush.bf16.msra.mxu0 0
  %1013 = vmatpush.bf16.msra.mxu0 0
  %1014 = vmatpush.bf16.msra.mxu0 0
  %1015 = vmatpush.bf16.msra.mxu0 0
  %1016 = vmatpush.bf16.msra.mxu0 %v998
  %1017 = vmatmul.bf16.gmra.mxu0 %v1007
  %v1018 = vpop.f32.mrf.mxu0
  %v1019 = vadd.f32 0.0, %v1018
  %v1020 = vpop.f32.mrf.mxu0
  %1021 = vdwg.mxu0
  %1022 = vmatpush.bf16.msra.mxu0 0
  %1023 = vmatpush.bf16.msra.mxu0 0
  %1024 = vmatpush.bf16.msra.mxu0 0
  %1025 = vmatpush.bf16.msra.mxu0 0
  %1026 = vmatpush.bf16.msra.mxu0 0
  %1027 = vmatpush.bf16.msra.mxu0 0
  %1028 = vmatpush.bf16.msra.mxu0 0
  %1029 = vmatpush.bf16.msra.mxu0 %v999
  %1030 = vmatmul.bf16.gmra.mxu0 %v1007
  %v1031 = vpop.f32.mrf.mxu0
  %v1032 = vadd.f32 0.0, %v1031
  %v1033 = vpop.f32.mrf.mxu0
  %1034 = vdwg.mxu0
  %1035 = vmatpush.bf16.msra.mxu0 0
  %1036 = vmatpush.bf16.msra.mxu0 0
  %1037 = vmatpush.bf16.msra.mxu0 0
  %1038 = vmatpush.bf16.msra.mxu0 0
  %1039 = vmatpush.bf16.msra.mxu0 0
  %1040 = vmatpush.bf16.msra.mxu0 0
  %1041 = vmatpush.bf16.msra.mxu0 0
  %1042 = vmatpush.bf16.msra.mxu0 %v1000
  %1043 = vmatmul.bf16.gmra.mxu0 %v1007
  %v1044 = vpop.f32.mrf.mxu0
  %v1045 = vadd.f32 0.0, %v1044
  %v1046 = vpop.f32.mrf.mxu0
  %1047 = vdwg.mxu0
  %1048 = vmatpush.bf16.msra.mxu0 0
  %1049 = vmatpush.bf16.msra.mxu0 0
  %1050 = vmatpush.bf16.msra.mxu0 0
  %1051 = vmatpush.bf16.msra.mxu0 0
  %1052 = vmatpush.bf16.msra.mxu0 0
  %1053 = vmatpush.bf16.msra.mxu0 0
  %1054 = vmatpush.bf16.msra.mxu0 0
  %1055 = vmatpush.bf16.msra.mxu0 %v1001
  %1056 = vmatmul.bf16.gmra.mxu0 %v1007
  %v1057 = vpop.f32.mrf.mxu0
  %v1058 = vadd.f32 0.0, %v1057
  %v1059 = vpop.f32.mrf.mxu0
  %1060 = vdwg.mxu0
  %v1061 = vadd.f32 %v937, %v1019
  %v1062 = vadd.f32 %v938, %v1032
  %v1063 = vadd.f32 %v939, %v1045
  %v1064 = vadd.f32 %v940, %v1058
  %s1065 = scalar_lea.vmem %s7, 28
  %v1066 = vld [vmem:[%s1065] sm:$0xf]
  %v1068 = vperm.slane %v1066, 0
  %v1069 = vperm.slane %v1066, 1
  %v1070 = vperm.slane %v1066, 2
  %v1071 = vperm.slane %v1066, 3
  %1072 = vrot.lane.b32.xlu0 %v1068, 16
  %v1073 = vpop.permute.xlu0 %1072
  %1074 = vrot.lane.b32.xlu0 %v1069, 16
  %v1075 = vpop.permute.xlu0 %1074
  %1076 = vrot.lane.b32.xlu0 %v1070, 16
  %v1077 = vpop.permute.xlu0 %1076
  %1078 = vrot.lane.b32.xlu0 %v1071, 16
  %v1079 = vpop.permute.xlu0 %1078
  %v1080 = vsel %vm99, %v1073, %v1075
  %v1081 = vsel %vm99, %v1075, %v1077
  %v1082 = vsel %vm99, %v1077, %v1079
  %v1088 = vmul.f32 %v807, %v1073
  %v1089 = vmul.f32 %v808, %v1080
  %v1090 = vmul.f32 %v809, %v1081
  %v1091 = vmul.f32 %v810, %v1082
  %v1092 = vmul.f32 %v811, %v1079
  %v1093 = vmul.f32 %v812, %v1073
  %v1094 = vmul.f32 %v813, %v1080
  %v1095 = vmul.f32 %v814, %v1081
  %v1096 = vmul.f32 %v815, %v1082
  %v1097 = vmul.f32 %v816, %v1079
  %s1098 = scalar_lea.vmem %s6, 28
  %v1099 = vld [vmem:[%s1098] sm:$0xf]
  %v1100 = vpack.c.bf16 %v1093, %v1088
  %v1101 = vpack.c.bf16 %v1094, %v1089
  %v1102 = vpack.c.bf16 %v1095, %v1090
  %v1103 = vpack.c.bf16 %v1096, %v1091
  %v1104 = vpack.c.bf16 %v1097, %v1092
  %1110 = vrot.lane.b32.xlu0 %v1100, 112
  %v1111 = vpop.permute.xlu0 %1110
  %1112 = vrot.lane.b32.xlu0 %v1101, 112
  %v1113 = vpop.permute.xlu0 %1112
  %1114 = vrot.lane.b32.xlu0 %v1102, 112
  %v1115 = vpop.permute.xlu0 %1114
  %1116 = vrot.lane.b32.xlu0 %v1103, 112
  %v1117 = vpop.permute.xlu0 %1116
  %1118 = vrot.lane.b32.xlu0 %v1104, 112
  %v1119 = vpop.permute.xlu0 %1118
  %vm1120 = vcmask 916480
  %v1121 = vsel %vm1120, %v1111, %v1113
  %v1122 = vsel %vm1120, %v1113, %v1115
  %v1123 = vsel %vm1120, %v1115, %v1117
  %v1124 = vsel %vm1120, %v1117, %v1119
  %v1130 = vsel %vm99, %v1099, 0
  %1132 = vmatpush.bf16.msra.mxu0 0
  %1133 = vmatpush.bf16.msra.mxu0 0
  %1134 = vmatpush.bf16.msra.mxu0 0
  %1135 = vmatpush.bf16.msra.mxu0 0
  %1136 = vmatpush.bf16.msra.mxu0 0
  %1137 = vmatpush.bf16.msra.mxu0 0
  %1138 = vmatpush.bf16.msra.mxu0 0
  %1139 = vmatpush.bf16.msra.mxu0 %v1121
  %1140 = vmatmul.bf16.gmra.mxu0 %v1130
  %v1141 = vpop.f32.mrf.mxu0
  %v1142 = vadd.f32 0.0, %v1141
  %v1143 = vpop.f32.mrf.mxu0
  %1144 = vdwg.mxu0
  %1145 = vmatpush.bf16.msra.mxu0 0
  %1146 = vmatpush.bf16.msra.mxu0 0
  %1147 = vmatpush.bf16.msra.mxu0 0
  %1148 = vmatpush.bf16.msra.mxu0 0
  %1149 = vmatpush.bf16.msra.mxu0 0
  %1150 = vmatpush.bf16.msra.mxu0 0
  %1151 = vmatpush.bf16.msra.mxu0 0
  %1152 = vmatpush.bf16.msra.mxu0 %v1122
  %1153 = vmatmul.bf16.gmra.mxu0 %v1130
  %v1154 = vpop.f32.mrf.mxu0
  %v1155 = vadd.f32 0.0, %v1154
  %v1156 = vpop.f32.mrf.mxu0
  %1157 = vdwg.mxu0
  %1158 = vmatpush.bf16.msra.mxu0 0
  %1159 = vmatpush.bf16.msra.mxu0 0
  %1160 = vmatpush.bf16.msra.mxu0 0
  %1161 = vmatpush.bf16.msra.mxu0 0
  %1162 = vmatpush.bf16.msra.mxu0 0
  %1163 = vmatpush.bf16.msra.mxu0 0
  %1164 = vmatpush.bf16.msra.mxu0 0
  %1165 = vmatpush.bf16.msra.mxu0 %v1123
  %1166 = vmatmul.bf16.gmra.mxu0 %v1130
  %v1167 = vpop.f32.mrf.mxu0
  %v1168 = vadd.f32 0.0, %v1167
  %v1169 = vpop.f32.mrf.mxu0
  %1170 = vdwg.mxu0
  %1171 = vmatpush.bf16.msra.mxu0 0
  %1172 = vmatpush.bf16.msra.mxu0 0
  %1173 = vmatpush.bf16.msra.mxu0 0
  %1174 = vmatpush.bf16.msra.mxu0 0
  %1175 = vmatpush.bf16.msra.mxu0 0
  %1176 = vmatpush.bf16.msra.mxu0 0
  %1177 = vmatpush.bf16.msra.mxu0 0
  %1178 = vmatpush.bf16.msra.mxu0 %v1124
  %1179 = vmatmul.bf16.gmra.mxu0 %v1130
  %v1180 = vpop.f32.mrf.mxu0
  %v1181 = vadd.f32 0.0, %v1180
  %v1182 = vpop.f32.mrf.mxu0
  %1183 = vdwg.mxu0
  %v1184 = vadd.f32 %v1061, %v1142
  %v1185 = vadd.f32 %v1062, %v1155
  %v1186 = vadd.f32 %v1063, %v1168
  %v1187 = vadd.f32 %v1064, %v1181
  %s1188 = scalar_lea.vmem %s7, 32
  %v1189 = vld [vmem:[%s1188] sm:$0xf]
  %v1191 = vperm.slane %v1189, 0
  %v1192 = vperm.slane %v1189, 1
  %v1193 = vperm.slane %v1189, 2
  %v1194 = vperm.slane %v1189, 3
  %1195 = vrot.lane.b32.xlu0 %v1191, 17
  %v1196 = vpop.permute.xlu0 %1195
  %1197 = vrot.lane.b32.xlu0 %v1192, 17
  %v1198 = vpop.permute.xlu0 %1197
  %1199 = vrot.lane.b32.xlu0 %v1193, 17
  %v1200 = vpop.permute.xlu0 %1199
  %1201 = vrot.lane.b32.xlu0 %v1194, 17
  %v1202 = vpop.permute.xlu0 %1201
  %vm1203 = vcmask 138240
  %v1204 = vsel %vm1203, %v1196, %v1198
  %v1205 = vsel %vm1203, %v1198, %v1200
  %v1206 = vsel %vm1203, %v1200, %v1202
  %v1212 = vmul.f32 %v807, %v1196
  %v1213 = vmul.f32 %v808, %v1204
  %v1214 = vmul.f32 %v809, %v1205
  %v1215 = vmul.f32 %v810, %v1206
  %v1216 = vmul.f32 %v811, %v1202
  %v1217 = vmul.f32 %v812, %v1196
  %v1218 = vmul.f32 %v813, %v1204
  %v1219 = vmul.f32 %v814, %v1205
  %v1220 = vmul.f32 %v815, %v1206
  %v1221 = vmul.f32 %v816, %v1202
  %s1222 = scalar_lea.vmem %s6, 32
  %v1223 = vld [vmem:[%s1222] sm:$0xf]
  %v1224 = vpack.c.bf16 %v1217, %v1212
  %v1225 = vpack.c.bf16 %v1218, %v1213
  %v1226 = vpack.c.bf16 %v1219, %v1214
  %v1227 = vpack.c.bf16 %v1220, %v1215
  %v1228 = vpack.c.bf16 %v1221, %v1216
  %1234 = vrot.lane.b32.xlu0 %v1224, 111
  %v1235 = vpop.permute.xlu0 %1234
  %1236 = vrot.lane.b32.xlu0 %v1225, 111
  %v1237 = vpop.permute.xlu0 %1236
  %1238 = vrot.lane.b32.xlu0 %v1226, 111
  %v1239 = vpop.permute.xlu0 %1238
  %1240 = vrot.lane.b32.xlu0 %v1227, 111
  %v1241 = vpop.permute.xlu0 %1240
  %1242 = vrot.lane.b32.xlu0 %v1228, 111
  %v1243 = vpop.permute.xlu0 %1242
  %vm1244 = vcmask 908288
  %v1245 = vsel %vm1244, %v1235, %v1237
  %v1246 = vsel %vm1244, %v1237, %v1239
  %v1247 = vsel %vm1244, %v1239, %v1241
  %v1248 = vsel %vm1244, %v1241, %v1243
  %v1254 = vsel %vm99, %v1223, 0
  %1256 = vmatpush.bf16.msra.mxu0 0
  %1257 = vmatpush.bf16.msra.mxu0 0
  %1258 = vmatpush.bf16.msra.mxu0 0
  %1259 = vmatpush.bf16.msra.mxu0 0
  %1260 = vmatpush.bf16.msra.mxu0 0
  %1261 = vmatpush.bf16.msra.mxu0 0
  %1262 = vmatpush.bf16.msra.mxu0 0
  %1263 = vmatpush.bf16.msra.mxu0 %v1245
  %1264 = vmatmul.bf16.gmra.mxu0 %v1254
  %v1265 = vpop.f32.mrf.mxu0
  %v1266 = vadd.f32 0.0, %v1265
  %v1267 = vpop.f32.mrf.mxu0
  %1268 = vdwg.mxu0
  %1269 = vmatpush.bf16.msra.mxu0 0
  %1270 = vmatpush.bf16.msra.mxu0 0
  %1271 = vmatpush.bf16.msra.mxu0 0
  %1272 = vmatpush.bf16.msra.mxu0 0
  %1273 = vmatpush.bf16.msra.mxu0 0
  %1274 = vmatpush.bf16.msra.mxu0 0
  %1275 = vmatpush.bf16.msra.mxu0 0
  %1276 = vmatpush.bf16.msra.mxu0 %v1246
  %1277 = vmatmul.bf16.gmra.mxu0 %v1254
  %v1278 = vpop.f32.mrf.mxu0
  %v1279 = vadd.f32 0.0, %v1278
  %v1280 = vpop.f32.mrf.mxu0
  %1281 = vdwg.mxu0
  %1282 = vmatpush.bf16.msra.mxu0 0
  %1283 = vmatpush.bf16.msra.mxu0 0
  %1284 = vmatpush.bf16.msra.mxu0 0
  %1285 = vmatpush.bf16.msra.mxu0 0
  %1286 = vmatpush.bf16.msra.mxu0 0
  %1287 = vmatpush.bf16.msra.mxu0 0
  %1288 = vmatpush.bf16.msra.mxu0 0
  %1289 = vmatpush.bf16.msra.mxu0 %v1247
  %1290 = vmatmul.bf16.gmra.mxu0 %v1254
  %v1291 = vpop.f32.mrf.mxu0
  %v1292 = vadd.f32 0.0, %v1291
  %v1293 = vpop.f32.mrf.mxu0
  %1294 = vdwg.mxu0
  %1295 = vmatpush.bf16.msra.mxu0 0
  %1296 = vmatpush.bf16.msra.mxu0 0
  %1297 = vmatpush.bf16.msra.mxu0 0
  %1298 = vmatpush.bf16.msra.mxu0 0
  %1299 = vmatpush.bf16.msra.mxu0 0
  %1300 = vmatpush.bf16.msra.mxu0 0
  %1301 = vmatpush.bf16.msra.mxu0 0
  %1302 = vmatpush.bf16.msra.mxu0 %v1248
  %1303 = vmatmul.bf16.gmra.mxu0 %v1254
  %v1304 = vpop.f32.mrf.mxu0
  %v1305 = vadd.f32 0.0, %v1304
  %v1306 = vpop.f32.mrf.mxu0
  %1307 = vdwg.mxu0
  %v1308 = vadd.f32 %v1184, %v1266
  %v1309 = vadd.f32 %v1185, %v1279
  %v1310 = vadd.f32 %v1186, %v1292
  %v1311 = vadd.f32 %v1187, %v1305
  %1312 = vst [vmem:[%s30] sm:$0xff] %v1308
  %1313 = vst [vmem:[%s30 + $0x8] sm:$0xff] %v1309
  %1314 = vst [vmem:[%s30 + $0x10] sm:$0xff] %v1310
  %1315 = vst [vmem:[%s30 + $0x18] sm:$0xff] %v1311
  %s1316 = scalar_lea.vmem %s8, 64
  // Predicated region
  $region34: #{densenet_forward.14} parent=0 // pred_check
    _
  $region35: #{densenet_forward.14} parent=0 // pred_check_branch
    %1318 = sbr.rel (0) target = $region37
  $region36: #{densenet_forward.14} parent=0 // pred_region
    _
  $region37: #{densenet_forward.14} parent=0 // pred_fallthru
    _
  // Predicated region
  $region38: #{densenet_forward.14} parent=0 // pred_check
    _
  $region39: #{densenet_forward.14} parent=0 // pred_check_branch
    %1320 = sbr.rel (0) target = $region41
  $region40: #{densenet_forward.14} parent=0 // pred_region
    %s1321 = scalar_lea.vmem %s8, 64
  $region41: #{densenet_forward.14} parent=0 // pred_fallthru
    _

// kernel: densenet_forward.15
$region0: #{densenet_forward.15}
  #allocation0 [shape = 'u32[]', space=smem, size = 0x4, offset = 0x4, fixed_abs, tag = 'smem constant byte address 0x4 - core index']
  #allocation1 [shape = 'u32[72,128]{1,0:T(1,128)}', space=vmem, size = 0x9000, scoped, tag = 'internal scratch']
  #allocation2 [shape = 'f32[16,768]{1,0:T(8,128)}', space=vmem, size = 0xc000, scoped, tag = 'scratch operand']
  %s0 = inlined_call_operand.vmem [shape: f32[32,512], index: 0, kind: input, shape index: {}, may-alias: {0,8}]
  %s1 = inlined_call_operand.vmem [shape: f32[24,1], index: 1, kind: input, shape index: {}]
  %s2 = inlined_call_operand.vmem [shape: f32[24,1], index: 2, kind: input, shape index: {}]
  %s3 = inlined_call_operand.vmem [shape: bf16[16,24], index: 3, kind: input, shape index: {}]
  %s4 = inlined_call_operand.vmem [shape: f32[16,1], index: 4, kind: input, shape index: {}]
  %s5 = inlined_call_operand.vmem [shape: f32[16,1], index: 5, kind: input, shape index: {}]
  %s6 = inlined_call_operand.vmem [shape: bf16[9,8,16], index: 6, kind: input, shape index: {}]
  %s7 = inlined_call_operand.vmem [shape: f32[9,1,512], index: 7, kind: input, shape index: {}]
  %s8 = inlined_call_operand.vmem [shape: f32[32,512], index: 8, kind: output, shape index: {}, may-alias: {0,8}]
  %s9 = sld [smem:[#allocation0]]
  $region42: #{densenet_forward.15} parent=0
    _
  %s11 = ssub.s32 1, %s9
  %s12 = scalar_select 0, %s11, %s9
  // Predicated region
  $region2: #{densenet_forward.15} parent=0 // pred_check
    _
  $region3: #{densenet_forward.15} parent=0 // pred_check_branch
    %14 = sbr.rel (0) target = $region5
  $region4: #{densenet_forward.15} parent=0 // pred_region
    _
  $region5: #{densenet_forward.15} parent=0 // pred_fallthru
    _
  // Predicated region
  $region6: #{densenet_forward.15} parent=0 // pred_check
    _
  $region7: #{densenet_forward.15} parent=0 // pred_check_branch
    %16 = sbr.rel (0) target = $region9
  $region8: #{densenet_forward.15} parent=0 // pred_region
    _
  $region9: #{densenet_forward.15} parent=0 // pred_fallthru
    _
  // Predicated region
  $region10: #{densenet_forward.15} parent=0 // pred_check
    _
  $region11: #{densenet_forward.15} parent=0 // pred_check_branch
    %18 = sbr.rel (0) target = $region13
  $region12: #{densenet_forward.15} parent=0 // pred_region
    _
  $region13: #{densenet_forward.15} parent=0 // pred_fallthru
    _
  // Predicated region
  $region14: #{densenet_forward.15} parent=0 // pred_check
    _
  $region15: #{densenet_forward.15} parent=0 // pred_check_branch
    %20 = sbr.rel (0) target = $region17
  $region16: #{densenet_forward.15} parent=0 // pred_region
    _
  $region17: #{densenet_forward.15} parent=0 // pred_fallthru
    _
  // Predicated region
  $region18: #{densenet_forward.15} parent=0 // pred_check
    _
  $region19: #{densenet_forward.15} parent=0 // pred_check_branch
    %22 = sbr.rel (0) target = $region21
  $region20: #{densenet_forward.15} parent=0 // pred_region
    _
  $region21: #{densenet_forward.15} parent=0 // pred_fallthru
    _
  // Predicated region
  $region22: #{densenet_forward.15} parent=0 // pred_check
    _
  $region23: #{densenet_forward.15} parent=0 // pred_check_branch
    %24 = sbr.rel (0) target = $region25
  $region24: #{densenet_forward.15} parent=0 // pred_region
    _
  $region25: #{densenet_forward.15} parent=0 // pred_fallthru
    _
  // Predicated region
  $region26: #{densenet_forward.15} parent=0 // pred_check
    _
  $region27: #{densenet_forward.15} parent=0 // pred_check_branch
    %26 = sbr.rel (0) target = $region29
  $region28: #{densenet_forward.15} parent=0 // pred_region
    _
  $region29: #{densenet_forward.15} parent=0 // pred_fallthru
    _
  // Predicated region
  $region30: #{densenet_forward.15} parent=0 // pred_check
    _
  $region31: #{densenet_forward.15} parent=0 // pred_check_branch
    %28 = sbr.rel (0) target = $region33
  $region32: #{densenet_forward.15} parent=0 // pred_region
    _
  $region33: #{densenet_forward.15} parent=0 // pred_fallthru
    _
  %s29 = scalar_lea.vmem %s8, 96
  %s30 = scalar_lea.vmem %s8, 96
  %v32 = vld [vmem:[%s0] sm:$0xff]
  %v33 = vld [vmem:[%s0 + $0x8] sm:$0xff]
  %v34 = vld [vmem:[%s0 + $0x10] sm:$0xff]
  %v35 = vld [vmem:[%s0 + $0x18] sm:$0xff]
  %v36 = vld [vmem:[%s0 + $0x20] sm:$0xff]
  %v37 = vld [vmem:[%s0 + $0x28] sm:$0xff]
  %v38 = vld [vmem:[%s0 + $0x30] sm:$0xff]
  %v39 = vld [vmem:[%s0 + $0x38] sm:$0xff]
  %v40 = vld [vmem:[%s0 + $0x40] sm:$0xff]
  %v41 = vld [vmem:[%s0 + $0x48] sm:$0xff]
  %v42 = vld [vmem:[%s0 + $0x50] sm:$0xff]
  %v43 = vld [vmem:[%s0 + $0x58] sm:$0xff]
  %v44 = vld [vmem:[%s1] sm:$0xff]
  %v45 = vld [vmem:[%s1 + $0x8] sm:$0xff]
  %v46 = vld [vmem:[%s1 + $0x10] sm:$0xff]
  %48 = vset.pattern.permute.xlu0 0
  %49 = vperm.xlu0 %48, %v44
  %v50 = vpop.permute.xlu0 %49
  %53 = vset.pattern.permute.xlu0 0
  %54 = vperm.xlu0 %53, %v45
  %v55 = vpop.permute.xlu0 %54
  %58 = vset.pattern.permute.xlu0 0
  %59 = vperm.xlu0 %58, %v46
  %v60 = vpop.permute.xlu0 %59
  %v62 = vmul.f32 %v32, %v50
  %v63 = vmul.f32 %v33, %v50
  %v64 = vmul.f32 %v34, %v50
  %v65 = vmul.f32 %v35, %v50
  %v66 = vmul.f32 %v36, %v55
  %v67 = vmul.f32 %v37, %v55
  %v68 = vmul.f32 %v38, %v55
  %v69 = vmul.f32 %v39, %v55
  %v70 = vmul.f32 %v40, %v60
  %v71 = vmul.f32 %v41, %v60
  %v72 = vmul.f32 %v42, %v60
  %v73 = vmul.f32 %v43, %v60
  %v74 = vld [vmem:[%s2] sm:$0xff]
  %v75 = vld [vmem:[%s2 + $0x8] sm:$0xff]
  %v76 = vld [vmem:[%s2 + $0x10] sm:$0xff]
  %78 = vset.pattern.permute.xlu0 0
  %79 = vperm.xlu0 %78, %v74
  %v80 = vpop.permute.xlu0 %79
  %83 = vset.pattern.permute.xlu0 0
  %84 = vperm.xlu0 %83, %v75
  %v85 = vpop.permute.xlu0 %84
  %88 = vset.pattern.permute.xlu0 0
  %89 = vperm.xlu0 %88, %v76
  %v90 = vpop.permute.xlu0 %89
  %v92 = vadd.f32 %v62, %v80
  %v93 = vadd.f32 %v63, %v80
  %v94 = vadd.f32 %v64, %v80
  %v95 = vadd.f32 %v65, %v80
  %v96 = vadd.f32 %v66, %v85
  %v97 = vadd.f32 %v67, %v85
  %v98 = vadd.f32 %v68, %v85
  %v99 = vadd.f32 %v69, %v85
  %v100 = vadd.f32 %v70, %v90
  %v101 = vadd.f32 %v71, %v90
  %v102 = vadd.f32 %v72, %v90
  %v103 = vadd.f32 %v73, %v90
  %v104 = vmax.f32 %v92, 0.0
  %v105 = vmax.f32 %v93, 0.0
  %v106 = vmax.f32 %v94, 0.0
  %v107 = vmax.f32 %v95, 0.0
  %v108 = vmax.f32 %v96, 0.0
  %v109 = vmax.f32 %v97, 0.0
  %v110 = vmax.f32 %v98, 0.0
  %v111 = vmax.f32 %v99, 0.0
  %v112 = vmax.f32 %v100, 0.0
  %v113 = vmax.f32 %v101, 0.0
  %v114 = vmax.f32 %v102, 0.0
  %v115 = vmax.f32 %v103, 0.0
  %v116 = vld [vmem:[%s3] sm:$0xf]
  %v117 = vld [vmem:[%s3 + $0x4] sm:$0xf]
  %v118 = vpack.c.bf16 %v108, %v104
  %v119 = vpack.c.bf16 %v109, %v105
  %v120 = vpack.c.bf16 %v110, %v106
  %v121 = vpack.c.bf16 %v111, %v107
  %v122 = vpack.c.bf16 %v112, %v112
  %v123 = vpack.c.bf16 %v113, %v113
  %v124 = vpack.c.bf16 %v114, %v114
  %v125 = vpack.c.bf16 %v115, %v115
  %v128 = vunpack.c.l.b16 %v116
  %v129 = vunpack.c.l.b16 %v117
  %v130 = vpack.c.b16 %v129, %v128
  %vm131 = vcmask 195584
  %v133 = vsel %vm131, %v130, 0
  %vm135 = vcmask 1043456
  %v137 = vsel %vm135, %v122, 0
  %v140 = vsel %vm135, %v123, 0
  %v143 = vsel %vm135, %v124, 0
  %v146 = vsel %vm135, %v125, 0
  %148 = vmatpush.bf16.msra.mxu0 0
  %149 = vmatpush.bf16.msra.mxu0 0
  %150 = vmatpush.bf16.msra.mxu0 0
  %151 = vmatpush.bf16.msra.mxu0 0
  %152 = vmatpush.bf16.msra.mxu0 0
  %153 = vmatpush.bf16.msra.mxu0 0
  %154 = vmatpush.bf16.msra.mxu0 %v137
  %155 = vmatpush.bf16.msra.mxu0 %v118
  %156 = vmatmul.bf16.gmra.mxu0 %v133
  %v157 = vpop.f32.mrf.mxu0
  %v158 = vadd.f32 0.0, %v157
  %v159 = vpop.f32.mrf.mxu0
  %v160 = vadd.f32 0.0, %v159
  %161 = vdwg.mxu0
  %162 = vmatpush.bf16.msra.mxu0 0
  %163 = vmatpush.bf16.msra.mxu0 0
  %164 = vmatpush.bf16.msra.mxu0 0
  %165 = vmatpush.bf16.msra.mxu0 0
  %166 = vmatpush.bf16.msra.mxu0 0
  %167 = vmatpush.bf16.msra.mxu0 0
  %168 = vmatpush.bf16.msra.mxu0 %v140
  %169 = vmatpush.bf16.msra.mxu0 %v119
  %170 = vmatmul.bf16.gmra.mxu0 %v133
  %v171 = vpop.f32.mrf.mxu0
  %v172 = vadd.f32 0.0, %v171
  %v173 = vpop.f32.mrf.mxu0
  %v174 = vadd.f32 0.0, %v173
  %175 = vdwg.mxu0
  %176 = vmatpush.bf16.msra.mxu0 0
  %177 = vmatpush.bf16.msra.mxu0 0
  %178 = vmatpush.bf16.msra.mxu0 0
  %179 = vmatpush.bf16.msra.mxu0 0
  %180 = vmatpush.bf16.msra.mxu0 0
  %181 = vmatpush.bf16.msra.mxu0 0
  %182 = vmatpush.bf16.msra.mxu0 %v143
  %183 = vmatpush.bf16.msra.mxu0 %v120
  %184 = vmatmul.bf16.gmra.mxu0 %v133
  %v185 = vpop.f32.mrf.mxu0
  %v186 = vadd.f32 0.0, %v185
  %v187 = vpop.f32.mrf.mxu0
  %v188 = vadd.f32 0.0, %v187
  %189 = vdwg.mxu0
  %190 = vmatpush.bf16.msra.mxu0 0
  %191 = vmatpush.bf16.msra.mxu0 0
  %192 = vmatpush.bf16.msra.mxu0 0
  %193 = vmatpush.bf16.msra.mxu0 0
  %194 = vmatpush.bf16.msra.mxu0 0
  %195 = vmatpush.bf16.msra.mxu0 0
  %196 = vmatpush.bf16.msra.mxu0 %v146
  %197 = vmatpush.bf16.msra.mxu0 %v121
  %198 = vmatmul.bf16.gmra.mxu0 %v133
  %v199 = vpop.f32.mrf.mxu0
  %v200 = vadd.f32 0.0, %v199
  %v201 = vpop.f32.mrf.mxu0
  %v202 = vadd.f32 0.0, %v201
  %203 = vdwg.mxu0
  %v204 = vld [vmem:[%s4] sm:$0xff]
  %v205 = vld [vmem:[%s4 + $0x8] sm:$0xff]
  %207 = vset.pattern.permute.xlu0 0
  %208 = vperm.xlu0 %207, %v204
  %v209 = vpop.permute.xlu0 %208
  %212 = vset.pattern.permute.xlu0 0
  %213 = vperm.xlu0 %212, %v205
  %v214 = vpop.permute.xlu0 %213
  %v216 = vmul.f32 %v158, %v209
  %v217 = vmul.f32 %v172, %v209
  %v218 = vmul.f32 %v186, %v209
  %v219 = vmul.f32 %v200, %v209
  %v220 = vmul.f32 %v160, %v214
  %v221 = vmul.f32 %v174, %v214
  %v222 = vmul.f32 %v188, %v214
  %v223 = vmul.f32 %v202, %v214
  %v224 = vld [vmem:[%s5] sm:$0xff]
  %v225 = vld [vmem:[%s5 + $0x8] sm:$0xff]
  %227 = vset.pattern.permute.xlu0 0
  %228 = vperm.xlu0 %227, %v224
  %v229 = vpop.permute.xlu0 %228
  %232 = vset.pattern.permute.xlu0 0
  %233 = vperm.xlu0 %232, %v225
  %v234 = vpop.permute.xlu0 %233
  %v236 = vadd.f32 %v216, %v229
  %v237 = vadd.f32 %v217, %v229
  %v238 = vadd.f32 %v218, %v229
  %v239 = vadd.f32 %v219, %v229
  %v240 = vadd.f32 %v220, %v234
  %v241 = vadd.f32 %v221, %v234
  %v242 = vadd.f32 %v222, %v234
  %v243 = vadd.f32 %v223, %v234
  %v244 = vmax.f32 %v236, 0.0
  %v245 = vmax.f32 %v237, 0.0
  %v246 = vmax.f32 %v238, 0.0
  %v247 = vmax.f32 %v239, 0.0
  %v248 = vmax.f32 %v240, 0.0
  %v249 = vmax.f32 %v241, 0.0
  %v250 = vmax.f32 %v242, 0.0
  %v251 = vmax.f32 %v243, 0.0
  %252 = vst [vmem:[#allocation2] sm:$0xff] 0.0
  %253 = vst [vmem:[#allocation2 + $0x8] sm:$0xff] 0.0
  %254 = vst [vmem:[#allocation2 + $0x10] sm:$0xff] 0.0
  %255 = vst [vmem:[#allocation2 + $0x18] sm:$0xff] 0.0
  %256 = vst [vmem:[#allocation2 + $0x20] sm:$0xff] 0.0
  %257 = vst [vmem:[#allocation2 + $0x28] sm:$0xff] 0.0
  %258 = vst [vmem:[#allocation2 + $0x30] sm:$0xff] 0.0
  %259 = vst [vmem:[#allocation2 + $0x38] sm:$0xff] 0.0
  %260 = vst [vmem:[#allocation2 + $0x40] sm:$0xff] 0.0
  %261 = vst [vmem:[#allocation2 + $0x48] sm:$0xff] 0.0
  %262 = vst [vmem:[#allocation2 + $0x50] sm:$0xff] 0.0
  %263 = vst [vmem:[#allocation2 + $0x58] sm:$0xff] 0.0
  %264 = vst [vmem:[#allocation2 + $0x8] sm:$0xff] %v244
  %265 = vst [vmem:[#allocation2 + $0x10] sm:$0xff] %v245
  %266 = vst [vmem:[#allocation2 + $0x18] sm:$0xff] %v246
  %267 = vst [vmem:[#allocation2 + $0x20] sm:$0xff] %v247
  %268 = vst [vmem:[#allocation2 + $0x38] sm:$0xff] %v248
  %269 = vst [vmem:[#allocation2 + $0x40] sm:$0xff] %v249
  %270 = vst [vmem:[#allocation2 + $0x48] sm:$0xff] %v250
  %271 = vst [vmem:[#allocation2 + $0x50] sm:$0xff] %v251
  %v272 = vld [vmem:[#allocation2] sm:$0xff]
  %v273 = vld [vmem:[#allocation2 + $0x8] sm:$0xff]
  %v274 = vld [vmem:[#allocation2 + $0x10] sm:$0xff]
  %v275 = vld [vmem:[#allocation2 + $0x18] sm:$0xff]
  %v276 = vld [vmem:[#allocation2 + $0x20] sm:$0xff]
  %v277 = vld [vmem:[#allocation2 + $0x30] sm:$0xff]
  %v278 = vld [vmem:[#allocation2 + $0x38] sm:$0xff]
  %v279 = vld [vmem:[#allocation2 + $0x40] sm:$0xff]
  %v280 = vld [vmem:[#allocation2 + $0x48] sm:$0xff]
  %v281 = vld [vmem:[#allocation2 + $0x50] sm:$0xff]
  %v282 = vld [vmem:[%s7] sm:$0xf]
  %v284 = vperm.slane %v282, 0
  %v285 = vperm.slane %v282, 1
  %v286 = vperm.slane %v282, 2
  %v287 = vperm.slane %v282, 3
  %288 = vrot.lane.b32.xlu0 %v284, 111
  %v289 = vpop.permute.xlu0 %288
  %290 = vrot.lane.b32.xlu0 %v285, 111
  %v291 = vpop.permute.xlu0 %290
  %292 = vrot.lane.b32.xlu0 %v286, 111
  %v293 = vpop.permute.xlu0 %292
  %294 = vrot.lane.b32.xlu0 %v287, 111
  %v295 = vpop.permute.xlu0 %294
  %vm296 = vcmask 908288
  %v297 = vsel %vm296, %v289, %v291
  %v298 = vsel %vm296, %v291, %v293
  %v299 = vsel %vm296, %v293, %v295
  %v305 = vmul.f32 %v272, %v289
  %v306 = vmul.f32 %v273, %v297
  %v307 = vmul.f32 %v274, %v298
  %v308 = vmul.f32 %v275, %v299
  %v309 = vmul.f32 %v276, %v295
  %v310 = vmul.f32 %v277, %v289
  %v311 = vmul.f32 %v278, %v297
  %v312 = vmul.f32 %v279, %v298
  %v313 = vmul.f32 %v280, %v299
  %v314 = vmul.f32 %v281, %v295
  %v315 = vld [vmem:[%s6] sm:$0xf]
  %v316 = vpack.c.bf16 %v310, %v305
  %v317 = vpack.c.bf16 %v311, %v306
  %v318 = vpack.c.bf16 %v312, %v307
  %v319 = vpack.c.bf16 %v313, %v308
  %v320 = vpack.c.bf16 %v314, %v309
  %s321 = scalar_lea.vmem %s7, 4
  %v322 = vld [vmem:[%s321] sm:$0xf]
  %v324 = vperm.slane %v322, 0
  %v325 = vperm.slane %v322, 1
  %v326 = vperm.slane %v322, 2
  %v327 = vperm.slane %v322, 3
  %328 = vrot.lane.b32.xlu0 %v324, 112
  %v329 = vpop.permute.xlu0 %328
  %330 = vrot.lane.b32.xlu0 %v325, 112
  %v331 = vpop.permute.xlu0 %330
  %332 = vrot.lane.b32.xlu0 %v326, 112
  %v333 = vpop.permute.xlu0 %332
  %334 = vrot.lane.b32.xlu0 %v327, 112
  %v335 = vpop.permute.xlu0 %334
  %vm336 = vcmask 916480
  %v337 = vsel %vm336, %v329, %v331
  %v338 = vsel %vm336, %v331, %v333
  %v339 = vsel %vm336, %v333, %v335
  %v345 = vmul.f32 %v272, %v329
  %v346 = vmul.f32 %v273, %v337
  %v347 = vmul.f32 %v274, %v338
  %v348 = vmul.f32 %v275, %v339
  %v349 = vmul.f32 %v276, %v335
  %v350 = vmul.f32 %v277, %v329
  %v351 = vmul.f32 %v278, %v337
  %v352 = vmul.f32 %v279, %v338
  %v353 = vmul.f32 %v280, %v339
  %v354 = vmul.f32 %v281, %v335
  %s355 = scalar_lea.vmem %s6, 4
  %v356 = vld [vmem:[%s355] sm:$0xf]
  %v357 = vpack.c.bf16 %v350, %v345
  %v358 = vpack.c.bf16 %v351, %v346
  %v359 = vpack.c.bf16 %v352, %v347
  %v360 = vpack.c.bf16 %v353, %v348
  %v361 = vpack.c.bf16 %v354, %v349
  %367 = vrot.lane.b32.xlu0 %v357, 16
  %v368 = vpop.permute.xlu0 %367
  %369 = vrot.lane.b32.xlu0 %v358, 16
  %v370 = vpop.permute.xlu0 %369
  %371 = vrot.lane.b32.xlu0 %v359, 16
  %v372 = vpop.permute.xlu0 %371
  %373 = vrot.lane.b32.xlu0 %v360, 16
  %v374 = vpop.permute.xlu0 %373
  %375 = vrot.lane.b32.xlu0 %v361, 16
  %v376 = vpop.permute.xlu0 %375
  %vm377 = vcmask 130048
  %v378 = vsel %vm377, %v368, %v370
  %v379 = vsel %vm377, %v370, %v372
  %v380 = vsel %vm377, %v372, %v374
  %v381 = vsel %vm377, %v374, %v376
  %vm386 = vcmask 130048
  %v388 = vsel %vm386, %v356, 0
  %390 = vmatpush.bf16.msra.mxu0 0
  %391 = vmatpush.bf16.msra.mxu0 0
  %392 = vmatpush.bf16.msra.mxu0 0
  %393 = vmatpush.bf16.msra.mxu0 0
  %394 = vmatpush.bf16.msra.mxu0 0
  %395 = vmatpush.bf16.msra.mxu0 0
  %396 = vmatpush.bf16.msra.mxu0 0
  %397 = vmatpush.bf16.msra.mxu0 %v378
  %398 = vmatmul.bf16.gmra.mxu0 %v388
  %v399 = vpop.f32.mrf.mxu0
  %v400 = vadd.f32 0.0, %v399
  %v401 = vpop.f32.mrf.mxu0
  %402 = vdwg.mxu0
  %403 = vmatpush.bf16.msra.mxu0 0
  %404 = vmatpush.bf16.msra.mxu0 0
  %405 = vmatpush.bf16.msra.mxu0 0
  %406 = vmatpush.bf16.msra.mxu0 0
  %407 = vmatpush.bf16.msra.mxu0 0
  %408 = vmatpush.bf16.msra.mxu0 0
  %409 = vmatpush.bf16.msra.mxu0 0
  %410 = vmatpush.bf16.msra.mxu0 %v379
  %411 = vmatmul.bf16.gmra.mxu0 %v388
  %v412 = vpop.f32.mrf.mxu0
  %v413 = vadd.f32 0.0, %v412
  %v414 = vpop.f32.mrf.mxu0
  %415 = vdwg.mxu0
  %416 = vmatpush.bf16.msra.mxu0 0
  %417 = vmatpush.bf16.msra.mxu0 0
  %418 = vmatpush.bf16.msra.mxu0 0
  %419 = vmatpush.bf16.msra.mxu0 0
  %420 = vmatpush.bf16.msra.mxu0 0
  %421 = vmatpush.bf16.msra.mxu0 0
  %422 = vmatpush.bf16.msra.mxu0 0
  %423 = vmatpush.bf16.msra.mxu0 %v380
  %424 = vmatmul.bf16.gmra.mxu0 %v388
  %v425 = vpop.f32.mrf.mxu0
  %v426 = vadd.f32 0.0, %v425
  %v427 = vpop.f32.mrf.mxu0
  %428 = vdwg.mxu0
  %429 = vmatpush.bf16.msra.mxu0 0
  %430 = vmatpush.bf16.msra.mxu0 0
  %431 = vmatpush.bf16.msra.mxu0 0
  %432 = vmatpush.bf16.msra.mxu0 0
  %433 = vmatpush.bf16.msra.mxu0 0
  %434 = vmatpush.bf16.msra.mxu0 0
  %435 = vmatpush.bf16.msra.mxu0 0
  %436 = vmatpush.bf16.msra.mxu0 %v381
  %437 = vmatmul.bf16.gmra.mxu0 %v388
  %v438 = vpop.f32.mrf.mxu0
  %v439 = vadd.f32 0.0, %v438
  %v440 = vpop.f32.mrf.mxu0
  %441 = vdwg.mxu0
  %447 = vrot.lane.b32.xlu0 %v316, 17
  %v448 = vpop.permute.xlu0 %447
  %449 = vrot.lane.b32.xlu0 %v317, 17
  %v450 = vpop.permute.xlu0 %449
  %451 = vrot.lane.b32.xlu0 %v318, 17
  %v452 = vpop.permute.xlu0 %451
  %453 = vrot.lane.b32.xlu0 %v319, 17
  %v454 = vpop.permute.xlu0 %453
  %455 = vrot.lane.b32.xlu0 %v320, 17
  %v456 = vpop.permute.xlu0 %455
  %vm457 = vcmask 138240
  %v458 = vsel %vm457, %v448, %v450
  %v459 = vsel %vm457, %v450, %v452
  %v460 = vsel %vm457, %v452, %v454
  %v461 = vsel %vm457, %v454, %v456
  %v467 = vsel %vm386, %v315, 0
  %469 = vmatpush.bf16.msra.mxu0 0
  %470 = vmatpush.bf16.msra.mxu0 0
  %471 = vmatpush.bf16.msra.mxu0 0
  %472 = vmatpush.bf16.msra.mxu0 0
  %473 = vmatpush.bf16.msra.mxu0 0
  %474 = vmatpush.bf16.msra.mxu0 0
  %475 = vmatpush.bf16.msra.mxu0 0
  %476 = vmatpush.bf16.msra.mxu0 %v458
  %477 = vmatmul.bf16.gmra.mxu0 %v467
  %v478 = vpop.f32.mrf.mxu0
  %v479 = vadd.f32 %v400, %v478
  %v480 = vpop.f32.mrf.mxu0
  %481 = vdwg.mxu0
  %482 = vmatpush.bf16.msra.mxu0 0
  %483 = vmatpush.bf16.msra.mxu0 0
  %484 = vmatpush.bf16.msra.mxu0 0
  %485 = vmatpush.bf16.msra.mxu0 0
  %486 = vmatpush.bf16.msra.mxu0 0
  %487 = vmatpush.bf16.msra.mxu0 0
  %488 = vmatpush.bf16.msra.mxu0 0
  %489 = vmatpush.bf16.msra.mxu0 %v459
  %490 = vmatmul.bf16.gmra.mxu0 %v467
  %v491 = vpop.f32.mrf.mxu0
  %v492 = vadd.f32 %v413, %v491
  %v493 = vpop.f32.mrf.mxu0
  %494 = vdwg.mxu0
  %495 = vmatpush.bf16.msra.mxu0 0
  %496 = vmatpush.bf16.msra.mxu0 0
  %497 = vmatpush.bf16.msra.mxu0 0
  %498 = vmatpush.bf16.msra.mxu0 0
  %499 = vmatpush.bf16.msra.mxu0 0
  %500 = vmatpush.bf16.msra.mxu0 0
  %501 = vmatpush.bf16.msra.mxu0 0
  %502 = vmatpush.bf16.msra.mxu0 %v460
  %503 = vmatmul.bf16.gmra.mxu0 %v467
  %v504 = vpop.f32.mrf.mxu0
  %v505 = vadd.f32 %v426, %v504
  %v506 = vpop.f32.mrf.mxu0
  %507 = vdwg.mxu0
  %508 = vmatpush.bf16.msra.mxu0 0
  %509 = vmatpush.bf16.msra.mxu0 0
  %510 = vmatpush.bf16.msra.mxu0 0
  %511 = vmatpush.bf16.msra.mxu0 0
  %512 = vmatpush.bf16.msra.mxu0 0
  %513 = vmatpush.bf16.msra.mxu0 0
  %514 = vmatpush.bf16.msra.mxu0 0
  %515 = vmatpush.bf16.msra.mxu0 %v461
  %516 = vmatmul.bf16.gmra.mxu0 %v467
  %v517 = vpop.f32.mrf.mxu0
  %v518 = vadd.f32 %v439, %v517
  %v519 = vpop.f32.mrf.mxu0
  %520 = vdwg.mxu0
  %s521 = scalar_lea.vmem %s7, 8
  %v522 = vld [vmem:[%s521] sm:$0xf]
  %v524 = vperm.slane %v522, 0
  %v525 = vperm.slane %v522, 1
  %v526 = vperm.slane %v522, 2
  %v527 = vperm.slane %v522, 3
  %528 = vrot.lane.b32.xlu0 %v524, 113
  %v529 = vpop.permute.xlu0 %528
  %530 = vrot.lane.b32.xlu0 %v525, 113
  %v531 = vpop.permute.xlu0 %530
  %532 = vrot.lane.b32.xlu0 %v526, 113
  %v533 = vpop.permute.xlu0 %532
  %534 = vrot.lane.b32.xlu0 %v527, 113
  %v535 = vpop.permute.xlu0 %534
  %vm536 = vcmask 924672
  %v537 = vsel %vm536, %v529, %v531
  %v538 = vsel %vm536, %v531, %v533
  %v539 = vsel %vm536, %v533, %v535
  %v545 = vmul.f32 %v272, %v529
  %v546 = vmul.f32 %v273, %v537
  %v547 = vmul.f32 %v274, %v538
  %v548 = vmul.f32 %v275, %v539
  %v549 = vmul.f32 %v276, %v535
  %v550 = vmul.f32 %v277, %v529
  %v551 = vmul.f32 %v278, %v537
  %v552 = vmul.f32 %v279, %v538
  %v553 = vmul.f32 %v280, %v539
  %v554 = vmul.f32 %v281, %v535
  %s555 = scalar_lea.vmem %s6, 8
  %v556 = vld [vmem:[%s555] sm:$0xf]
  %v557 = vpack.c.bf16 %v550, %v545
  %v558 = vpack.c.bf16 %v551, %v546
  %v559 = vpack.c.bf16 %v552, %v547
  %v560 = vpack.c.bf16 %v553, %v548
  %v561 = vpack.c.bf16 %v554, %v549
  %567 = vrot.lane.b32.xlu0 %v557, 15
  %v568 = vpop.permute.xlu0 %567
  %569 = vrot.lane.b32.xlu0 %v558, 15
  %v570 = vpop.permute.xlu0 %569
  %571 = vrot.lane.b32.xlu0 %v559, 15
  %v572 = vpop.permute.xlu0 %571
  %573 = vrot.lane.b32.xlu0 %v560, 15
  %v574 = vpop.permute.xlu0 %573
  %575 = vrot.lane.b32.xlu0 %v561, 15
  %v576 = vpop.permute.xlu0 %575
  %vm577 = vcmask 121856
  %v578 = vsel %vm577, %v568, %v570
  %v579 = vsel %vm577, %v570, %v572
  %v580 = vsel %vm577, %v572, %v574
  %v581 = vsel %vm577, %v574, %v576
  %v587 = vsel %vm386, %v556, 0
  %589 = vmatpush.bf16.msra.mxu0 0
  %590 = vmatpush.bf16.msra.mxu0 0
  %591 = vmatpush.bf16.msra.mxu0 0
  %592 = vmatpush.bf16.msra.mxu0 0
  %593 = vmatpush.bf16.msra.mxu0 0
  %594 = vmatpush.bf16.msra.mxu0 0
  %595 = vmatpush.bf16.msra.mxu0 0
  %596 = vmatpush.bf16.msra.mxu0 %v578
  %597 = vmatmul.bf16.gmra.mxu0 %v587
  %v598 = vpop.f32.mrf.mxu0
  %v599 = vadd.f32 0.0, %v598
  %v600 = vpop.f32.mrf.mxu0
  %601 = vdwg.mxu0
  %602 = vmatpush.bf16.msra.mxu0 0
  %603 = vmatpush.bf16.msra.mxu0 0
  %604 = vmatpush.bf16.msra.mxu0 0
  %605 = vmatpush.bf16.msra.mxu0 0
  %606 = vmatpush.bf16.msra.mxu0 0
  %607 = vmatpush.bf16.msra.mxu0 0
  %608 = vmatpush.bf16.msra.mxu0 0
  %609 = vmatpush.bf16.msra.mxu0 %v579
  %610 = vmatmul.bf16.gmra.mxu0 %v587
  %v611 = vpop.f32.mrf.mxu0
  %v612 = vadd.f32 0.0, %v611
  %v613 = vpop.f32.mrf.mxu0
  %614 = vdwg.mxu0
  %615 = vmatpush.bf16.msra.mxu0 0
  %616 = vmatpush.bf16.msra.mxu0 0
  %617 = vmatpush.bf16.msra.mxu0 0
  %618 = vmatpush.bf16.msra.mxu0 0
  %619 = vmatpush.bf16.msra.mxu0 0
  %620 = vmatpush.bf16.msra.mxu0 0
  %621 = vmatpush.bf16.msra.mxu0 0
  %622 = vmatpush.bf16.msra.mxu0 %v580
  %623 = vmatmul.bf16.gmra.mxu0 %v587
  %v624 = vpop.f32.mrf.mxu0
  %v625 = vadd.f32 0.0, %v624
  %v626 = vpop.f32.mrf.mxu0
  %627 = vdwg.mxu0
  %628 = vmatpush.bf16.msra.mxu0 0
  %629 = vmatpush.bf16.msra.mxu0 0
  %630 = vmatpush.bf16.msra.mxu0 0
  %631 = vmatpush.bf16.msra.mxu0 0
  %632 = vmatpush.bf16.msra.mxu0 0
  %633 = vmatpush.bf16.msra.mxu0 0
  %634 = vmatpush.bf16.msra.mxu0 0
  %635 = vmatpush.bf16.msra.mxu0 %v581
  %636 = vmatmul.bf16.gmra.mxu0 %v587
  %v637 = vpop.f32.mrf.mxu0
  %v638 = vadd.f32 0.0, %v637
  %v639 = vpop.f32.mrf.mxu0
  %640 = vdwg.mxu0
  %v641 = vadd.f32 %v479, %v599
  %v642 = vadd.f32 %v492, %v612
  %v643 = vadd.f32 %v505, %v625
  %v644 = vadd.f32 %v518, %v638
  %s645 = scalar_lea.vmem %s7, 12
  %v646 = vld [vmem:[%s645] sm:$0xf]
  %v648 = vperm.slane %v646, 0
  %v649 = vperm.slane %v646, 1
  %v650 = vperm.slane %v646, 2
  %v651 = vperm.slane %v646, 3
  %652 = vrot.lane.b32.xlu0 %v648, 127
  %v653 = vpop.permute.xlu0 %652
  %654 = vrot.lane.b32.xlu0 %v649, 127
  %v655 = vpop.permute.xlu0 %654
  %656 = vrot.lane.b32.xlu0 %v650, 127
  %v657 = vpop.permute.xlu0 %656
  %658 = vrot.lane.b32.xlu0 %v651, 127
  %v659 = vpop.permute.xlu0 %658
  %vm660 = vcmask 1039360
  %v661 = vsel %vm660, %v653, %v655
  %v662 = vsel %vm660, %v655, %v657
  %v663 = vsel %vm660, %v657, %v659
  %v669 = vmul.f32 %v272, %v653
  %v670 = vmul.f32 %v273, %v661
  %v671 = vmul.f32 %v274, %v662
  %v672 = vmul.f32 %v275, %v663
  %v673 = vmul.f32 %v276, %v659
  %v674 = vmul.f32 %v277, %v653
  %v675 = vmul.f32 %v278, %v661
  %v676 = vmul.f32 %v279, %v662
  %v677 = vmul.f32 %v280, %v663
  %v678 = vmul.f32 %v281, %v659
  %s679 = scalar_lea.vmem %s6, 12
  %v680 = vld [vmem:[%s679] sm:$0xf]
  %v681 = vpack.c.bf16 %v674, %v669
  %v682 = vpack.c.bf16 %v675, %v670
  %v683 = vpack.c.bf16 %v676, %v671
  %v684 = vpack.c.bf16 %v677, %v672
  %v685 = vpack.c.bf16 %v678, %v673
  %691 = vrot.lane.b32.xlu0 %v681, 1
  %v692 = vpop.permute.xlu0 %691
  %693 = vrot.lane.b32.xlu0 %v682, 1
  %v694 = vpop.permute.xlu0 %693
  %695 = vrot.lane.b32.xlu0 %v683, 1
  %v696 = vpop.permute.xlu0 %695
  %697 = vrot.lane.b32.xlu0 %v684, 1
  %v698 = vpop.permute.xlu0 %697
  %699 = vrot.lane.b32.xlu0 %v685, 1
  %v700 = vpop.permute.xlu0 %699
  %vm701 = vcmask 7168
  %v702 = vsel %vm701, %v692, %v694
  %v703 = vsel %vm701, %v694, %v696
  %v704 = vsel %vm701, %v696, %v698
  %v705 = vsel %vm701, %v698, %v700
  %v711 = vsel %vm386, %v680, 0
  %713 = vmatpush.bf16.msra.mxu0 0
  %714 = vmatpush.bf16.msra.mxu0 0
  %715 = vmatpush.bf16.msra.mxu0 0
  %716 = vmatpush.bf16.msra.mxu0 0
  %717 = vmatpush.bf16.msra.mxu0 0
  %718 = vmatpush.bf16.msra.mxu0 0
  %719 = vmatpush.bf16.msra.mxu0 0
  %720 = vmatpush.bf16.msra.mxu0 %v702
  %721 = vmatmul.bf16.gmra.mxu0 %v711
  %v722 = vpop.f32.mrf.mxu0
  %v723 = vadd.f32 0.0, %v722
  %v724 = vpop.f32.mrf.mxu0
  %725 = vdwg.mxu0
  %726 = vmatpush.bf16.msra.mxu0 0
  %727 = vmatpush.bf16.msra.mxu0 0
  %728 = vmatpush.bf16.msra.mxu0 0
  %729 = vmatpush.bf16.msra.mxu0 0
  %730 = vmatpush.bf16.msra.mxu0 0
  %731 = vmatpush.bf16.msra.mxu0 0
  %732 = vmatpush.bf16.msra.mxu0 0
  %733 = vmatpush.bf16.msra.mxu0 %v703
  %734 = vmatmul.bf16.gmra.mxu0 %v711
  %v735 = vpop.f32.mrf.mxu0
  %v736 = vadd.f32 0.0, %v735
  %v737 = vpop.f32.mrf.mxu0
  %738 = vdwg.mxu0
  %739 = vmatpush.bf16.msra.mxu0 0
  %740 = vmatpush.bf16.msra.mxu0 0
  %741 = vmatpush.bf16.msra.mxu0 0
  %742 = vmatpush.bf16.msra.mxu0 0
  %743 = vmatpush.bf16.msra.mxu0 0
  %744 = vmatpush.bf16.msra.mxu0 0
  %745 = vmatpush.bf16.msra.mxu0 0
  %746 = vmatpush.bf16.msra.mxu0 %v704
  %747 = vmatmul.bf16.gmra.mxu0 %v711
  %v748 = vpop.f32.mrf.mxu0
  %v749 = vadd.f32 0.0, %v748
  %v750 = vpop.f32.mrf.mxu0
  %751 = vdwg.mxu0
  %752 = vmatpush.bf16.msra.mxu0 0
  %753 = vmatpush.bf16.msra.mxu0 0
  %754 = vmatpush.bf16.msra.mxu0 0
  %755 = vmatpush.bf16.msra.mxu0 0
  %756 = vmatpush.bf16.msra.mxu0 0
  %757 = vmatpush.bf16.msra.mxu0 0
  %758 = vmatpush.bf16.msra.mxu0 0
  %759 = vmatpush.bf16.msra.mxu0 %v705
  %760 = vmatmul.bf16.gmra.mxu0 %v711
  %v761 = vpop.f32.mrf.mxu0
  %v762 = vadd.f32 0.0, %v761
  %v763 = vpop.f32.mrf.mxu0
  %764 = vdwg.mxu0
  %v765 = vadd.f32 %v641, %v723
  %v766 = vadd.f32 %v642, %v736
  %v767 = vadd.f32 %v643, %v749
  %v768 = vadd.f32 %v644, %v762
  %s769 = scalar_lea.vmem %s7, 16
  %v770 = vld [vmem:[%s769] sm:$0xf]
  %v772 = vperm.slane %v770, 0
  %v773 = vperm.slane %v770, 1
  %v774 = vperm.slane %v770, 2
  %v775 = vperm.slane %v770, 3
  %v780 = vmul.f32 %v273, %v772
  %v781 = vmul.f32 %v274, %v773
  %v782 = vmul.f32 %v275, %v774
  %v783 = vmul.f32 %v276, %v775
  %v784 = vmul.f32 %v278, %v772
  %v785 = vmul.f32 %v279, %v773
  %v786 = vmul.f32 %v280, %v774
  %v787 = vmul.f32 %v281, %v775
  %s788 = scalar_lea.vmem %s6, 16
  %v789 = vld [vmem:[%s788] sm:$0xf]
  %v790 = vpack.c.bf16 %v784, %v780
  %v791 = vpack.c.bf16 %v785, %v781
  %v792 = vpack.c.bf16 %v786, %v782
  %v793 = vpack.c.bf16 %v787, %v783
  %v795 = vsel %vm386, %v789, 0
  %797 = vmatpush.bf16.msra.mxu0 0
  %798 = vmatpush.bf16.msra.mxu0 0
  %799 = vmatpush.bf16.msra.mxu0 0
  %800 = vmatpush.bf16.msra.mxu0 0
  %801 = vmatpush.bf16.msra.mxu0 0
  %802 = vmatpush.bf16.msra.mxu0 0
  %803 = vmatpush.bf16.msra.mxu0 0
  %804 = vmatpush.bf16.msra.mxu0 %v790
  %805 = vmatmul.bf16.gmra.mxu0 %v795
  %v806 = vpop.f32.mrf.mxu0
  %v807 = vadd.f32 0.0, %v806
  %v808 = vpop.f32.mrf.mxu0
  %809 = vdwg.mxu0
  %810 = vmatpush.bf16.msra.mxu0 0
  %811 = vmatpush.bf16.msra.mxu0 0
  %812 = vmatpush.bf16.msra.mxu0 0
  %813 = vmatpush.bf16.msra.mxu0 0
  %814 = vmatpush.bf16.msra.mxu0 0
  %815 = vmatpush.bf16.msra.mxu0 0
  %816 = vmatpush.bf16.msra.mxu0 0
  %817 = vmatpush.bf16.msra.mxu0 %v791
  %818 = vmatmul.bf16.gmra.mxu0 %v795
  %v819 = vpop.f32.mrf.mxu0
  %v820 = vadd.f32 0.0, %v819
  %v821 = vpop.f32.mrf.mxu0
  %822 = vdwg.mxu0
  %823 = vmatpush.bf16.msra.mxu0 0
  %824 = vmatpush.bf16.msra.mxu0 0
  %825 = vmatpush.bf16.msra.mxu0 0
  %826 = vmatpush.bf16.msra.mxu0 0
  %827 = vmatpush.bf16.msra.mxu0 0
  %828 = vmatpush.bf16.msra.mxu0 0
  %829 = vmatpush.bf16.msra.mxu0 0
  %830 = vmatpush.bf16.msra.mxu0 %v792
  %831 = vmatmul.bf16.gmra.mxu0 %v795
  %v832 = vpop.f32.mrf.mxu0
  %v833 = vadd.f32 0.0, %v832
  %v834 = vpop.f32.mrf.mxu0
  %835 = vdwg.mxu0
  %836 = vmatpush.bf16.msra.mxu0 0
  %837 = vmatpush.bf16.msra.mxu0 0
  %838 = vmatpush.bf16.msra.mxu0 0
  %839 = vmatpush.bf16.msra.mxu0 0
  %840 = vmatpush.bf16.msra.mxu0 0
  %841 = vmatpush.bf16.msra.mxu0 0
  %842 = vmatpush.bf16.msra.mxu0 0
  %843 = vmatpush.bf16.msra.mxu0 %v793
  %844 = vmatmul.bf16.gmra.mxu0 %v795
  %v845 = vpop.f32.mrf.mxu0
  %v846 = vadd.f32 0.0, %v845
  %v847 = vpop.f32.mrf.mxu0
  %848 = vdwg.mxu0
  %v849 = vadd.f32 %v765, %v807
  %v850 = vadd.f32 %v766, %v820
  %v851 = vadd.f32 %v767, %v833
  %v852 = vadd.f32 %v768, %v846
  %v853 = vld [vmem:[#allocation2 + $0x8] sm:$0xff]
  %v854 = vld [vmem:[#allocation2 + $0x10] sm:$0xff]
  %v855 = vld [vmem:[#allocation2 + $0x18] sm:$0xff]
  %v856 = vld [vmem:[#allocation2 + $0x20] sm:$0xff]
  %v857 = vld [vmem:[#allocation2 + $0x28] sm:$0xff]
  %v858 = vld [vmem:[#allocation2 + $0x38] sm:$0xff]
  %v859 = vld [vmem:[#allocation2 + $0x40] sm:$0xff]
  %v860 = vld [vmem:[#allocation2 + $0x48] sm:$0xff]
  %v861 = vld [vmem:[#allocation2 + $0x50] sm:$0xff]
  %v862 = vld [vmem:[#allocation2 + $0x58] sm:$0xff]
  %s863 = scalar_lea.vmem %s7, 20
  %v864 = vld [vmem:[%s863] sm:$0xf]
  %v866 = vperm.slane %v864, 0
  %v867 = vperm.slane %v864, 1
  %v868 = vperm.slane %v864, 2
  %v869 = vperm.slane %v864, 3
  %870 = vrot.lane.b32.xlu0 %v866, 1
  %v871 = vpop.permute.xlu0 %870
  %872 = vrot.lane.b32.xlu0 %v867, 1
  %v873 = vpop.permute.xlu0 %872
  %874 = vrot.lane.b32.xlu0 %v868, 1
  %v875 = vpop.permute.xlu0 %874
  %876 = vrot.lane.b32.xlu0 %v869, 1
  %v877 = vpop.permute.xlu0 %876
  %vm878 = vcmask 7168
  %v879 = vsel %vm878, %v871, %v873
  %v880 = vsel %vm878, %v873, %v875
  %v881 = vsel %vm878, %v875, %v877
  %v887 = vmul.f32 %v853, %v871
  %v888 = vmul.f32 %v854, %v879
  %v889 = vmul.f32 %v855, %v880
  %v890 = vmul.f32 %v856, %v881
  %v891 = vmul.f32 %v857, %v877
  %v892 = vmul.f32 %v858, %v871
  %v893 = vmul.f32 %v859, %v879
  %v894 = vmul.f32 %v860, %v880
  %v895 = vmul.f32 %v861, %v881
  %v896 = vmul.f32 %v862, %v877
  %s897 = scalar_lea.vmem %s6, 20
  %v898 = vld [vmem:[%s897] sm:$0xf]
  %v899 = vpack.c.bf16 %v892, %v887
  %v900 = vpack.c.bf16 %v893, %v888
  %v901 = vpack.c.bf16 %v894, %v889
  %v902 = vpack.c.bf16 %v895, %v890
  %v903 = vpack.c.bf16 %v896, %v891
  %909 = vrot.lane.b32.xlu0 %v899, 127
  %v910 = vpop.permute.xlu0 %909
  %911 = vrot.lane.b32.xlu0 %v900, 127
  %v912 = vpop.permute.xlu0 %911
  %913 = vrot.lane.b32.xlu0 %v901, 127
  %v914 = vpop.permute.xlu0 %913
  %915 = vrot.lane.b32.xlu0 %v902, 127
  %v916 = vpop.permute.xlu0 %915
  %917 = vrot.lane.b32.xlu0 %v903, 127
  %v918 = vpop.permute.xlu0 %917
  %vm919 = vcmask 1039360
  %v920 = vsel %vm919, %v910, %v912
  %v921 = vsel %vm919, %v912, %v914
  %v922 = vsel %vm919, %v914, %v916
  %v923 = vsel %vm919, %v916, %v918
  %v929 = vsel %vm386, %v898, 0
  %931 = vmatpush.bf16.msra.mxu0 0
  %932 = vmatpush.bf16.msra.mxu0 0
  %933 = vmatpush.bf16.msra.mxu0 0
  %934 = vmatpush.bf16.msra.mxu0 0
  %935 = vmatpush.bf16.msra.mxu0 0
  %936 = vmatpush.bf16.msra.mxu0 0
  %937 = vmatpush.bf16.msra.mxu0 0
  %938 = vmatpush.bf16.msra.mxu0 %v920
  %939 = vmatmul.bf16.gmra.mxu0 %v929
  %v940 = vpop.f32.mrf.mxu0
  %v941 = vadd.f32 0.0, %v940
  %v942 = vpop.f32.mrf.mxu0
  %943 = vdwg.mxu0
  %944 = vmatpush.bf16.msra.mxu0 0
  %945 = vmatpush.bf16.msra.mxu0 0
  %946 = vmatpush.bf16.msra.mxu0 0
  %947 = vmatpush.bf16.msra.mxu0 0
  %948 = vmatpush.bf16.msra.mxu0 0
  %949 = vmatpush.bf16.msra.mxu0 0
  %950 = vmatpush.bf16.msra.mxu0 0
  %951 = vmatpush.bf16.msra.mxu0 %v921
  %952 = vmatmul.bf16.gmra.mxu0 %v929
  %v953 = vpop.f32.mrf.mxu0
  %v954 = vadd.f32 0.0, %v953
  %v955 = vpop.f32.mrf.mxu0
  %956 = vdwg.mxu0
  %957 = vmatpush.bf16.msra.mxu0 0
  %958 = vmatpush.bf16.msra.mxu0 0
  %959 = vmatpush.bf16.msra.mxu0 0
  %960 = vmatpush.bf16.msra.mxu0 0
  %961 = vmatpush.bf16.msra.mxu0 0
  %962 = vmatpush.bf16.msra.mxu0 0
  %963 = vmatpush.bf16.msra.mxu0 0
  %964 = vmatpush.bf16.msra.mxu0 %v922
  %965 = vmatmul.bf16.gmra.mxu0 %v929
  %v966 = vpop.f32.mrf.mxu0
  %v967 = vadd.f32 0.0, %v966
  %v968 = vpop.f32.mrf.mxu0
  %969 = vdwg.mxu0
  %970 = vmatpush.bf16.msra.mxu0 0
  %971 = vmatpush.bf16.msra.mxu0 0
  %972 = vmatpush.bf16.msra.mxu0 0
  %973 = vmatpush.bf16.msra.mxu0 0
  %974 = vmatpush.bf16.msra.mxu0 0
  %975 = vmatpush.bf16.msra.mxu0 0
  %976 = vmatpush.bf16.msra.mxu0 0
  %977 = vmatpush.bf16.msra.mxu0 %v923
  %978 = vmatmul.bf16.gmra.mxu0 %v929
  %v979 = vpop.f32.mrf.mxu0
  %v980 = vadd.f32 0.0, %v979
  %v981 = vpop.f32.mrf.mxu0
  %982 = vdwg.mxu0
  %v983 = vadd.f32 %v849, %v941
  %v984 = vadd.f32 %v850, %v954
  %v985 = vadd.f32 %v851, %v967
  %v986 = vadd.f32 %v852, %v980
  %s987 = scalar_lea.vmem %s7, 24
  %v988 = vld [vmem:[%s987] sm:$0xf]
  %v990 = vperm.slane %v988, 0
  %v991 = vperm.slane %v988, 1
  %v992 = vperm.slane %v988, 2
  %v993 = vperm.slane %v988, 3
  %994 = vrot.lane.b32.xlu0 %v990, 15
  %v995 = vpop.permute.xlu0 %994
  %996 = vrot.lane.b32.xlu0 %v991, 15
  %v997 = vpop.permute.xlu0 %996
  %998 = vrot.lane.b32.xlu0 %v992, 15
  %v999 = vpop.permute.xlu0 %998
  %1000 = vrot.lane.b32.xlu0 %v993, 15
  %v1001 = vpop.permute.xlu0 %1000
  %vm1002 = vcmask 121856
  %v1003 = vsel %vm1002, %v995, %v997
  %v1004 = vsel %vm1002, %v997, %v999
  %v1005 = vsel %vm1002, %v999, %v1001
  %v1011 = vmul.f32 %v853, %v995
  %v1012 = vmul.f32 %v854, %v1003
  %v1013 = vmul.f32 %v855, %v1004
  %v1014 = vmul.f32 %v856, %v1005
  %v1015 = vmul.f32 %v857, %v1001
  %v1016 = vmul.f32 %v858, %v995
  %v1017 = vmul.f32 %v859, %v1003
  %v1018 = vmul.f32 %v860, %v1004
  %v1019 = vmul.f32 %v861, %v1005
  %v1020 = vmul.f32 %v862, %v1001
  %s1021 = scalar_lea.vmem %s6, 24
  %v1022 = vld [vmem:[%s1021] sm:$0xf]
  %v1023 = vpack.c.bf16 %v1016, %v1011
  %v1024 = vpack.c.bf16 %v1017, %v1012
  %v1025 = vpack.c.bf16 %v1018, %v1013
  %v1026 = vpack.c.bf16 %v1019, %v1014
  %v1027 = vpack.c.bf16 %v1020, %v1015
  %1033 = vrot.lane.b32.xlu0 %v1023, 113
  %v1034 = vpop.permute.xlu0 %1033
  %1035 = vrot.lane.b32.xlu0 %v1024, 113
  %v1036 = vpop.permute.xlu0 %1035
  %1037 = vrot.lane.b32.xlu0 %v1025, 113
  %v1038 = vpop.permute.xlu0 %1037
  %1039 = vrot.lane.b32.xlu0 %v1026, 113
  %v1040 = vpop.permute.xlu0 %1039
  %1041 = vrot.lane.b32.xlu0 %v1027, 113
  %v1042 = vpop.permute.xlu0 %1041
  %vm1043 = vcmask 924672
  %v1044 = vsel %vm1043, %v1034, %v1036
  %v1045 = vsel %vm1043, %v1036, %v1038
  %v1046 = vsel %vm1043, %v1038, %v1040
  %v1047 = vsel %vm1043, %v1040, %v1042
  %v1053 = vsel %vm386, %v1022, 0
  %1055 = vmatpush.bf16.msra.mxu0 0
  %1056 = vmatpush.bf16.msra.mxu0 0
  %1057 = vmatpush.bf16.msra.mxu0 0
  %1058 = vmatpush.bf16.msra.mxu0 0
  %1059 = vmatpush.bf16.msra.mxu0 0
  %1060 = vmatpush.bf16.msra.mxu0 0
  %1061 = vmatpush.bf16.msra.mxu0 0
  %1062 = vmatpush.bf16.msra.mxu0 %v1044
  %1063 = vmatmul.bf16.gmra.mxu0 %v1053
  %v1064 = vpop.f32.mrf.mxu0
  %v1065 = vadd.f32 0.0, %v1064
  %v1066 = vpop.f32.mrf.mxu0
  %1067 = vdwg.mxu0
  %1068 = vmatpush.bf16.msra.mxu0 0
  %1069 = vmatpush.bf16.msra.mxu0 0
  %1070 = vmatpush.bf16.msra.mxu0 0
  %1071 = vmatpush.bf16.msra.mxu0 0
  %1072 = vmatpush.bf16.msra.mxu0 0
  %1073 = vmatpush.bf16.msra.mxu0 0
  %1074 = vmatpush.bf16.msra.mxu0 0
  %1075 = vmatpush.bf16.msra.mxu0 %v1045
  %1076 = vmatmul.bf16.gmra.mxu0 %v1053
  %v1077 = vpop.f32.mrf.mxu0
  %v1078 = vadd.f32 0.0, %v1077
  %v1079 = vpop.f32.mrf.mxu0
  %1080 = vdwg.mxu0
  %1081 = vmatpush.bf16.msra.mxu0 0
  %1082 = vmatpush.bf16.msra.mxu0 0
  %1083 = vmatpush.bf16.msra.mxu0 0
  %1084 = vmatpush.bf16.msra.mxu0 0
  %1085 = vmatpush.bf16.msra.mxu0 0
  %1086 = vmatpush.bf16.msra.mxu0 0
  %1087 = vmatpush.bf16.msra.mxu0 0
  %1088 = vmatpush.bf16.msra.mxu0 %v1046
  %1089 = vmatmul.bf16.gmra.mxu0 %v1053
  %v1090 = vpop.f32.mrf.mxu0
  %v1091 = vadd.f32 0.0, %v1090
  %v1092 = vpop.f32.mrf.mxu0
  %1093 = vdwg.mxu0
  %1094 = vmatpush.bf16.msra.mxu0 0
  %1095 = vmatpush.bf16.msra.mxu0 0
  %1096 = vmatpush.bf16.msra.mxu0 0
  %1097 = vmatpush.bf16.msra.mxu0 0
  %1098 = vmatpush.bf16.msra.mxu0 0
  %1099 = vmatpush.bf16.msra.mxu0 0
  %1100 = vmatpush.bf16.msra.mxu0 0
  %1101 = vmatpush.bf16.msra.mxu0 %v1047
  %1102 = vmatmul.bf16.gmra.mxu0 %v1053
  %v1103 = vpop.f32.mrf.mxu0
  %v1104 = vadd.f32 0.0, %v1103
  %v1105 = vpop.f32.mrf.mxu0
  %1106 = vdwg.mxu0
  %v1107 = vadd.f32 %v983, %v1065
  %v1108 = vadd.f32 %v984, %v1078
  %v1109 = vadd.f32 %v985, %v1091
  %v1110 = vadd.f32 %v986, %v1104
  %s1111 = scalar_lea.vmem %s7, 28
  %v1112 = vld [vmem:[%s1111] sm:$0xf]
  %v1114 = vperm.slane %v1112, 0
  %v1115 = vperm.slane %v1112, 1
  %v1116 = vperm.slane %v1112, 2
  %v1117 = vperm.slane %v1112, 3
  %1118 = vrot.lane.b32.xlu0 %v1114, 16
  %v1119 = vpop.permute.xlu0 %1118
  %1120 = vrot.lane.b32.xlu0 %v1115, 16
  %v1121 = vpop.permute.xlu0 %1120
  %1122 = vrot.lane.b32.xlu0 %v1116, 16
  %v1123 = vpop.permute.xlu0 %1122
  %1124 = vrot.lane.b32.xlu0 %v1117, 16
  %v1125 = vpop.permute.xlu0 %1124
  %v1126 = vsel %vm386, %v1119, %v1121
  %v1127 = vsel %vm386, %v1121, %v1123
  %v1128 = vsel %vm386, %v1123, %v1125
  %v1134 = vmul.f32 %v853, %v1119
  %v1135 = vmul.f32 %v854, %v1126
  %v1136 = vmul.f32 %v855, %v1127
  %v1137 = vmul.f32 %v856, %v1128
  %v1138 = vmul.f32 %v857, %v1125
  %v1139 = vmul.f32 %v858, %v1119
  %v1140 = vmul.f32 %v859, %v1126
  %v1141 = vmul.f32 %v860, %v1127
  %v1142 = vmul.f32 %v861, %v1128
  %v1143 = vmul.f32 %v862, %v1125
  %s1144 = scalar_lea.vmem %s6, 28
  %v1145 = vld [vmem:[%s1144] sm:$0xf]
  %v1146 = vpack.c.bf16 %v1139, %v1134
  %v1147 = vpack.c.bf16 %v1140, %v1135
  %v1148 = vpack.c.bf16 %v1141, %v1136
  %v1149 = vpack.c.bf16 %v1142, %v1137
  %v1150 = vpack.c.bf16 %v1143, %v1138
  %1156 = vrot.lane.b32.xlu0 %v1146, 112
  %v1157 = vpop.permute.xlu0 %1156
  %1158 = vrot.lane.b32.xlu0 %v1147, 112
  %v1159 = vpop.permute.xlu0 %1158
  %1160 = vrot.lane.b32.xlu0 %v1148, 112
  %v1161 = vpop.permute.xlu0 %1160
  %1162 = vrot.lane.b32.xlu0 %v1149, 112
  %v1163 = vpop.permute.xlu0 %1162
  %1164 = vrot.lane.b32.xlu0 %v1150, 112
  %v1165 = vpop.permute.xlu0 %1164
  %vm1166 = vcmask 916480
  %v1167 = vsel %vm1166, %v1157, %v1159
  %v1168 = vsel %vm1166, %v1159, %v1161
  %v1169 = vsel %vm1166, %v1161, %v1163
  %v1170 = vsel %vm1166, %v1163, %v1165
  %v1176 = vsel %vm386, %v1145, 0
  %1178 = vmatpush.bf16.msra.mxu0 0
  %1179 = vmatpush.bf16.msra.mxu0 0
  %1180 = vmatpush.bf16.msra.mxu0 0
  %1181 = vmatpush.bf16.msra.mxu0 0
  %1182 = vmatpush.bf16.msra.mxu0 0
  %1183 = vmatpush.bf16.msra.mxu0 0
  %1184 = vmatpush.bf16.msra.mxu0 0
  %1185 = vmatpush.bf16.msra.mxu0 %v1167
  %1186 = vmatmul.bf16.gmra.mxu0 %v1176
  %v1187 = vpop.f32.mrf.mxu0
  %v1188 = vadd.f32 0.0, %v1187
  %v1189 = vpop.f32.mrf.mxu0
  %1190 = vdwg.mxu0
  %1191 = vmatpush.bf16.msra.mxu0 0
  %1192 = vmatpush.bf16.msra.mxu0 0
  %1193 = vmatpush.bf16.msra.mxu0 0
  %1194 = vmatpush.bf16.msra.mxu0 0
  %1195 = vmatpush.bf16.msra.mxu0 0
  %1196 = vmatpush.bf16.msra.mxu0 0
  %1197 = vmatpush.bf16.msra.mxu0 0
  %1198 = vmatpush.bf16.msra.mxu0 %v1168
  %1199 = vmatmul.bf16.gmra.mxu0 %v1176
  %v1200 = vpop.f32.mrf.mxu0
  %v1201 = vadd.f32 0.0, %v1200
  %v1202 = vpop.f32.mrf.mxu0
  %1203 = vdwg.mxu0
  %1204 = vmatpush.bf16.msra.mxu0 0
  %1205 = vmatpush.bf16.msra.mxu0 0
  %1206 = vmatpush.bf16.msra.mxu0 0
  %1207 = vmatpush.bf16.msra.mxu0 0
  %1208 = vmatpush.bf16.msra.mxu0 0
  %1209 = vmatpush.bf16.msra.mxu0 0
  %1210 = vmatpush.bf16.msra.mxu0 0
  %1211 = vmatpush.bf16.msra.mxu0 %v1169
  %1212 = vmatmul.bf16.gmra.mxu0 %v1176
  %v1213 = vpop.f32.mrf.mxu0
  %v1214 = vadd.f32 0.0, %v1213
  %v1215 = vpop.f32.mrf.mxu0
  %1216 = vdwg.mxu0
  %1217 = vmatpush.bf16.msra.mxu0 0
  %1218 = vmatpush.bf16.msra.mxu0 0
  %1219 = vmatpush.bf16.msra.mxu0 0
  %1220 = vmatpush.bf16.msra.mxu0 0
  %1221 = vmatpush.bf16.msra.mxu0 0
  %1222 = vmatpush.bf16.msra.mxu0 0
  %1223 = vmatpush.bf16.msra.mxu0 0
  %1224 = vmatpush.bf16.msra.mxu0 %v1170
  %1225 = vmatmul.bf16.gmra.mxu0 %v1176
  %v1226 = vpop.f32.mrf.mxu0
  %v1227 = vadd.f32 0.0, %v1226
  %v1228 = vpop.f32.mrf.mxu0
  %1229 = vdwg.mxu0
  %v1230 = vadd.f32 %v1107, %v1188
  %v1231 = vadd.f32 %v1108, %v1201
  %v1232 = vadd.f32 %v1109, %v1214
  %v1233 = vadd.f32 %v1110, %v1227
  %s1234 = scalar_lea.vmem %s7, 32
  %v1235 = vld [vmem:[%s1234] sm:$0xf]
  %v1237 = vperm.slane %v1235, 0
  %v1238 = vperm.slane %v1235, 1
  %v1239 = vperm.slane %v1235, 2
  %v1240 = vperm.slane %v1235, 3
  %1241 = vrot.lane.b32.xlu0 %v1237, 17
  %v1242 = vpop.permute.xlu0 %1241
  %1243 = vrot.lane.b32.xlu0 %v1238, 17
  %v1244 = vpop.permute.xlu0 %1243
  %1245 = vrot.lane.b32.xlu0 %v1239, 17
  %v1246 = vpop.permute.xlu0 %1245
  %1247 = vrot.lane.b32.xlu0 %v1240, 17
  %v1248 = vpop.permute.xlu0 %1247
  %vm1249 = vcmask 138240
  %v1250 = vsel %vm1249, %v1242, %v1244
  %v1251 = vsel %vm1249, %v1244, %v1246
  %v1252 = vsel %vm1249, %v1246, %v1248
  %v1258 = vmul.f32 %v853, %v1242
  %v1259 = vmul.f32 %v854, %v1250
  %v1260 = vmul.f32 %v855, %v1251
  %v1261 = vmul.f32 %v856, %v1252
  %v1262 = vmul.f32 %v857, %v1248
  %v1263 = vmul.f32 %v858, %v1242
  %v1264 = vmul.f32 %v859, %v1250
  %v1265 = vmul.f32 %v860, %v1251
  %v1266 = vmul.f32 %v861, %v1252
  %v1267 = vmul.f32 %v862, %v1248
  %s1268 = scalar_lea.vmem %s6, 32
  %v1269 = vld [vmem:[%s1268] sm:$0xf]
  %v1270 = vpack.c.bf16 %v1263, %v1258
  %v1271 = vpack.c.bf16 %v1264, %v1259
  %v1272 = vpack.c.bf16 %v1265, %v1260
  %v1273 = vpack.c.bf16 %v1266, %v1261
  %v1274 = vpack.c.bf16 %v1267, %v1262
  %1280 = vrot.lane.b32.xlu0 %v1270, 111
  %v1281 = vpop.permute.xlu0 %1280
  %1282 = vrot.lane.b32.xlu0 %v1271, 111
  %v1283 = vpop.permute.xlu0 %1282
  %1284 = vrot.lane.b32.xlu0 %v1272, 111
  %v1285 = vpop.permute.xlu0 %1284
  %1286 = vrot.lane.b32.xlu0 %v1273, 111
  %v1287 = vpop.permute.xlu0 %1286
  %1288 = vrot.lane.b32.xlu0 %v1274, 111
  %v1289 = vpop.permute.xlu0 %1288
  %vm1290 = vcmask 908288
  %v1291 = vsel %vm1290, %v1281, %v1283
  %v1292 = vsel %vm1290, %v1283, %v1285
  %v1293 = vsel %vm1290, %v1285, %v1287
  %v1294 = vsel %vm1290, %v1287, %v1289
  %v1300 = vsel %vm386, %v1269, 0
  %1302 = vmatpush.bf16.msra.mxu0 0
  %1303 = vmatpush.bf16.msra.mxu0 0
  %1304 = vmatpush.bf16.msra.mxu0 0
  %1305 = vmatpush.bf16.msra.mxu0 0
  %1306 = vmatpush.bf16.msra.mxu0 0
  %1307 = vmatpush.bf16.msra.mxu0 0
  %1308 = vmatpush.bf16.msra.mxu0 0
  %1309 = vmatpush.bf16.msra.mxu0 %v1291
  %1310 = vmatmul.bf16.gmra.mxu0 %v1300
  %v1311 = vpop.f32.mrf.mxu0
  %v1312 = vadd.f32 0.0, %v1311
  %v1313 = vpop.f32.mrf.mxu0
  %1314 = vdwg.mxu0
  %1315 = vmatpush.bf16.msra.mxu0 0
  %1316 = vmatpush.bf16.msra.mxu0 0
  %1317 = vmatpush.bf16.msra.mxu0 0
  %1318 = vmatpush.bf16.msra.mxu0 0
  %1319 = vmatpush.bf16.msra.mxu0 0
  %1320 = vmatpush.bf16.msra.mxu0 0
  %1321 = vmatpush.bf16.msra.mxu0 0
  %1322 = vmatpush.bf16.msra.mxu0 %v1292
  %1323 = vmatmul.bf16.gmra.mxu0 %v1300
  %v1324 = vpop.f32.mrf.mxu0
  %v1325 = vadd.f32 0.0, %v1324
  %v1326 = vpop.f32.mrf.mxu0
  %1327 = vdwg.mxu0
  %1328 = vmatpush.bf16.msra.mxu0 0
  %1329 = vmatpush.bf16.msra.mxu0 0
  %1330 = vmatpush.bf16.msra.mxu0 0
  %1331 = vmatpush.bf16.msra.mxu0 0
  %1332 = vmatpush.bf16.msra.mxu0 0
  %1333 = vmatpush.bf16.msra.mxu0 0
  %1334 = vmatpush.bf16.msra.mxu0 0
  %1335 = vmatpush.bf16.msra.mxu0 %v1293
  %1336 = vmatmul.bf16.gmra.mxu0 %v1300
  %v1337 = vpop.f32.mrf.mxu0
  %v1338 = vadd.f32 0.0, %v1337
  %v1339 = vpop.f32.mrf.mxu0
  %1340 = vdwg.mxu0
  %1341 = vmatpush.bf16.msra.mxu0 0
  %1342 = vmatpush.bf16.msra.mxu0 0
  %1343 = vmatpush.bf16.msra.mxu0 0
  %1344 = vmatpush.bf16.msra.mxu0 0
  %1345 = vmatpush.bf16.msra.mxu0 0
  %1346 = vmatpush.bf16.msra.mxu0 0
  %1347 = vmatpush.bf16.msra.mxu0 0
  %1348 = vmatpush.bf16.msra.mxu0 %v1294
  %1349 = vmatmul.bf16.gmra.mxu0 %v1300
  %v1350 = vpop.f32.mrf.mxu0
  %v1351 = vadd.f32 0.0, %v1350
  %v1352 = vpop.f32.mrf.mxu0
  %1353 = vdwg.mxu0
  %v1354 = vadd.f32 %v1230, %v1312
  %v1355 = vadd.f32 %v1231, %v1325
  %v1356 = vadd.f32 %v1232, %v1338
  %v1357 = vadd.f32 %v1233, %v1351
  %1358 = vst [vmem:[%s30] sm:$0xff] %v1354
  %1359 = vst [vmem:[%s30 + $0x8] sm:$0xff] %v1355
  %1360 = vst [vmem:[%s30 + $0x10] sm:$0xff] %v1356
  %1361 = vst [vmem:[%s30 + $0x18] sm:$0xff] %v1357
  %s1362 = scalar_lea.vmem %s8, 96
  // Predicated region
  $region34: #{densenet_forward.15} parent=0 // pred_check
    _
  $region35: #{densenet_forward.15} parent=0 // pred_check_branch
    %1364 = sbr.rel (0) target = $region37
  $region36: #{densenet_forward.15} parent=0 // pred_region
    _
  $region37: #{densenet_forward.15} parent=0 // pred_fallthru
    _
  // Predicated region
  $region38: #{densenet_forward.15} parent=0 // pred_check
    _
  $region39: #{densenet_forward.15} parent=0 // pred_check_branch
    %1366 = sbr.rel (0) target = $region41
  $region40: #{densenet_forward.15} parent=0 // pred_region
    %s1367 = scalar_lea.vmem %s8, 96
  $region41: #{densenet_forward.15} parent=0 // pred_fallthru
    _

// kernel: densenet_forward.19
$region0: #{densenet_forward.19}
  #allocation0 [shape = 'u32[]', space=smem, size = 0x4, offset = 0x4, fixed_abs, tag = 'smem constant byte address 0x4 - core index']
  #allocation1 [shape = 'u32[72,128]{1,0:T(1,128)}', space=vmem, size = 0x9000, scoped, tag = 'internal scratch']
  %s0 = inlined_call_operand.vmem [shape: f32[32,128], index: 0, kind: input, shape index: {}]
  %s1 = inlined_call_operand.vmem [shape: f32[32,1], index: 1, kind: input, shape index: {}]
  %s2 = inlined_call_operand.vmem [shape: f32[32,1], index: 2, kind: input, shape index: {}]
  %s3 = inlined_call_operand.vmem [shape: bf16[16,32], index: 3, kind: input, shape index: {}]
  %s4 = inlined_call_operand.vmem [shape: f32[16,128], index: 4, kind: output, shape index: {}]
  %s5 = sld [smem:[#allocation0]]
  $region26: #{densenet_forward.19} parent=0
    _
  %s7 = ssub.s32 1, %s5
  %s8 = scalar_select 0, %s7, %s5
  // Predicated region
  $region2: #{densenet_forward.19} parent=0 // pred_check
    _
  $region3: #{densenet_forward.19} parent=0 // pred_check_branch
    %10 = sbr.rel (0) target = $region5
  $region4: #{densenet_forward.19} parent=0 // pred_region
    _
  $region5: #{densenet_forward.19} parent=0 // pred_fallthru
    _
  // Predicated region
  $region6: #{densenet_forward.19} parent=0 // pred_check
    _
  $region7: #{densenet_forward.19} parent=0 // pred_check_branch
    %12 = sbr.rel (0) target = $region9
  $region8: #{densenet_forward.19} parent=0 // pred_region
    _
  $region9: #{densenet_forward.19} parent=0 // pred_fallthru
    _
  // Predicated region
  $region10: #{densenet_forward.19} parent=0 // pred_check
    _
  $region11: #{densenet_forward.19} parent=0 // pred_check_branch
    %14 = sbr.rel (0) target = $region13
  $region12: #{densenet_forward.19} parent=0 // pred_region
    _
  $region13: #{densenet_forward.19} parent=0 // pred_fallthru
    _
  // Predicated region
  $region14: #{densenet_forward.19} parent=0 // pred_check
    _
  $region15: #{densenet_forward.19} parent=0 // pred_check_branch
    %16 = sbr.rel (0) target = $region17
  $region16: #{densenet_forward.19} parent=0 // pred_region
    _
  $region17: #{densenet_forward.19} parent=0 // pred_fallthru
    _
  %v18 = vld [vmem:[%s0] sm:$0xff]
  %v19 = vld [vmem:[%s0 + $0x8] sm:$0xff]
  %v20 = vld [vmem:[%s0 + $0x10] sm:$0xff]
  %v21 = vld [vmem:[%s0 + $0x18] sm:$0xff]
  %v22 = vld [vmem:[%s1] sm:$0xff]
  %v23 = vld [vmem:[%s1 + $0x8] sm:$0xff]
  %v24 = vld [vmem:[%s1 + $0x10] sm:$0xff]
  %v25 = vld [vmem:[%s1 + $0x18] sm:$0xff]
  %27 = vset.pattern.permute.xlu0 0
  %28 = vperm.xlu0 %27, %v22
  %v29 = vpop.permute.xlu0 %28
  %32 = vset.pattern.permute.xlu0 0
  %33 = vperm.xlu0 %32, %v23
  %v34 = vpop.permute.xlu0 %33
  %37 = vset.pattern.permute.xlu0 0
  %38 = vperm.xlu0 %37, %v24
  %v39 = vpop.permute.xlu0 %38
  %42 = vset.pattern.permute.xlu0 0
  %43 = vperm.xlu0 %42, %v25
  %v44 = vpop.permute.xlu0 %43
  %v46 = vmul.f32 %v18, %v29
  %v47 = vmul.f32 %v19, %v34
  %v48 = vmul.f32 %v20, %v39
  %v49 = vmul.f32 %v21, %v44
  %v50 = vld [vmem:[%s2] sm:$0xff]
  %v51 = vld [vmem:[%s2 + $0x8] sm:$0xff]
  %v52 = vld [vmem:[%s2 + $0x10] sm:$0xff]
  %v53 = vld [vmem:[%s2 + $0x18] sm:$0xff]
  %55 = vset.pattern.permute.xlu0 0
  %56 = vperm.xlu0 %55, %v50
  %v57 = vpop.permute.xlu0 %56
  %60 = vset.pattern.permute.xlu0 0
  %61 = vperm.xlu0 %60, %v51
  %v62 = vpop.permute.xlu0 %61
  %65 = vset.pattern.permute.xlu0 0
  %66 = vperm.xlu0 %65, %v52
  %v67 = vpop.permute.xlu0 %66
  %70 = vset.pattern.permute.xlu0 0
  %71 = vperm.xlu0 %70, %v53
  %v72 = vpop.permute.xlu0 %71
  %v74 = vadd.f32 %v46, %v57
  %v75 = vadd.f32 %v47, %v62
  %v76 = vadd.f32 %v48, %v67
  %v77 = vadd.f32 %v49, %v72
  %v78 = vmax.f32 %v74, 0.0
  %v79 = vmax.f32 %v75, 0.0
  %v80 = vmax.f32 %v76, 0.0
  %v81 = vmax.f32 %v77, 0.0
  %v82 = vld [vmem:[%s3] sm:$0xf]
  %v83 = vld [vmem:[%s3 + $0x4] sm:$0xf]
  %v84 = vpack.c.bf16 %v79, %v78
  %v85 = vpack.c.bf16 %v81, %v80
  %v88 = vunpack.c.l.b16 %v82
  %v89 = vunpack.c.l.b16 %v83
  %v90 = vpack.c.b16 %v89, %v88
  %vm91 = vcmask 261120
  %v93 = vsel %vm91, %v90, 0
  %95 = vmatpush.bf16.msra.mxu0 0
  %96 = vmatpush.bf16.msra.mxu0 0
  %97 = vmatpush.bf16.msra.mxu0 0
  %98 = vmatpush.bf16.msra.mxu0 0
  %99 = vmatpush.bf16.msra.mxu0 0
  %100 = vmatpush.bf16.msra.mxu0 0
  %101 = vmatpush.bf16.msra.mxu0 %v85
  %102 = vmatpush.bf16.msra.mxu0 %v84
  %103 = vmatmul.bf16.gmra.mxu0 %v93
  %v104 = vpop.f32.mrf.mxu0
  %v105 = vadd.f32 0.0, %v104
  %v106 = vpop.f32.mrf.mxu0
  %v107 = vadd.f32 0.0, %v106
  %108 = vdwg.mxu0
  %109 = vst [vmem:[%s4] sm:$0xff] %v105
  %110 = vst [vmem:[%s4 + $0x8] sm:$0xff] %v107
  // Predicated region
  $region18: #{densenet_forward.19} parent=0 // pred_check
    _
  $region19: #{densenet_forward.19} parent=0 // pred_check_branch
    %112 = sbr.rel (0) target = $region21
  $region20: #{densenet_forward.19} parent=0 // pred_region
    _
  $region21: #{densenet_forward.19} parent=0 // pred_fallthru
    _
  // Predicated region
  $region22: #{densenet_forward.19} parent=0 // pred_check
    _
  $region23: #{densenet_forward.19} parent=0 // pred_check_branch
    %114 = sbr.rel (0) target = $region25
  $region24: #{densenet_forward.19} parent=0 // pred_region
    _
  $region25: #{densenet_forward.19} parent=0 // pred_fallthru
    _

// kernel: densenet_forward.17
$region0: #{densenet_forward.17}
  #allocation0 [shape = 'u32[]', space=smem, size = 0x4, offset = 0x4, fixed_abs, tag = 'smem constant byte address 0x4 - core index']
  #allocation1 [shape = 'u32[72,128]{1,0:T(1,128)}', space=vmem, size = 0x9000, scoped, tag = 'internal scratch']
  #allocation2 [shape = 'f32[16,384]{1,0:T(8,128)}', space=vmem, size = 0x6000, scoped, tag = 'scratch operand']
  %s0 = inlined_call_operand.vmem [shape: f32[32,128], index: 0, kind: input, shape index: {}, may-alias: {0,8}]
  %s1 = inlined_call_operand.vmem [shape: f32[16,1], index: 1, kind: input, shape index: {}]
  %s2 = inlined_call_operand.vmem [shape: f32[16,1], index: 2, kind: input, shape index: {}]
  %s3 = inlined_call_operand.vmem [shape: bf16[16,16], index: 3, kind: input, shape index: {}]
  %s4 = inlined_call_operand.vmem [shape: f32[16,1], index: 4, kind: input, shape index: {}]
  %s5 = inlined_call_operand.vmem [shape: f32[16,1], index: 5, kind: input, shape index: {}]
  %s6 = inlined_call_operand.vmem [shape: bf16[9,8,16], index: 6, kind: input, shape index: {}]
  %s7 = inlined_call_operand.vmem [shape: f32[9,1,128], index: 7, kind: input, shape index: {}]
  %s8 = inlined_call_operand.vmem [shape: f32[32,128], index: 8, kind: output, shape index: {}, may-alias: {0,8}]
  %s9 = sld [smem:[#allocation0]]
  $region42: #{densenet_forward.17} parent=0
    _
  %s11 = ssub.s32 1, %s9
  %s12 = scalar_select 0, %s11, %s9
  // Predicated region
  $region2: #{densenet_forward.17} parent=0 // pred_check
    _
  $region3: #{densenet_forward.17} parent=0 // pred_check_branch
    %14 = sbr.rel (0) target = $region5
  $region4: #{densenet_forward.17} parent=0 // pred_region
    _
  $region5: #{densenet_forward.17} parent=0 // pred_fallthru
    _
  // Predicated region
  $region6: #{densenet_forward.17} parent=0 // pred_check
    _
  $region7: #{densenet_forward.17} parent=0 // pred_check_branch
    %16 = sbr.rel (0) target = $region9
  $region8: #{densenet_forward.17} parent=0 // pred_region
    _
  $region9: #{densenet_forward.17} parent=0 // pred_fallthru
    _
  // Predicated region
  $region10: #{densenet_forward.17} parent=0 // pred_check
    _
  $region11: #{densenet_forward.17} parent=0 // pred_check_branch
    %18 = sbr.rel (0) target = $region13
  $region12: #{densenet_forward.17} parent=0 // pred_region
    _
  $region13: #{densenet_forward.17} parent=0 // pred_fallthru
    _
  // Predicated region
  $region14: #{densenet_forward.17} parent=0 // pred_check
    _
  $region15: #{densenet_forward.17} parent=0 // pred_check_branch
    %20 = sbr.rel (0) target = $region17
  $region16: #{densenet_forward.17} parent=0 // pred_region
    _
  $region17: #{densenet_forward.17} parent=0 // pred_fallthru
    _
  // Predicated region
  $region18: #{densenet_forward.17} parent=0 // pred_check
    _
  $region19: #{densenet_forward.17} parent=0 // pred_check_branch
    %22 = sbr.rel (0) target = $region21
  $region20: #{densenet_forward.17} parent=0 // pred_region
    _
  $region21: #{densenet_forward.17} parent=0 // pred_fallthru
    _
  // Predicated region
  $region22: #{densenet_forward.17} parent=0 // pred_check
    _
  $region23: #{densenet_forward.17} parent=0 // pred_check_branch
    %24 = sbr.rel (0) target = $region25
  $region24: #{densenet_forward.17} parent=0 // pred_region
    _
  $region25: #{densenet_forward.17} parent=0 // pred_fallthru
    _
  // Predicated region
  $region26: #{densenet_forward.17} parent=0 // pred_check
    _
  $region27: #{densenet_forward.17} parent=0 // pred_check_branch
    %26 = sbr.rel (0) target = $region29
  $region28: #{densenet_forward.17} parent=0 // pred_region
    _
  $region29: #{densenet_forward.17} parent=0 // pred_fallthru
    _
  // Predicated region
  $region30: #{densenet_forward.17} parent=0 // pred_check
    _
  $region31: #{densenet_forward.17} parent=0 // pred_check_branch
    %28 = sbr.rel (0) target = $region33
  $region32: #{densenet_forward.17} parent=0 // pred_region
    _
  $region33: #{densenet_forward.17} parent=0 // pred_fallthru
    _
  %s29 = scalar_lea.vmem %s8, 16
  %s30 = scalar_lea.vmem %s8, 16
  %v32 = vld [vmem:[%s0] sm:$0xff]
  %v33 = vld [vmem:[%s0 + $0x8] sm:$0xff]
  %v34 = vld [vmem:[%s1] sm:$0xff]
  %v35 = vld [vmem:[%s1 + $0x8] sm:$0xff]
  %37 = vset.pattern.permute.xlu0 0
  %38 = vperm.xlu0 %37, %v34
  %v39 = vpop.permute.xlu0 %38
  %42 = vset.pattern.permute.xlu0 0
  %43 = vperm.xlu0 %42, %v35
  %v44 = vpop.permute.xlu0 %43
  %v46 = vmul.f32 %v32, %v39
  %v47 = vmul.f32 %v33, %v44
  %v48 = vld [vmem:[%s2] sm:$0xff]
  %v49 = vld [vmem:[%s2 + $0x8] sm:$0xff]
  %51 = vset.pattern.permute.xlu0 0
  %52 = vperm.xlu0 %51, %v48
  %v53 = vpop.permute.xlu0 %52
  %56 = vset.pattern.permute.xlu0 0
  %57 = vperm.xlu0 %56, %v49
  %v58 = vpop.permute.xlu0 %57
  %v60 = vadd.f32 %v46, %v53
  %v61 = vadd.f32 %v47, %v58
  %v62 = vmax.f32 %v60, 0.0
  %v63 = vmax.f32 %v61, 0.0
  %v64 = vld [vmem:[%s3] sm:$0xf]
  %v65 = vld [vmem:[%s3 + $0x4] sm:$0xf]
  %v66 = vpack.c.bf16 %v63, %v62
  %v69 = vunpack.c.l.b16 %v64
  %v70 = vunpack.c.l.b16 %v65
  %v71 = vpack.c.b16 %v70, %v69
  %vm72 = vcmask 130048
  %v74 = vsel %vm72, %v71, 0
  %76 = vmatpush.bf16.msra.mxu0 0
  %77 = vmatpush.bf16.msra.mxu0 0
  %78 = vmatpush.bf16.msra.mxu0 0
  %79 = vmatpush.bf16.msra.mxu0 0
  %80 = vmatpush.bf16.msra.mxu0 0
  %81 = vmatpush.bf16.msra.mxu0 0
  %82 = vmatpush.bf16.msra.mxu0 0
  %83 = vmatpush.bf16.msra.mxu0 %v66
  %84 = vmatmul.bf16.gmra.mxu0 %v74
  %v85 = vpop.f32.mrf.mxu0
  %v86 = vadd.f32 0.0, %v85
  %v87 = vpop.f32.mrf.mxu0
  %v88 = vadd.f32 0.0, %v87
  %89 = vdwg.mxu0
  %v90 = vld [vmem:[%s4] sm:$0xff]
  %v91 = vld [vmem:[%s4 + $0x8] sm:$0xff]
  %93 = vset.pattern.permute.xlu0 0
  %94 = vperm.xlu0 %93, %v90
  %v95 = vpop.permute.xlu0 %94
  %98 = vset.pattern.permute.xlu0 0
  %99 = vperm.xlu0 %98, %v91
  %v100 = vpop.permute.xlu0 %99
  %v102 = vmul.f32 %v86, %v95
  %v103 = vmul.f32 %v88, %v100
  %v104 = vld [vmem:[%s5] sm:$0xff]
  %v105 = vld [vmem:[%s5 + $0x8] sm:$0xff]
  %107 = vset.pattern.permute.xlu0 0
  %108 = vperm.xlu0 %107, %v104
  %v109 = vpop.permute.xlu0 %108
  %112 = vset.pattern.permute.xlu0 0
  %113 = vperm.xlu0 %112, %v105
  %v114 = vpop.permute.xlu0 %113
  %v116 = vadd.f32 %v102, %v109
  %v117 = vadd.f32 %v103, %v114
  %v118 = vmax.f32 %v116, 0.0
  %v119 = vmax.f32 %v117, 0.0
  %120 = vst [vmem:[#allocation2] sm:$0xff] 0.0
  %121 = vst [vmem:[#allocation2 + $0x8] sm:$0xff] 0.0
  %122 = vst [vmem:[#allocation2 + $0x10] sm:$0xff] 0.0
  %123 = vst [vmem:[#allocation2 + $0x18] sm:$0xff] 0.0
  %124 = vst [vmem:[#allocation2 + $0x20] sm:$0xff] 0.0
  %125 = vst [vmem:[#allocation2 + $0x28] sm:$0xff] 0.0
  %126 = vst [vmem:[#allocation2 + $0x8] sm:$0xff] %v118
  %127 = vst [vmem:[#allocation2 + $0x20] sm:$0xff] %v119
  %v128 = vld [vmem:[#allocation2] sm:$0xff]
  %v129 = vld [vmem:[#allocation2 + $0x8] sm:$0xff]
  %v130 = vld [vmem:[#allocation2 + $0x18] sm:$0xff]
  %v131 = vld [vmem:[#allocation2 + $0x20] sm:$0xff]
  %v132 = vld [vmem:[%s7] sm:$0x1]
  %v134 = vperm.slane %v132, 0
  %135 = vrot.lane.b32.xlu0 %v134, 119
  %v136 = vpop.permute.xlu0 %135
  %v138 = vmul.f32 %v128, %v136
  %v139 = vmul.f32 %v129, %v136
  %v140 = vmul.f32 %v130, %v136
  %v141 = vmul.f32 %v131, %v136
  %v142 = vld [vmem:[%s6] sm:$0xf]
  %v143 = vpack.c.bf16 %v140, %v138
  %v144 = vpack.c.bf16 %v141, %v139
  %s145 = scalar_lea.vmem %s7, 1
  %v146 = vld [vmem:[%s145] sm:$0x1]
  %v148 = vperm.slane %v146, 0
  %149 = vrot.lane.b32.xlu0 %v148, 120
  %v150 = vpop.permute.xlu0 %149
  %v152 = vmul.f32 %v128, %v150
  %v153 = vmul.f32 %v129, %v150
  %v154 = vmul.f32 %v130, %v150
  %v155 = vmul.f32 %v131, %v150
  %s156 = scalar_lea.vmem %s6, 4
  %v157 = vld [vmem:[%s156] sm:$0xf]
  %v158 = vpack.c.bf16 %v154, %v152
  %v159 = vpack.c.bf16 %v155, %v153
  %162 = vrot.lane.b32.xlu0 %v158, 8
  %v163 = vpop.permute.xlu0 %162
  %164 = vrot.lane.b32.xlu0 %v159, 8
  %v165 = vpop.permute.xlu0 %164
  %vm166 = vcmask 64512
  %v167 = vsel %vm166, %v163, %v165
  %v170 = vsel %vm72, %v157, 0
  %172 = vmatpush.bf16.msra.mxu0 0
  %173 = vmatpush.bf16.msra.mxu0 0
  %174 = vmatpush.bf16.msra.mxu0 0
  %175 = vmatpush.bf16.msra.mxu0 0
  %176 = vmatpush.bf16.msra.mxu0 0
  %177 = vmatpush.bf16.msra.mxu0 0
  %178 = vmatpush.bf16.msra.mxu0 0
  %179 = vmatpush.bf16.msra.mxu0 %v167
  %180 = vmatmul.bf16.gmra.mxu0 %v170
  %v181 = vpop.f32.mrf.mxu0
  %v182 = vadd.f32 0.0, %v181
  %v183 = vpop.f32.mrf.mxu0
  %184 = vdwg.mxu0
  %187 = vrot.lane.b32.xlu0 %v143, 9
  %v188 = vpop.permute.xlu0 %187
  %189 = vrot.lane.b32.xlu0 %v144, 9
  %v190 = vpop.permute.xlu0 %189
  %vm191 = vcmask 72704
  %v192 = vsel %vm191, %v188, %v190
  %v195 = vsel %vm72, %v142, 0
  %197 = vmatpush.bf16.msra.mxu0 0
  %198 = vmatpush.bf16.msra.mxu0 0
  %199 = vmatpush.bf16.msra.mxu0 0
  %200 = vmatpush.bf16.msra.mxu0 0
  %201 = vmatpush.bf16.msra.mxu0 0
  %202 = vmatpush.bf16.msra.mxu0 0
  %203 = vmatpush.bf16.msra.mxu0 0
  %204 = vmatpush.bf16.msra.mxu0 %v192
  %205 = vmatmul.bf16.gmra.mxu0 %v195
  %v206 = vpop.f32.mrf.mxu0
  %v207 = vadd.f32 %v182, %v206
  %v208 = vpop.f32.mrf.mxu0
  %209 = vdwg.mxu0
  %s210 = scalar_lea.vmem %s7, 2
  %v211 = vld [vmem:[%s210] sm:$0x1]
  %v213 = vperm.slane %v211, 0
  %214 = vrot.lane.b32.xlu0 %v213, 121
  %v215 = vpop.permute.xlu0 %214
  %v217 = vmul.f32 %v128, %v215
  %v218 = vmul.f32 %v129, %v215
  %v219 = vmul.f32 %v130, %v215
  %v220 = vmul.f32 %v131, %v215
  %s221 = scalar_lea.vmem %s6, 8
  %v222 = vld [vmem:[%s221] sm:$0xf]
  %v223 = vpack.c.bf16 %v219, %v217
  %v224 = vpack.c.bf16 %v220, %v218
  %227 = vrot.lane.b32.xlu0 %v223, 7
  %v228 = vpop.permute.xlu0 %227
  %229 = vrot.lane.b32.xlu0 %v224, 7
  %v230 = vpop.permute.xlu0 %229
  %vm231 = vcmask 56320
  %v232 = vsel %vm231, %v228, %v230
  %v235 = vsel %vm72, %v222, 0
  %237 = vmatpush.bf16.msra.mxu0 0
  %238 = vmatpush.bf16.msra.mxu0 0
  %239 = vmatpush.bf16.msra.mxu0 0
  %240 = vmatpush.bf16.msra.mxu0 0
  %241 = vmatpush.bf16.msra.mxu0 0
  %242 = vmatpush.bf16.msra.mxu0 0
  %243 = vmatpush.bf16.msra.mxu0 0
  %244 = vmatpush.bf16.msra.mxu0 %v232
  %245 = vmatmul.bf16.gmra.mxu0 %v235
  %v246 = vpop.f32.mrf.mxu0
  %v247 = vadd.f32 0.0, %v246
  %v248 = vpop.f32.mrf.mxu0
  %249 = vdwg.mxu0
  %v250 = vadd.f32 %v207, %v247
  %s251 = scalar_lea.vmem %s7, 3
  %v252 = vld [vmem:[%s251] sm:$0x1]
  %v254 = vperm.slane %v252, 0
  %255 = vrot.lane.b32.xlu0 %v254, 127
  %v256 = vpop.permute.xlu0 %255
  %v258 = vmul.f32 %v128, %v256
  %v259 = vmul.f32 %v129, %v256
  %v260 = vmul.f32 %v130, %v256
  %v261 = vmul.f32 %v131, %v256
  %s262 = scalar_lea.vmem %s6, 12
  %v263 = vld [vmem:[%s262] sm:$0xf]
  %v264 = vpack.c.bf16 %v260, %v258
  %v265 = vpack.c.bf16 %v261, %v259
  %268 = vrot.lane.b32.xlu0 %v264, 1
  %v269 = vpop.permute.xlu0 %268
  %270 = vrot.lane.b32.xlu0 %v265, 1
  %v271 = vpop.permute.xlu0 %270
  %vm272 = vcmask 7168
  %v273 = vsel %vm272, %v269, %v271
  %v276 = vsel %vm72, %v263, 0
  %278 = vmatpush.bf16.msra.mxu0 0
  %279 = vmatpush.bf16.msra.mxu0 0
  %280 = vmatpush.bf16.msra.mxu0 0
  %281 = vmatpush.bf16.msra.mxu0 0
  %282 = vmatpush.bf16.msra.mxu0 0
  %283 = vmatpush.bf16.msra.mxu0 0
  %284 = vmatpush.bf16.msra.mxu0 0
  %285 = vmatpush.bf16.msra.mxu0 %v273
  %286 = vmatmul.bf16.gmra.mxu0 %v276
  %v287 = vpop.f32.mrf.mxu0
  %v288 = vadd.f32 0.0, %v287
  %v289 = vpop.f32.mrf.mxu0
  %290 = vdwg.mxu0
  %v291 = vadd.f32 %v250, %v288
  %s292 = scalar_lea.vmem %s7, 4
  %v293 = vld [vmem:[%s292] sm:$0x1]
  %v295 = vperm.slane %v293, 0
  %v297 = vmul.f32 %v129, %v295
  %v298 = vmul.f32 %v131, %v295
  %s299 = scalar_lea.vmem %s6, 16
  %v300 = vld [vmem:[%s299] sm:$0xf]
  %v301 = vpack.c.bf16 %v298, %v297
  %v303 = vsel %vm72, %v300, 0
  %305 = vmatpush.bf16.msra.mxu0 0
  %306 = vmatpush.bf16.msra.mxu0 0
  %307 = vmatpush.bf16.msra.mxu0 0
  %308 = vmatpush.bf16.msra.mxu0 0
  %309 = vmatpush.bf16.msra.mxu0 0
  %310 = vmatpush.bf16.msra.mxu0 0
  %311 = vmatpush.bf16.msra.mxu0 0
  %312 = vmatpush.bf16.msra.mxu0 %v301
  %313 = vmatmul.bf16.gmra.mxu0 %v303
  %v314 = vpop.f32.mrf.mxu0
  %v315 = vadd.f32 0.0, %v314
  %v316 = vpop.f32.mrf.mxu0
  %317 = vdwg.mxu0
  %v318 = vadd.f32 %v291, %v315
  %v319 = vld [vmem:[#allocation2 + $0x8] sm:$0xff]
  %v320 = vld [vmem:[#allocation2 + $0x10] sm:$0xff]
  %v321 = vld [vmem:[#allocation2 + $0x20] sm:$0xff]
  %v322 = vld [vmem:[#allocation2 + $0x28] sm:$0xff]
  %s323 = scalar_lea.vmem %s7, 5
  %v324 = vld [vmem:[%s323] sm:$0x1]
  %v326 = vperm.slane %v324, 0
  %327 = vrot.lane.b32.xlu0 %v326, 1
  %v328 = vpop.permute.xlu0 %327
  %v330 = vmul.f32 %v319, %v328
  %v331 = vmul.f32 %v320, %v328
  %v332 = vmul.f32 %v321, %v328
  %v333 = vmul.f32 %v322, %v328
  %s334 = scalar_lea.vmem %s6, 20
  %v335 = vld [vmem:[%s334] sm:$0xf]
  %v336 = vpack.c.bf16 %v332, %v330
  %v337 = vpack.c.bf16 %v333, %v331
  %340 = vrot.lane.b32.xlu0 %v336, 127
  %v341 = vpop.permute.xlu0 %340
  %342 = vrot.lane.b32.xlu0 %v337, 127
  %v343 = vpop.permute.xlu0 %342
  %vm344 = vcmask 1039360
  %v345 = vsel %vm344, %v341, %v343
  %v348 = vsel %vm72, %v335, 0
  %350 = vmatpush.bf16.msra.mxu0 0
  %351 = vmatpush.bf16.msra.mxu0 0
  %352 = vmatpush.bf16.msra.mxu0 0
  %353 = vmatpush.bf16.msra.mxu0 0
  %354 = vmatpush.bf16.msra.mxu0 0
  %355 = vmatpush.bf16.msra.mxu0 0
  %356 = vmatpush.bf16.msra.mxu0 0
  %357 = vmatpush.bf16.msra.mxu0 %v345
  %358 = vmatmul.bf16.gmra.mxu0 %v348
  %v359 = vpop.f32.mrf.mxu0
  %v360 = vadd.f32 0.0, %v359
  %v361 = vpop.f32.mrf.mxu0
  %362 = vdwg.mxu0
  %v363 = vadd.f32 %v318, %v360
  %s364 = scalar_lea.vmem %s7, 6
  %v365 = vld [vmem:[%s364] sm:$0x1]
  %v367 = vperm.slane %v365, 0
  %368 = vrot.lane.b32.xlu0 %v367, 7
  %v369 = vpop.permute.xlu0 %368
  %v371 = vmul.f32 %v319, %v369
  %v372 = vmul.f32 %v320, %v369
  %v373 = vmul.f32 %v321, %v369
  %v374 = vmul.f32 %v322, %v369
  %s375 = scalar_lea.vmem %s6, 24
  %v376 = vld [vmem:[%s375] sm:$0xf]
  %v377 = vpack.c.bf16 %v373, %v371
  %v378 = vpack.c.bf16 %v374, %v372
  %381 = vrot.lane.b32.xlu0 %v377, 121
  %v382 = vpop.permute.xlu0 %381
  %383 = vrot.lane.b32.xlu0 %v378, 121
  %v384 = vpop.permute.xlu0 %383
  %vm385 = vcmask 990208
  %v386 = vsel %vm385, %v382, %v384
  %v389 = vsel %vm72, %v376, 0
  %391 = vmatpush.bf16.msra.mxu0 0
  %392 = vmatpush.bf16.msra.mxu0 0
  %393 = vmatpush.bf16.msra.mxu0 0
  %394 = vmatpush.bf16.msra.mxu0 0
  %395 = vmatpush.bf16.msra.mxu0 0
  %396 = vmatpush.bf16.msra.mxu0 0
  %397 = vmatpush.bf16.msra.mxu0 0
  %398 = vmatpush.bf16.msra.mxu0 %v386
  %399 = vmatmul.bf16.gmra.mxu0 %v389
  %v400 = vpop.f32.mrf.mxu0
  %v401 = vadd.f32 0.0, %v400
  %v402 = vpop.f32.mrf.mxu0
  %403 = vdwg.mxu0
  %v404 = vadd.f32 %v363, %v401
  %s405 = scalar_lea.vmem %s7, 7
  %v406 = vld [vmem:[%s405] sm:$0x1]
  %v408 = vperm.slane %v406, 0
  %409 = vrot.lane.b32.xlu0 %v408, 8
  %v410 = vpop.permute.xlu0 %409
  %v412 = vmul.f32 %v319, %v410
  %v413 = vmul.f32 %v320, %v410
  %v414 = vmul.f32 %v321, %v410
  %v415 = vmul.f32 %v322, %v410
  %s416 = scalar_lea.vmem %s6, 28
  %v417 = vld [vmem:[%s416] sm:$0xf]
  %v418 = vpack.c.bf16 %v414, %v412
  %v419 = vpack.c.bf16 %v415, %v413
  %422 = vrot.lane.b32.xlu0 %v418, 120
  %v423 = vpop.permute.xlu0 %422
  %424 = vrot.lane.b32.xlu0 %v419, 120
  %v425 = vpop.permute.xlu0 %424
  %vm426 = vcmask 982016
  %v427 = vsel %vm426, %v423, %v425
  %v430 = vsel %vm72, %v417, 0
  %432 = vmatpush.bf16.msra.mxu0 0
  %433 = vmatpush.bf16.msra.mxu0 0
  %434 = vmatpush.bf16.msra.mxu0 0
  %435 = vmatpush.bf16.msra.mxu0 0
  %436 = vmatpush.bf16.msra.mxu0 0
  %437 = vmatpush.bf16.msra.mxu0 0
  %438 = vmatpush.bf16.msra.mxu0 0
  %439 = vmatpush.bf16.msra.mxu0 %v427
  %440 = vmatmul.bf16.gmra.mxu0 %v430
  %v441 = vpop.f32.mrf.mxu0
  %v442 = vadd.f32 0.0, %v441
  %v443 = vpop.f32.mrf.mxu0
  %444 = vdwg.mxu0
  %v445 = vadd.f32 %v404, %v442
  %s446 = scalar_lea.vmem %s7, 8
  %v447 = vld [vmem:[%s446] sm:$0x1]
  %v449 = vperm.slane %v447, 0
  %450 = vrot.lane.b32.xlu0 %v449, 9
  %v451 = vpop.permute.xlu0 %450
  %v453 = vmul.f32 %v319, %v451
  %v454 = vmul.f32 %v320, %v451
  %v455 = vmul.f32 %v321, %v451
  %v456 = vmul.f32 %v322, %v451
  %s457 = scalar_lea.vmem %s6, 32
  %v458 = vld [vmem:[%s457] sm:$0xf]
  %v459 = vpack.c.bf16 %v455, %v453
  %v460 = vpack.c.bf16 %v456, %v454
  %463 = vrot.lane.b32.xlu0 %v459, 119
  %v464 = vpop.permute.xlu0 %463
  %465 = vrot.lane.b32.xlu0 %v460, 119
  %v466 = vpop.permute.xlu0 %465
  %vm467 = vcmask 973824
  %v468 = vsel %vm467, %v464, %v466
  %v471 = vsel %vm72, %v458, 0
  %473 = vmatpush.bf16.msra.mxu0 0
  %474 = vmatpush.bf16.msra.mxu0 0
  %475 = vmatpush.bf16.msra.mxu0 0
  %476 = vmatpush.bf16.msra.mxu0 0
  %477 = vmatpush.bf16.msra.mxu0 0
  %478 = vmatpush.bf16.msra.mxu0 0
  %479 = vmatpush.bf16.msra.mxu0 0
  %480 = vmatpush.bf16.msra.mxu0 %v468
  %481 = vmatmul.bf16.gmra.mxu0 %v471
  %v482 = vpop.f32.mrf.mxu0
  %v483 = vadd.f32 0.0, %v482
  %v484 = vpop.f32.mrf.mxu0
  %485 = vdwg.mxu0
  %v486 = vadd.f32 %v445, %v483
  %487 = vst [vmem:[%s30] sm:$0xff] %v486
  %s488 = scalar_lea.vmem %s8, 16
  // Predicated region
  $region34: #{densenet_forward.17} parent=0 // pred_check
    _
  $region35: #{densenet_forward.17} parent=0 // pred_check_branch
    %490 = sbr.rel (0) target = $region37
  $region36: #{densenet_forward.17} parent=0 // pred_region
    _
  $region37: #{densenet_forward.17} parent=0 // pred_fallthru
    _
  // Predicated region
  $region38: #{densenet_forward.17} parent=0 // pred_check
    _
  $region39: #{densenet_forward.17} parent=0 // pred_check_branch
    %492 = sbr.rel (0) target = $region41
  $region40: #{densenet_forward.17} parent=0 // pred_region
    %s493 = scalar_lea.vmem %s8, 16
  $region41: #{densenet_forward.17} parent=0 // pred_fallthru
    _

// kernel: densenet_forward.18
$region0: #{densenet_forward.18}
  #allocation0 [shape = 'u32[]', space=smem, size = 0x4, offset = 0x4, fixed_abs, tag = 'smem constant byte address 0x4 - core index']
  #allocation1 [shape = 'u32[72,128]{1,0:T(1,128)}', space=vmem, size = 0x9000, scoped, tag = 'internal scratch']
  #allocation2 [shape = 'f32[16,384]{1,0:T(8,128)}', space=vmem, size = 0x6000, scoped, tag = 'scratch operand']
  %s0 = inlined_call_operand.vmem [shape: f32[32,128], index: 0, kind: input, shape index: {}, may-alias: {0,8}]
  %s1 = inlined_call_operand.vmem [shape: f32[24,1], index: 1, kind: input, shape index: {}]
  %s2 = inlined_call_operand.vmem [shape: f32[24,1], index: 2, kind: input, shape index: {}]
  %s3 = inlined_call_operand.vmem [shape: bf16[16,24], index: 3, kind: input, shape index: {}]
  %s4 = inlined_call_operand.vmem [shape: f32[16,1], index: 4, kind: input, shape index: {}]
  %s5 = inlined_call_operand.vmem [shape: f32[16,1], index: 5, kind: input, shape index: {}]
  %s6 = inlined_call_operand.vmem [shape: bf16[9,8,16], index: 6, kind: input, shape index: {}]
  %s7 = inlined_call_operand.vmem [shape: f32[9,1,128], index: 7, kind: input, shape index: {}]
  %s8 = inlined_call_operand.vmem [shape: f32[32,128], index: 8, kind: output, shape index: {}, may-alias: {0,8}]
  %s9 = sld [smem:[#allocation0]]
  $region42: #{densenet_forward.18} parent=0
    _
  %s11 = ssub.s32 1, %s9
  %s12 = scalar_select 0, %s11, %s9
  // Predicated region
  $region2: #{densenet_forward.18} parent=0 // pred_check
    _
  $region3: #{densenet_forward.18} parent=0 // pred_check_branch
    %14 = sbr.rel (0) target = $region5
  $region4: #{densenet_forward.18} parent=0 // pred_region
    _
  $region5: #{densenet_forward.18} parent=0 // pred_fallthru
    _
  // Predicated region
  $region6: #{densenet_forward.18} parent=0 // pred_check
    _
  $region7: #{densenet_forward.18} parent=0 // pred_check_branch
    %16 = sbr.rel (0) target = $region9
  $region8: #{densenet_forward.18} parent=0 // pred_region
    _
  $region9: #{densenet_forward.18} parent=0 // pred_fallthru
    _
  // Predicated region
  $region10: #{densenet_forward.18} parent=0 // pred_check
    _
  $region11: #{densenet_forward.18} parent=0 // pred_check_branch
    %18 = sbr.rel (0) target = $region13
  $region12: #{densenet_forward.18} parent=0 // pred_region
    _
  $region13: #{densenet_forward.18} parent=0 // pred_fallthru
    _
  // Predicated region
  $region14: #{densenet_forward.18} parent=0 // pred_check
    _
  $region15: #{densenet_forward.18} parent=0 // pred_check_branch
    %20 = sbr.rel (0) target = $region17
  $region16: #{densenet_forward.18} parent=0 // pred_region
    _
  $region17: #{densenet_forward.18} parent=0 // pred_fallthru
    _
  // Predicated region
  $region18: #{densenet_forward.18} parent=0 // pred_check
    _
  $region19: #{densenet_forward.18} parent=0 // pred_check_branch
    %22 = sbr.rel (0) target = $region21
  $region20: #{densenet_forward.18} parent=0 // pred_region
    _
  $region21: #{densenet_forward.18} parent=0 // pred_fallthru
    _
  // Predicated region
  $region22: #{densenet_forward.18} parent=0 // pred_check
    _
  $region23: #{densenet_forward.18} parent=0 // pred_check_branch
    %24 = sbr.rel (0) target = $region25
  $region24: #{densenet_forward.18} parent=0 // pred_region
    _
  $region25: #{densenet_forward.18} parent=0 // pred_fallthru
    _
  // Predicated region
  $region26: #{densenet_forward.18} parent=0 // pred_check
    _
  $region27: #{densenet_forward.18} parent=0 // pred_check_branch
    %26 = sbr.rel (0) target = $region29
  $region28: #{densenet_forward.18} parent=0 // pred_region
    _
  $region29: #{densenet_forward.18} parent=0 // pred_fallthru
    _
  // Predicated region
  $region30: #{densenet_forward.18} parent=0 // pred_check
    _
  $region31: #{densenet_forward.18} parent=0 // pred_check_branch
    %28 = sbr.rel (0) target = $region33
  $region32: #{densenet_forward.18} parent=0 // pred_region
    _
  $region33: #{densenet_forward.18} parent=0 // pred_fallthru
    _
  %s29 = scalar_lea.vmem %s8, 24
  %s30 = scalar_lea.vmem %s8, 24
  %v32 = vld [vmem:[%s0] sm:$0xff]
  %v33 = vld [vmem:[%s0 + $0x8] sm:$0xff]
  %v34 = vld [vmem:[%s0 + $0x10] sm:$0xff]
  %v35 = vld [vmem:[%s1] sm:$0xff]
  %v36 = vld [vmem:[%s1 + $0x8] sm:$0xff]
  %v37 = vld [vmem:[%s1 + $0x10] sm:$0xff]
  %39 = vset.pattern.permute.xlu0 0
  %40 = vperm.xlu0 %39, %v35
  %v41 = vpop.permute.xlu0 %40
  %44 = vset.pattern.permute.xlu0 0
  %45 = vperm.xlu0 %44, %v36
  %v46 = vpop.permute.xlu0 %45
  %49 = vset.pattern.permute.xlu0 0
  %50 = vperm.xlu0 %49, %v37
  %v51 = vpop.permute.xlu0 %50
  %v53 = vmul.f32 %v32, %v41
  %v54 = vmul.f32 %v33, %v46
  %v55 = vmul.f32 %v34, %v51
  %v56 = vld [vmem:[%s2] sm:$0xff]
  %v57 = vld [vmem:[%s2 + $0x8] sm:$0xff]
  %v58 = vld [vmem:[%s2 + $0x10] sm:$0xff]
  %60 = vset.pattern.permute.xlu0 0
  %61 = vperm.xlu0 %60, %v56
  %v62 = vpop.permute.xlu0 %61
  %65 = vset.pattern.permute.xlu0 0
  %66 = vperm.xlu0 %65, %v57
  %v67 = vpop.permute.xlu0 %66
  %70 = vset.pattern.permute.xlu0 0
  %71 = vperm.xlu0 %70, %v58
  %v72 = vpop.permute.xlu0 %71
  %v74 = vadd.f32 %v53, %v62
  %v75 = vadd.f32 %v54, %v67
  %v76 = vadd.f32 %v55, %v72
  %v77 = vmax.f32 %v74, 0.0
  %v78 = vmax.f32 %v75, 0.0
  %v79 = vmax.f32 %v76, 0.0
  %v80 = vld [vmem:[%s3] sm:$0xf]
  %v81 = vld [vmem:[%s3 + $0x4] sm:$0xf]
  %v82 = vpack.c.bf16 %v78, %v77
  %v83 = vpack.c.bf16 %v79, %v79
  %v86 = vunpack.c.l.b16 %v80
  %v87 = vunpack.c.l.b16 %v81
  %v88 = vpack.c.b16 %v87, %v86
  %vm89 = vcmask 195584
  %v91 = vsel %vm89, %v88, 0
  %vm93 = vcmask 1043456
  %v95 = vsel %vm93, %v83, 0
  %97 = vmatpush.bf16.msra.mxu0 0
  %98 = vmatpush.bf16.msra.mxu0 0
  %99 = vmatpush.bf16.msra.mxu0 0
  %100 = vmatpush.bf16.msra.mxu0 0
  %101 = vmatpush.bf16.msra.mxu0 0
  %102 = vmatpush.bf16.msra.mxu0 0
  %103 = vmatpush.bf16.msra.mxu0 %v95
  %104 = vmatpush.bf16.msra.mxu0 %v82
  %105 = vmatmul.bf16.gmra.mxu0 %v91
  %v106 = vpop.f32.mrf.mxu0
  %v107 = vadd.f32 0.0, %v106
  %v108 = vpop.f32.mrf.mxu0
  %v109 = vadd.f32 0.0, %v108
  %110 = vdwg.mxu0
  %v111 = vld [vmem:[%s4] sm:$0xff]
  %v112 = vld [vmem:[%s4 + $0x8] sm:$0xff]
  %114 = vset.pattern.permute.xlu0 0
  %115 = vperm.xlu0 %114, %v111
  %v116 = vpop.permute.xlu0 %115
  %119 = vset.pattern.permute.xlu0 0
  %120 = vperm.xlu0 %119, %v112
  %v121 = vpop.permute.xlu0 %120
  %v123 = vmul.f32 %v107, %v116
  %v124 = vmul.f32 %v109, %v121
  %v125 = vld [vmem:[%s5] sm:$0xff]
  %v126 = vld [vmem:[%s5 + $0x8] sm:$0xff]
  %128 = vset.pattern.permute.xlu0 0
  %129 = vperm.xlu0 %128, %v125
  %v130 = vpop.permute.xlu0 %129
  %133 = vset.pattern.permute.xlu0 0
  %134 = vperm.xlu0 %133, %v126
  %v135 = vpop.permute.xlu0 %134
  %v137 = vadd.f32 %v123, %v130
  %v138 = vadd.f32 %v124, %v135
  %v139 = vmax.f32 %v137, 0.0
  %v140 = vmax.f32 %v138, 0.0
  %141 = vst [vmem:[#allocation2] sm:$0xff] 0.0
  %142 = vst [vmem:[#allocation2 + $0x8] sm:$0xff] 0.0
  %143 = vst [vmem:[#allocation2 + $0x10] sm:$0xff] 0.0
  %144 = vst [vmem:[#allocation2 + $0x18] sm:$0xff] 0.0
  %145 = vst [vmem:[#allocation2 + $0x20] sm:$0xff] 0.0
  %146 = vst [vmem:[#allocation2 + $0x28] sm:$0xff] 0.0
  %147 = vst [vmem:[#allocation2 + $0x8] sm:$0xff] %v139
  %148 = vst [vmem:[#allocation2 + $0x20] sm:$0xff] %v140
  %v149 = vld [vmem:[#allocation2] sm:$0xff]
  %v150 = vld [vmem:[#allocation2 + $0x8] sm:$0xff]
  %v151 = vld [vmem:[#allocation2 + $0x18] sm:$0xff]
  %v152 = vld [vmem:[#allocation2 + $0x20] sm:$0xff]
  %v153 = vld [vmem:[%s7] sm:$0x1]
  %v155 = vperm.slane %v153, 0
  %156 = vrot.lane.b32.xlu0 %v155, 119
  %v157 = vpop.permute.xlu0 %156
  %v159 = vmul.f32 %v149, %v157
  %v160 = vmul.f32 %v150, %v157
  %v161 = vmul.f32 %v151, %v157
  %v162 = vmul.f32 %v152, %v157
  %v163 = vld [vmem:[%s6] sm:$0xf]
  %v164 = vpack.c.bf16 %v161, %v159
  %v165 = vpack.c.bf16 %v162, %v160
  %s166 = scalar_lea.vmem %s7, 1
  %v167 = vld [vmem:[%s166] sm:$0x1]
  %v169 = vperm.slane %v167, 0
  %170 = vrot.lane.b32.xlu0 %v169, 120
  %v171 = vpop.permute.xlu0 %170
  %v173 = vmul.f32 %v149, %v171
  %v174 = vmul.f32 %v150, %v171
  %v175 = vmul.f32 %v151, %v171
  %v176 = vmul.f32 %v152, %v171
  %s177 = scalar_lea.vmem %s6, 4
  %v178 = vld [vmem:[%s177] sm:$0xf]
  %v179 = vpack.c.bf16 %v175, %v173
  %v180 = vpack.c.bf16 %v176, %v174
  %183 = vrot.lane.b32.xlu0 %v179, 8
  %v184 = vpop.permute.xlu0 %183
  %185 = vrot.lane.b32.xlu0 %v180, 8
  %v186 = vpop.permute.xlu0 %185
  %vm187 = vcmask 64512
  %v188 = vsel %vm187, %v184, %v186
  %vm190 = vcmask 130048
  %v192 = vsel %vm190, %v178, 0
  %194 = vmatpush.bf16.msra.mxu0 0
  %195 = vmatpush.bf16.msra.mxu0 0
  %196 = vmatpush.bf16.msra.mxu0 0
  %197 = vmatpush.bf16.msra.mxu0 0
  %198 = vmatpush.bf16.msra.mxu0 0
  %199 = vmatpush.bf16.msra.mxu0 0
  %200 = vmatpush.bf16.msra.mxu0 0
  %201 = vmatpush.bf16.msra.mxu0 %v188
  %202 = vmatmul.bf16.gmra.mxu0 %v192
  %v203 = vpop.f32.mrf.mxu0
  %v204 = vadd.f32 0.0, %v203
  %v205 = vpop.f32.mrf.mxu0
  %206 = vdwg.mxu0
  %209 = vrot.lane.b32.xlu0 %v164, 9
  %v210 = vpop.permute.xlu0 %209
  %211 = vrot.lane.b32.xlu0 %v165, 9
  %v212 = vpop.permute.xlu0 %211
  %vm213 = vcmask 72704
  %v214 = vsel %vm213, %v210, %v212
  %v217 = vsel %vm190, %v163, 0
  %219 = vmatpush.bf16.msra.mxu0 0
  %220 = vmatpush.bf16.msra.mxu0 0
  %221 = vmatpush.bf16.msra.mxu0 0
  %222 = vmatpush.bf16.msra.mxu0 0
  %223 = vmatpush.bf16.msra.mxu0 0
  %224 = vmatpush.bf16.msra.mxu0 0
  %225 = vmatpush.bf16.msra.mxu0 0
  %226 = vmatpush.bf16.msra.mxu0 %v214
  %227 = vmatmul.bf16.gmra.mxu0 %v217
  %v228 = vpop.f32.mrf.mxu0
  %v229 = vadd.f32 %v204, %v228
  %v230 = vpop.f32.mrf.mxu0
  %231 = vdwg.mxu0
  %s232 = scalar_lea.vmem %s7, 2
  %v233 = vld [vmem:[%s232] sm:$0x1]
  %v235 = vperm.slane %v233, 0
  %236 = vrot.lane.b32.xlu0 %v235, 121
  %v237 = vpop.permute.xlu0 %236
  %v239 = vmul.f32 %v149, %v237
  %v240 = vmul.f32 %v150, %v237
  %v241 = vmul.f32 %v151, %v237
  %v242 = vmul.f32 %v152, %v237
  %s243 = scalar_lea.vmem %s6, 8
  %v244 = vld [vmem:[%s243] sm:$0xf]
  %v245 = vpack.c.bf16 %v241, %v239
  %v246 = vpack.c.bf16 %v242, %v240
  %249 = vrot.lane.b32.xlu0 %v245, 7
  %v250 = vpop.permute.xlu0 %249
  %251 = vrot.lane.b32.xlu0 %v246, 7
  %v252 = vpop.permute.xlu0 %251
  %vm253 = vcmask 56320
  %v254 = vsel %vm253, %v250, %v252
  %v257 = vsel %vm190, %v244, 0
  %259 = vmatpush.bf16.msra.mxu0 0
  %260 = vmatpush.bf16.msra.mxu0 0
  %261 = vmatpush.bf16.msra.mxu0 0
  %262 = vmatpush.bf16.msra.mxu0 0
  %263 = vmatpush.bf16.msra.mxu0 0
  %264 = vmatpush.bf16.msra.mxu0 0
  %265 = vmatpush.bf16.msra.mxu0 0
  %266 = vmatpush.bf16.msra.mxu0 %v254
  %267 = vmatmul.bf16.gmra.mxu0 %v257
  %v268 = vpop.f32.mrf.mxu0
  %v269 = vadd.f32 0.0, %v268
  %v270 = vpop.f32.mrf.mxu0
  %271 = vdwg.mxu0
  %v272 = vadd.f32 %v229, %v269
  %s273 = scalar_lea.vmem %s7, 3
  %v274 = vld [vmem:[%s273] sm:$0x1]
  %v276 = vperm.slane %v274, 0
  %277 = vrot.lane.b32.xlu0 %v276, 127
  %v278 = vpop.permute.xlu0 %277
  %v280 = vmul.f32 %v149, %v278
  %v281 = vmul.f32 %v150, %v278
  %v282 = vmul.f32 %v151, %v278
  %v283 = vmul.f32 %v152, %v278
  %s284 = scalar_lea.vmem %s6, 12
  %v285 = vld [vmem:[%s284] sm:$0xf]
  %v286 = vpack.c.bf16 %v282, %v280
  %v287 = vpack.c.bf16 %v283, %v281
  %290 = vrot.lane.b32.xlu0 %v286, 1
  %v291 = vpop.permute.xlu0 %290
  %292 = vrot.lane.b32.xlu0 %v287, 1
  %v293 = vpop.permute.xlu0 %292
  %vm294 = vcmask 7168
  %v295 = vsel %vm294, %v291, %v293
  %v298 = vsel %vm190, %v285, 0
  %300 = vmatpush.bf16.msra.mxu0 0
  %301 = vmatpush.bf16.msra.mxu0 0
  %302 = vmatpush.bf16.msra.mxu0 0
  %303 = vmatpush.bf16.msra.mxu0 0
  %304 = vmatpush.bf16.msra.mxu0 0
  %305 = vmatpush.bf16.msra.mxu0 0
  %306 = vmatpush.bf16.msra.mxu0 0
  %307 = vmatpush.bf16.msra.mxu0 %v295
  %308 = vmatmul.bf16.gmra.mxu0 %v298
  %v309 = vpop.f32.mrf.mxu0
  %v310 = vadd.f32 0.0, %v309
  %v311 = vpop.f32.mrf.mxu0
  %312 = vdwg.mxu0
  %v313 = vadd.f32 %v272, %v310
  %s314 = scalar_lea.vmem %s7, 4
  %v315 = vld [vmem:[%s314] sm:$0x1]
  %v317 = vperm.slane %v315, 0
  %v319 = vmul.f32 %v150, %v317
  %v320 = vmul.f32 %v152, %v317
  %s321 = scalar_lea.vmem %s6, 16
  %v322 = vld [vmem:[%s321] sm:$0xf]
  %v323 = vpack.c.bf16 %v320, %v319
  %v325 = vsel %vm190, %v322, 0
  %327 = vmatpush.bf16.msra.mxu0 0
  %328 = vmatpush.bf16.msra.mxu0 0
  %329 = vmatpush.bf16.msra.mxu0 0
  %330 = vmatpush.bf16.msra.mxu0 0
  %331 = vmatpush.bf16.msra.mxu0 0
  %332 = vmatpush.bf16.msra.mxu0 0
  %333 = vmatpush.bf16.msra.mxu0 0
  %334 = vmatpush.bf16.msra.mxu0 %v323
  %335 = vmatmul.bf16.gmra.mxu0 %v325
  %v336 = vpop.f32.mrf.mxu0
  %v337 = vadd.f32 0.0, %v336
  %v338 = vpop.f32.mrf.mxu0
  %339 = vdwg.mxu0
  %v340 = vadd.f32 %v313, %v337
  %v341 = vld [vmem:[#allocation2 + $0x8] sm:$0xff]
  %v342 = vld [vmem:[#allocation2 + $0x10] sm:$0xff]
  %v343 = vld [vmem:[#allocation2 + $0x20] sm:$0xff]
  %v344 = vld [vmem:[#allocation2 + $0x28] sm:$0xff]
  %s345 = scalar_lea.vmem %s7, 5
  %v346 = vld [vmem:[%s345] sm:$0x1]
  %v348 = vperm.slane %v346, 0
  %349 = vrot.lane.b32.xlu0 %v348, 1
  %v350 = vpop.permute.xlu0 %349
  %v352 = vmul.f32 %v341, %v350
  %v353 = vmul.f32 %v342, %v350
  %v354 = vmul.f32 %v343, %v350
  %v355 = vmul.f32 %v344, %v350
  %s356 = scalar_lea.vmem %s6, 20
  %v357 = vld [vmem:[%s356] sm:$0xf]
  %v358 = vpack.c.bf16 %v354, %v352
  %v359 = vpack.c.bf16 %v355, %v353
  %362 = vrot.lane.b32.xlu0 %v358, 127
  %v363 = vpop.permute.xlu0 %362
  %364 = vrot.lane.b32.xlu0 %v359, 127
  %v365 = vpop.permute.xlu0 %364
  %vm366 = vcmask 1039360
  %v367 = vsel %vm366, %v363, %v365
  %v370 = vsel %vm190, %v357, 0
  %372 = vmatpush.bf16.msra.mxu0 0
  %373 = vmatpush.bf16.msra.mxu0 0
  %374 = vmatpush.bf16.msra.mxu0 0
  %375 = vmatpush.bf16.msra.mxu0 0
  %376 = vmatpush.bf16.msra.mxu0 0
  %377 = vmatpush.bf16.msra.mxu0 0
  %378 = vmatpush.bf16.msra.mxu0 0
  %379 = vmatpush.bf16.msra.mxu0 %v367
  %380 = vmatmul.bf16.gmra.mxu0 %v370
  %v381 = vpop.f32.mrf.mxu0
  %v382 = vadd.f32 0.0, %v381
  %v383 = vpop.f32.mrf.mxu0
  %384 = vdwg.mxu0
  %v385 = vadd.f32 %v340, %v382
  %s386 = scalar_lea.vmem %s7, 6
  %v387 = vld [vmem:[%s386] sm:$0x1]
  %v389 = vperm.slane %v387, 0
  %390 = vrot.lane.b32.xlu0 %v389, 7
  %v391 = vpop.permute.xlu0 %390
  %v393 = vmul.f32 %v341, %v391
  %v394 = vmul.f32 %v342, %v391
  %v395 = vmul.f32 %v343, %v391
  %v396 = vmul.f32 %v344, %v391
  %s397 = scalar_lea.vmem %s6, 24
  %v398 = vld [vmem:[%s397] sm:$0xf]
  %v399 = vpack.c.bf16 %v395, %v393
  %v400 = vpack.c.bf16 %v396, %v394
  %403 = vrot.lane.b32.xlu0 %v399, 121
  %v404 = vpop.permute.xlu0 %403
  %405 = vrot.lane.b32.xlu0 %v400, 121
  %v406 = vpop.permute.xlu0 %405
  %vm407 = vcmask 990208
  %v408 = vsel %vm407, %v404, %v406
  %v411 = vsel %vm190, %v398, 0
  %413 = vmatpush.bf16.msra.mxu0 0
  %414 = vmatpush.bf16.msra.mxu0 0
  %415 = vmatpush.bf16.msra.mxu0 0
  %416 = vmatpush.bf16.msra.mxu0 0
  %417 = vmatpush.bf16.msra.mxu0 0
  %418 = vmatpush.bf16.msra.mxu0 0
  %419 = vmatpush.bf16.msra.mxu0 0
  %420 = vmatpush.bf16.msra.mxu0 %v408
  %421 = vmatmul.bf16.gmra.mxu0 %v411
  %v422 = vpop.f32.mrf.mxu0
  %v423 = vadd.f32 0.0, %v422
  %v424 = vpop.f32.mrf.mxu0
  %425 = vdwg.mxu0
  %v426 = vadd.f32 %v385, %v423
  %s427 = scalar_lea.vmem %s7, 7
  %v428 = vld [vmem:[%s427] sm:$0x1]
  %v430 = vperm.slane %v428, 0
  %431 = vrot.lane.b32.xlu0 %v430, 8
  %v432 = vpop.permute.xlu0 %431
  %v434 = vmul.f32 %v341, %v432
  %v435 = vmul.f32 %v342, %v432
  %v436 = vmul.f32 %v343, %v432
  %v437 = vmul.f32 %v344, %v432
  %s438 = scalar_lea.vmem %s6, 28
  %v439 = vld [vmem:[%s438] sm:$0xf]
  %v440 = vpack.c.bf16 %v436, %v434
  %v441 = vpack.c.bf16 %v437, %v435
  %444 = vrot.lane.b32.xlu0 %v440, 120
  %v445 = vpop.permute.xlu0 %444
  %446 = vrot.lane.b32.xlu0 %v441, 120
  %v447 = vpop.permute.xlu0 %446
  %vm448 = vcmask 982016
  %v449 = vsel %vm448, %v445, %v447
  %v452 = vsel %vm190, %v439, 0
  %454 = vmatpush.bf16.msra.mxu0 0
  %455 = vmatpush.bf16.msra.mxu0 0
  %456 = vmatpush.bf16.msra.mxu0 0
  %457 = vmatpush.bf16.msra.mxu0 0
  %458 = vmatpush.bf16.msra.mxu0 0
  %459 = vmatpush.bf16.msra.mxu0 0
  %460 = vmatpush.bf16.msra.mxu0 0
  %461 = vmatpush.bf16.msra.mxu0 %v449
  %462 = vmatmul.bf16.gmra.mxu0 %v452
  %v463 = vpop.f32.mrf.mxu0
  %v464 = vadd.f32 0.0, %v463
  %v465 = vpop.f32.mrf.mxu0
  %466 = vdwg.mxu0
  %v467 = vadd.f32 %v426, %v464
  %s468 = scalar_lea.vmem %s7, 8
  %v469 = vld [vmem:[%s468] sm:$0x1]
  %v471 = vperm.slane %v469, 0
  %472 = vrot.lane.b32.xlu0 %v471, 9
  %v473 = vpop.permute.xlu0 %472
  %v475 = vmul.f32 %v341, %v473
  %v476 = vmul.f32 %v342, %v473
  %v477 = vmul.f32 %v343, %v473
  %v478 = vmul.f32 %v344, %v473
  %s479 = scalar_lea.vmem %s6, 32
  %v480 = vld [vmem:[%s479] sm:$0xf]
  %v481 = vpack.c.bf16 %v477, %v475
  %v482 = vpack.c.bf16 %v478, %v476
  %485 = vrot.lane.b32.xlu0 %v481, 119
  %v486 = vpop.permute.xlu0 %485
  %487 = vrot.lane.b32.xlu0 %v482, 119
  %v488 = vpop.permute.xlu0 %487
  %vm489 = vcmask 973824
  %v490 = vsel %vm489, %v486, %v488
  %v493 = vsel %vm190, %v480, 0
  %495 = vmatpush.bf16.msra.mxu0 0
  %496 = vmatpush.bf16.msra.mxu0 0
  %497 = vmatpush.bf16.msra.mxu0 0
  %498 = vmatpush.bf16.msra.mxu0 0
  %499 = vmatpush.bf16.msra.mxu0 0
  %500 = vmatpush.bf16.msra.mxu0 0
  %501 = vmatpush.bf16.msra.mxu0 0
  %502 = vmatpush.bf16.msra.mxu0 %v490
  %503 = vmatmul.bf16.gmra.mxu0 %v493
  %v504 = vpop.f32.mrf.mxu0
  %v505 = vadd.f32 0.0, %v504
  %v506 = vpop.f32.mrf.mxu0
  %507 = vdwg.mxu0
  %v508 = vadd.f32 %v467, %v505
  %509 = vst [vmem:[%s30] sm:$0xff] %v508
  %s510 = scalar_lea.vmem %s8, 24
  // Predicated region
  $region34: #{densenet_forward.18} parent=0 // pred_check
    _
  $region35: #{densenet_forward.18} parent=0 // pred_check_branch
    %512 = sbr.rel (0) target = $region37
  $region36: #{densenet_forward.18} parent=0 // pred_region
    _
  $region37: #{densenet_forward.18} parent=0 // pred_fallthru
    _
  // Predicated region
  $region38: #{densenet_forward.18} parent=0 // pred_check
    _
  $region39: #{densenet_forward.18} parent=0 // pred_check_branch
    %514 = sbr.rel (0) target = $region41
  $region40: #{densenet_forward.18} parent=0 // pred_region
    %s515 = scalar_lea.vmem %s8, 24
  $region41: #{densenet_forward.18} parent=0 // pred_fallthru
    _

// kernel: densenet_forward.22
$region0: #{densenet_forward.22}
  #allocation0 [shape = 'u32[]', space=smem, size = 0x4, offset = 0x4, fixed_abs, tag = 'smem constant byte address 0x4 - core index']
  #allocation1 [shape = 'u32[72,128]{1,0:T(1,128)}', space=vmem, size = 0x9000, scoped, tag = 'internal scratch']
  %s0 = inlined_call_operand.vmem [shape: f32[32,32], index: 0, kind: input, shape index: {}]
  %s1 = inlined_call_operand.vmem [shape: f32[32,1], index: 1, kind: input, shape index: {}]
  %s2 = inlined_call_operand.vmem [shape: f32[32,1], index: 2, kind: input, shape index: {}]
  %s3 = inlined_call_operand.vmem [shape: bf16[16,32], index: 3, kind: input, shape index: {}]
  %s4 = inlined_call_operand.vmem [shape: f32[16,32], index: 4, kind: output, shape index: {}]
  %s5 = sld [smem:[#allocation0]]
  $region26: #{densenet_forward.22} parent=0
    _
  %s7 = ssub.s32 1, %s5
  %s8 = scalar_select 0, %s7, %s5
  // Predicated region
  $region2: #{densenet_forward.22} parent=0 // pred_check
    _
  $region3: #{densenet_forward.22} parent=0 // pred_check_branch
    %10 = sbr.rel (0) target = $region5
  $region4: #{densenet_forward.22} parent=0 // pred_region
    _
  $region5: #{densenet_forward.22} parent=0 // pred_fallthru
    _
  // Predicated region
  $region6: #{densenet_forward.22} parent=0 // pred_check
    _
  $region7: #{densenet_forward.22} parent=0 // pred_check_branch
    %12 = sbr.rel (0) target = $region9
  $region8: #{densenet_forward.22} parent=0 // pred_region
    _
  $region9: #{densenet_forward.22} parent=0 // pred_fallthru
    _
  // Predicated region
  $region10: #{densenet_forward.22} parent=0 // pred_check
    _
  $region11: #{densenet_forward.22} parent=0 // pred_check_branch
    %14 = sbr.rel (0) target = $region13
  $region12: #{densenet_forward.22} parent=0 // pred_region
    _
  $region13: #{densenet_forward.22} parent=0 // pred_fallthru
    _
  // Predicated region
  $region14: #{densenet_forward.22} parent=0 // pred_check
    _
  $region15: #{densenet_forward.22} parent=0 // pred_check_branch
    %16 = sbr.rel (0) target = $region17
  $region16: #{densenet_forward.22} parent=0 // pred_region
    _
  $region17: #{densenet_forward.22} parent=0 // pred_fallthru
    _
  %v18 = vld [vmem:[%s0] sm:$0xff]
  %v19 = vld [vmem:[%s0 + $0x8] sm:$0xff]
  %v20 = vld [vmem:[%s0 + $0x10] sm:$0xff]
  %v21 = vld [vmem:[%s0 + $0x18] sm:$0xff]
  %v22 = vld [vmem:[%s1] sm:$0xff]
  %v23 = vld [vmem:[%s1 + $0x8] sm:$0xff]
  %v24 = vld [vmem:[%s1 + $0x10] sm:$0xff]
  %v25 = vld [vmem:[%s1 + $0x18] sm:$0xff]
  %27 = vset.pattern.permute.xlu0 0
  %28 = vperm.xlu0 %27, %v22
  %v29 = vpop.permute.xlu0 %28
  %32 = vset.pattern.permute.xlu0 0
  %33 = vperm.xlu0 %32, %v23
  %v34 = vpop.permute.xlu0 %33
  %37 = vset.pattern.permute.xlu0 0
  %38 = vperm.xlu0 %37, %v24
  %v39 = vpop.permute.xlu0 %38
  %42 = vset.pattern.permute.xlu0 0
  %43 = vperm.xlu0 %42, %v25
  %v44 = vpop.permute.xlu0 %43
  %v46 = vmul.f32 %v18, %v29
  %v47 = vmul.f32 %v19, %v34
  %v48 = vmul.f32 %v20, %v39
  %v49 = vmul.f32 %v21, %v44
  %v50 = vld [vmem:[%s2] sm:$0xff]
  %v51 = vld [vmem:[%s2 + $0x8] sm:$0xff]
  %v52 = vld [vmem:[%s2 + $0x10] sm:$0xff]
  %v53 = vld [vmem:[%s2 + $0x18] sm:$0xff]
  %55 = vset.pattern.permute.xlu0 0
  %56 = vperm.xlu0 %55, %v50
  %v57 = vpop.permute.xlu0 %56
  %60 = vset.pattern.permute.xlu0 0
  %61 = vperm.xlu0 %60, %v51
  %v62 = vpop.permute.xlu0 %61
  %65 = vset.pattern.permute.xlu0 0
  %66 = vperm.xlu0 %65, %v52
  %v67 = vpop.permute.xlu0 %66
  %70 = vset.pattern.permute.xlu0 0
  %71 = vperm.xlu0 %70, %v53
  %v72 = vpop.permute.xlu0 %71
  %v74 = vadd.f32 %v46, %v57
  %v75 = vadd.f32 %v47, %v62
  %v76 = vadd.f32 %v48, %v67
  %v77 = vadd.f32 %v49, %v72
  %v78 = vmax.f32 %v74, 0.0
  %v79 = vmax.f32 %v75, 0.0
  %v80 = vmax.f32 %v76, 0.0
  %v81 = vmax.f32 %v77, 0.0
  %v82 = vld [vmem:[%s3] sm:$0xf]
  %v83 = vld [vmem:[%s3 + $0x4] sm:$0xf]
  %v84 = vpack.c.bf16 %v79, %v78
  %v85 = vpack.c.bf16 %v81, %v80
  %v88 = vunpack.c.l.b16 %v82
  %v89 = vunpack.c.l.b16 %v83
  %v90 = vpack.c.b16 %v89, %v88
  %vm91 = vcmask 261120
  %v93 = vsel %vm91, %v90, 0
  %95 = vmatpush.bf16.msra.mxu0 0
  %96 = vmatpush.bf16.msra.mxu0 0
  %97 = vmatpush.bf16.msra.mxu0 0
  %98 = vmatpush.bf16.msra.mxu0 0
  %99 = vmatpush.bf16.msra.mxu0 0
  %100 = vmatpush.bf16.msra.mxu0 0
  %101 = vmatpush.bf16.msra.mxu0 %v85
  %102 = vmatpush.bf16.msra.mxu0 %v84
  %103 = vmatmul.bf16.gmra.mxu0 %v93
  %v104 = vpop.f32.mrf.mxu0
  %v105 = vadd.f32 0.0, %v104
  %v106 = vpop.f32.mrf.mxu0
  %v107 = vadd.f32 0.0, %v106
  %108 = vdwg.mxu0
  %109 = vst.msk [vmem:[%s4] sm:$0xff] %vm91, %v105
  %110 = vst.msk [vmem:[%s4 + $0x8] sm:$0xff] %vm91, %v107
  // Predicated region
  $region18: #{densenet_forward.22} parent=0 // pred_check
    _
  $region19: #{densenet_forward.22} parent=0 // pred_check_branch
    %112 = sbr.rel (0) target = $region21
  $region20: #{densenet_forward.22} parent=0 // pred_region
    _
  $region21: #{densenet_forward.22} parent=0 // pred_fallthru
    _
  // Predicated region
  $region22: #{densenet_forward.22} parent=0 // pred_check
    _
  $region23: #{densenet_forward.22} parent=0 // pred_check_branch
    %114 = sbr.rel (0) target = $region25
  $region24: #{densenet_forward.22} parent=0 // pred_region
    _
  $region25: #{densenet_forward.22} parent=0 // pred_fallthru
    _

// kernel: densenet_forward.20
$region0: #{densenet_forward.20}
  #allocation0 [shape = 'u32[]', space=smem, size = 0x4, offset = 0x4, fixed_abs, tag = 'smem constant byte address 0x4 - core index']
  #allocation1 [shape = 'u32[72,128]{1,0:T(1,128)}', space=vmem, size = 0x9000, scoped, tag = 'internal scratch']
  #allocation2 [shape = 'f32[16,288]{1,0:T(8,128)}', space=vmem, size = 0x6000, scoped, tag = 'scratch operand']
  %s0 = inlined_call_operand.vmem [shape: f32[32,32], index: 0, kind: input, shape index: {}, may-alias: {0,8}]
  %s1 = inlined_call_operand.vmem [shape: f32[16,1], index: 1, kind: input, shape index: {}]
  %s2 = inlined_call_operand.vmem [shape: f32[16,1], index: 2, kind: input, shape index: {}]
  %s3 = inlined_call_operand.vmem [shape: bf16[16,16], index: 3, kind: input, shape index: {}]
  %s4 = inlined_call_operand.vmem [shape: f32[16,1], index: 4, kind: input, shape index: {}]
  %s5 = inlined_call_operand.vmem [shape: f32[16,1], index: 5, kind: input, shape index: {}]
  %s6 = inlined_call_operand.vmem [shape: bf16[9,8,16], index: 6, kind: input, shape index: {}]
  %s7 = inlined_call_operand.vmem [shape: f32[9,1,32], index: 7, kind: input, shape index: {}]
  %s8 = inlined_call_operand.vmem [shape: f32[32,32], index: 8, kind: output, shape index: {}, may-alias: {0,8}]
  %s9 = sld [smem:[#allocation0]]
  $region42: #{densenet_forward.20} parent=0
    _
  %s11 = ssub.s32 1, %s9
  %s12 = scalar_select 0, %s11, %s9
  // Predicated region
  $region2: #{densenet_forward.20} parent=0 // pred_check
    _
  $region3: #{densenet_forward.20} parent=0 // pred_check_branch
    %14 = sbr.rel (0) target = $region5
  $region4: #{densenet_forward.20} parent=0 // pred_region
    _
  $region5: #{densenet_forward.20} parent=0 // pred_fallthru
    _
  // Predicated region
  $region6: #{densenet_forward.20} parent=0 // pred_check
    _
  $region7: #{densenet_forward.20} parent=0 // pred_check_branch
    %16 = sbr.rel (0) target = $region9
  $region8: #{densenet_forward.20} parent=0 // pred_region
    _
  $region9: #{densenet_forward.20} parent=0 // pred_fallthru
    _
  // Predicated region
  $region10: #{densenet_forward.20} parent=0 // pred_check
    _
  $region11: #{densenet_forward.20} parent=0 // pred_check_branch
    %18 = sbr.rel (0) target = $region13
  $region12: #{densenet_forward.20} parent=0 // pred_region
    _
  $region13: #{densenet_forward.20} parent=0 // pred_fallthru
    _
  // Predicated region
  $region14: #{densenet_forward.20} parent=0 // pred_check
    _
  $region15: #{densenet_forward.20} parent=0 // pred_check_branch
    %20 = sbr.rel (0) target = $region17
  $region16: #{densenet_forward.20} parent=0 // pred_region
    _
  $region17: #{densenet_forward.20} parent=0 // pred_fallthru
    _
  // Predicated region
  $region18: #{densenet_forward.20} parent=0 // pred_check
    _
  $region19: #{densenet_forward.20} parent=0 // pred_check_branch
    %22 = sbr.rel (0) target = $region21
  $region20: #{densenet_forward.20} parent=0 // pred_region
    _
  $region21: #{densenet_forward.20} parent=0 // pred_fallthru
    _
  // Predicated region
  $region22: #{densenet_forward.20} parent=0 // pred_check
    _
  $region23: #{densenet_forward.20} parent=0 // pred_check_branch
    %24 = sbr.rel (0) target = $region25
  $region24: #{densenet_forward.20} parent=0 // pred_region
    _
  $region25: #{densenet_forward.20} parent=0 // pred_fallthru
    _
  // Predicated region
  $region26: #{densenet_forward.20} parent=0 // pred_check
    _
  $region27: #{densenet_forward.20} parent=0 // pred_check_branch
    %26 = sbr.rel (0) target = $region29
  $region28: #{densenet_forward.20} parent=0 // pred_region
    _
  $region29: #{densenet_forward.20} parent=0 // pred_fallthru
    _
  // Predicated region
  $region30: #{densenet_forward.20} parent=0 // pred_check
    _
  $region31: #{densenet_forward.20} parent=0 // pred_check_branch
    %28 = sbr.rel (0) target = $region33
  $region32: #{densenet_forward.20} parent=0 // pred_region
    _
  $region33: #{densenet_forward.20} parent=0 // pred_fallthru
    _
  %s29 = scalar_lea.vmem %s8, 16
  %s30 = scalar_lea.vmem %s8, 16
  %v32 = vld [vmem:[%s0] sm:$0xff]
  %v33 = vld [vmem:[%s0 + $0x8] sm:$0xff]
  %v34 = vld [vmem:[%s1] sm:$0xff]
  %v35 = vld [vmem:[%s1 + $0x8] sm:$0xff]
  %37 = vset.pattern.permute.xlu0 0
  %38 = vperm.xlu0 %37, %v34
  %v39 = vpop.permute.xlu0 %38
  %42 = vset.pattern.permute.xlu0 0
  %43 = vperm.xlu0 %42, %v35
  %v44 = vpop.permute.xlu0 %43
  %v46 = vmul.f32 %v32, %v39
  %v47 = vmul.f32 %v33, %v44
  %v48 = vld [vmem:[%s2] sm:$0xff]
  %v49 = vld [vmem:[%s2 + $0x8] sm:$0xff]
  %51 = vset.pattern.permute.xlu0 0
  %52 = vperm.xlu0 %51, %v48
  %v53 = vpop.permute.xlu0 %52
  %56 = vset.pattern.permute.xlu0 0
  %57 = vperm.xlu0 %56, %v49
  %v58 = vpop.permute.xlu0 %57
  %v60 = vadd.f32 %v46, %v53
  %v61 = vadd.f32 %v47, %v58
  %v62 = vmax.f32 %v60, 0.0
  %v63 = vmax.f32 %v61, 0.0
  %v64 = vld [vmem:[%s3] sm:$0xf]
  %v65 = vld [vmem:[%s3 + $0x4] sm:$0xf]
  %v66 = vpack.c.bf16 %v63, %v62
  %v69 = vunpack.c.l.b16 %v64
  %v70 = vunpack.c.l.b16 %v65
  %v71 = vpack.c.b16 %v70, %v69
  %vm72 = vcmask 130048
  %v74 = vsel %vm72, %v71, 0
  %76 = vmatpush.bf16.msra.mxu0 0
  %77 = vmatpush.bf16.msra.mxu0 0
  %78 = vmatpush.bf16.msra.mxu0 0
  %79 = vmatpush.bf16.msra.mxu0 0
  %80 = vmatpush.bf16.msra.mxu0 0
  %81 = vmatpush.bf16.msra.mxu0 0
  %82 = vmatpush.bf16.msra.mxu0 0
  %83 = vmatpush.bf16.msra.mxu0 %v66
  %84 = vmatmul.bf16.gmra.mxu0 %v74
  %v85 = vpop.f32.mrf.mxu0
  %v86 = vadd.f32 0.0, %v85
  %v87 = vpop.f32.mrf.mxu0
  %v88 = vadd.f32 0.0, %v87
  %89 = vdwg.mxu0
  %v90 = vld [vmem:[%s4] sm:$0xff]
  %v91 = vld [vmem:[%s4 + $0x8] sm:$0xff]
  %93 = vset.pattern.permute.xlu0 0
  %94 = vperm.xlu0 %93, %v90
  %v95 = vpop.permute.xlu0 %94
  %98 = vset.pattern.permute.xlu0 0
  %99 = vperm.xlu0 %98, %v91
  %v100 = vpop.permute.xlu0 %99
  %v102 = vmul.f32 %v86, %v95
  %v103 = vmul.f32 %v88, %v100
  %v104 = vld [vmem:[%s5] sm:$0xff]
  %v105 = vld [vmem:[%s5 + $0x8] sm:$0xff]
  %107 = vset.pattern.permute.xlu0 0
  %108 = vperm.xlu0 %107, %v104
  %v109 = vpop.permute.xlu0 %108
  %112 = vset.pattern.permute.xlu0 0
  %113 = vperm.xlu0 %112, %v105
  %v114 = vpop.permute.xlu0 %113
  %v116 = vadd.f32 %v102, %v109
  %v117 = vadd.f32 %v103, %v114
  %v118 = vmax.f32 %v116, 0.0
  %v119 = vmax.f32 %v117, 0.0
  %120 = vst [vmem:[#allocation2] sm:$0xff] 0.0
  %121 = vst [vmem:[#allocation2 + $0x8] sm:$0xff] 0.0
  %vm122 = vcmask 261120
  %123 = vst.msk [vmem:[#allocation2 + $0x10] sm:$0xff] %vm122, 0.0
  %124 = vst [vmem:[#allocation2 + $0x18] sm:$0xff] 0.0
  %125 = vst [vmem:[#allocation2 + $0x20] sm:$0xff] 0.0
  %126 = vst.msk [vmem:[#allocation2 + $0x28] sm:$0xff] %vm122, 0.0
  %127 = vst.msk [vmem:[#allocation2 + $0x8] sm:$0xff] %vm122, %v118
  %128 = vst.msk [vmem:[#allocation2 + $0x20] sm:$0xff] %vm122, %v119
  %v129 = vld [vmem:[#allocation2] sm:$0xff]
  %v130 = vld [vmem:[#allocation2 + $0x8] sm:$0xff]
  %v131 = vld [vmem:[#allocation2 + $0x18] sm:$0xff]
  %v132 = vld [vmem:[#allocation2 + $0x20] sm:$0xff]
  %v133 = vld [vmem:[%s7] sm:$0x1]
  %v135 = vperm.slane %v133, 0
  %136 = vrot.lane.b32.xlu0 %v135, 123
  %v137 = vpop.permute.xlu0 %136
  %v139 = vmul.f32 %v129, %v137
  %v140 = vmul.f32 %v130, %v137
  %v141 = vmul.f32 %v131, %v137
  %v142 = vmul.f32 %v132, %v137
  %v143 = vld [vmem:[%s6] sm:$0xf]
  %v144 = vpack.c.bf16 %v141, %v139
  %v145 = vpack.c.bf16 %v142, %v140
  %s146 = scalar_lea.vmem %s7, 1
  %v147 = vld [vmem:[%s146] sm:$0x1]
  %v149 = vperm.slane %v147, 0
  %150 = vrot.lane.b32.xlu0 %v149, 124
  %v151 = vpop.permute.xlu0 %150
  %v153 = vmul.f32 %v129, %v151
  %v154 = vmul.f32 %v130, %v151
  %v155 = vmul.f32 %v131, %v151
  %v156 = vmul.f32 %v132, %v151
  %s157 = scalar_lea.vmem %s6, 4
  %v158 = vld [vmem:[%s157] sm:$0xf]
  %v159 = vpack.c.bf16 %v155, %v153
  %v160 = vpack.c.bf16 %v156, %v154
  %163 = vrot.lane.b32.xlu0 %v159, 4
  %v164 = vpop.permute.xlu0 %163
  %165 = vrot.lane.b32.xlu0 %v160, 4
  %v166 = vpop.permute.xlu0 %165
  %vm167 = vcmask 31744
  %v168 = vsel %vm167, %v164, %v166
  %v171 = vsel %vm72, %v158, 0
  %173 = vmatpush.bf16.msra.mxu0 0
  %174 = vmatpush.bf16.msra.mxu0 0
  %175 = vmatpush.bf16.msra.mxu0 0
  %176 = vmatpush.bf16.msra.mxu0 0
  %177 = vmatpush.bf16.msra.mxu0 0
  %178 = vmatpush.bf16.msra.mxu0 0
  %179 = vmatpush.bf16.msra.mxu0 0
  %180 = vmatpush.bf16.msra.mxu0 %v168
  %181 = vmatmul.bf16.gmra.mxu0 %v171
  %v182 = vpop.f32.mrf.mxu0
  %v183 = vadd.f32 0.0, %v182
  %v184 = vpop.f32.mrf.mxu0
  %185 = vdwg.mxu0
  %188 = vrot.lane.b32.xlu0 %v144, 5
  %v189 = vpop.permute.xlu0 %188
  %190 = vrot.lane.b32.xlu0 %v145, 5
  %v191 = vpop.permute.xlu0 %190
  %vm192 = vcmask 39936
  %v193 = vsel %vm192, %v189, %v191
  %v196 = vsel %vm72, %v143, 0
  %198 = vmatpush.bf16.msra.mxu0 0
  %199 = vmatpush.bf16.msra.mxu0 0
  %200 = vmatpush.bf16.msra.mxu0 0
  %201 = vmatpush.bf16.msra.mxu0 0
  %202 = vmatpush.bf16.msra.mxu0 0
  %203 = vmatpush.bf16.msra.mxu0 0
  %204 = vmatpush.bf16.msra.mxu0 0
  %205 = vmatpush.bf16.msra.mxu0 %v193
  %206 = vmatmul.bf16.gmra.mxu0 %v196
  %v207 = vpop.f32.mrf.mxu0
  %v208 = vadd.f32 %v183, %v207
  %v209 = vpop.f32.mrf.mxu0
  %210 = vdwg.mxu0
  %s211 = scalar_lea.vmem %s7, 2
  %v212 = vld [vmem:[%s211] sm:$0x1]
  %v214 = vperm.slane %v212, 0
  %215 = vrot.lane.b32.xlu0 %v214, 125
  %v216 = vpop.permute.xlu0 %215
  %v218 = vmul.f32 %v129, %v216
  %v219 = vmul.f32 %v130, %v216
  %v220 = vmul.f32 %v131, %v216
  %v221 = vmul.f32 %v132, %v216
  %s222 = scalar_lea.vmem %s6, 8
  %v223 = vld [vmem:[%s222] sm:$0xf]
  %v224 = vpack.c.bf16 %v220, %v218
  %v225 = vpack.c.bf16 %v221, %v219
  %228 = vrot.lane.b32.xlu0 %v224, 3
  %v229 = vpop.permute.xlu0 %228
  %230 = vrot.lane.b32.xlu0 %v225, 3
  %v231 = vpop.permute.xlu0 %230
  %vm232 = vcmask 23552
  %v233 = vsel %vm232, %v229, %v231
  %v236 = vsel %vm72, %v223, 0
  %238 = vmatpush.bf16.msra.mxu0 0
  %239 = vmatpush.bf16.msra.mxu0 0
  %240 = vmatpush.bf16.msra.mxu0 0
  %241 = vmatpush.bf16.msra.mxu0 0
  %242 = vmatpush.bf16.msra.mxu0 0
  %243 = vmatpush.bf16.msra.mxu0 0
  %244 = vmatpush.bf16.msra.mxu0 0
  %245 = vmatpush.bf16.msra.mxu0 %v233
  %246 = vmatmul.bf16.gmra.mxu0 %v236
  %v247 = vpop.f32.mrf.mxu0
  %v248 = vadd.f32 0.0, %v247
  %v249 = vpop.f32.mrf.mxu0
  %250 = vdwg.mxu0
  %v251 = vadd.f32 %v208, %v248
  %s252 = scalar_lea.vmem %s7, 3
  %v253 = vld [vmem:[%s252] sm:$0x1]
  %v255 = vperm.slane %v253, 0
  %256 = vrot.lane.b32.xlu0 %v255, 127
  %v257 = vpop.permute.xlu0 %256
  %v259 = vmul.f32 %v129, %v257
  %v260 = vmul.f32 %v130, %v257
  %v261 = vmul.f32 %v131, %v257
  %v262 = vmul.f32 %v132, %v257
  %s263 = scalar_lea.vmem %s6, 12
  %v264 = vld [vmem:[%s263] sm:$0xf]
  %v265 = vpack.c.bf16 %v261, %v259
  %v266 = vpack.c.bf16 %v262, %v260
  %269 = vrot.lane.b32.xlu0 %v265, 1
  %v270 = vpop.permute.xlu0 %269
  %271 = vrot.lane.b32.xlu0 %v266, 1
  %v272 = vpop.permute.xlu0 %271
  %vm273 = vcmask 7168
  %v274 = vsel %vm273, %v270, %v272
  %v277 = vsel %vm72, %v264, 0
  %279 = vmatpush.bf16.msra.mxu0 0
  %280 = vmatpush.bf16.msra.mxu0 0
  %281 = vmatpush.bf16.msra.mxu0 0
  %282 = vmatpush.bf16.msra.mxu0 0
  %283 = vmatpush.bf16.msra.mxu0 0
  %284 = vmatpush.bf16.msra.mxu0 0
  %285 = vmatpush.bf16.msra.mxu0 0
  %286 = vmatpush.bf16.msra.mxu0 %v274
  %287 = vmatmul.bf16.gmra.mxu0 %v277
  %v288 = vpop.f32.mrf.mxu0
  %v289 = vadd.f32 0.0, %v288
  %v290 = vpop.f32.mrf.mxu0
  %291 = vdwg.mxu0
  %v292 = vadd.f32 %v251, %v289
  %s293 = scalar_lea.vmem %s7, 4
  %v294 = vld [vmem:[%s293] sm:$0x1]
  %v296 = vperm.slane %v294, 0
  %v298 = vmul.f32 %v130, %v296
  %v299 = vmul.f32 %v132, %v296
  %s300 = scalar_lea.vmem %s6, 16
  %v301 = vld [vmem:[%s300] sm:$0xf]
  %v302 = vpack.c.bf16 %v299, %v298
  %v304 = vsel %vm72, %v301, 0
  %306 = vmatpush.bf16.msra.mxu0 0
  %307 = vmatpush.bf16.msra.mxu0 0
  %308 = vmatpush.bf16.msra.mxu0 0
  %309 = vmatpush.bf16.msra.mxu0 0
  %310 = vmatpush.bf16.msra.mxu0 0
  %311 = vmatpush.bf16.msra.mxu0 0
  %312 = vmatpush.bf16.msra.mxu0 0
  %313 = vmatpush.bf16.msra.mxu0 %v302
  %314 = vmatmul.bf16.gmra.mxu0 %v304
  %v315 = vpop.f32.mrf.mxu0
  %v316 = vadd.f32 0.0, %v315
  %v317 = vpop.f32.mrf.mxu0
  %318 = vdwg.mxu0
  %v319 = vadd.f32 %v292, %v316
  %s320 = scalar_lea.vmem %s7, 5
  %v321 = vld [vmem:[%s320] sm:$0x1]
  %v323 = vperm.slane %v321, 0
  %324 = vrot.lane.b32.xlu0 %v323, 1
  %v325 = vpop.permute.xlu0 %324
  %v327 = vmul.f32 %v130, %v325
  %v328 = vmul.f32 %v132, %v325
  %s329 = scalar_lea.vmem %s6, 20
  %v330 = vld [vmem:[%s329] sm:$0xf]
  %v331 = vpack.c.bf16 %v328, %v327
  %333 = vrot.lane.b32.xlu0 %v331, 127
  %v334 = vpop.permute.xlu0 %333
  %v337 = vsel %vm72, %v330, 0
  %339 = vmatpush.bf16.msra.mxu0 0
  %340 = vmatpush.bf16.msra.mxu0 0
  %341 = vmatpush.bf16.msra.mxu0 0
  %342 = vmatpush.bf16.msra.mxu0 0
  %343 = vmatpush.bf16.msra.mxu0 0
  %344 = vmatpush.bf16.msra.mxu0 0
  %345 = vmatpush.bf16.msra.mxu0 0
  %346 = vmatpush.bf16.msra.mxu0 %v334
  %347 = vmatmul.bf16.gmra.mxu0 %v337
  %v348 = vpop.f32.mrf.mxu0
  %v349 = vadd.f32 0.0, %v348
  %v350 = vpop.f32.mrf.mxu0
  %351 = vdwg.mxu0
  %v352 = vadd.f32 %v319, %v349
  %s353 = scalar_lea.vmem %s7, 6
  %v354 = vld [vmem:[%s353] sm:$0x1]
  %v356 = vperm.slane %v354, 0
  %357 = vrot.lane.b32.xlu0 %v356, 3
  %v358 = vpop.permute.xlu0 %357
  %v360 = vmul.f32 %v130, %v358
  %v361 = vmul.f32 %v132, %v358
  %s362 = scalar_lea.vmem %s6, 24
  %v363 = vld [vmem:[%s362] sm:$0xf]
  %v364 = vpack.c.bf16 %v361, %v360
  %366 = vrot.lane.b32.xlu0 %v364, 125
  %v367 = vpop.permute.xlu0 %366
  %v370 = vsel %vm72, %v363, 0
  %372 = vmatpush.bf16.msra.mxu0 0
  %373 = vmatpush.bf16.msra.mxu0 0
  %374 = vmatpush.bf16.msra.mxu0 0
  %375 = vmatpush.bf16.msra.mxu0 0
  %376 = vmatpush.bf16.msra.mxu0 0
  %377 = vmatpush.bf16.msra.mxu0 0
  %378 = vmatpush.bf16.msra.mxu0 0
  %379 = vmatpush.bf16.msra.mxu0 %v367
  %380 = vmatmul.bf16.gmra.mxu0 %v370
  %v381 = vpop.f32.mrf.mxu0
  %v382 = vadd.f32 0.0, %v381
  %v383 = vpop.f32.mrf.mxu0
  %384 = vdwg.mxu0
  %v385 = vadd.f32 %v352, %v382
  %s386 = scalar_lea.vmem %s7, 7
  %v387 = vld [vmem:[%s386] sm:$0x1]
  %v389 = vperm.slane %v387, 0
  %390 = vrot.lane.b32.xlu0 %v389, 4
  %v391 = vpop.permute.xlu0 %390
  %v393 = vmul.f32 %v130, %v391
  %v394 = vmul.f32 %v132, %v391
  %s395 = scalar_lea.vmem %s6, 28
  %v396 = vld [vmem:[%s395] sm:$0xf]
  %v397 = vpack.c.bf16 %v394, %v393
  %399 = vrot.lane.b32.xlu0 %v397, 124
  %v400 = vpop.permute.xlu0 %399
  %v403 = vsel %vm72, %v396, 0
  %405 = vmatpush.bf16.msra.mxu0 0
  %406 = vmatpush.bf16.msra.mxu0 0
  %407 = vmatpush.bf16.msra.mxu0 0
  %408 = vmatpush.bf16.msra.mxu0 0
  %409 = vmatpush.bf16.msra.mxu0 0
  %410 = vmatpush.bf16.msra.mxu0 0
  %411 = vmatpush.bf16.msra.mxu0 0
  %412 = vmatpush.bf16.msra.mxu0 %v400
  %413 = vmatmul.bf16.gmra.mxu0 %v403
  %v414 = vpop.f32.mrf.mxu0
  %v415 = vadd.f32 0.0, %v414
  %v416 = vpop.f32.mrf.mxu0
  %417 = vdwg.mxu0
  %v418 = vadd.f32 %v385, %v415
  %s419 = scalar_lea.vmem %s7, 8
  %v420 = vld [vmem:[%s419] sm:$0x1]
  %v422 = vperm.slane %v420, 0
  %423 = vrot.lane.b32.xlu0 %v422, 5
  %v424 = vpop.permute.xlu0 %423
  %v426 = vmul.f32 %v130, %v424
  %v427 = vmul.f32 %v132, %v424
  %s428 = scalar_lea.vmem %s6, 32
  %v429 = vld [vmem:[%s428] sm:$0xf]
  %v430 = vpack.c.bf16 %v427, %v426
  %432 = vrot.lane.b32.xlu0 %v430, 123
  %v433 = vpop.permute.xlu0 %432
  %v436 = vsel %vm72, %v429, 0
  %438 = vmatpush.bf16.msra.mxu0 0
  %439 = vmatpush.bf16.msra.mxu0 0
  %440 = vmatpush.bf16.msra.mxu0 0
  %441 = vmatpush.bf16.msra.mxu0 0
  %442 = vmatpush.bf16.msra.mxu0 0
  %443 = vmatpush.bf16.msra.mxu0 0
  %444 = vmatpush.bf16.msra.mxu0 0
  %445 = vmatpush.bf16.msra.mxu0 %v433
  %446 = vmatmul.bf16.gmra.mxu0 %v436
  %v447 = vpop.f32.mrf.mxu0
  %v448 = vadd.f32 0.0, %v447
  %v449 = vpop.f32.mrf.mxu0
  %450 = vdwg.mxu0
  %v451 = vadd.f32 %v418, %v448
  %452 = vst.msk [vmem:[%s30] sm:$0xff] %vm122, %v451
  %s453 = scalar_lea.vmem %s8, 16
  // Predicated region
  $region34: #{densenet_forward.20} parent=0 // pred_check
    _
  $region35: #{densenet_forward.20} parent=0 // pred_check_branch
    %455 = sbr.rel (0) target = $region37
  $region36: #{densenet_forward.20} parent=0 // pred_region
    _
  $region37: #{densenet_forward.20} parent=0 // pred_fallthru
    _
  // Predicated region
  $region38: #{densenet_forward.20} parent=0 // pred_check
    _
  $region39: #{densenet_forward.20} parent=0 // pred_check_branch
    %457 = sbr.rel (0) target = $region41
  $region40: #{densenet_forward.20} parent=0 // pred_region
    %s458 = scalar_lea.vmem %s8, 16
  $region41: #{densenet_forward.20} parent=0 // pred_fallthru
    _

// kernel: densenet_forward.21
$region0: #{densenet_forward.21}
  #allocation0 [shape = 'u32[]', space=smem, size = 0x4, offset = 0x4, fixed_abs, tag = 'smem constant byte address 0x4 - core index']
  #allocation1 [shape = 'u32[72,128]{1,0:T(1,128)}', space=vmem, size = 0x9000, scoped, tag = 'internal scratch']
  #allocation2 [shape = 'f32[16,288]{1,0:T(8,128)}', space=vmem, size = 0x6000, scoped, tag = 'scratch operand']
  %s0 = inlined_call_operand.vmem [shape: f32[32,32], index: 0, kind: input, shape index: {}, may-alias: {0,8}]
  %s1 = inlined_call_operand.vmem [shape: f32[24,1], index: 1, kind: input, shape index: {}]
  %s2 = inlined_call_operand.vmem [shape: f32[24,1], index: 2, kind: input, shape index: {}]
  %s3 = inlined_call_operand.vmem [shape: bf16[16,24], index: 3, kind: input, shape index: {}]
  %s4 = inlined_call_operand.vmem [shape: f32[16,1], index: 4, kind: input, shape index: {}]
  %s5 = inlined_call_operand.vmem [shape: f32[16,1], index: 5, kind: input, shape index: {}]
  %s6 = inlined_call_operand.vmem [shape: bf16[9,8,16], index: 6, kind: input, shape index: {}]
  %s7 = inlined_call_operand.vmem [shape: f32[9,1,32], index: 7, kind: input, shape index: {}]
  %s8 = inlined_call_operand.vmem [shape: f32[32,32], index: 8, kind: output, shape index: {}, may-alias: {0,8}]
  %s9 = sld [smem:[#allocation0]]
  $region42: #{densenet_forward.21} parent=0
    _
  %s11 = ssub.s32 1, %s9
  %s12 = scalar_select 0, %s11, %s9
  // Predicated region
  $region2: #{densenet_forward.21} parent=0 // pred_check
    _
  $region3: #{densenet_forward.21} parent=0 // pred_check_branch
    %14 = sbr.rel (0) target = $region5
  $region4: #{densenet_forward.21} parent=0 // pred_region
    _
  $region5: #{densenet_forward.21} parent=0 // pred_fallthru
    _
  // Predicated region
  $region6: #{densenet_forward.21} parent=0 // pred_check
    _
  $region7: #{densenet_forward.21} parent=0 // pred_check_branch
    %16 = sbr.rel (0) target = $region9
  $region8: #{densenet_forward.21} parent=0 // pred_region
    _
  $region9: #{densenet_forward.21} parent=0 // pred_fallthru
    _
  // Predicated region
  $region10: #{densenet_forward.21} parent=0 // pred_check
    _
  $region11: #{densenet_forward.21} parent=0 // pred_check_branch
    %18 = sbr.rel (0) target = $region13
  $region12: #{densenet_forward.21} parent=0 // pred_region
    _
  $region13: #{densenet_forward.21} parent=0 // pred_fallthru
    _
  // Predicated region
  $region14: #{densenet_forward.21} parent=0 // pred_check
    _
  $region15: #{densenet_forward.21} parent=0 // pred_check_branch
    %20 = sbr.rel (0) target = $region17
  $region16: #{densenet_forward.21} parent=0 // pred_region
    _
  $region17: #{densenet_forward.21} parent=0 // pred_fallthru
    _
  // Predicated region
  $region18: #{densenet_forward.21} parent=0 // pred_check
    _
  $region19: #{densenet_forward.21} parent=0 // pred_check_branch
    %22 = sbr.rel (0) target = $region21
  $region20: #{densenet_forward.21} parent=0 // pred_region
    _
  $region21: #{densenet_forward.21} parent=0 // pred_fallthru
    _
  // Predicated region
  $region22: #{densenet_forward.21} parent=0 // pred_check
    _
  $region23: #{densenet_forward.21} parent=0 // pred_check_branch
    %24 = sbr.rel (0) target = $region25
  $region24: #{densenet_forward.21} parent=0 // pred_region
    _
  $region25: #{densenet_forward.21} parent=0 // pred_fallthru
    _
  // Predicated region
  $region26: #{densenet_forward.21} parent=0 // pred_check
    _
  $region27: #{densenet_forward.21} parent=0 // pred_check_branch
    %26 = sbr.rel (0) target = $region29
  $region28: #{densenet_forward.21} parent=0 // pred_region
    _
  $region29: #{densenet_forward.21} parent=0 // pred_fallthru
    _
  // Predicated region
  $region30: #{densenet_forward.21} parent=0 // pred_check
    _
  $region31: #{densenet_forward.21} parent=0 // pred_check_branch
    %28 = sbr.rel (0) target = $region33
  $region32: #{densenet_forward.21} parent=0 // pred_region
    _
  $region33: #{densenet_forward.21} parent=0 // pred_fallthru
    _
  %s29 = scalar_lea.vmem %s8, 24
  %s30 = scalar_lea.vmem %s8, 24
  %v32 = vld [vmem:[%s0] sm:$0xff]
  %v33 = vld [vmem:[%s0 + $0x8] sm:$0xff]
  %v34 = vld [vmem:[%s0 + $0x10] sm:$0xff]
  %v35 = vld [vmem:[%s1] sm:$0xff]
  %v36 = vld [vmem:[%s1 + $0x8] sm:$0xff]
  %v37 = vld [vmem:[%s1 + $0x10] sm:$0xff]
  %39 = vset.pattern.permute.xlu0 0
  %40 = vperm.xlu0 %39, %v35
  %v41 = vpop.permute.xlu0 %40
  %44 = vset.pattern.permute.xlu0 0
  %45 = vperm.xlu0 %44, %v36
  %v46 = vpop.permute.xlu0 %45
  %49 = vset.pattern.permute.xlu0 0
  %50 = vperm.xlu0 %49, %v37
  %v51 = vpop.permute.xlu0 %50
  %v53 = vmul.f32 %v32, %v41
  %v54 = vmul.f32 %v33, %v46
  %v55 = vmul.f32 %v34, %v51
  %v56 = vld [vmem:[%s2] sm:$0xff]
  %v57 = vld [vmem:[%s2 + $0x8] sm:$0xff]
  %v58 = vld [vmem:[%s2 + $0x10] sm:$0xff]
  %60 = vset.pattern.permute.xlu0 0
  %61 = vperm.xlu0 %60, %v56
  %v62 = vpop.permute.xlu0 %61
  %65 = vset.pattern.permute.xlu0 0
  %66 = vperm.xlu0 %65, %v57
  %v67 = vpop.permute.xlu0 %66
  %70 = vset.pattern.permute.xlu0 0
  %71 = vperm.xlu0 %70, %v58
  %v72 = vpop.permute.xlu0 %71
  %v74 = vadd.f32 %v53, %v62
  %v75 = vadd.f32 %v54, %v67
  %v76 = vadd.f32 %v55, %v72
  %v77 = vmax.f32 %v74, 0.0
  %v78 = vmax.f32 %v75, 0.0
  %v79 = vmax.f32 %v76, 0.0
  %v80 = vld [vmem:[%s3] sm:$0xf]
  %v81 = vld [vmem:[%s3 + $0x4] sm:$0xf]
  %v82 = vpack.c.bf16 %v78, %v77
  %v83 = vpack.c.bf16 %v79, %v79
  %v86 = vunpack.c.l.b16 %v80
  %v87 = vunpack.c.l.b16 %v81
  %v88 = vpack.c.b16 %v87, %v86
  %vm89 = vcmask 195584
  %v91 = vsel %vm89, %v88, 0
  %vm93 = vcmask 1043456
  %v95 = vsel %vm93, %v83, 0
  %97 = vmatpush.bf16.msra.mxu0 0
  %98 = vmatpush.bf16.msra.mxu0 0
  %99 = vmatpush.bf16.msra.mxu0 0
  %100 = vmatpush.bf16.msra.mxu0 0
  %101 = vmatpush.bf16.msra.mxu0 0
  %102 = vmatpush.bf16.msra.mxu0 0
  %103 = vmatpush.bf16.msra.mxu0 %v95
  %104 = vmatpush.bf16.msra.mxu0 %v82
  %105 = vmatmul.bf16.gmra.mxu0 %v91
  %v106 = vpop.f32.mrf.mxu0
  %v107 = vadd.f32 0.0, %v106
  %v108 = vpop.f32.mrf.mxu0
  %v109 = vadd.f32 0.0, %v108
  %110 = vdwg.mxu0
  %v111 = vld [vmem:[%s4] sm:$0xff]
  %v112 = vld [vmem:[%s4 + $0x8] sm:$0xff]
  %114 = vset.pattern.permute.xlu0 0
  %115 = vperm.xlu0 %114, %v111
  %v116 = vpop.permute.xlu0 %115
  %119 = vset.pattern.permute.xlu0 0
  %120 = vperm.xlu0 %119, %v112
  %v121 = vpop.permute.xlu0 %120
  %v123 = vmul.f32 %v107, %v116
  %v124 = vmul.f32 %v109, %v121
  %v125 = vld [vmem:[%s5] sm:$0xff]
  %v126 = vld [vmem:[%s5 + $0x8] sm:$0xff]
  %128 = vset.pattern.permute.xlu0 0
  %129 = vperm.xlu0 %128, %v125
  %v130 = vpop.permute.xlu0 %129
  %133 = vset.pattern.permute.xlu0 0
  %134 = vperm.xlu0 %133, %v126
  %v135 = vpop.permute.xlu0 %134
  %v137 = vadd.f32 %v123, %v130
  %v138 = vadd.f32 %v124, %v135
  %v139 = vmax.f32 %v137, 0.0
  %v140 = vmax.f32 %v138, 0.0
  %141 = vst [vmem:[#allocation2] sm:$0xff] 0.0
  %142 = vst [vmem:[#allocation2 + $0x8] sm:$0xff] 0.0
  %vm143 = vcmask 261120
  %144 = vst.msk [vmem:[#allocation2 + $0x10] sm:$0xff] %vm143, 0.0
  %145 = vst [vmem:[#allocation2 + $0x18] sm:$0xff] 0.0
  %146 = vst [vmem:[#allocation2 + $0x20] sm:$0xff] 0.0
  %147 = vst.msk [vmem:[#allocation2 + $0x28] sm:$0xff] %vm143, 0.0
  %148 = vst.msk [vmem:[#allocation2 + $0x8] sm:$0xff] %vm143, %v139
  %149 = vst.msk [vmem:[#allocation2 + $0x20] sm:$0xff] %vm143, %v140
  %v150 = vld [vmem:[#allocation2] sm:$0xff]
  %v151 = vld [vmem:[#allocation2 + $0x8] sm:$0xff]
  %v152 = vld [vmem:[#allocation2 + $0x18] sm:$0xff]
  %v153 = vld [vmem:[#allocation2 + $0x20] sm:$0xff]
  %v154 = vld [vmem:[%s7] sm:$0x1]
  %v156 = vperm.slane %v154, 0
  %157 = vrot.lane.b32.xlu0 %v156, 123
  %v158 = vpop.permute.xlu0 %157
  %v160 = vmul.f32 %v150, %v158
  %v161 = vmul.f32 %v151, %v158
  %v162 = vmul.f32 %v152, %v158
  %v163 = vmul.f32 %v153, %v158
  %v164 = vld [vmem:[%s6] sm:$0xf]
  %v165 = vpack.c.bf16 %v162, %v160
  %v166 = vpack.c.bf16 %v163, %v161
  %s167 = scalar_lea.vmem %s7, 1
  %v168 = vld [vmem:[%s167] sm:$0x1]
  %v170 = vperm.slane %v168, 0
  %171 = vrot.lane.b32.xlu0 %v170, 124
  %v172 = vpop.permute.xlu0 %171
  %v174 = vmul.f32 %v150, %v172
  %v175 = vmul.f32 %v151, %v172
  %v176 = vmul.f32 %v152, %v172
  %v177 = vmul.f32 %v153, %v172
  %s178 = scalar_lea.vmem %s6, 4
  %v179 = vld [vmem:[%s178] sm:$0xf]
  %v180 = vpack.c.bf16 %v176, %v174
  %v181 = vpack.c.bf16 %v177, %v175
  %184 = vrot.lane.b32.xlu0 %v180, 4
  %v185 = vpop.permute.xlu0 %184
  %186 = vrot.lane.b32.xlu0 %v181, 4
  %v187 = vpop.permute.xlu0 %186
  %vm188 = vcmask 31744
  %v189 = vsel %vm188, %v185, %v187
  %vm191 = vcmask 130048
  %v193 = vsel %vm191, %v179, 0
  %195 = vmatpush.bf16.msra.mxu0 0
  %196 = vmatpush.bf16.msra.mxu0 0
  %197 = vmatpush.bf16.msra.mxu0 0
  %198 = vmatpush.bf16.msra.mxu0 0
  %199 = vmatpush.bf16.msra.mxu0 0
  %200 = vmatpush.bf16.msra.mxu0 0
  %201 = vmatpush.bf16.msra.mxu0 0
  %202 = vmatpush.bf16.msra.mxu0 %v189
  %203 = vmatmul.bf16.gmra.mxu0 %v193
  %v204 = vpop.f32.mrf.mxu0
  %v205 = vadd.f32 0.0, %v204
  %v206 = vpop.f32.mrf.mxu0
  %207 = vdwg.mxu0
  %210 = vrot.lane.b32.xlu0 %v165, 5
  %v211 = vpop.permute.xlu0 %210
  %212 = vrot.lane.b32.xlu0 %v166, 5
  %v213 = vpop.permute.xlu0 %212
  %vm214 = vcmask 39936
  %v215 = vsel %vm214, %v211, %v213
  %v218 = vsel %vm191, %v164, 0
  %220 = vmatpush.bf16.msra.mxu0 0
  %221 = vmatpush.bf16.msra.mxu0 0
  %222 = vmatpush.bf16.msra.mxu0 0
  %223 = vmatpush.bf16.msra.mxu0 0
  %224 = vmatpush.bf16.msra.mxu0 0
  %225 = vmatpush.bf16.msra.mxu0 0
  %226 = vmatpush.bf16.msra.mxu0 0
  %227 = vmatpush.bf16.msra.mxu0 %v215
  %228 = vmatmul.bf16.gmra.mxu0 %v218
  %v229 = vpop.f32.mrf.mxu0
  %v230 = vadd.f32 %v205, %v229
  %v231 = vpop.f32.mrf.mxu0
  %232 = vdwg.mxu0
  %s233 = scalar_lea.vmem %s7, 2
  %v234 = vld [vmem:[%s233] sm:$0x1]
  %v236 = vperm.slane %v234, 0
  %237 = vrot.lane.b32.xlu0 %v236, 125
  %v238 = vpop.permute.xlu0 %237
  %v240 = vmul.f32 %v150, %v238
  %v241 = vmul.f32 %v151, %v238
  %v242 = vmul.f32 %v152, %v238
  %v243 = vmul.f32 %v153, %v238
  %s244 = scalar_lea.vmem %s6, 8
  %v245 = vld [vmem:[%s244] sm:$0xf]
  %v246 = vpack.c.bf16 %v242, %v240
  %v247 = vpack.c.bf16 %v243, %v241
  %250 = vrot.lane.b32.xlu0 %v246, 3
  %v251 = vpop.permute.xlu0 %250
  %252 = vrot.lane.b32.xlu0 %v247, 3
  %v253 = vpop.permute.xlu0 %252
  %vm254 = vcmask 23552
  %v255 = vsel %vm254, %v251, %v253
  %v258 = vsel %vm191, %v245, 0
  %260 = vmatpush.bf16.msra.mxu0 0
  %261 = vmatpush.bf16.msra.mxu0 0
  %262 = vmatpush.bf16.msra.mxu0 0
  %263 = vmatpush.bf16.msra.mxu0 0
  %264 = vmatpush.bf16.msra.mxu0 0
  %265 = vmatpush.bf16.msra.mxu0 0
  %266 = vmatpush.bf16.msra.mxu0 0
  %267 = vmatpush.bf16.msra.mxu0 %v255
  %268 = vmatmul.bf16.gmra.mxu0 %v258
  %v269 = vpop.f32.mrf.mxu0
  %v270 = vadd.f32 0.0, %v269
  %v271 = vpop.f32.mrf.mxu0
  %272 = vdwg.mxu0
  %v273 = vadd.f32 %v230, %v270
  %s274 = scalar_lea.vmem %s7, 3
  %v275 = vld [vmem:[%s274] sm:$0x1]
  %v277 = vperm.slane %v275, 0
  %278 = vrot.lane.b32.xlu0 %v277, 127
  %v279 = vpop.permute.xlu0 %278
  %v281 = vmul.f32 %v150, %v279
  %v282 = vmul.f32 %v151, %v279
  %v283 = vmul.f32 %v152, %v279
  %v284 = vmul.f32 %v153, %v279
  %s285 = scalar_lea.vmem %s6, 12
  %v286 = vld [vmem:[%s285] sm:$0xf]
  %v287 = vpack.c.bf16 %v283, %v281
  %v288 = vpack.c.bf16 %v284, %v282
  %291 = vrot.lane.b32.xlu0 %v287, 1
  %v292 = vpop.permute.xlu0 %291
  %293 = vrot.lane.b32.xlu0 %v288, 1
  %v294 = vpop.permute.xlu0 %293
  %vm295 = vcmask 7168
  %v296 = vsel %vm295, %v292, %v294
  %v299 = vsel %vm191, %v286, 0
  %301 = vmatpush.bf16.msra.mxu0 0
  %302 = vmatpush.bf16.msra.mxu0 0
  %303 = vmatpush.bf16.msra.mxu0 0
  %304 = vmatpush.bf16.msra.mxu0 0
  %305 = vmatpush.bf16.msra.mxu0 0
  %306 = vmatpush.bf16.msra.mxu0 0
  %307 = vmatpush.bf16.msra.mxu0 0
  %308 = vmatpush.bf16.msra.mxu0 %v296
  %309 = vmatmul.bf16.gmra.mxu0 %v299
  %v310 = vpop.f32.mrf.mxu0
  %v311 = vadd.f32 0.0, %v310
  %v312 = vpop.f32.mrf.mxu0
  %313 = vdwg.mxu0
  %v314 = vadd.f32 %v273, %v311
  %s315 = scalar_lea.vmem %s7, 4
  %v316 = vld [vmem:[%s315] sm:$0x1]
  %v318 = vperm.slane %v316, 0
  %v320 = vmul.f32 %v151, %v318
  %v321 = vmul.f32 %v153, %v318
  %s322 = scalar_lea.vmem %s6, 16
  %v323 = vld [vmem:[%s322] sm:$0xf]
  %v324 = vpack.c.bf16 %v321, %v320
  %v326 = vsel %vm191, %v323, 0
  %328 = vmatpush.bf16.msra.mxu0 0
  %329 = vmatpush.bf16.msra.mxu0 0
  %330 = vmatpush.bf16.msra.mxu0 0
  %331 = vmatpush.bf16.msra.mxu0 0
  %332 = vmatpush.bf16.msra.mxu0 0
  %333 = vmatpush.bf16.msra.mxu0 0
  %334 = vmatpush.bf16.msra.mxu0 0
  %335 = vmatpush.bf16.msra.mxu0 %v324
  %336 = vmatmul.bf16.gmra.mxu0 %v326
  %v337 = vpop.f32.mrf.mxu0
  %v338 = vadd.f32 0.0, %v337
  %v339 = vpop.f32.mrf.mxu0
  %340 = vdwg.mxu0
  %v341 = vadd.f32 %v314, %v338
  %s342 = scalar_lea.vmem %s7, 5
  %v343 = vld [vmem:[%s342] sm:$0x1]
  %v345 = vperm.slane %v343, 0
  %346 = vrot.lane.b32.xlu0 %v345, 1
  %v347 = vpop.permute.xlu0 %346
  %v349 = vmul.f32 %v151, %v347
  %v350 = vmul.f32 %v153, %v347
  %s351 = scalar_lea.vmem %s6, 20
  %v352 = vld [vmem:[%s351] sm:$0xf]
  %v353 = vpack.c.bf16 %v350, %v349
  %355 = vrot.lane.b32.xlu0 %v353, 127
  %v356 = vpop.permute.xlu0 %355
  %v359 = vsel %vm191, %v352, 0
  %361 = vmatpush.bf16.msra.mxu0 0
  %362 = vmatpush.bf16.msra.mxu0 0
  %363 = vmatpush.bf16.msra.mxu0 0
  %364 = vmatpush.bf16.msra.mxu0 0
  %365 = vmatpush.bf16.msra.mxu0 0
  %366 = vmatpush.bf16.msra.mxu0 0
  %367 = vmatpush.bf16.msra.mxu0 0
  %368 = vmatpush.bf16.msra.mxu0 %v356
  %369 = vmatmul.bf16.gmra.mxu0 %v359
  %v370 = vpop.f32.mrf.mxu0
  %v371 = vadd.f32 0.0, %v370
  %v372 = vpop.f32.mrf.mxu0
  %373 = vdwg.mxu0
  %v374 = vadd.f32 %v341, %v371
  %s375 = scalar_lea.vmem %s7, 6
  %v376 = vld [vmem:[%s375] sm:$0x1]
  %v378 = vperm.slane %v376, 0
  %379 = vrot.lane.b32.xlu0 %v378, 3
  %v380 = vpop.permute.xlu0 %379
  %v382 = vmul.f32 %v151, %v380
  %v383 = vmul.f32 %v153, %v380
  %s384 = scalar_lea.vmem %s6, 24
  %v385 = vld [vmem:[%s384] sm:$0xf]
  %v386 = vpack.c.bf16 %v383, %v382
  %388 = vrot.lane.b32.xlu0 %v386, 125
  %v389 = vpop.permute.xlu0 %388
  %v392 = vsel %vm191, %v385, 0
  %394 = vmatpush.bf16.msra.mxu0 0
  %395 = vmatpush.bf16.msra.mxu0 0
  %396 = vmatpush.bf16.msra.mxu0 0
  %397 = vmatpush.bf16.msra.mxu0 0
  %398 = vmatpush.bf16.msra.mxu0 0
  %399 = vmatpush.bf16.msra.mxu0 0
  %400 = vmatpush.bf16.msra.mxu0 0
  %401 = vmatpush.bf16.msra.mxu0 %v389
  %402 = vmatmul.bf16.gmra.mxu0 %v392
  %v403 = vpop.f32.mrf.mxu0
  %v404 = vadd.f32 0.0, %v403
  %v405 = vpop.f32.mrf.mxu0
  %406 = vdwg.mxu0
  %v407 = vadd.f32 %v374, %v404
  %s408 = scalar_lea.vmem %s7, 7
  %v409 = vld [vmem:[%s408] sm:$0x1]
  %v411 = vperm.slane %v409, 0
  %412 = vrot.lane.b32.xlu0 %v411, 4
  %v413 = vpop.permute.xlu0 %412
  %v415 = vmul.f32 %v151, %v413
  %v416 = vmul.f32 %v153, %v413
  %s417 = scalar_lea.vmem %s6, 28
  %v418 = vld [vmem:[%s417] sm:$0xf]
  %v419 = vpack.c.bf16 %v416, %v415
  %421 = vrot.lane.b32.xlu0 %v419, 124
  %v422 = vpop.permute.xlu0 %421
  %v425 = vsel %vm191, %v418, 0
  %427 = vmatpush.bf16.msra.mxu0 0
  %428 = vmatpush.bf16.msra.mxu0 0
  %429 = vmatpush.bf16.msra.mxu0 0
  %430 = vmatpush.bf16.msra.mxu0 0
  %431 = vmatpush.bf16.msra.mxu0 0
  %432 = vmatpush.bf16.msra.mxu0 0
  %433 = vmatpush.bf16.msra.mxu0 0
  %434 = vmatpush.bf16.msra.mxu0 %v422
  %435 = vmatmul.bf16.gmra.mxu0 %v425
  %v436 = vpop.f32.mrf.mxu0
  %v437 = vadd.f32 0.0, %v436
  %v438 = vpop.f32.mrf.mxu0
  %439 = vdwg.mxu0
  %v440 = vadd.f32 %v407, %v437
  %s441 = scalar_lea.vmem %s7, 8
  %v442 = vld [vmem:[%s441] sm:$0x1]
  %v444 = vperm.slane %v442, 0
  %445 = vrot.lane.b32.xlu0 %v444, 5
  %v446 = vpop.permute.xlu0 %445
  %v448 = vmul.f32 %v151, %v446
  %v449 = vmul.f32 %v153, %v446
  %s450 = scalar_lea.vmem %s6, 32
  %v451 = vld [vmem:[%s450] sm:$0xf]
  %v452 = vpack.c.bf16 %v449, %v448
  %454 = vrot.lane.b32.xlu0 %v452, 123
  %v455 = vpop.permute.xlu0 %454
  %v458 = vsel %vm191, %v451, 0
  %460 = vmatpush.bf16.msra.mxu0 0
  %461 = vmatpush.bf16.msra.mxu0 0
  %462 = vmatpush.bf16.msra.mxu0 0
  %463 = vmatpush.bf16.msra.mxu0 0
  %464 = vmatpush.bf16.msra.mxu0 0
  %465 = vmatpush.bf16.msra.mxu0 0
  %466 = vmatpush.bf16.msra.mxu0 0
  %467 = vmatpush.bf16.msra.mxu0 %v455
  %468 = vmatmul.bf16.gmra.mxu0 %v458
  %v469 = vpop.f32.mrf.mxu0
  %v470 = vadd.f32 0.0, %v469
  %v471 = vpop.f32.mrf.mxu0
  %472 = vdwg.mxu0
  %v473 = vadd.f32 %v440, %v470
  %474 = vst.msk [vmem:[%s30] sm:$0xff] %vm143, %v473
  %s475 = scalar_lea.vmem %s8, 24
  // Predicated region
  $region34: #{densenet_forward.21} parent=0 // pred_check
    _
  $region35: #{densenet_forward.21} parent=0 // pred_check_branch
    %477 = sbr.rel (0) target = $region37
  $region36: #{densenet_forward.21} parent=0 // pred_region
    _
  $region37: #{densenet_forward.21} parent=0 // pred_fallthru
    _
  // Predicated region
  $region38: #{densenet_forward.21} parent=0 // pred_check
    _
  $region39: #{densenet_forward.21} parent=0 // pred_check_branch
    %479 = sbr.rel (0) target = $region41
  $region40: #{densenet_forward.21} parent=0 // pred_region
    %s480 = scalar_lea.vmem %s8, 24
  $region41: #{densenet_forward.21} parent=0 // pred_fallthru
    _

// kernel: densenet_forward.25
$region0: #{densenet_forward.25}
  #allocation0 [shape = 'u32[]', space=smem, size = 0x4, offset = 0x4, fixed_abs, tag = 'smem constant byte address 0x4 - core index']
  #allocation1 [shape = 'u32[72,128]{1,0:T(1,128)}', space=vmem, size = 0x9000, scoped, tag = 'internal scratch']
  %s0 = inlined_call_operand.vmem [shape: f32[32,8], index: 0, kind: input, shape index: {}]
  %s1 = inlined_call_operand.vmem [shape: f32[32,1], index: 1, kind: input, shape index: {}]
  %s2 = inlined_call_operand.vmem [shape: f32[32,1], index: 2, kind: input, shape index: {}]
  %s3 = inlined_call_operand.vmem [shape: f32[32,8], index: 3, kind: output, shape index: {}]
  %s4 = sld [smem:[#allocation0]]
  $region22: #{densenet_forward.25} parent=0
    _
  %s6 = ssub.s32 1, %s4
  %s7 = scalar_select 0, %s6, %s4
  // Predicated region
  $region2: #{densenet_forward.25} parent=0 // pred_check
    _
  $region3: #{densenet_forward.25} parent=0 // pred_check_branch
    %9 = sbr.rel (0) target = $region5
  $region4: #{densenet_forward.25} parent=0 // pred_region
    _
  $region5: #{densenet_forward.25} parent=0 // pred_fallthru
    _
  // Predicated region
  $region6: #{densenet_forward.25} parent=0 // pred_check
    _
  $region7: #{densenet_forward.25} parent=0 // pred_check_branch
    %11 = sbr.rel (0) target = $region9
  $region8: #{densenet_forward.25} parent=0 // pred_region
    _
  $region9: #{densenet_forward.25} parent=0 // pred_fallthru
    _
  // Predicated region
  $region10: #{densenet_forward.25} parent=0 // pred_check
    _
  $region11: #{densenet_forward.25} parent=0 // pred_check_branch
    %13 = sbr.rel (0) target = $region13
  $region12: #{densenet_forward.25} parent=0 // pred_region
    _
  $region13: #{densenet_forward.25} parent=0 // pred_fallthru
    _
  %v14 = vld [vmem:[%s0] sm:$0xff]
  %v15 = vld [vmem:[%s0 + $0x8] sm:$0xff]
  %v16 = vld [vmem:[%s0 + $0x10] sm:$0xff]
  %v17 = vld [vmem:[%s0 + $0x18] sm:$0xff]
  %v18 = vld [vmem:[%s1] sm:$0xff]
  %v19 = vld [vmem:[%s1 + $0x8] sm:$0xff]
  %v20 = vld [vmem:[%s1 + $0x10] sm:$0xff]
  %v21 = vld [vmem:[%s1 + $0x18] sm:$0xff]
  %23 = vset.pattern.permute.xlu0 0
  %24 = vperm.xlu0 %23, %v18
  %v25 = vpop.permute.xlu0 %24
  %28 = vset.pattern.permute.xlu0 0
  %29 = vperm.xlu0 %28, %v19
  %v30 = vpop.permute.xlu0 %29
  %33 = vset.pattern.permute.xlu0 0
  %34 = vperm.xlu0 %33, %v20
  %v35 = vpop.permute.xlu0 %34
  %38 = vset.pattern.permute.xlu0 0
  %39 = vperm.xlu0 %38, %v21
  %v40 = vpop.permute.xlu0 %39
  %v42 = vmul.f32 %v14, %v25
  %v43 = vmul.f32 %v15, %v30
  %v44 = vmul.f32 %v16, %v35
  %v45 = vmul.f32 %v17, %v40
  %v46 = vld [vmem:[%s2] sm:$0xff]
  %v47 = vld [vmem:[%s2 + $0x8] sm:$0xff]
  %v48 = vld [vmem:[%s2 + $0x10] sm:$0xff]
  %v49 = vld [vmem:[%s2 + $0x18] sm:$0xff]
  %51 = vset.pattern.permute.xlu0 0
  %52 = vperm.xlu0 %51, %v46
  %v53 = vpop.permute.xlu0 %52
  %56 = vset.pattern.permute.xlu0 0
  %57 = vperm.xlu0 %56, %v47
  %v58 = vpop.permute.xlu0 %57
  %61 = vset.pattern.permute.xlu0 0
  %62 = vperm.xlu0 %61, %v48
  %v63 = vpop.permute.xlu0 %62
  %66 = vset.pattern.permute.xlu0 0
  %67 = vperm.xlu0 %66, %v49
  %v68 = vpop.permute.xlu0 %67
  %v70 = vadd.f32 %v42, %v53
  %v71 = vadd.f32 %v43, %v58
  %v72 = vadd.f32 %v44, %v63
  %v73 = vadd.f32 %v45, %v68
  %v74 = vmax.f32 %v70, 0.0
  %v75 = vmax.f32 %v71, 0.0
  %v76 = vmax.f32 %v72, 0.0
  %v77 = vmax.f32 %v73, 0.0
  %vm78 = vcmask 64512
  %79 = vst.msk [vmem:[%s3] sm:$0xff] %vm78, %v74
  %80 = vst.msk [vmem:[%s3 + $0x8] sm:$0xff] %vm78, %v75
  %81 = vst.msk [vmem:[%s3 + $0x10] sm:$0xff] %vm78, %v76
  %82 = vst.msk [vmem:[%s3 + $0x18] sm:$0xff] %vm78, %v77
  // Predicated region
  $region14: #{densenet_forward.25} parent=0 // pred_check
    _
  $region15: #{densenet_forward.25} parent=0 // pred_check_branch
    %84 = sbr.rel (0) target = $region17
  $region16: #{densenet_forward.25} parent=0 // pred_region
    _
  $region17: #{densenet_forward.25} parent=0 // pred_fallthru
    _
  // Predicated region
  $region18: #{densenet_forward.25} parent=0 // pred_check
    _
  $region19: #{densenet_forward.25} parent=0 // pred_check_branch
    %86 = sbr.rel (0) target = $region21
  $region20: #{densenet_forward.25} parent=0 // pred_region
    _
  $region21: #{densenet_forward.25} parent=0 // pred_fallthru
    _

// kernel: densenet_forward.23
$region0: #{densenet_forward.23}
  #allocation0 [shape = 'u32[]', space=smem, size = 0x4, offset = 0x4, fixed_abs, tag = 'smem constant byte address 0x4 - core index']
  #allocation1 [shape = 'u32[72,128]{1,0:T(1,128)}', space=vmem, size = 0x9000, scoped, tag = 'internal scratch']
  #allocation2 [shape = 'f32[16,264]{1,0:T(8,128)}', space=vmem, size = 0x6000, scoped, tag = 'scratch operand']
  %s0 = inlined_call_operand.vmem [shape: f32[32,8], index: 0, kind: input, shape index: {}, may-alias: {0,8}]
  %s1 = inlined_call_operand.vmem [shape: f32[16,1], index: 1, kind: input, shape index: {}]
  %s2 = inlined_call_operand.vmem [shape: f32[16,1], index: 2, kind: input, shape index: {}]
  %s3 = inlined_call_operand.vmem [shape: bf16[16,16], index: 3, kind: input, shape index: {}]
  %s4 = inlined_call_operand.vmem [shape: f32[16,1], index: 4, kind: input, shape index: {}]
  %s5 = inlined_call_operand.vmem [shape: f32[16,1], index: 5, kind: input, shape index: {}]
  %s6 = inlined_call_operand.vmem [shape: bf16[9,8,16], index: 6, kind: input, shape index: {}]
  %s7 = inlined_call_operand.vmem [shape: f32[9,1,8], index: 7, kind: input, shape index: {}]
  %s8 = inlined_call_operand.vmem [shape: f32[32,8], index: 8, kind: output, shape index: {}, may-alias: {0,8}]
  %s9 = sld [smem:[#allocation0]]
  $region42: #{densenet_forward.23} parent=0
    _
  %s11 = ssub.s32 1, %s9
  %s12 = scalar_select 0, %s11, %s9
  // Predicated region
  $region2: #{densenet_forward.23} parent=0 // pred_check
    _
  $region3: #{densenet_forward.23} parent=0 // pred_check_branch
    %14 = sbr.rel (0) target = $region5
  $region4: #{densenet_forward.23} parent=0 // pred_region
    _
  $region5: #{densenet_forward.23} parent=0 // pred_fallthru
    _
  // Predicated region
  $region6: #{densenet_forward.23} parent=0 // pred_check
    _
  $region7: #{densenet_forward.23} parent=0 // pred_check_branch
    %16 = sbr.rel (0) target = $region9
  $region8: #{densenet_forward.23} parent=0 // pred_region
    _
  $region9: #{densenet_forward.23} parent=0 // pred_fallthru
    _
  // Predicated region
  $region10: #{densenet_forward.23} parent=0 // pred_check
    _
  $region11: #{densenet_forward.23} parent=0 // pred_check_branch
    %18 = sbr.rel (0) target = $region13
  $region12: #{densenet_forward.23} parent=0 // pred_region
    _
  $region13: #{densenet_forward.23} parent=0 // pred_fallthru
    _
  // Predicated region
  $region14: #{densenet_forward.23} parent=0 // pred_check
    _
  $region15: #{densenet_forward.23} parent=0 // pred_check_branch
    %20 = sbr.rel (0) target = $region17
  $region16: #{densenet_forward.23} parent=0 // pred_region
    _
  $region17: #{densenet_forward.23} parent=0 // pred_fallthru
    _
  // Predicated region
  $region18: #{densenet_forward.23} parent=0 // pred_check
    _
  $region19: #{densenet_forward.23} parent=0 // pred_check_branch
    %22 = sbr.rel (0) target = $region21
  $region20: #{densenet_forward.23} parent=0 // pred_region
    _
  $region21: #{densenet_forward.23} parent=0 // pred_fallthru
    _
  // Predicated region
  $region22: #{densenet_forward.23} parent=0 // pred_check
    _
  $region23: #{densenet_forward.23} parent=0 // pred_check_branch
    %24 = sbr.rel (0) target = $region25
  $region24: #{densenet_forward.23} parent=0 // pred_region
    _
  $region25: #{densenet_forward.23} parent=0 // pred_fallthru
    _
  // Predicated region
  $region26: #{densenet_forward.23} parent=0 // pred_check
    _
  $region27: #{densenet_forward.23} parent=0 // pred_check_branch
    %26 = sbr.rel (0) target = $region29
  $region28: #{densenet_forward.23} parent=0 // pred_region
    _
  $region29: #{densenet_forward.23} parent=0 // pred_fallthru
    _
  // Predicated region
  $region30: #{densenet_forward.23} parent=0 // pred_check
    _
  $region31: #{densenet_forward.23} parent=0 // pred_check_branch
    %28 = sbr.rel (0) target = $region33
  $region32: #{densenet_forward.23} parent=0 // pred_region
    _
  $region33: #{densenet_forward.23} parent=0 // pred_fallthru
    _
  %s29 = scalar_lea.vmem %s8, 16
  %s30 = scalar_lea.vmem %s8, 16
  %v32 = vld [vmem:[%s0] sm:$0xff]
  %v33 = vld [vmem:[%s0 + $0x8] sm:$0xff]
  %v34 = vld [vmem:[%s1] sm:$0xff]
  %v35 = vld [vmem:[%s1 + $0x8] sm:$0xff]
  %37 = vset.pattern.permute.xlu0 0
  %38 = vperm.xlu0 %37, %v34
  %v39 = vpop.permute.xlu0 %38
  %42 = vset.pattern.permute.xlu0 0
  %43 = vperm.xlu0 %42, %v35
  %v44 = vpop.permute.xlu0 %43
  %v46 = vmul.f32 %v32, %v39
  %v47 = vmul.f32 %v33, %v44
  %v48 = vld [vmem:[%s2] sm:$0xff]
  %v49 = vld [vmem:[%s2 + $0x8] sm:$0xff]
  %51 = vset.pattern.permute.xlu0 0
  %52 = vperm.xlu0 %51, %v48
  %v53 = vpop.permute.xlu0 %52
  %56 = vset.pattern.permute.xlu0 0
  %57 = vperm.xlu0 %56, %v49
  %v58 = vpop.permute.xlu0 %57
  %v60 = vadd.f32 %v46, %v53
  %v61 = vadd.f32 %v47, %v58
  %v62 = vmax.f32 %v60, 0.0
  %v63 = vmax.f32 %v61, 0.0
  %v64 = vld [vmem:[%s3] sm:$0xf]
  %v65 = vld [vmem:[%s3 + $0x4] sm:$0xf]
  %v66 = vpack.c.bf16 %v63, %v62
  %v69 = vunpack.c.l.b16 %v64
  %v70 = vunpack.c.l.b16 %v65
  %v71 = vpack.c.b16 %v70, %v69
  %vm72 = vcmask 130048
  %v74 = vsel %vm72, %v71, 0
  %76 = vmatpush.bf16.msra.mxu0 0
  %77 = vmatpush.bf16.msra.mxu0 0
  %78 = vmatpush.bf16.msra.mxu0 0
  %79 = vmatpush.bf16.msra.mxu0 0
  %80 = vmatpush.bf16.msra.mxu0 0
  %81 = vmatpush.bf16.msra.mxu0 0
  %82 = vmatpush.bf16.msra.mxu0 0
  %83 = vmatpush.bf16.msra.mxu0 %v66
  %84 = vmatmul.bf16.gmra.mxu0 %v74
  %v85 = vpop.f32.mrf.mxu0
  %v86 = vadd.f32 0.0, %v85
  %v87 = vpop.f32.mrf.mxu0
  %v88 = vadd.f32 0.0, %v87
  %89 = vdwg.mxu0
  %v90 = vld [vmem:[%s4] sm:$0xff]
  %v91 = vld [vmem:[%s4 + $0x8] sm:$0xff]
  %93 = vset.pattern.permute.xlu0 0
  %94 = vperm.xlu0 %93, %v90
  %v95 = vpop.permute.xlu0 %94
  %98 = vset.pattern.permute.xlu0 0
  %99 = vperm.xlu0 %98, %v91
  %v100 = vpop.permute.xlu0 %99
  %v102 = vmul.f32 %v86, %v95
  %v103 = vmul.f32 %v88, %v100
  %v104 = vld [vmem:[%s5] sm:$0xff]
  %v105 = vld [vmem:[%s5 + $0x8] sm:$0xff]
  %107 = vset.pattern.permute.xlu0 0
  %108 = vperm.xlu0 %107, %v104
  %v109 = vpop.permute.xlu0 %108
  %112 = vset.pattern.permute.xlu0 0
  %113 = vperm.xlu0 %112, %v105
  %v114 = vpop.permute.xlu0 %113
  %v116 = vadd.f32 %v102, %v109
  %v117 = vadd.f32 %v103, %v114
  %v118 = vmax.f32 %v116, 0.0
  %v119 = vmax.f32 %v117, 0.0
  %120 = vst [vmem:[#allocation2] sm:$0xff] 0.0
  %121 = vst [vmem:[#allocation2 + $0x8] sm:$0xff] 0.0
  %vm122 = vcmask 64512
  %123 = vst.msk [vmem:[#allocation2 + $0x10] sm:$0xff] %vm122, 0.0
  %124 = vst [vmem:[#allocation2 + $0x18] sm:$0xff] 0.0
  %125 = vst [vmem:[#allocation2 + $0x20] sm:$0xff] 0.0
  %126 = vst.msk [vmem:[#allocation2 + $0x28] sm:$0xff] %vm122, 0.0
  %127 = vst.msk [vmem:[#allocation2 + $0x8] sm:$0xff] %vm122, %v118
  %128 = vst.msk [vmem:[#allocation2 + $0x20] sm:$0xff] %vm122, %v119
  %v129 = vld [vmem:[#allocation2] sm:$0xff]
  %v130 = vld [vmem:[#allocation2 + $0x8] sm:$0xff]
  %v131 = vld [vmem:[#allocation2 + $0x18] sm:$0xff]
  %v132 = vld [vmem:[#allocation2 + $0x20] sm:$0xff]
  %v133 = vld [vmem:[%s7] sm:$0x1]
  %v135 = vperm.slane %v133, 0
  %136 = vrot.lane.b32.xlu0 %v135, 125
  %v137 = vpop.permute.xlu0 %136
  %v139 = vmul.f32 %v129, %v137
  %v140 = vmul.f32 %v130, %v137
  %v141 = vmul.f32 %v131, %v137
  %v142 = vmul.f32 %v132, %v137
  %v143 = vld [vmem:[%s6] sm:$0xf]
  %v144 = vpack.c.bf16 %v141, %v139
  %v145 = vpack.c.bf16 %v142, %v140
  %s146 = scalar_lea.vmem %s7, 1
  %v147 = vld [vmem:[%s146] sm:$0x1]
  %v149 = vperm.slane %v147, 0
  %150 = vrot.lane.b32.xlu0 %v149, 126
  %v151 = vpop.permute.xlu0 %150
  %v153 = vmul.f32 %v129, %v151
  %v154 = vmul.f32 %v130, %v151
  %v155 = vmul.f32 %v131, %v151
  %v156 = vmul.f32 %v132, %v151
  %s157 = scalar_lea.vmem %s6, 4
  %v158 = vld [vmem:[%s157] sm:$0xf]
  %v159 = vpack.c.bf16 %v155, %v153
  %v160 = vpack.c.bf16 %v156, %v154
  %163 = vrot.lane.b32.xlu0 %v159, 2
  %v164 = vpop.permute.xlu0 %163
  %165 = vrot.lane.b32.xlu0 %v160, 2
  %v166 = vpop.permute.xlu0 %165
  %vm167 = vcmask 15360
  %v168 = vsel %vm167, %v164, %v166
  %v171 = vsel %vm72, %v158, 0
  %173 = vmatpush.bf16.msra.mxu0 0
  %174 = vmatpush.bf16.msra.mxu0 0
  %175 = vmatpush.bf16.msra.mxu0 0
  %176 = vmatpush.bf16.msra.mxu0 0
  %177 = vmatpush.bf16.msra.mxu0 0
  %178 = vmatpush.bf16.msra.mxu0 0
  %179 = vmatpush.bf16.msra.mxu0 0
  %180 = vmatpush.bf16.msra.mxu0 %v168
  %181 = vmatmul.bf16.gmra.mxu0 %v171
  %v182 = vpop.f32.mrf.mxu0
  %v183 = vadd.f32 0.0, %v182
  %v184 = vpop.f32.mrf.mxu0
  %185 = vdwg.mxu0
  %188 = vrot.lane.b32.xlu0 %v144, 3
  %v189 = vpop.permute.xlu0 %188
  %190 = vrot.lane.b32.xlu0 %v145, 3
  %v191 = vpop.permute.xlu0 %190
  %vm192 = vcmask 23552
  %v193 = vsel %vm192, %v189, %v191
  %v196 = vsel %vm72, %v143, 0
  %198 = vmatpush.bf16.msra.mxu0 0
  %199 = vmatpush.bf16.msra.mxu0 0
  %200 = vmatpush.bf16.msra.mxu0 0
  %201 = vmatpush.bf16.msra.mxu0 0
  %202 = vmatpush.bf16.msra.mxu0 0
  %203 = vmatpush.bf16.msra.mxu0 0
  %204 = vmatpush.bf16.msra.mxu0 0
  %205 = vmatpush.bf16.msra.mxu0 %v193
  %206 = vmatmul.bf16.gmra.mxu0 %v196
  %v207 = vpop.f32.mrf.mxu0
  %v208 = vadd.f32 %v183, %v207
  %v209 = vpop.f32.mrf.mxu0
  %210 = vdwg.mxu0
  %s211 = scalar_lea.vmem %s7, 2
  %v212 = vld [vmem:[%s211] sm:$0x1]
  %v214 = vperm.slane %v212, 0
  %215 = vrot.lane.b32.xlu0 %v214, 127
  %v216 = vpop.permute.xlu0 %215
  %v218 = vmul.f32 %v129, %v216
  %v219 = vmul.f32 %v130, %v216
  %v220 = vmul.f32 %v131, %v216
  %v221 = vmul.f32 %v132, %v216
  %s222 = scalar_lea.vmem %s6, 8
  %v223 = vld [vmem:[%s222] sm:$0xf]
  %v224 = vpack.c.bf16 %v220, %v218
  %v225 = vpack.c.bf16 %v221, %v219
  %228 = vrot.lane.b32.xlu0 %v224, 1
  %v229 = vpop.permute.xlu0 %228
  %230 = vrot.lane.b32.xlu0 %v225, 1
  %v231 = vpop.permute.xlu0 %230
  %vm232 = vcmask 7168
  %v233 = vsel %vm232, %v229, %v231
  %v236 = vsel %vm72, %v223, 0
  %238 = vmatpush.bf16.msra.mxu0 0
  %239 = vmatpush.bf16.msra.mxu0 0
  %240 = vmatpush.bf16.msra.mxu0 0
  %241 = vmatpush.bf16.msra.mxu0 0
  %242 = vmatpush.bf16.msra.mxu0 0
  %243 = vmatpush.bf16.msra.mxu0 0
  %244 = vmatpush.bf16.msra.mxu0 0
  %245 = vmatpush.bf16.msra.mxu0 %v233
  %246 = vmatmul.bf16.gmra.mxu0 %v236
  %v247 = vpop.f32.mrf.mxu0
  %v248 = vadd.f32 0.0, %v247
  %v249 = vpop.f32.mrf.mxu0
  %250 = vdwg.mxu0
  %v251 = vadd.f32 %v208, %v248
  %s252 = scalar_lea.vmem %s7, 3
  %v253 = vld [vmem:[%s252] sm:$0x1]
  %v255 = vperm.slane %v253, 0
  %256 = vrot.lane.b32.xlu0 %v255, 127
  %v257 = vpop.permute.xlu0 %256
  %v259 = vmul.f32 %v129, %v257
  %v260 = vmul.f32 %v130, %v257
  %v261 = vmul.f32 %v131, %v257
  %v262 = vmul.f32 %v132, %v257
  %s263 = scalar_lea.vmem %s6, 12
  %v264 = vld [vmem:[%s263] sm:$0xf]
  %v265 = vpack.c.bf16 %v261, %v259
  %v266 = vpack.c.bf16 %v262, %v260
  %269 = vrot.lane.b32.xlu0 %v265, 1
  %v270 = vpop.permute.xlu0 %269
  %271 = vrot.lane.b32.xlu0 %v266, 1
  %v272 = vpop.permute.xlu0 %271
  %v273 = vsel %vm232, %v270, %v272
  %v276 = vsel %vm72, %v264, 0
  %278 = vmatpush.bf16.msra.mxu0 0
  %279 = vmatpush.bf16.msra.mxu0 0
  %280 = vmatpush.bf16.msra.mxu0 0
  %281 = vmatpush.bf16.msra.mxu0 0
  %282 = vmatpush.bf16.msra.mxu0 0
  %283 = vmatpush.bf16.msra.mxu0 0
  %284 = vmatpush.bf16.msra.mxu0 0
  %285 = vmatpush.bf16.msra.mxu0 %v273
  %286 = vmatmul.bf16.gmra.mxu0 %v276
  %v287 = vpop.f32.mrf.mxu0
  %v288 = vadd.f32 0.0, %v287
  %v289 = vpop.f32.mrf.mxu0
  %290 = vdwg.mxu0
  %v291 = vadd.f32 %v251, %v288
  %s292 = scalar_lea.vmem %s7, 4
  %v293 = vld [vmem:[%s292] sm:$0x1]
  %v295 = vperm.slane %v293, 0
  %v297 = vmul.f32 %v130, %v295
  %v298 = vmul.f32 %v132, %v295
  %s299 = scalar_lea.vmem %s6, 16
  %v300 = vld [vmem:[%s299] sm:$0xf]
  %v301 = vpack.c.bf16 %v298, %v297
  %v303 = vsel %vm72, %v300, 0
  %305 = vmatpush.bf16.msra.mxu0 0
  %306 = vmatpush.bf16.msra.mxu0 0
  %307 = vmatpush.bf16.msra.mxu0 0
  %308 = vmatpush.bf16.msra.mxu0 0
  %309 = vmatpush.bf16.msra.mxu0 0
  %310 = vmatpush.bf16.msra.mxu0 0
  %311 = vmatpush.bf16.msra.mxu0 0
  %312 = vmatpush.bf16.msra.mxu0 %v301
  %313 = vmatmul.bf16.gmra.mxu0 %v303
  %v314 = vpop.f32.mrf.mxu0
  %v315 = vadd.f32 0.0, %v314
  %v316 = vpop.f32.mrf.mxu0
  %317 = vdwg.mxu0
  %v318 = vadd.f32 %v291, %v315
  %s319 = scalar_lea.vmem %s7, 5
  %v320 = vld [vmem:[%s319] sm:$0x1]
  %v322 = vperm.slane %v320, 0
  %323 = vrot.lane.b32.xlu0 %v322, 1
  %v324 = vpop.permute.xlu0 %323
  %v326 = vmul.f32 %v130, %v324
  %v327 = vmul.f32 %v132, %v324
  %s328 = scalar_lea.vmem %s6, 20
  %v329 = vld [vmem:[%s328] sm:$0xf]
  %v330 = vpack.c.bf16 %v327, %v326
  %332 = vrot.lane.b32.xlu0 %v330, 127
  %v333 = vpop.permute.xlu0 %332
  %v336 = vsel %vm72, %v329, 0
  %338 = vmatpush.bf16.msra.mxu0 0
  %339 = vmatpush.bf16.msra.mxu0 0
  %340 = vmatpush.bf16.msra.mxu0 0
  %341 = vmatpush.bf16.msra.mxu0 0
  %342 = vmatpush.bf16.msra.mxu0 0
  %343 = vmatpush.bf16.msra.mxu0 0
  %344 = vmatpush.bf16.msra.mxu0 0
  %345 = vmatpush.bf16.msra.mxu0 %v333
  %346 = vmatmul.bf16.gmra.mxu0 %v336
  %v347 = vpop.f32.mrf.mxu0
  %v348 = vadd.f32 0.0, %v347
  %v349 = vpop.f32.mrf.mxu0
  %350 = vdwg.mxu0
  %v351 = vadd.f32 %v318, %v348
  %s352 = scalar_lea.vmem %s7, 6
  %v353 = vld [vmem:[%s352] sm:$0x1]
  %v355 = vperm.slane %v353, 0
  %356 = vrot.lane.b32.xlu0 %v355, 1
  %v357 = vpop.permute.xlu0 %356
  %v359 = vmul.f32 %v130, %v357
  %v360 = vmul.f32 %v132, %v357
  %s361 = scalar_lea.vmem %s6, 24
  %v362 = vld [vmem:[%s361] sm:$0xf]
  %v363 = vpack.c.bf16 %v360, %v359
  %365 = vrot.lane.b32.xlu0 %v363, 127
  %v366 = vpop.permute.xlu0 %365
  %v369 = vsel %vm72, %v362, 0
  %371 = vmatpush.bf16.msra.mxu0 0
  %372 = vmatpush.bf16.msra.mxu0 0
  %373 = vmatpush.bf16.msra.mxu0 0
  %374 = vmatpush.bf16.msra.mxu0 0
  %375 = vmatpush.bf16.msra.mxu0 0
  %376 = vmatpush.bf16.msra.mxu0 0
  %377 = vmatpush.bf16.msra.mxu0 0
  %378 = vmatpush.bf16.msra.mxu0 %v366
  %379 = vmatmul.bf16.gmra.mxu0 %v369
  %v380 = vpop.f32.mrf.mxu0
  %v381 = vadd.f32 0.0, %v380
  %v382 = vpop.f32.mrf.mxu0
  %383 = vdwg.mxu0
  %v384 = vadd.f32 %v351, %v381
  %s385 = scalar_lea.vmem %s7, 7
  %v386 = vld [vmem:[%s385] sm:$0x1]
  %v388 = vperm.slane %v386, 0
  %389 = vrot.lane.b32.xlu0 %v388, 2
  %v390 = vpop.permute.xlu0 %389
  %v392 = vmul.f32 %v130, %v390
  %v393 = vmul.f32 %v132, %v390
  %s394 = scalar_lea.vmem %s6, 28
  %v395 = vld [vmem:[%s394] sm:$0xf]
  %v396 = vpack.c.bf16 %v393, %v392
  %398 = vrot.lane.b32.xlu0 %v396, 126
  %v399 = vpop.permute.xlu0 %398
  %v402 = vsel %vm72, %v395, 0
  %404 = vmatpush.bf16.msra.mxu0 0
  %405 = vmatpush.bf16.msra.mxu0 0
  %406 = vmatpush.bf16.msra.mxu0 0
  %407 = vmatpush.bf16.msra.mxu0 0
  %408 = vmatpush.bf16.msra.mxu0 0
  %409 = vmatpush.bf16.msra.mxu0 0
  %410 = vmatpush.bf16.msra.mxu0 0
  %411 = vmatpush.bf16.msra.mxu0 %v399
  %412 = vmatmul.bf16.gmra.mxu0 %v402
  %v413 = vpop.f32.mrf.mxu0
  %v414 = vadd.f32 0.0, %v413
  %v415 = vpop.f32.mrf.mxu0
  %416 = vdwg.mxu0
  %v417 = vadd.f32 %v384, %v414
  %s418 = scalar_lea.vmem %s7, 8
  %v419 = vld [vmem:[%s418] sm:$0x1]
  %v421 = vperm.slane %v419, 0
  %422 = vrot.lane.b32.xlu0 %v421, 3
  %v423 = vpop.permute.xlu0 %422
  %v425 = vmul.f32 %v130, %v423
  %v426 = vmul.f32 %v132, %v423
  %s427 = scalar_lea.vmem %s6, 32
  %v428 = vld [vmem:[%s427] sm:$0xf]
  %v429 = vpack.c.bf16 %v426, %v425
  %431 = vrot.lane.b32.xlu0 %v429, 125
  %v432 = vpop.permute.xlu0 %431
  %v435 = vsel %vm72, %v428, 0
  %437 = vmatpush.bf16.msra.mxu0 0
  %438 = vmatpush.bf16.msra.mxu0 0
  %439 = vmatpush.bf16.msra.mxu0 0
  %440 = vmatpush.bf16.msra.mxu0 0
  %441 = vmatpush.bf16.msra.mxu0 0
  %442 = vmatpush.bf16.msra.mxu0 0
  %443 = vmatpush.bf16.msra.mxu0 0
  %444 = vmatpush.bf16.msra.mxu0 %v432
  %445 = vmatmul.bf16.gmra.mxu0 %v435
  %v446 = vpop.f32.mrf.mxu0
  %v447 = vadd.f32 0.0, %v446
  %v448 = vpop.f32.mrf.mxu0
  %449 = vdwg.mxu0
  %v450 = vadd.f32 %v417, %v447
  %451 = vst.msk [vmem:[%s30] sm:$0xff] %vm122, %v450
  %s452 = scalar_lea.vmem %s8, 16
  // Predicated region
  $region34: #{densenet_forward.23} parent=0 // pred_check
    _
  $region35: #{densenet_forward.23} parent=0 // pred_check_branch
    %454 = sbr.rel (0) target = $region37
  $region36: #{densenet_forward.23} parent=0 // pred_region
    _
  $region37: #{densenet_forward.23} parent=0 // pred_fallthru
    _
  // Predicated region
  $region38: #{densenet_forward.23} parent=0 // pred_check
    _
  $region39: #{densenet_forward.23} parent=0 // pred_check_branch
    %456 = sbr.rel (0) target = $region41
  $region40: #{densenet_forward.23} parent=0 // pred_region
    %s457 = scalar_lea.vmem %s8, 16
  $region41: #{densenet_forward.23} parent=0 // pred_fallthru
    _

// kernel: densenet_forward.24
$region0: #{densenet_forward.24}
  #allocation0 [shape = 'u32[]', space=smem, size = 0x4, offset = 0x4, fixed_abs, tag = 'smem constant byte address 0x4 - core index']
  #allocation1 [shape = 'u32[72,128]{1,0:T(1,128)}', space=vmem, size = 0x9000, scoped, tag = 'internal scratch']
  #allocation2 [shape = 'f32[16,264]{1,0:T(8,128)}', space=vmem, size = 0x6000, scoped, tag = 'scratch operand']
  %s0 = inlined_call_operand.vmem [shape: f32[32,8], index: 0, kind: input, shape index: {}, may-alias: {0,8}]
  %s1 = inlined_call_operand.vmem [shape: f32[24,1], index: 1, kind: input, shape index: {}]
  %s2 = inlined_call_operand.vmem [shape: f32[24,1], index: 2, kind: input, shape index: {}]
  %s3 = inlined_call_operand.vmem [shape: bf16[16,24], index: 3, kind: input, shape index: {}]
  %s4 = inlined_call_operand.vmem [shape: f32[16,1], index: 4, kind: input, shape index: {}]
  %s5 = inlined_call_operand.vmem [shape: f32[16,1], index: 5, kind: input, shape index: {}]
  %s6 = inlined_call_operand.vmem [shape: bf16[9,8,16], index: 6, kind: input, shape index: {}]
  %s7 = inlined_call_operand.vmem [shape: f32[9,1,8], index: 7, kind: input, shape index: {}]
  %s8 = inlined_call_operand.vmem [shape: f32[32,8], index: 8, kind: output, shape index: {}, may-alias: {0,8}]
  %s9 = sld [smem:[#allocation0]]
  $region42: #{densenet_forward.24} parent=0
    _
  %s11 = ssub.s32 1, %s9
  %s12 = scalar_select 0, %s11, %s9
  // Predicated region
  $region2: #{densenet_forward.24} parent=0 // pred_check
    _
  $region3: #{densenet_forward.24} parent=0 // pred_check_branch
    %14 = sbr.rel (0) target = $region5
  $region4: #{densenet_forward.24} parent=0 // pred_region
    _
  $region5: #{densenet_forward.24} parent=0 // pred_fallthru
    _
  // Predicated region
  $region6: #{densenet_forward.24} parent=0 // pred_check
    _
  $region7: #{densenet_forward.24} parent=0 // pred_check_branch
    %16 = sbr.rel (0) target = $region9
  $region8: #{densenet_forward.24} parent=0 // pred_region
    _
  $region9: #{densenet_forward.24} parent=0 // pred_fallthru
    _
  // Predicated region
  $region10: #{densenet_forward.24} parent=0 // pred_check
    _
  $region11: #{densenet_forward.24} parent=0 // pred_check_branch
    %18 = sbr.rel (0) target = $region13
  $region12: #{densenet_forward.24} parent=0 // pred_region
    _
  $region13: #{densenet_forward.24} parent=0 // pred_fallthru
    _
  // Predicated region
  $region14: #{densenet_forward.24} parent=0 // pred_check
    _
  $region15: #{densenet_forward.24} parent=0 // pred_check_branch
    %20 = sbr.rel (0) target = $region17
  $region16: #{densenet_forward.24} parent=0 // pred_region
    _
  $region17: #{densenet_forward.24} parent=0 // pred_fallthru
    _
  // Predicated region
  $region18: #{densenet_forward.24} parent=0 // pred_check
    _
  $region19: #{densenet_forward.24} parent=0 // pred_check_branch
    %22 = sbr.rel (0) target = $region21
  $region20: #{densenet_forward.24} parent=0 // pred_region
    _
  $region21: #{densenet_forward.24} parent=0 // pred_fallthru
    _
  // Predicated region
  $region22: #{densenet_forward.24} parent=0 // pred_check
    _
  $region23: #{densenet_forward.24} parent=0 // pred_check_branch
    %24 = sbr.rel (0) target = $region25
  $region24: #{densenet_forward.24} parent=0 // pred_region
    _
  $region25: #{densenet_forward.24} parent=0 // pred_fallthru
    _
  // Predicated region
  $region26: #{densenet_forward.24} parent=0 // pred_check
    _
  $region27: #{densenet_forward.24} parent=0 // pred_check_branch
    %26 = sbr.rel (0) target = $region29
  $region28: #{densenet_forward.24} parent=0 // pred_region
    _
  $region29: #{densenet_forward.24} parent=0 // pred_fallthru
    _
  // Predicated region
  $region30: #{densenet_forward.24} parent=0 // pred_check
    _
  $region31: #{densenet_forward.24} parent=0 // pred_check_branch
    %28 = sbr.rel (0) target = $region33
  $region32: #{densenet_forward.24} parent=0 // pred_region
    _
  $region33: #{densenet_forward.24} parent=0 // pred_fallthru
    _
  %s29 = scalar_lea.vmem %s8, 24
  %s30 = scalar_lea.vmem %s8, 24
  %v32 = vld [vmem:[%s0] sm:$0xff]
  %v33 = vld [vmem:[%s0 + $0x8] sm:$0xff]
  %v34 = vld [vmem:[%s0 + $0x10] sm:$0xff]
  %v35 = vld [vmem:[%s1] sm:$0xff]
  %v36 = vld [vmem:[%s1 + $0x8] sm:$0xff]
  %v37 = vld [vmem:[%s1 + $0x10] sm:$0xff]
  %39 = vset.pattern.permute.xlu0 0
  %40 = vperm.xlu0 %39, %v35
  %v41 = vpop.permute.xlu0 %40
  %44 = vset.pattern.permute.xlu0 0
  %45 = vperm.xlu0 %44, %v36
  %v46 = vpop.permute.xlu0 %45
  %49 = vset.pattern.permute.xlu0 0
  %50 = vperm.xlu0 %49, %v37
  %v51 = vpop.permute.xlu0 %50
  %v53 = vmul.f32 %v32, %v41
  %v54 = vmul.f32 %v33, %v46
  %v55 = vmul.f32 %v34, %v51
  %v56 = vld [vmem:[%s2] sm:$0xff]
  %v57 = vld [vmem:[%s2 + $0x8] sm:$0xff]
  %v58 = vld [vmem:[%s2 + $0x10] sm:$0xff]
  %60 = vset.pattern.permute.xlu0 0
  %61 = vperm.xlu0 %60, %v56
  %v62 = vpop.permute.xlu0 %61
  %65 = vset.pattern.permute.xlu0 0
  %66 = vperm.xlu0 %65, %v57
  %v67 = vpop.permute.xlu0 %66
  %70 = vset.pattern.permute.xlu0 0
  %71 = vperm.xlu0 %70, %v58
  %v72 = vpop.permute.xlu0 %71
  %v74 = vadd.f32 %v53, %v62
  %v75 = vadd.f32 %v54, %v67
  %v76 = vadd.f32 %v55, %v72
  %v77 = vmax.f32 %v74, 0.0
  %v78 = vmax.f32 %v75, 0.0
  %v79 = vmax.f32 %v76, 0.0
  %v80 = vld [vmem:[%s3] sm:$0xf]
  %v81 = vld [vmem:[%s3 + $0x4] sm:$0xf]
  %v82 = vpack.c.bf16 %v78, %v77
  %v83 = vpack.c.bf16 %v79, %v79
  %v86 = vunpack.c.l.b16 %v80
  %v87 = vunpack.c.l.b16 %v81
  %v88 = vpack.c.b16 %v87, %v86
  %vm89 = vcmask 195584
  %v91 = vsel %vm89, %v88, 0
  %vm93 = vcmask 1043456
  %v95 = vsel %vm93, %v83, 0
  %97 = vmatpush.bf16.msra.mxu0 0
  %98 = vmatpush.bf16.msra.mxu0 0
  %99 = vmatpush.bf16.msra.mxu0 0
  %100 = vmatpush.bf16.msra.mxu0 0
  %101 = vmatpush.bf16.msra.mxu0 0
  %102 = vmatpush.bf16.msra.mxu0 0
  %103 = vmatpush.bf16.msra.mxu0 %v95
  %104 = vmatpush.bf16.msra.mxu0 %v82
  %105 = vmatmul.bf16.gmra.mxu0 %v91
  %v106 = vpop.f32.mrf.mxu0
  %v107 = vadd.f32 0.0, %v106
  %v108 = vpop.f32.mrf.mxu0
  %v109 = vadd.f32 0.0, %v108
  %110 = vdwg.mxu0
  %v111 = vld [vmem:[%s4] sm:$0xff]
  %v112 = vld [vmem:[%s4 + $0x8] sm:$0xff]
  %114 = vset.pattern.permute.xlu0 0
  %115 = vperm.xlu0 %114, %v111
  %v116 = vpop.permute.xlu0 %115
  %119 = vset.pattern.permute.xlu0 0
  %120 = vperm.xlu0 %119, %v112
  %v121 = vpop.permute.xlu0 %120
  %v123 = vmul.f32 %v107, %v116
  %v124 = vmul.f32 %v109, %v121
  %v125 = vld [vmem:[%s5] sm:$0xff]
  %v126 = vld [vmem:[%s5 + $0x8] sm:$0xff]
  %128 = vset.pattern.permute.xlu0 0
  %129 = vperm.xlu0 %128, %v125
  %v130 = vpop.permute.xlu0 %129
  %133 = vset.pattern.permute.xlu0 0
  %134 = vperm.xlu0 %133, %v126
  %v135 = vpop.permute.xlu0 %134
  %v137 = vadd.f32 %v123, %v130
  %v138 = vadd.f32 %v124, %v135
  %v139 = vmax.f32 %v137, 0.0
  %v140 = vmax.f32 %v138, 0.0
  %141 = vst [vmem:[#allocation2] sm:$0xff] 0.0
  %142 = vst [vmem:[#allocation2 + $0x8] sm:$0xff] 0.0
  %vm143 = vcmask 64512
  %144 = vst.msk [vmem:[#allocation2 + $0x10] sm:$0xff] %vm143, 0.0
  %145 = vst [vmem:[#allocation2 + $0x18] sm:$0xff] 0.0
  %146 = vst [vmem:[#allocation2 + $0x20] sm:$0xff] 0.0
  %147 = vst.msk [vmem:[#allocation2 + $0x28] sm:$0xff] %vm143, 0.0
  %148 = vst.msk [vmem:[#allocation2 + $0x8] sm:$0xff] %vm143, %v139
  %149 = vst.msk [vmem:[#allocation2 + $0x20] sm:$0xff] %vm143, %v140
  %v150 = vld [vmem:[#allocation2] sm:$0xff]
  %v151 = vld [vmem:[#allocation2 + $0x8] sm:$0xff]
  %v152 = vld [vmem:[#allocation2 + $0x18] sm:$0xff]
  %v153 = vld [vmem:[#allocation2 + $0x20] sm:$0xff]
  %v154 = vld [vmem:[%s7] sm:$0x1]
  %v156 = vperm.slane %v154, 0
  %157 = vrot.lane.b32.xlu0 %v156, 125
  %v158 = vpop.permute.xlu0 %157
  %v160 = vmul.f32 %v150, %v158
  %v161 = vmul.f32 %v151, %v158
  %v162 = vmul.f32 %v152, %v158
  %v163 = vmul.f32 %v153, %v158
  %v164 = vld [vmem:[%s6] sm:$0xf]
  %v165 = vpack.c.bf16 %v162, %v160
  %v166 = vpack.c.bf16 %v163, %v161
  %s167 = scalar_lea.vmem %s7, 1
  %v168 = vld [vmem:[%s167] sm:$0x1]
  %v170 = vperm.slane %v168, 0
  %171 = vrot.lane.b32.xlu0 %v170, 126
  %v172 = vpop.permute.xlu0 %171
  %v174 = vmul.f32 %v150, %v172
  %v175 = vmul.f32 %v151, %v172
  %v176 = vmul.f32 %v152, %v172
  %v177 = vmul.f32 %v153, %v172
  %s178 = scalar_lea.vmem %s6, 4
  %v179 = vld [vmem:[%s178] sm:$0xf]
  %v180 = vpack.c.bf16 %v176, %v174
  %v181 = vpack.c.bf16 %v177, %v175
  %184 = vrot.lane.b32.xlu0 %v180, 2
  %v185 = vpop.permute.xlu0 %184
  %186 = vrot.lane.b32.xlu0 %v181, 2
  %v187 = vpop.permute.xlu0 %186
  %vm188 = vcmask 15360
  %v189 = vsel %vm188, %v185, %v187
  %vm191 = vcmask 130048
  %v193 = vsel %vm191, %v179, 0
  %195 = vmatpush.bf16.msra.mxu0 0
  %196 = vmatpush.bf16.msra.mxu0 0
  %197 = vmatpush.bf16.msra.mxu0 0
  %198 = vmatpush.bf16.msra.mxu0 0
  %199 = vmatpush.bf16.msra.mxu0 0
  %200 = vmatpush.bf16.msra.mxu0 0
  %201 = vmatpush.bf16.msra.mxu0 0
  %202 = vmatpush.bf16.msra.mxu0 %v189
  %203 = vmatmul.bf16.gmra.mxu0 %v193
  %v204 = vpop.f32.mrf.mxu0
  %v205 = vadd.f32 0.0, %v204
  %v206 = vpop.f32.mrf.mxu0
  %207 = vdwg.mxu0
  %210 = vrot.lane.b32.xlu0 %v165, 3
  %v211 = vpop.permute.xlu0 %210
  %212 = vrot.lane.b32.xlu0 %v166, 3
  %v213 = vpop.permute.xlu0 %212
  %vm214 = vcmask 23552
  %v215 = vsel %vm214, %v211, %v213
  %v218 = vsel %vm191, %v164, 0
  %220 = vmatpush.bf16.msra.mxu0 0
  %221 = vmatpush.bf16.msra.mxu0 0
  %222 = vmatpush.bf16.msra.mxu0 0
  %223 = vmatpush.bf16.msra.mxu0 0
  %224 = vmatpush.bf16.msra.mxu0 0
  %225 = vmatpush.bf16.msra.mxu0 0
  %226 = vmatpush.bf16.msra.mxu0 0
  %227 = vmatpush.bf16.msra.mxu0 %v215
  %228 = vmatmul.bf16.gmra.mxu0 %v218
  %v229 = vpop.f32.mrf.mxu0
  %v230 = vadd.f32 %v205, %v229
  %v231 = vpop.f32.mrf.mxu0
  %232 = vdwg.mxu0
  %s233 = scalar_lea.vmem %s7, 2
  %v234 = vld [vmem:[%s233] sm:$0x1]
  %v236 = vperm.slane %v234, 0
  %237 = vrot.lane.b32.xlu0 %v236, 127
  %v238 = vpop.permute.xlu0 %237
  %v240 = vmul.f32 %v150, %v238
  %v241 = vmul.f32 %v151, %v238
  %v242 = vmul.f32 %v152, %v238
  %v243 = vmul.f32 %v153, %v238
  %s244 = scalar_lea.vmem %s6, 8
  %v245 = vld [vmem:[%s244] sm:$0xf]
  %v246 = vpack.c.bf16 %v242, %v240
  %v247 = vpack.c.bf16 %v243, %v241
  %250 = vrot.lane.b32.xlu0 %v246, 1
  %v251 = vpop.permute.xlu0 %250
  %252 = vrot.lane.b32.xlu0 %v247, 1
  %v253 = vpop.permute.xlu0 %252
  %vm254 = vcmask 7168
  %v255 = vsel %vm254, %v251, %v253
  %v258 = vsel %vm191, %v245, 0
  %260 = vmatpush.bf16.msra.mxu0 0
  %261 = vmatpush.bf16.msra.mxu0 0
  %262 = vmatpush.bf16.msra.mxu0 0
  %263 = vmatpush.bf16.msra.mxu0 0
  %264 = vmatpush.bf16.msra.mxu0 0
  %265 = vmatpush.bf16.msra.mxu0 0
  %266 = vmatpush.bf16.msra.mxu0 0
  %267 = vmatpush.bf16.msra.mxu0 %v255
  %268 = vmatmul.bf16.gmra.mxu0 %v258
  %v269 = vpop.f32.mrf.mxu0
  %v270 = vadd.f32 0.0, %v269
  %v271 = vpop.f32.mrf.mxu0
  %272 = vdwg.mxu0
  %v273 = vadd.f32 %v230, %v270
  %s274 = scalar_lea.vmem %s7, 3
  %v275 = vld [vmem:[%s274] sm:$0x1]
  %v277 = vperm.slane %v275, 0
  %278 = vrot.lane.b32.xlu0 %v277, 127
  %v279 = vpop.permute.xlu0 %278
  %v281 = vmul.f32 %v150, %v279
  %v282 = vmul.f32 %v151, %v279
  %v283 = vmul.f32 %v152, %v279
  %v284 = vmul.f32 %v153, %v279
  %s285 = scalar_lea.vmem %s6, 12
  %v286 = vld [vmem:[%s285] sm:$0xf]
  %v287 = vpack.c.bf16 %v283, %v281
  %v288 = vpack.c.bf16 %v284, %v282
  %291 = vrot.lane.b32.xlu0 %v287, 1
  %v292 = vpop.permute.xlu0 %291
  %293 = vrot.lane.b32.xlu0 %v288, 1
  %v294 = vpop.permute.xlu0 %293
  %v295 = vsel %vm254, %v292, %v294
  %v298 = vsel %vm191, %v286, 0
  %300 = vmatpush.bf16.msra.mxu0 0
  %301 = vmatpush.bf16.msra.mxu0 0
  %302 = vmatpush.bf16.msra.mxu0 0
  %303 = vmatpush.bf16.msra.mxu0 0
  %304 = vmatpush.bf16.msra.mxu0 0
  %305 = vmatpush.bf16.msra.mxu0 0
  %306 = vmatpush.bf16.msra.mxu0 0
  %307 = vmatpush.bf16.msra.mxu0 %v295
  %308 = vmatmul.bf16.gmra.mxu0 %v298
  %v309 = vpop.f32.mrf.mxu0
  %v310 = vadd.f32 0.0, %v309
  %v311 = vpop.f32.mrf.mxu0
  %312 = vdwg.mxu0
  %v313 = vadd.f32 %v273, %v310
  %s314 = scalar_lea.vmem %s7, 4
  %v315 = vld [vmem:[%s314] sm:$0x1]
  %v317 = vperm.slane %v315, 0
  %v319 = vmul.f32 %v151, %v317
  %v320 = vmul.f32 %v153, %v317
  %s321 = scalar_lea.vmem %s6, 16
  %v322 = vld [vmem:[%s321] sm:$0xf]
  %v323 = vpack.c.bf16 %v320, %v319
  %v325 = vsel %vm191, %v322, 0
  %327 = vmatpush.bf16.msra.mxu0 0
  %328 = vmatpush.bf16.msra.mxu0 0
  %329 = vmatpush.bf16.msra.mxu0 0
  %330 = vmatpush.bf16.msra.mxu0 0
  %331 = vmatpush.bf16.msra.mxu0 0
  %332 = vmatpush.bf16.msra.mxu0 0
  %333 = vmatpush.bf16.msra.mxu0 0
  %334 = vmatpush.bf16.msra.mxu0 %v323
  %335 = vmatmul.bf16.gmra.mxu0 %v325
  %v336 = vpop.f32.mrf.mxu0
  %v337 = vadd.f32 0.0, %v336
  %v338 = vpop.f32.mrf.mxu0
  %339 = vdwg.mxu0
  %v340 = vadd.f32 %v313, %v337
  %s341 = scalar_lea.vmem %s7, 5
  %v342 = vld [vmem:[%s341] sm:$0x1]
  %v344 = vperm.slane %v342, 0
  %345 = vrot.lane.b32.xlu0 %v344, 1
  %v346 = vpop.permute.xlu0 %345
  %v348 = vmul.f32 %v151, %v346
  %v349 = vmul.f32 %v153, %v346
  %s350 = scalar_lea.vmem %s6, 20
  %v351 = vld [vmem:[%s350] sm:$0xf]
  %v352 = vpack.c.bf16 %v349, %v348
  %354 = vrot.lane.b32.xlu0 %v352, 127
  %v355 = vpop.permute.xlu0 %354
  %v358 = vsel %vm191, %v351, 0
  %360 = vmatpush.bf16.msra.mxu0 0
  %361 = vmatpush.bf16.msra.mxu0 0
  %362 = vmatpush.bf16.msra.mxu0 0
  %363 = vmatpush.bf16.msra.mxu0 0
  %364 = vmatpush.bf16.msra.mxu0 0
  %365 = vmatpush.bf16.msra.mxu0 0
  %366 = vmatpush.bf16.msra.mxu0 0
  %367 = vmatpush.bf16.msra.mxu0 %v355
  %368 = vmatmul.bf16.gmra.mxu0 %v358
  %v369 = vpop.f32.mrf.mxu0
  %v370 = vadd.f32 0.0, %v369
  %v371 = vpop.f32.mrf.mxu0
  %372 = vdwg.mxu0
  %v373 = vadd.f32 %v340, %v370
  %s374 = scalar_lea.vmem %s7, 6
  %v375 = vld [vmem:[%s374] sm:$0x1]
  %v377 = vperm.slane %v375, 0
  %378 = vrot.lane.b32.xlu0 %v377, 1
  %v379 = vpop.permute.xlu0 %378
  %v381 = vmul.f32 %v151, %v379
  %v382 = vmul.f32 %v153, %v379
  %s383 = scalar_lea.vmem %s6, 24
  %v384 = vld [vmem:[%s383] sm:$0xf]
  %v385 = vpack.c.bf16 %v382, %v381
  %387 = vrot.lane.b32.xlu0 %v385, 127
  %v388 = vpop.permute.xlu0 %387
  %v391 = vsel %vm191, %v384, 0
  %393 = vmatpush.bf16.msra.mxu0 0
  %394 = vmatpush.bf16.msra.mxu0 0
  %395 = vmatpush.bf16.msra.mxu0 0
  %396 = vmatpush.bf16.msra.mxu0 0
  %397 = vmatpush.bf16.msra.mxu0 0
  %398 = vmatpush.bf16.msra.mxu0 0
  %399 = vmatpush.bf16.msra.mxu0 0
  %400 = vmatpush.bf16.msra.mxu0 %v388
  %401 = vmatmul.bf16.gmra.mxu0 %v391
  %v402 = vpop.f32.mrf.mxu0
  %v403 = vadd.f32 0.0, %v402
  %v404 = vpop.f32.mrf.mxu0
  %405 = vdwg.mxu0
  %v406 = vadd.f32 %v373, %v403
  %s407 = scalar_lea.vmem %s7, 7
  %v408 = vld [vmem:[%s407] sm:$0x1]
  %v410 = vperm.slane %v408, 0
  %411 = vrot.lane.b32.xlu0 %v410, 2
  %v412 = vpop.permute.xlu0 %411
  %v414 = vmul.f32 %v151, %v412
  %v415 = vmul.f32 %v153, %v412
  %s416 = scalar_lea.vmem %s6, 28
  %v417 = vld [vmem:[%s416] sm:$0xf]
  %v418 = vpack.c.bf16 %v415, %v414
  %420 = vrot.lane.b32.xlu0 %v418, 126
  %v421 = vpop.permute.xlu0 %420
  %v424 = vsel %vm191, %v417, 0
  %426 = vmatpush.bf16.msra.mxu0 0
  %427 = vmatpush.bf16.msra.mxu0 0
  %428 = vmatpush.bf16.msra.mxu0 0
  %429 = vmatpush.bf16.msra.mxu0 0
  %430 = vmatpush.bf16.msra.mxu0 0
  %431 = vmatpush.bf16.msra.mxu0 0
  %432 = vmatpush.bf16.msra.mxu0 0
  %433 = vmatpush.bf16.msra.mxu0 %v421
  %434 = vmatmul.bf16.gmra.mxu0 %v424
  %v435 = vpop.f32.mrf.mxu0
  %v436 = vadd.f32 0.0, %v435
  %v437 = vpop.f32.mrf.mxu0
  %438 = vdwg.mxu0
  %v439 = vadd.f32 %v406, %v436
  %s440 = scalar_lea.vmem %s7, 8
  %v441 = vld [vmem:[%s440] sm:$0x1]
  %v443 = vperm.slane %v441, 0
  %444 = vrot.lane.b32.xlu0 %v443, 3
  %v445 = vpop.permute.xlu0 %444
  %v447 = vmul.f32 %v151, %v445
  %v448 = vmul.f32 %v153, %v445
  %s449 = scalar_lea.vmem %s6, 32
  %v450 = vld [vmem:[%s449] sm:$0xf]
  %v451 = vpack.c.bf16 %v448, %v447
  %453 = vrot.lane.b32.xlu0 %v451, 125
  %v454 = vpop.permute.xlu0 %453
  %v457 = vsel %vm191, %v450, 0
  %459 = vmatpush.bf16.msra.mxu0 0
  %460 = vmatpush.bf16.msra.mxu0 0
  %461 = vmatpush.bf16.msra.mxu0 0
  %462 = vmatpush.bf16.msra.mxu0 0
  %463 = vmatpush.bf16.msra.mxu0 0
  %464 = vmatpush.bf16.msra.mxu0 0
  %465 = vmatpush.bf16.msra.mxu0 0
  %466 = vmatpush.bf16.msra.mxu0 %v454
  %467 = vmatmul.bf16.gmra.mxu0 %v457
  %v468 = vpop.f32.mrf.mxu0
  %v469 = vadd.f32 0.0, %v468
  %v470 = vpop.f32.mrf.mxu0
  %471 = vdwg.mxu0
  %v472 = vadd.f32 %v439, %v469
  %473 = vst.msk [vmem:[%s30] sm:$0xff] %vm143, %v472
  %s474 = scalar_lea.vmem %s8, 24
  // Predicated region
  $region34: #{densenet_forward.24} parent=0 // pred_check
    _
  $region35: #{densenet_forward.24} parent=0 // pred_check_branch
    %476 = sbr.rel (0) target = $region37
  $region36: #{densenet_forward.24} parent=0 // pred_region
    _
  $region37: #{densenet_forward.24} parent=0 // pred_fallthru
    _
  // Predicated region
  $region38: #{densenet_forward.24} parent=0 // pred_check
    _
  $region39: #{densenet_forward.24} parent=0 // pred_check_branch
    %478 = sbr.rel (0) target = $region41
  $region40: #{densenet_forward.24} parent=0 // pred_region
    %s479 = scalar_lea.vmem %s8, 24
  $region41: #{densenet_forward.24} parent=0 // pred_fallthru
    _

</llo_original>
